<compile_context>
chip_gen: v5e
topology: v5e:2x2
jax: 0.10.0
libtpu: 0.0.40
codegen_flags: <defaults>
</compile_context>

<pallas_src>
import functools

import jax
import jax.numpy as jnp
from jax.experimental import pallas as pl
from jax.experimental.pallas import tpu as pltpu


def _round_up(v, m):
    return (v + m - 1) // m * m


def _act(v, elu):
    if elu:
        return jnp.where(v > 0, v, jnp.expm1(v))   # ELU(alpha=1)
    return jnp.maximum(v, 0.0)                     # ReLU


# --------------------------- in-kernel helpers ------------------------------ #

def _fill_halo(pad_ref, a, H, W, Wp):
    """Write image `a` (H, W, C) into the zero-initialized flat halo buffer.

    pad_ref is a flat ((H+3)*Wp, C) VMEM scratch; image row y goes to flat rows
    (y+1)*Wp+1 .. (y+1)*Wp+W; everything else stays zero (the conv's zero padding).
    """
    pad_ref[...] = jnp.zeros_like(pad_ref)
    for y in range(H):                      # unrolled; H is small/static
        r0 = (y + 1) * Wp + 1
        pad_ref[r0:r0 + W, :] = a[y].astype(pad_ref.dtype)


def _conv3x3_taps(pad_ref, w_ref, H, W, Wp):
    """3x3 conv as 9 flat-offset taps: each tap is one contiguous dslice of the
    halo buffer feeding one (H*Wp, Cin) x (Cin, Cout) MXU matmul (f32 accum)."""
    Cout = w_ref.shape[-1]
    cdt = w_ref.dtype                       # compute dtype (bf16 by default)
    acc = jnp.zeros((H * Wp, Cout), jnp.float32)
    for ky in range(3):
        for kx in range(3):
            off = ky * Wp + kx
            xt = pad_ref[off:off + H * Wp, :].astype(cdt)
            acc = acc + jnp.dot(xt, w_ref[3 * ky + kx],
                                preferred_element_type=jnp.float32)
    return acc


# ------------------------------ Pallas kernels ------------------------------ #

def _conv1_fused_kernel(x_ref, s1_ref, t1_ref, w_ref, b_ref, s2_ref, t2_ref,
                        o_ref, pad_ref, *, H, W, Wp, elu):
    """act(bn2(conv3x3(act(bn1(x))) + b1)) for one image. Dropout = identity (eval)."""
    f32 = jnp.float32
    Cin = x_ref.shape[-1]
    Cmid = w_ref.shape[-1]
    # fused bn1 + activation, written straight into the zero-padded halo buffer
    a = x_ref[0].astype(f32) * s1_ref[...].reshape(1, 1, Cin) \
        + t1_ref[...].reshape(1, 1, Cin)
    a = _act(a, elu)
    _fill_halo(pad_ref, a, H, W, Wp)
    # conv1 (+ bias) and fused bn2 + activation epilogue (no extra HBM round-trip)
    acc = _conv3x3_taps(pad_ref, w_ref, H, W, Wp) + b_ref[...].astype(f32)
    acc = acc * s2_ref[...].astype(f32) + t2_ref[...].astype(f32)
    acc = _act(acc, elu)
    out = acc.reshape(H, Wp, Cmid)[:, :W, :]     # drop the garbage padded columns
    o_ref[...] = out[None].astype(o_ref.dtype)


def _conv2_fused_kernel(*refs, H, W, Wp, shortcut):
    """conv3x3(h) + b2 (+ fused identity / 1x1-projection shortcut on x)."""
    if shortcut == "conv":
        h_ref, w_ref, b_ref, x_ref, ws_ref, bs_ref, o_ref, pad_ref = refs
    elif shortcut == "identity":
        h_ref, w_ref, b_ref, x_ref, o_ref, pad_ref = refs
        ws_ref = bs_ref = None
    else:  # "none": conv only (strided fallback adds the shortcut outside)
        h_ref, w_ref, b_ref, o_ref, pad_ref = refs
        x_ref = ws_ref = bs_ref = None
    f32 = jnp.float32
    Cout = w_ref.shape[-1]
    _fill_halo(pad_ref, h_ref[0], H, W, Wp)      # h is already bn2+act'ed (kernel 1)
    acc = _conv3x3_taps(pad_ref, w_ref, H, W, Wp) + b_ref[...].astype(f32)
    out = acc.reshape(H, Wp, Cout)[:, :W, :]
    if shortcut == "conv":                       # fused 1x1 projection: extra MXU matmul
        Cin = x_ref.shape[-1]
        xs = x_ref[0].astype(w_ref.dtype).reshape(H * W, Cin)
        sc = jnp.dot(xs, ws_ref[...], preferred_element_type=f32) \
            + bs_ref[...].astype(f32)
        out = out + sc.reshape(H, W, Cout)
    elif shortcut == "identity":
        out = out + x_ref[0].astype(f32)
    o_ref[...] = out[None].astype(o_ref.dtype)


def _conv1x1_kernel(x_ref, w_ref, b_ref, o_ref, *, H, W):
    # fallback kernel, only used by the stride != 1 path
    Cin = x_ref.shape[-1]
    Cout = w_ref.shape[-1]
    xt = x_ref[0].astype(w_ref.dtype).reshape(H * W, Cin)
    y = jnp.dot(xt, w_ref[...], preferred_element_type=jnp.float32) + b_ref[...]
    o_ref[...] = y.reshape(1, H, W, Cout).astype(o_ref.dtype)


# ------------------------------ pallas_call wrappers ------------------------ #

def _compiler_params():
    # Batch grid axis is independent per image -> shard across TensorCores on v7x
    # megacore; harmless no-op on single-TC v5e/v6e.
    return pltpu.CompilerParams(dimension_semantics=("parallel",))


def conv1_bn_act(x, s1, t1, w1, b1, s2, t2, *, elu, out_dtype):
    """Kernel 1 wrapper. x: NHWC f32; w1: (9, Cin, Cmid) in compute dtype."""
    N, H, W, Cin = x.shape
    Cmid = w1.shape[-1]
    Wp = _round_up(W + 2, 8)
    f32 = jnp.float32
    kern = functools.partial(_conv1_fused_kernel, H=H, W=W, Wp=Wp, elu=elu)
    return pl.pallas_call(
        kern,
        out_shape=jax.ShapeDtypeStruct((N, H, W, Cmid), out_dtype),
        grid=(N,),
        in_specs=[
            pl.BlockSpec((1, H, W, Cin), lambda n: (n, 0, 0, 0)),
            pl.BlockSpec((1, Cin), lambda n: (0, 0)),
            pl.BlockSpec((1, Cin), lambda n: (0, 0)),
            pl.BlockSpec((9, Cin, Cmid), lambda n: (0, 0, 0)),
            pl.BlockSpec((1, Cmid), lambda n: (0, 0)),
            pl.BlockSpec((1, Cmid), lambda n: (0, 0)),
            pl.BlockSpec((1, Cmid), lambda n: (0, 0)),
        ],
        out_specs=pl.BlockSpec((1, H, W, Cmid), lambda n: (n, 0, 0, 0)),
        scratch_shapes=[pltpu.VMEM(((H + 3) * Wp, Cin), jnp.float32)],
        compiler_params=_compiler_params(),
    )(x,
      s1.reshape(1, Cin).astype(f32), t1.reshape(1, Cin).astype(f32),
      w1,
      b1.reshape(1, Cmid).astype(f32),
      s2.reshape(1, Cmid).astype(f32), t2.reshape(1, Cmid).astype(f32))


def conv2_shortcut(h, w2, b2, *, x=None, ws=None, bs=None, out_dtype):
    """Kernel 2 wrapper. h: NHWC (compute dtype); w2: (9, Cmid, Cout)."""
    N, H, W, Cmid = h.shape
    Cout = w2.shape[-1]
    Wp = _round_up(W + 2, 8)
    f32 = jnp.float32
    if x is not None and ws is not None:
        shortcut = "conv"
    elif x is not None:
        shortcut = "identity"
    else:
        shortcut = "none"
    kern = functools.partial(_conv2_fused_kernel, H=H, W=W, Wp=Wp, shortcut=shortcut)
    in_specs = [
        pl.BlockSpec((1, H, W, Cmid), lambda n: (n, 0, 0, 0)),
        pl.BlockSpec((9, Cmid, Cout), lambda n: (0, 0, 0)),
        pl.BlockSpec((1, Cout), lambda n: (0, 0)),
    ]
    args = [h, w2, b2.reshape(1, Cout).astype(f32)]
    if shortcut in ("conv", "identity"):
        Cin = x.shape[-1]
        in_specs.append(pl.BlockSpec((1, H, W, Cin), lambda n: (n, 0, 0, 0)))
        args.append(x)
    if shortcut == "conv":
        Cin = x.shape[-1]
        in_specs.append(pl.BlockSpec((Cin, Cout), lambda n: (0, 0)))
        in_specs.append(pl.BlockSpec((1, Cout), lambda n: (0, 0)))
        args.append(ws)
        args.append(bs.reshape(1, Cout).astype(f32))
    return pl.pallas_call(
        kern,
        out_shape=jax.ShapeDtypeStruct((N, H, W, Cout), out_dtype),
        grid=(N,),
        in_specs=in_specs,
        out_specs=pl.BlockSpec((1, H, W, Cout), lambda n: (n, 0, 0, 0)),
        scratch_shapes=[pltpu.VMEM(((H + 3) * Wp, Cmid), jnp.float32)],
        compiler_params=_compiler_params(),
    )(*args)


def conv1x1(x, w, b, *, stride=1):
    """1x1 conv shortcut (stride as pre-subsample). Only used by the stride!=1 path."""
    if stride != 1:
        x = x[:, ::stride, ::stride, :]
    N, H, W, Cin = x.shape
    Cout = w.shape[-1]
    return pl.pallas_call(
        functools.partial(_conv1x1_kernel, H=H, W=W),
        out_shape=jax.ShapeDtypeStruct((N, H, W, Cout), x.dtype),
        grid=(N,),
        in_specs=[
            pl.BlockSpec((1, H, W, Cin), lambda n: (n, 0, 0, 0)),
            pl.BlockSpec((Cin, Cout), lambda n: (0, 0)),
            pl.BlockSpec((1, Cout), lambda n: (0, 0)),
        ],
        out_specs=pl.BlockSpec((1, H, W, Cout), lambda n: (n, 0, 0, 0)),
        compiler_params=_compiler_params(),
    )(x, w, b.reshape(1, Cout).astype(jnp.float32))


# -------------------------------- wide_basic -------------------------------- #

def _bn_fold(bnp):
    scale = bnp["gamma"] / jnp.sqrt(bnp["var"] + bnp["eps"])
    shift = bnp["beta"] - bnp["mean"] * scale
    return scale, shift


@functools.partial(jax.jit,
                   static_argnames=("stride", "bn", "elu_flag", "compute_dtype"))
def wide_basic_forward(x_nchw, params, *, stride=1, bn=True, elu_flag=False,
                       compute_dtype=jnp.bfloat16):
    """Forward pass of wide_basic (eval mode). Input/output NCHW (PyTorch)."""
    x = jnp.transpose(x_nchw, (0, 2, 3, 1))  # NCHW -> NHWC
    N, H, W, Cin = x.shape
    Cout = params["w1"].shape[-1]            # = planes (conv1 and conv2 output width)

    if bn:
        s1, t1 = _bn_fold(params["bn1"])
        s2, t2 = _bn_fold(params["bn2"])
    else:
        s1 = jnp.ones((Cin,), jnp.float32)
        t1 = jnp.zeros((Cin,), jnp.float32)
        s2 = jnp.ones((Cout,), jnp.float32)
        t2 = jnp.zeros((Cout,), jnp.float32)

    # MXU operands in compute_dtype (bf16 by default); accumulation stays f32 in-kernel.
    w1 = params["w1"].reshape(9, Cin, Cout).astype(compute_dtype)
    w2 = params["w2"].reshape(9, Cout, Cout).astype(compute_dtype)

    # kernel 1: bn1 -> act -> conv1 (+bias) -> dropout(identity) -> bn2 -> act
    h = conv1_bn_act(x, s1, t1, w1, params["b1"], s2, t2,
                     elu=elu_flag, out_dtype=compute_dtype)

    has_proj = (stride != 1) or (Cin != Cout)
    if stride == 1:
        ws = params["ws"].astype(compute_dtype) if has_proj else None
        bs = params["bs"] if has_proj else None
        # kernel 2: conv2 (+bias) with the shortcut fused into the same kernel
        out = conv2_shortcut(h, w2, params["b2"], x=x, ws=ws, bs=bs,
                             out_dtype=x.dtype)
    else:
        # TODO(synk): strided taps in-kernel (pl.ds(..., stride)) to avoid the 4x
        # redundant stride-1 compute + subsample and to fuse the residual add.
        full = conv2_shortcut(h, w2, params["b2"], out_dtype=x.dtype)
        sc = conv1x1(x, params["ws"].astype(compute_dtype), params["bs"],
                     stride=stride)
        out = full[:, ::stride, ::stride, :] + sc

    return jnp.transpose(out, (0, 3, 1, 2))  # NHWC -> NCHW


# --------------------------- pure-JAX reference ----------------------------- #

def _ref_forward(x_nchw, params, *, stride=1, bn=True, elu_flag=False):
    x = jnp.transpose(x_nchw, (0, 2, 3, 1))
    Cin = x.shape[-1]
    Cout = params["w1"].shape[-1]

    def act(v):
        return jnp.where(v > 0, v, jnp.expm1(v)) if elu_flag else jnp.maximum(v, 0.0)

    def bnorm(v, bnp):
        s, t = _bn_fold(bnp)
        return v * s + t

    def conv(v, w, b, s, pad):
        y = jax.lax.conv_general_dilated(
            v, w, (s, s), pad, dimension_numbers=("NHWC", "HWIO", "NHWC"))
        return y + b

    h = act(bnorm(x, params["bn1"]) if bn else x)
    h = conv(h, params["w1"], params["b1"], 1, ((1, 1), (1, 1)))
    h = act(bnorm(h, params["bn2"]) if bn else h)
    if stride != 1 or Cin != Cout:
        sc = conv(x, params["ws"].reshape(1, 1, Cin, Cout), params["bs"], stride,
                  ((0, 0), (0, 0)))
    else:
        sc = x
    out = conv(h, params["w2"], params["b2"], stride, ((1, 1), (1, 1))) + sc
    return jnp.transpose(out, (0, 3, 1, 2))


# ---------------------------------- main ------------------------------------ #

def _make_params(key, in_planes, planes):
    ks = jax.random.split(key, 12)
    f32 = jnp.float32
    return {
        # conv weights in HWIO (converted from PyTorch OIHW convention)
        "w1": (0.1 * jax.random.normal(ks[0], (3, 3, in_planes, planes))).astype(f32),
        "b1": (0.1 * jax.random.normal(ks[1], (planes,))).astype(f32),
        "w2": (0.1 * jax.random.normal(ks[2], (3, 3, planes, planes))).astype(f32),
        "b2": (0.1 * jax.random.normal(ks[3], (planes,))).astype(f32),
        # shortcut 1x1 conv stored as (Cin, Cout)
        "ws": (0.1 * jax.random.normal(ks[4], (in_planes, planes))).astype(f32),
        "bs": (0.1 * jax.random.normal(ks[5], (planes,))).astype(f32),
        "bn1": {
            "gamma": (1.0 + 0.1 * jax.random.normal(ks[6], (in_planes,))).astype(f32),
            "beta": (0.1 * jax.random.normal(ks[7], (in_planes,))).astype(f32),
            "mean": (0.1 * jax.random.normal(ks[8], (in_planes,))).astype(f32),
            "var": (1.0 + 0.1 * jax.random.uniform(ks[9], (in_planes,))).astype(f32),
            "eps": jnp.float32(1e-5),
        },
        "bn2": {
            "gamma": (1.0 + 0.1 * jax.random.normal(ks[10], (planes,))).astype(f32),
            "beta": (0.1 * jax.random.normal(ks[11], (planes,))).astype(f32),
            "mean": jnp.zeros((planes,), f32),
            "var": jnp.ones((planes,), f32),
            "eps": jnp.float32(1e-5),
        },
    }


if __name__ == "__main__":
    key = jax.random.PRNGKey(0)
    kx, kp = jax.random.split(key)

    # wide_basic(in_planes=4, planes=8, dropout_rate=0.3, stride=1) -> 1x1 projection shortcut
    N, Cin, H, W = 2, 4, 16, 16
    Cout = 8
    x = jax.random.normal(kx, (N, Cin, H, W), dtype=jnp.float32)  # NCHW like PyTorch
    params = _make_params(kp, Cin, Cout)

    ref = jax.block_until_ready(
        _ref_forward(x, params, stride=1, bn=True, elu_flag=False))

    # f32 MXU path: tight check against the XLA reference.
    out_f32 = jax.block_until_ready(
        wide_basic_forward(x, params, stride=1, bn=True, elu_flag=False,
                           compute_dtype=jnp.float32))
    assert out_f32.shape == (N, Cout, H, W), out_f32.shape
    assert jnp.allclose(out_f32, ref, rtol=1e-4, atol=1e-4), \
        float(jnp.max(jnp.abs(out_f32 - ref)))

    # bf16 MXU path (default / fast): loose sanity check against the f32 reference.
    out_bf16 = jax.block_until_ready(
        wide_basic_forward(x, params, stride=1, bn=True, elu_flag=False,
                           compute_dtype=jnp.bfloat16))
    assert out_bf16.shape == (N, Cout, H, W), out_bf16.shape
    assert jnp.allclose(out_bf16, ref, rtol=1e-1, atol=1e-1), \
        float(jnp.max(jnp.abs(out_bf16 - ref)))

    print("KERNEL_OK")
</pallas_src>

<mosaic_0001>
module attributes {stable_mosaic.version = 11 : i64} {
  func.func @_conv1_fused_kernel(%arg0: i32, %arg1: memref<1x16x16x4xf32, #tpu.memory_space<vmem>>, %arg2: memref<1x4xf32, #tpu.memory_space<vmem>>, %arg3: memref<1x4xf32, #tpu.memory_space<vmem>>, %arg4: memref<9x4x8xf32, #tpu.memory_space<vmem>>, %arg5: memref<1x8xf32, #tpu.memory_space<vmem>>, %arg6: memref<1x8xf32, #tpu.memory_space<vmem>>, %arg7: memref<1x8xf32, #tpu.memory_space<vmem>>, %arg8: memref<1x16x16x8xf32, #tpu.memory_space<vmem>>, %arg9: memref<456x4xf32, #tpu.memory_space<vmem>>) attributes {dimension_semantics = [#tpu.dimension_semantics<parallel>], iteration_bounds = array<i64: 2>, scalar_prefetch = 0 : i64, scratch_operands = 1 : i64, tpu.core_type = #tpu.core_type<tc>, window_params = [{transform_indices = @transform_0, window_bounds = array<i64: 1, 16, 16, 4>}, {pipeline_mode = #tpu.pipeline_mode<synchronous>, transform_indices = @transform_1, window_bounds = array<i64: 1, 4>}, {pipeline_mode = #tpu.pipeline_mode<synchronous>, transform_indices = @transform_2, window_bounds = array<i64: 1, 4>}, {pipeline_mode = #tpu.pipeline_mode<synchronous>, transform_indices = @transform_3, window_bounds = array<i64: 9, 4, 8>}, {pipeline_mode = #tpu.pipeline_mode<synchronous>, transform_indices = @transform_4, window_bounds = array<i64: 1, 8>}, {pipeline_mode = #tpu.pipeline_mode<synchronous>, transform_indices = @transform_5, window_bounds = array<i64: 1, 8>}, {pipeline_mode = #tpu.pipeline_mode<synchronous>, transform_indices = @transform_6, window_bounds = array<i64: 1, 8>}, {transform_indices = @transform_7, window_bounds = array<i64: 1, 16, 16, 8>}]} {
    %c0 = arith.constant 0 : index
    %c0_0 = arith.constant 0 : index
    %c0_1 = arith.constant 0 : index
    %c0_2 = arith.constant 0 : index
    %0 = vector.load %arg1[%c0, %c0_0, %c0_1, %c0_2] : memref<1x16x16x4xf32, #tpu.memory_space<vmem>>, vector<1x16x16x4xf32>
    %1 = vector.shape_cast %0 : vector<1x16x16x4xf32> to vector<16x16x4xf32>
    %c0_3 = arith.constant 0 : index
    %c0_4 = arith.constant 0 : index
    %2 = vector.load %arg2[%c0_3, %c0_4] : memref<1x4xf32, #tpu.memory_space<vmem>>, vector<1x4xf32>
    %3 = vector.shape_cast %2 : vector<1x4xf32> to vector<1x1x4xf32>
    %4 = vector.broadcast %3 : vector<1x1x4xf32> to vector<16x16x4xf32>
    %5 = arith.mulf %1, %4 : vector<16x16x4xf32>
    %c0_5 = arith.constant 0 : index
    %c0_6 = arith.constant 0 : index
    %6 = vector.load %arg3[%c0_5, %c0_6] : memref<1x4xf32, #tpu.memory_space<vmem>>, vector<1x4xf32>
    %7 = vector.shape_cast %6 : vector<1x4xf32> to vector<1x1x4xf32>
    %8 = vector.broadcast %7 : vector<1x1x4xf32> to vector<16x16x4xf32>
    %9 = arith.addf %5, %8 : vector<16x16x4xf32>
    %cst = arith.constant 0.000000e+00 : f32
    %10 = vector.broadcast %cst : f32 to vector<16x16x4xf32>
    %11 = arith.maximumf %9, %10 : vector<16x16x4xf32>
    %cst_7 = arith.constant 0.000000e+00 : f32
    %12 = vector.broadcast %cst_7 : f32 to vector<456x4xf32>
    %c0_8 = arith.constant 0 : index
    %c0_9 = arith.constant 0 : index
    %13 = vector.load %arg9[%c0_8, %c0_9] : memref<456x4xf32, #tpu.memory_space<vmem>>, vector<456x4xf32>
    tpu.vector_store %arg9[%c0_8, %c0_9], %12 {strides = array<i32>} : memref<456x4xf32, #tpu.memory_space<vmem>>, vector<456x4xf32>,
    %14 = vector.extract_strided_slice %11 {offsets = [0, 0, 0], sizes = [1, 16, 4], strides = [1, 1, 1]} : vector<16x16x4xf32> to vector<1x16x4xf32>
    %15 = vector.shape_cast %14 : vector<1x16x4xf32> to vector<16x4xf32>
    %c25 = arith.constant 25 : index
    %c0_10 = arith.constant 0 : index
    %16 = vector.load %arg9[%c25, %c0_10] : memref<456x4xf32, #tpu.memory_space<vmem>>, vector<16x4xf32>
    tpu.vector_store %arg9[%c25, %c0_10], %15 {strides = array<i32>} : memref<456x4xf32, #tpu.memory_space<vmem>>, vector<16x4xf32>,
    %17 = vector.extract_strided_slice %11 {offsets = [1, 0, 0], sizes = [1, 16, 4], strides = [1, 1, 1]} : vector<16x16x4xf32> to vector<1x16x4xf32>
    %18 = vector.shape_cast %17 : vector<1x16x4xf32> to vector<16x4xf32>
    %c49 = arith.constant 49 : index
    %c0_11 = arith.constant 0 : index
    %19 = vector.load %arg9[%c49, %c0_11] : memref<456x4xf32, #tpu.memory_space<vmem>>, vector<16x4xf32>
    tpu.vector_store %arg9[%c49, %c0_11], %18 {strides = array<i32>} : memref<456x4xf32, #tpu.memory_space<vmem>>, vector<16x4xf32>,
    %20 = vector.extract_strided_slice %11 {offsets = [2, 0, 0], sizes = [1, 16, 4], strides = [1, 1, 1]} : vector<16x16x4xf32> to vector<1x16x4xf32>
    %21 = vector.shape_cast %20 : vector<1x16x4xf32> to vector<16x4xf32>
    %c73 = arith.constant 73 : index
    %c0_12 = arith.constant 0 : index
    %22 = vector.load %arg9[%c73, %c0_12] : memref<456x4xf32, #tpu.memory_space<vmem>>, vector<16x4xf32>
    tpu.vector_store %arg9[%c73, %c0_12], %21 {strides = array<i32>} : memref<456x4xf32, #tpu.memory_space<vmem>>, vector<16x4xf32>,
    %23 = vector.extract_strided_slice %11 {offsets = [3, 0, 0], sizes = [1, 16, 4], strides = [1, 1, 1]} : vector<16x16x4xf32> to vector<1x16x4xf32>
    %24 = vector.shape_cast %23 : vector<1x16x4xf32> to vector<16x4xf32>
    %c97 = arith.constant 97 : index
    %c0_13 = arith.constant 0 : index
    %25 = vector.load %arg9[%c97, %c0_13] : memref<456x4xf32, #tpu.memory_space<vmem>>, vector<16x4xf32>
    tpu.vector_store %arg9[%c97, %c0_13], %24 {strides = array<i32>} : memref<456x4xf32, #tpu.memory_space<vmem>>, vector<16x4xf32>,
    %26 = vector.extract_strided_slice %11 {offsets = [4, 0, 0], sizes = [1, 16, 4], strides = [1, 1, 1]} : vector<16x16x4xf32> to vector<1x16x4xf32>
    %27 = vector.shape_cast %26 : vector<1x16x4xf32> to vector<16x4xf32>
    %c121 = arith.constant 121 : index
    %c0_14 = arith.constant 0 : index
    %28 = vector.load %arg9[%c121, %c0_14] : memref<456x4xf32, #tpu.memory_space<vmem>>, vector<16x4xf32>
    tpu.vector_store %arg9[%c121, %c0_14], %27 {strides = array<i32>} : memref<456x4xf32, #tpu.memory_space<vmem>>, vector<16x4xf32>,
    %29 = vector.extract_strided_slice %11 {offsets = [5, 0, 0], sizes = [1, 16, 4], strides = [1, 1, 1]} : vector<16x16x4xf32> to vector<1x16x4xf32>
    %30 = vector.shape_cast %29 : vector<1x16x4xf32> to vector<16x4xf32>
    %c145 = arith.constant 145 : index
    %c0_15 = arith.constant 0 : index
    %31 = vector.load %arg9[%c145, %c0_15] : memref<456x4xf32, #tpu.memory_space<vmem>>, vector<16x4xf32>
    tpu.vector_store %arg9[%c145, %c0_15], %30 {strides = array<i32>} : memref<456x4xf32, #tpu.memory_space<vmem>>, vector<16x4xf32>,
    %32 = vector.extract_strided_slice %11 {offsets = [6, 0, 0], sizes = [1, 16, 4], strides = [1, 1, 1]} : vector<16x16x4xf32> to vector<1x16x4xf32>
    %33 = vector.shape_cast %32 : vector<1x16x4xf32> to vector<16x4xf32>
    %c169 = arith.constant 169 : index
    %c0_16 = arith.constant 0 : index
    %34 = vector.load %arg9[%c169, %c0_16] : memref<456x4xf32, #tpu.memory_space<vmem>>, vector<16x4xf32>
    tpu.vector_store %arg9[%c169, %c0_16], %33 {strides = array<i32>} : memref<456x4xf32, #tpu.memory_space<vmem>>, vector<16x4xf32>,
    %35 = vector.extract_strided_slice %11 {offsets = [7, 0, 0], sizes = [1, 16, 4], strides = [1, 1, 1]} : vector<16x16x4xf32> to vector<1x16x4xf32>
    %36 = vector.shape_cast %35 : vector<1x16x4xf32> to vector<16x4xf32>
    %c193 = arith.constant 193 : index
    %c0_17 = arith.constant 0 : index
    %37 = vector.load %arg9[%c193, %c0_17] : memref<456x4xf32, #tpu.memory_space<vmem>>, vector<16x4xf32>
    tpu.vector_store %arg9[%c193, %c0_17], %36 {strides = array<i32>} : memref<456x4xf32, #tpu.memory_space<vmem>>, vector<16x4xf32>,
    %38 = vector.extract_strided_slice %11 {offsets = [8, 0, 0], sizes = [1, 16, 4], strides = [1, 1, 1]} : vector<16x16x4xf32> to vector<1x16x4xf32>
    %39 = vector.shape_cast %38 : vector<1x16x4xf32> to vector<16x4xf32>
    %c217 = arith.constant 217 : index
    %c0_18 = arith.constant 0 : index
    %40 = vector.load %arg9[%c217, %c0_18] : memref<456x4xf32, #tpu.memory_space<vmem>>, vector<16x4xf32>
    tpu.vector_store %arg9[%c217, %c0_18], %39 {strides = array<i32>} : memref<456x4xf32, #tpu.memory_space<vmem>>, vector<16x4xf32>,
    %41 = vector.extract_strided_slice %11 {offsets = [9, 0, 0], sizes = [1, 16, 4], strides = [1, 1, 1]} : vector<16x16x4xf32> to vector<1x16x4xf32>
    %42 = vector.shape_cast %41 : vector<1x16x4xf32> to vector<16x4xf32>
    %c241 = arith.constant 241 : index
    %c0_19 = arith.constant 0 : index
    %43 = vector.load %arg9[%c241, %c0_19] : memref<456x4xf32, #tpu.memory_space<vmem>>, vector<16x4xf32>
    tpu.vector_store %arg9[%c241, %c0_19], %42 {strides = array<i32>} : memref<456x4xf32, #tpu.memory_space<vmem>>, vector<16x4xf32>,
    %44 = vector.extract_strided_slice %11 {offsets = [10, 0, 0], sizes = [1, 16, 4], strides = [1, 1, 1]} : vector<16x16x4xf32> to vector<1x16x4xf32>
    %45 = vector.shape_cast %44 : vector<1x16x4xf32> to vector<16x4xf32>
    %c265 = arith.constant 265 : index
    %c0_20 = arith.constant 0 : index
    %46 = vector.load %arg9[%c265, %c0_20] : memref<456x4xf32, #tpu.memory_space<vmem>>, vector<16x4xf32>
    tpu.vector_store %arg9[%c265, %c0_20], %45 {strides = array<i32>} : memref<456x4xf32, #tpu.memory_space<vmem>>, vector<16x4xf32>,
    %47 = vector.extract_strided_slice %11 {offsets = [11, 0, 0], sizes = [1, 16, 4], strides = [1, 1, 1]} : vector<16x16x4xf32> to vector<1x16x4xf32>
    %48 = vector.shape_cast %47 : vector<1x16x4xf32> to vector<16x4xf32>
    %c289 = arith.constant 289 : index
    %c0_21 = arith.constant 0 : index
    %49 = vector.load %arg9[%c289, %c0_21] : memref<456x4xf32, #tpu.memory_space<vmem>>, vector<16x4xf32>
    tpu.vector_store %arg9[%c289, %c0_21], %48 {strides = array<i32>} : memref<456x4xf32, #tpu.memory_space<vmem>>, vector<16x4xf32>,
    %50 = vector.extract_strided_slice %11 {offsets = [12, 0, 0], sizes = [1, 16, 4], strides = [1, 1, 1]} : vector<16x16x4xf32> to vector<1x16x4xf32>
    %51 = vector.shape_cast %50 : vector<1x16x4xf32> to vector<16x4xf32>
    %c313 = arith.constant 313 : index
    %c0_22 = arith.constant 0 : index
    %52 = vector.load %arg9[%c313, %c0_22] : memref<456x4xf32, #tpu.memory_space<vmem>>, vector<16x4xf32>
    tpu.vector_store %arg9[%c313, %c0_22], %51 {strides = array<i32>} : memref<456x4xf32, #tpu.memory_space<vmem>>, vector<16x4xf32>,
    %53 = vector.extract_strided_slice %11 {offsets = [13, 0, 0], sizes = [1, 16, 4], strides = [1, 1, 1]} : vector<16x16x4xf32> to vector<1x16x4xf32>
    %54 = vector.shape_cast %53 : vector<1x16x4xf32> to vector<16x4xf32>
    %c337 = arith.constant 337 : index
    %c0_23 = arith.constant 0 : index
    %55 = vector.load %arg9[%c337, %c0_23] : memref<456x4xf32, #tpu.memory_space<vmem>>, vector<16x4xf32>
    tpu.vector_store %arg9[%c337, %c0_23], %54 {strides = array<i32>} : memref<456x4xf32, #tpu.memory_space<vmem>>, vector<16x4xf32>,
    %56 = vector.extract_strided_slice %11 {offsets = [14, 0, 0], sizes = [1, 16, 4], strides = [1, 1, 1]} : vector<16x16x4xf32> to vector<1x16x4xf32>
    %57 = vector.shape_cast %56 : vector<1x16x4xf32> to vector<16x4xf32>
    %c361 = arith.constant 361 : index
    %c0_24 = arith.constant 0 : index
    %58 = vector.load %arg9[%c361, %c0_24] : memref<456x4xf32, #tpu.memory_space<vmem>>, vector<16x4xf32>
    tpu.vector_store %arg9[%c361, %c0_24], %57 {strides = array<i32>} : memref<456x4xf32, #tpu.memory_space<vmem>>, vector<16x4xf32>,
    %59 = vector.extract_strided_slice %11 {offsets = [15, 0, 0], sizes = [1, 16, 4], strides = [1, 1, 1]} : vector<16x16x4xf32> to vector<1x16x4xf32>
    %60 = vector.shape_cast %59 : vector<1x16x4xf32> to vector<16x4xf32>
    %c385 = arith.constant 385 : index
    %c0_25 = arith.constant 0 : index
    %61 = vector.load %arg9[%c385, %c0_25] : memref<456x4xf32, #tpu.memory_space<vmem>>, vector<16x4xf32>
    tpu.vector_store %arg9[%c385, %c0_25], %60 {strides = array<i32>} : memref<456x4xf32, #tpu.memory_space<vmem>>, vector<16x4xf32>,
    %cst_26 = arith.constant 0.000000e+00 : f32
    %62 = vector.broadcast %cst_26 : f32 to vector<384x8xf32>
    %c0_27 = arith.constant 0 : index
    %c0_28 = arith.constant 0 : index
    %63 = vector.load %arg9[%c0_27, %c0_28] : memref<456x4xf32, #tpu.memory_space<vmem>>, vector<384x4xf32>
    %c0_29 = arith.constant 0 : index
    %c0_30 = arith.constant 0 : index
    %c0_31 = arith.constant 0 : index
    %64 = vector.load %arg4[%c0_29, %c0_30, %c0_31] : memref<9x4x8xf32, #tpu.memory_space<vmem>>, vector<1x4x8xf32>
    %65 = vector.shape_cast %64 : vector<1x4x8xf32> to vector<4x8xf32>
    %cst_32 = arith.constant dense<0.000000e+00> : vector<384x8xf32>
    %66 = tpu.matmul %63, %65, %cst_32 {dimension_numbers = #tpu.dot_dimension_numbers<[1], [0], [0], [1], [0, 0, 1, 1], [], []>} : vector<384x4xf32>, vector<4x8xf32>, vector<384x8xf32> -> vector<384x8xf32>
    %67 = arith.addf %62, %66 : vector<384x8xf32>
    %c1 = arith.constant 1 : index
    %c0_33 = arith.constant 0 : index
    %68 = vector.load %arg9[%c1, %c0_33] : memref<456x4xf32, #tpu.memory_space<vmem>>, vector<384x4xf32>
    %c1_34 = arith.constant 1 : index
    %c0_35 = arith.constant 0 : index
    %c0_36 = arith.constant 0 : index
    %69 = vector.load %arg4[%c1_34, %c0_35, %c0_36] : memref<9x4x8xf32, #tpu.memory_space<vmem>>, vector<1x4x8xf32>
    %70 = vector.shape_cast %69 : vector<1x4x8xf32> to vector<4x8xf32>
    %cst_37 = arith.constant dense<0.000000e+00> : vector<384x8xf32>
    %71 = tpu.matmul %68, %70, %cst_37 {dimension_numbers = #tpu.dot_dimension_numbers<[1], [0], [0], [1], [0, 0, 1, 1], [], []>} : vector<384x4xf32>, vector<4x8xf32>, vector<384x8xf32> -> vector<384x8xf32>
    %72 = arith.addf %67, %71 : vector<384x8xf32>
    %c2 = arith.constant 2 : index
    %c0_38 = arith.constant 0 : index
    %73 = vector.load %arg9[%c2, %c0_38] : memref<456x4xf32, #tpu.memory_space<vmem>>, vector<384x4xf32>
    %c2_39 = arith.constant 2 : index
    %c0_40 = arith.constant 0 : index
    %c0_41 = arith.constant 0 : index
    %74 = vector.load %arg4[%c2_39, %c0_40, %c0_41] : memref<9x4x8xf32, #tpu.memory_space<vmem>>, vector<1x4x8xf32>
    %75 = vector.shape_cast %74 : vector<1x4x8xf32> to vector<4x8xf32>
    %cst_42 = arith.constant dense<0.000000e+00> : vector<384x8xf32>
    %76 = tpu.matmul %73, %75, %cst_42 {dimension_numbers = #tpu.dot_dimension_numbers<[1], [0], [0], [1], [0, 0, 1, 1], [], []>} : vector<384x4xf32>, vector<4x8xf32>, vector<384x8xf32> -> vector<384x8xf32>
    %77 = arith.addf %72, %76 : vector<384x8xf32>
    %c24 = arith.constant 24 : index
    %c0_43 = arith.constant 0 : index
    %78 = vector.load %arg9[%c24, %c0_43] : memref<456x4xf32, #tpu.memory_space<vmem>>, vector<384x4xf32>
    %c3 = arith.constant 3 : index
    %c0_44 = arith.constant 0 : index
    %c0_45 = arith.constant 0 : index
    %79 = vector.load %arg4[%c3, %c0_44, %c0_45] : memref<9x4x8xf32, #tpu.memory_space<vmem>>, vector<1x4x8xf32>
    %80 = vector.shape_cast %79 : vector<1x4x8xf32> to vector<4x8xf32>
    %cst_46 = arith.constant dense<0.000000e+00> : vector<384x8xf32>
    %81 = tpu.matmul %78, %80, %cst_46 {dimension_numbers = #tpu.dot_dimension_numbers<[1], [0], [0], [1], [0, 0, 1, 1], [], []>} : vector<384x4xf32>, vector<4x8xf32>, vector<384x8xf32> -> vector<384x8xf32>
    %82 = arith.addf %77, %81 : vector<384x8xf32>
    %c25_47 = arith.constant 25 : index
    %c0_48 = arith.constant 0 : index
    %83 = vector.load %arg9[%c25_47, %c0_48] : memref<456x4xf32, #tpu.memory_space<vmem>>, vector<384x4xf32>
    %c4 = arith.constant 4 : index
    %c0_49 = arith.constant 0 : index
    %c0_50 = arith.constant 0 : index
    %84 = vector.load %arg4[%c4, %c0_49, %c0_50] : memref<9x4x8xf32, #tpu.memory_space<vmem>>, vector<1x4x8xf32>
    %85 = vector.shape_cast %84 : vector<1x4x8xf32> to vector<4x8xf32>
    %cst_51 = arith.constant dense<0.000000e+00> : vector<384x8xf32>
    %86 = tpu.matmul %83, %85, %cst_51 {dimension_numbers = #tpu.dot_dimension_numbers<[1], [0], [0], [1], [0, 0, 1, 1], [], []>} : vector<384x4xf32>, vector<4x8xf32>, vector<384x8xf32> -> vector<384x8xf32>
    %87 = arith.addf %82, %86 : vector<384x8xf32>
    %c26 = arith.constant 26 : index
    %c0_52 = arith.constant 0 : index
    %88 = vector.load %arg9[%c26, %c0_52] : memref<456x4xf32, #tpu.memory_space<vmem>>, vector<384x4xf32>
    %c5 = arith.constant 5 : index
    %c0_53 = arith.constant 0 : index
    %c0_54 = arith.constant 0 : index
    %89 = vector.load %arg4[%c5, %c0_53, %c0_54] : memref<9x4x8xf32, #tpu.memory_space<vmem>>, vector<1x4x8xf32>
    %90 = vector.shape_cast %89 : vector<1x4x8xf32> to vector<4x8xf32>
    %cst_55 = arith.constant dense<0.000000e+00> : vector<384x8xf32>
    %91 = tpu.matmul %88, %90, %cst_55 {dimension_numbers = #tpu.dot_dimension_numbers<[1], [0], [0], [1], [0, 0, 1, 1], [], []>} : vector<384x4xf32>, vector<4x8xf32>, vector<384x8xf32> -> vector<384x8xf32>
    %92 = arith.addf %87, %91 : vector<384x8xf32>
    %c48 = arith.constant 48 : index
    %c0_56 = arith.constant 0 : index
    %93 = vector.load %arg9[%c48, %c0_56] : memref<456x4xf32, #tpu.memory_space<vmem>>, vector<384x4xf32>
    %c6 = arith.constant 6 : index
    %c0_57 = arith.constant 0 : index
    %c0_58 = arith.constant 0 : index
    %94 = vector.load %arg4[%c6, %c0_57, %c0_58] : memref<9x4x8xf32, #tpu.memory_space<vmem>>, vector<1x4x8xf32>
    %95 = vector.shape_cast %94 : vector<1x4x8xf32> to vector<4x8xf32>
    %cst_59 = arith.constant dense<0.000000e+00> : vector<384x8xf32>
    %96 = tpu.matmul %93, %95, %cst_59 {dimension_numbers = #tpu.dot_dimension_numbers<[1], [0], [0], [1], [0, 0, 1, 1], [], []>} : vector<384x4xf32>, vector<4x8xf32>, vector<384x8xf32> -> vector<384x8xf32>
    %97 = arith.addf %92, %96 : vector<384x8xf32>
    %c49_60 = arith.constant 49 : index
    %c0_61 = arith.constant 0 : index
    %98 = vector.load %arg9[%c49_60, %c0_61] : memref<456x4xf32, #tpu.memory_space<vmem>>, vector<384x4xf32>
    %c7 = arith.constant 7 : index
    %c0_62 = arith.constant 0 : index
    %c0_63 = arith.constant 0 : index
    %99 = vector.load %arg4[%c7, %c0_62, %c0_63] : memref<9x4x8xf32, #tpu.memory_space<vmem>>, vector<1x4x8xf32>
    %100 = vector.shape_cast %99 : vector<1x4x8xf32> to vector<4x8xf32>
    %cst_64 = arith.constant dense<0.000000e+00> : vector<384x8xf32>
    %101 = tpu.matmul %98, %100, %cst_64 {dimension_numbers = #tpu.dot_dimension_numbers<[1], [0], [0], [1], [0, 0, 1, 1], [], []>} : vector<384x4xf32>, vector<4x8xf32>, vector<384x8xf32> -> vector<384x8xf32>
    %102 = arith.addf %97, %101 : vector<384x8xf32>
    %c50 = arith.constant 50 : index
    %c0_65 = arith.constant 0 : index
    %103 = vector.load %arg9[%c50, %c0_65] : memref<456x4xf32, #tpu.memory_space<vmem>>, vector<384x4xf32>
    %c8 = arith.constant 8 : index
    %c0_66 = arith.constant 0 : index
    %c0_67 = arith.constant 0 : index
    %104 = vector.load %arg4[%c8, %c0_66, %c0_67] : memref<9x4x8xf32, #tpu.memory_space<vmem>>, vector<1x4x8xf32>
    %105 = vector.shape_cast %104 : vector<1x4x8xf32> to vector<4x8xf32>
    %cst_68 = arith.constant dense<0.000000e+00> : vector<384x8xf32>
    %106 = tpu.matmul %103, %105, %cst_68 {dimension_numbers = #tpu.dot_dimension_numbers<[1], [0], [0], [1], [0, 0, 1, 1], [], []>} : vector<384x4xf32>, vector<4x8xf32>, vector<384x8xf32> -> vector<384x8xf32>
    %107 = arith.addf %102, %106 : vector<384x8xf32>
    %c0_69 = arith.constant 0 : index
    %c0_70 = arith.constant 0 : index
    %108 = vector.load %arg5[%c0_69, %c0_70] : memref<1x8xf32, #tpu.memory_space<vmem>>, vector<1x8xf32>
    %109 = vector.broadcast %108 : vector<1x8xf32> to vector<384x8xf32>
    %110 = arith.addf %107, %109 : vector<384x8xf32>
    %c0_71 = arith.constant 0 : index
    %c0_72 = arith.constant 0 : index
    %111 = vector.load %arg6[%c0_71, %c0_72] : memref<1x8xf32, #tpu.memory_space<vmem>>, vector<1x8xf32>
    %112 = vector.broadcast %111 : vector<1x8xf32> to vector<384x8xf32>
    %113 = arith.mulf %110, %112 : vector<384x8xf32>
    %c0_73 = arith.constant 0 : index
    %c0_74 = arith.constant 0 : index
    %114 = vector.load %arg7[%c0_73, %c0_74] : memref<1x8xf32, #tpu.memory_space<vmem>>, vector<1x8xf32>
    %115 = vector.broadcast %114 : vector<1x8xf32> to vector<384x8xf32>
    %116 = arith.addf %113, %115 : vector<384x8xf32>
    %cst_75 = arith.constant 0.000000e+00 : f32
    %117 = vector.broadcast %cst_75 : f32 to vector<384x8xf32>
    %118 = arith.maximumf %116, %117 : vector<384x8xf32>
    %119 = vector.shape_cast %118 : vector<384x8xf32> to vector<16x24x8xf32>
    %120 = vector.extract_strided_slice %119 {offsets = [0, 0, 0], sizes = [16, 16, 8], strides = [1, 1, 1]} : vector<16x24x8xf32> to vector<16x16x8xf32>
    %121 = vector.shape_cast %120 : vector<16x16x8xf32> to vector<1x16x16x8xf32>
    %c0_76 = arith.constant 0 : index
    %c0_77 = arith.constant 0 : index
    %c0_78 = arith.constant 0 : index
    %c0_79 = arith.constant 0 : index
    %122 = vector.load %arg8[%c0_76, %c0_77, %c0_78, %c0_79] : memref<1x16x16x8xf32, #tpu.memory_space<vmem>>, vector<1x16x16x8xf32>
    tpu.vector_store %arg8[%c0_76, %c0_77, %c0_78, %c0_79], %121 {strides = array<i32>} : memref<1x16x16x8xf32, #tpu.memory_space<vmem>>, vector<1x16x16x8xf32>,
    return
  }
  func.func @transform_0(%arg0: i32) -> (i32, i32, i32, i32) {
    %c0_i32 = arith.constant 0 : i32
    %c0_i32_0 = arith.constant 0 : i32
    %c0_i32_1 = arith.constant 0 : i32
    %c0_i32_2 = arith.constant 0 : i32
    return %arg0, %c0_i32, %c0_i32_0, %c0_i32_1 : i32, i32, i32, i32
  }
  func.func @transform_1(%arg0: i32) -> (i32, i32) {
    %c0_i32 = arith.constant 0 : i32
    %c0_i32_0 = arith.constant 0 : i32
    %c0_i32_1 = arith.constant 0 : i32
    return %c0_i32, %c0_i32_0 : i32, i32
  }
  func.func @transform_2(%arg0: i32) -> (i32, i32) {
    %c0_i32 = arith.constant 0 : i32
    %c0_i32_0 = arith.constant 0 : i32
    %c0_i32_1 = arith.constant 0 : i32
    return %c0_i32, %c0_i32_0 : i32, i32
  }
  func.func @transform_3(%arg0: i32) -> (i32, i32, i32) {
    %c0_i32 = arith.constant 0 : i32
    %c0_i32_0 = arith.constant 0 : i32
    %c0_i32_1 = arith.constant 0 : i32
    %c0_i32_2 = arith.constant 0 : i32
    return %c0_i32, %c0_i32_0, %c0_i32_1 : i32, i32, i32
  }
  func.func @transform_4(%arg0: i32) -> (i32, i32) {
    %c0_i32 = arith.constant 0 : i32
    %c0_i32_0 = arith.constant 0 : i32
    %c0_i32_1 = arith.constant 0 : i32
    return %c0_i32, %c0_i32_0 : i32, i32
  }
  func.func @transform_5(%arg0: i32) -> (i32, i32) {
    %c0_i32 = arith.constant 0 : i32
    %c0_i32_0 = arith.constant 0 : i32
    %c0_i32_1 = arith.constant 0 : i32
    return %c0_i32, %c0_i32_0 : i32, i32
  }
  func.func @transform_6(%arg0: i32) -> (i32, i32) {
    %c0_i32 = arith.constant 0 : i32
    %c0_i32_0 = arith.constant 0 : i32
    %c0_i32_1 = arith.constant 0 : i32
    return %c0_i32, %c0_i32_0 : i32, i32
  }
  func.func @transform_7(%arg0: i32) -> (i32, i32, i32, i32) {
    %c0_i32 = arith.constant 0 : i32
    %c0_i32_0 = arith.constant 0 : i32
    %c0_i32_1 = arith.constant 0 : i32
    %c0_i32_2 = arith.constant 0 : i32
    return %arg0, %c0_i32, %c0_i32_0, %c0_i32_1 : i32, i32, i32, i32
  }
}

module attributes {stable_mosaic.version = 11 : i64} {
  func.func @_conv2_fused_kernel(%arg0: i32, %arg1: memref<1x16x16x8xf32, #tpu.memory_space<vmem>>, %arg2: memref<9x8x8xf32, #tpu.memory_space<vmem>>, %arg3: memref<1x8xf32, #tpu.memory_space<vmem>>, %arg4: memref<1x16x16x4xf32, #tpu.memory_space<vmem>>, %arg5: memref<4x8xf32, #tpu.memory_space<vmem>>, %arg6: memref<1x8xf32, #tpu.memory_space<vmem>>, %arg7: memref<1x16x16x8xf32, #tpu.memory_space<vmem>>, %arg8: memref<456x8xf32, #tpu.memory_space<vmem>>) attributes {dimension_semantics = [#tpu.dimension_semantics<parallel>], iteration_bounds = array<i64: 2>, scalar_prefetch = 0 : i64, scratch_operands = 1 : i64, tpu.core_type = #tpu.core_type<tc>, window_params = [{transform_indices = @transform_0, window_bounds = array<i64: 1, 16, 16, 8>}, {pipeline_mode = #tpu.pipeline_mode<synchronous>, transform_indices = @transform_1, window_bounds = array<i64: 9, 8, 8>}, {pipeline_mode = #tpu.pipeline_mode<synchronous>, transform_indices = @transform_2, window_bounds = array<i64: 1, 8>}, {transform_indices = @transform_3, window_bounds = array<i64: 1, 16, 16, 4>}, {pipeline_mode = #tpu.pipeline_mode<synchronous>, transform_indices = @transform_4, window_bounds = array<i64: 4, 8>}, {pipeline_mode = #tpu.pipeline_mode<synchronous>, transform_indices = @transform_5, window_bounds = array<i64: 1, 8>}, {transform_indices = @transform_6, window_bounds = array<i64: 1, 16, 16, 8>}]} {
    %c0 = arith.constant 0 : index
    %c0_0 = arith.constant 0 : index
    %c0_1 = arith.constant 0 : index
    %c0_2 = arith.constant 0 : index
    %0 = vector.load %arg1[%c0, %c0_0, %c0_1, %c0_2] : memref<1x16x16x8xf32, #tpu.memory_space<vmem>>, vector<1x16x16x8xf32>
    %1 = vector.shape_cast %0 : vector<1x16x16x8xf32> to vector<16x16x8xf32>
    %cst = arith.constant 0.000000e+00 : f32
    %2 = vector.broadcast %cst : f32 to vector<456x8xf32>
    %c0_3 = arith.constant 0 : index
    %c0_4 = arith.constant 0 : index
    %3 = vector.load %arg8[%c0_3, %c0_4] : memref<456x8xf32, #tpu.memory_space<vmem>>, vector<456x8xf32>
    tpu.vector_store %arg8[%c0_3, %c0_4], %2 {strides = array<i32>} : memref<456x8xf32, #tpu.memory_space<vmem>>, vector<456x8xf32>,
    %4 = vector.extract_strided_slice %1 {offsets = [0, 0, 0], sizes = [1, 16, 8], strides = [1, 1, 1]} : vector<16x16x8xf32> to vector<1x16x8xf32>
    %5 = vector.shape_cast %4 : vector<1x16x8xf32> to vector<16x8xf32>
    %c25 = arith.constant 25 : index
    %c0_5 = arith.constant 0 : index
    %6 = vector.load %arg8[%c25, %c0_5] : memref<456x8xf32, #tpu.memory_space<vmem>>, vector<16x8xf32>
    tpu.vector_store %arg8[%c25, %c0_5], %5 {strides = array<i32>} : memref<456x8xf32, #tpu.memory_space<vmem>>, vector<16x8xf32>,
    %7 = vector.extract_strided_slice %1 {offsets = [1, 0, 0], sizes = [1, 16, 8], strides = [1, 1, 1]} : vector<16x16x8xf32> to vector<1x16x8xf32>
    %8 = vector.shape_cast %7 : vector<1x16x8xf32> to vector<16x8xf32>
    %c49 = arith.constant 49 : index
    %c0_6 = arith.constant 0 : index
    %9 = vector.load %arg8[%c49, %c0_6] : memref<456x8xf32, #tpu.memory_space<vmem>>, vector<16x8xf32>
    tpu.vector_store %arg8[%c49, %c0_6], %8 {strides = array<i32>} : memref<456x8xf32, #tpu.memory_space<vmem>>, vector<16x8xf32>,
    %10 = vector.extract_strided_slice %1 {offsets = [2, 0, 0], sizes = [1, 16, 8], strides = [1, 1, 1]} : vector<16x16x8xf32> to vector<1x16x8xf32>
    %11 = vector.shape_cast %10 : vector<1x16x8xf32> to vector<16x8xf32>
    %c73 = arith.constant 73 : index
    %c0_7 = arith.constant 0 : index
    %12 = vector.load %arg8[%c73, %c0_7] : memref<456x8xf32, #tpu.memory_space<vmem>>, vector<16x8xf32>
    tpu.vector_store %arg8[%c73, %c0_7], %11 {strides = array<i32>} : memref<456x8xf32, #tpu.memory_space<vmem>>, vector<16x8xf32>,
    %13 = vector.extract_strided_slice %1 {offsets = [3, 0, 0], sizes = [1, 16, 8], strides = [1, 1, 1]} : vector<16x16x8xf32> to vector<1x16x8xf32>
    %14 = vector.shape_cast %13 : vector<1x16x8xf32> to vector<16x8xf32>
    %c97 = arith.constant 97 : index
    %c0_8 = arith.constant 0 : index
    %15 = vector.load %arg8[%c97, %c0_8] : memref<456x8xf32, #tpu.memory_space<vmem>>, vector<16x8xf32>
    tpu.vector_store %arg8[%c97, %c0_8], %14 {strides = array<i32>} : memref<456x8xf32, #tpu.memory_space<vmem>>, vector<16x8xf32>,
    %16 = vector.extract_strided_slice %1 {offsets = [4, 0, 0], sizes = [1, 16, 8], strides = [1, 1, 1]} : vector<16x16x8xf32> to vector<1x16x8xf32>
    %17 = vector.shape_cast %16 : vector<1x16x8xf32> to vector<16x8xf32>
    %c121 = arith.constant 121 : index
    %c0_9 = arith.constant 0 : index
    %18 = vector.load %arg8[%c121, %c0_9] : memref<456x8xf32, #tpu.memory_space<vmem>>, vector<16x8xf32>
    tpu.vector_store %arg8[%c121, %c0_9], %17 {strides = array<i32>} : memref<456x8xf32, #tpu.memory_space<vmem>>, vector<16x8xf32>,
    %19 = vector.extract_strided_slice %1 {offsets = [5, 0, 0], sizes = [1, 16, 8], strides = [1, 1, 1]} : vector<16x16x8xf32> to vector<1x16x8xf32>
    %20 = vector.shape_cast %19 : vector<1x16x8xf32> to vector<16x8xf32>
    %c145 = arith.constant 145 : index
    %c0_10 = arith.constant 0 : index
    %21 = vector.load %arg8[%c145, %c0_10] : memref<456x8xf32, #tpu.memory_space<vmem>>, vector<16x8xf32>
    tpu.vector_store %arg8[%c145, %c0_10], %20 {strides = array<i32>} : memref<456x8xf32, #tpu.memory_space<vmem>>, vector<16x8xf32>,
    %22 = vector.extract_strided_slice %1 {offsets = [6, 0, 0], sizes = [1, 16, 8], strides = [1, 1, 1]} : vector<16x16x8xf32> to vector<1x16x8xf32>
    %23 = vector.shape_cast %22 : vector<1x16x8xf32> to vector<16x8xf32>
    %c169 = arith.constant 169 : index
    %c0_11 = arith.constant 0 : index
    %24 = vector.load %arg8[%c169, %c0_11] : memref<456x8xf32, #tpu.memory_space<vmem>>, vector<16x8xf32>
    tpu.vector_store %arg8[%c169, %c0_11], %23 {strides = array<i32>} : memref<456x8xf32, #tpu.memory_space<vmem>>, vector<16x8xf32>,
    %25 = vector.extract_strided_slice %1 {offsets = [7, 0, 0], sizes = [1, 16, 8], strides = [1, 1, 1]} : vector<16x16x8xf32> to vector<1x16x8xf32>
    %26 = vector.shape_cast %25 : vector<1x16x8xf32> to vector<16x8xf32>
    %c193 = arith.constant 193 : index
    %c0_12 = arith.constant 0 : index
    %27 = vector.load %arg8[%c193, %c0_12] : memref<456x8xf32, #tpu.memory_space<vmem>>, vector<16x8xf32>
    tpu.vector_store %arg8[%c193, %c0_12], %26 {strides = array<i32>} : memref<456x8xf32, #tpu.memory_space<vmem>>, vector<16x8xf32>,
    %28 = vector.extract_strided_slice %1 {offsets = [8, 0, 0], sizes = [1, 16, 8], strides = [1, 1, 1]} : vector<16x16x8xf32> to vector<1x16x8xf32>
    %29 = vector.shape_cast %28 : vector<1x16x8xf32> to vector<16x8xf32>
    %c217 = arith.constant 217 : index
    %c0_13 = arith.constant 0 : index
    %30 = vector.load %arg8[%c217, %c0_13] : memref<456x8xf32, #tpu.memory_space<vmem>>, vector<16x8xf32>
    tpu.vector_store %arg8[%c217, %c0_13], %29 {strides = array<i32>} : memref<456x8xf32, #tpu.memory_space<vmem>>, vector<16x8xf32>,
    %31 = vector.extract_strided_slice %1 {offsets = [9, 0, 0], sizes = [1, 16, 8], strides = [1, 1, 1]} : vector<16x16x8xf32> to vector<1x16x8xf32>
    %32 = vector.shape_cast %31 : vector<1x16x8xf32> to vector<16x8xf32>
    %c241 = arith.constant 241 : index
    %c0_14 = arith.constant 0 : index
    %33 = vector.load %arg8[%c241, %c0_14] : memref<456x8xf32, #tpu.memory_space<vmem>>, vector<16x8xf32>
    tpu.vector_store %arg8[%c241, %c0_14], %32 {strides = array<i32>} : memref<456x8xf32, #tpu.memory_space<vmem>>, vector<16x8xf32>,
    %34 = vector.extract_strided_slice %1 {offsets = [10, 0, 0], sizes = [1, 16, 8], strides = [1, 1, 1]} : vector<16x16x8xf32> to vector<1x16x8xf32>
    %35 = vector.shape_cast %34 : vector<1x16x8xf32> to vector<16x8xf32>
    %c265 = arith.constant 265 : index
    %c0_15 = arith.constant 0 : index
    %36 = vector.load %arg8[%c265, %c0_15] : memref<456x8xf32, #tpu.memory_space<vmem>>, vector<16x8xf32>
    tpu.vector_store %arg8[%c265, %c0_15], %35 {strides = array<i32>} : memref<456x8xf32, #tpu.memory_space<vmem>>, vector<16x8xf32>,
    %37 = vector.extract_strided_slice %1 {offsets = [11, 0, 0], sizes = [1, 16, 8], strides = [1, 1, 1]} : vector<16x16x8xf32> to vector<1x16x8xf32>
    %38 = vector.shape_cast %37 : vector<1x16x8xf32> to vector<16x8xf32>
    %c289 = arith.constant 289 : index
    %c0_16 = arith.constant 0 : index
    %39 = vector.load %arg8[%c289, %c0_16] : memref<456x8xf32, #tpu.memory_space<vmem>>, vector<16x8xf32>
    tpu.vector_store %arg8[%c289, %c0_16], %38 {strides = array<i32>} : memref<456x8xf32, #tpu.memory_space<vmem>>, vector<16x8xf32>,
    %40 = vector.extract_strided_slice %1 {offsets = [12, 0, 0], sizes = [1, 16, 8], strides = [1, 1, 1]} : vector<16x16x8xf32> to vector<1x16x8xf32>
    %41 = vector.shape_cast %40 : vector<1x16x8xf32> to vector<16x8xf32>
    %c313 = arith.constant 313 : index
    %c0_17 = arith.constant 0 : index
    %42 = vector.load %arg8[%c313, %c0_17] : memref<456x8xf32, #tpu.memory_space<vmem>>, vector<16x8xf32>
    tpu.vector_store %arg8[%c313, %c0_17], %41 {strides = array<i32>} : memref<456x8xf32, #tpu.memory_space<vmem>>, vector<16x8xf32>,
    %43 = vector.extract_strided_slice %1 {offsets = [13, 0, 0], sizes = [1, 16, 8], strides = [1, 1, 1]} : vector<16x16x8xf32> to vector<1x16x8xf32>
    %44 = vector.shape_cast %43 : vector<1x16x8xf32> to vector<16x8xf32>
    %c337 = arith.constant 337 : index
    %c0_18 = arith.constant 0 : index
    %45 = vector.load %arg8[%c337, %c0_18] : memref<456x8xf32, #tpu.memory_space<vmem>>, vector<16x8xf32>
    tpu.vector_store %arg8[%c337, %c0_18], %44 {strides = array<i32>} : memref<456x8xf32, #tpu.memory_space<vmem>>, vector<16x8xf32>,
    %46 = vector.extract_strided_slice %1 {offsets = [14, 0, 0], sizes = [1, 16, 8], strides = [1, 1, 1]} : vector<16x16x8xf32> to vector<1x16x8xf32>
    %47 = vector.shape_cast %46 : vector<1x16x8xf32> to vector<16x8xf32>
    %c361 = arith.constant 361 : index
    %c0_19 = arith.constant 0 : index
    %48 = vector.load %arg8[%c361, %c0_19] : memref<456x8xf32, #tpu.memory_space<vmem>>, vector<16x8xf32>
    tpu.vector_store %arg8[%c361, %c0_19], %47 {strides = array<i32>} : memref<456x8xf32, #tpu.memory_space<vmem>>, vector<16x8xf32>,
    %49 = vector.extract_strided_slice %1 {offsets = [15, 0, 0], sizes = [1, 16, 8], strides = [1, 1, 1]} : vector<16x16x8xf32> to vector<1x16x8xf32>
    %50 = vector.shape_cast %49 : vector<1x16x8xf32> to vector<16x8xf32>
    %c385 = arith.constant 385 : index
    %c0_20 = arith.constant 0 : index
    %51 = vector.load %arg8[%c385, %c0_20] : memref<456x8xf32, #tpu.memory_space<vmem>>, vector<16x8xf32>
    tpu.vector_store %arg8[%c385, %c0_20], %50 {strides = array<i32>} : memref<456x8xf32, #tpu.memory_space<vmem>>, vector<16x8xf32>,
    %cst_21 = arith.constant 0.000000e+00 : f32
    %52 = vector.broadcast %cst_21 : f32 to vector<384x8xf32>
    %c0_22 = arith.constant 0 : index
    %c0_23 = arith.constant 0 : index
    %53 = vector.load %arg8[%c0_22, %c0_23] : memref<456x8xf32, #tpu.memory_space<vmem>>, vector<384x8xf32>
    %c0_24 = arith.constant 0 : index
    %c0_25 = arith.constant 0 : index
    %c0_26 = arith.constant 0 : index
    %54 = vector.load %arg2[%c0_24, %c0_25, %c0_26] : memref<9x8x8xf32, #tpu.memory_space<vmem>>, vector<1x8x8xf32>
    %55 = vector.shape_cast %54 : vector<1x8x8xf32> to vector<8x8xf32>
    %cst_27 = arith.constant dense<0.000000e+00> : vector<384x8xf32>
    %56 = tpu.matmul %53, %55, %cst_27 {dimension_numbers = #tpu.dot_dimension_numbers<[1], [0], [0], [1], [0, 0, 1, 1], [], []>} : vector<384x8xf32>, vector<8x8xf32>, vector<384x8xf32> -> vector<384x8xf32>
    %57 = arith.addf %52, %56 : vector<384x8xf32>
    %c1 = arith.constant 1 : index
    %c0_28 = arith.constant 0 : index
    %58 = vector.load %arg8[%c1, %c0_28] : memref<456x8xf32, #tpu.memory_space<vmem>>, vector<384x8xf32>
    %c1_29 = arith.constant 1 : index
    %c0_30 = arith.constant 0 : index
    %c0_31 = arith.constant 0 : index
    %59 = vector.load %arg2[%c1_29, %c0_30, %c0_31] : memref<9x8x8xf32, #tpu.memory_space<vmem>>, vector<1x8x8xf32>
    %60 = vector.shape_cast %59 : vector<1x8x8xf32> to vector<8x8xf32>
    %cst_32 = arith.constant dense<0.000000e+00> : vector<384x8xf32>
    %61 = tpu.matmul %58, %60, %cst_32 {dimension_numbers = #tpu.dot_dimension_numbers<[1], [0], [0], [1], [0, 0, 1, 1], [], []>} : vector<384x8xf32>, vector<8x8xf32>, vector<384x8xf32> -> vector<384x8xf32>
    %62 = arith.addf %57, %61 : vector<384x8xf32>
    %c2 = arith.constant 2 : index
    %c0_33 = arith.constant 0 : index
    %63 = vector.load %arg8[%c2, %c0_33] : memref<456x8xf32, #tpu.memory_space<vmem>>, vector<384x8xf32>
    %c2_34 = arith.constant 2 : index
    %c0_35 = arith.constant 0 : index
    %c0_36 = arith.constant 0 : index
    %64 = vector.load %arg2[%c2_34, %c0_35, %c0_36] : memref<9x8x8xf32, #tpu.memory_space<vmem>>, vector<1x8x8xf32>
    %65 = vector.shape_cast %64 : vector<1x8x8xf32> to vector<8x8xf32>
    %cst_37 = arith.constant dense<0.000000e+00> : vector<384x8xf32>
    %66 = tpu.matmul %63, %65, %cst_37 {dimension_numbers = #tpu.dot_dimension_numbers<[1], [0], [0], [1], [0, 0, 1, 1], [], []>} : vector<384x8xf32>, vector<8x8xf32>, vector<384x8xf32> -> vector<384x8xf32>
    %67 = arith.addf %62, %66 : vector<384x8xf32>
    %c24 = arith.constant 24 : index
    %c0_38 = arith.constant 0 : index
    %68 = vector.load %arg8[%c24, %c0_38] : memref<456x8xf32, #tpu.memory_space<vmem>>, vector<384x8xf32>
    %c3 = arith.constant 3 : index
    %c0_39 = arith.constant 0 : index
    %c0_40 = arith.constant 0 : index
    %69 = vector.load %arg2[%c3, %c0_39, %c0_40] : memref<9x8x8xf32, #tpu.memory_space<vmem>>, vector<1x8x8xf32>
    %70 = vector.shape_cast %69 : vector<1x8x8xf32> to vector<8x8xf32>
    %cst_41 = arith.constant dense<0.000000e+00> : vector<384x8xf32>
    %71 = tpu.matmul %68, %70, %cst_41 {dimension_numbers = #tpu.dot_dimension_numbers<[1], [0], [0], [1], [0, 0, 1, 1], [], []>} : vector<384x8xf32>, vector<8x8xf32>, vector<384x8xf32> -> vector<384x8xf32>
    %72 = arith.addf %67, %71 : vector<384x8xf32>
    %c25_42 = arith.constant 25 : index
    %c0_43 = arith.constant 0 : index
    %73 = vector.load %arg8[%c25_42, %c0_43] : memref<456x8xf32, #tpu.memory_space<vmem>>, vector<384x8xf32>
    %c4 = arith.constant 4 : index
    %c0_44 = arith.constant 0 : index
    %c0_45 = arith.constant 0 : index
    %74 = vector.load %arg2[%c4, %c0_44, %c0_45] : memref<9x8x8xf32, #tpu.memory_space<vmem>>, vector<1x8x8xf32>
    %75 = vector.shape_cast %74 : vector<1x8x8xf32> to vector<8x8xf32>
    %cst_46 = arith.constant dense<0.000000e+00> : vector<384x8xf32>
    %76 = tpu.matmul %73, %75, %cst_46 {dimension_numbers = #tpu.dot_dimension_numbers<[1], [0], [0], [1], [0, 0, 1, 1], [], []>} : vector<384x8xf32>, vector<8x8xf32>, vector<384x8xf32> -> vector<384x8xf32>
    %77 = arith.addf %72, %76 : vector<384x8xf32>
    %c26 = arith.constant 26 : index
    %c0_47 = arith.constant 0 : index
    %78 = vector.load %arg8[%c26, %c0_47] : memref<456x8xf32, #tpu.memory_space<vmem>>, vector<384x8xf32>
    %c5 = arith.constant 5 : index
    %c0_48 = arith.constant 0 : index
    %c0_49 = arith.constant 0 : index
    %79 = vector.load %arg2[%c5, %c0_48, %c0_49] : memref<9x8x8xf32, #tpu.memory_space<vmem>>, vector<1x8x8xf32>
    %80 = vector.shape_cast %79 : vector<1x8x8xf32> to vector<8x8xf32>
    %cst_50 = arith.constant dense<0.000000e+00> : vector<384x8xf32>
    %81 = tpu.matmul %78, %80, %cst_50 {dimension_numbers = #tpu.dot_dimension_numbers<[1], [0], [0], [1], [0, 0, 1, 1], [], []>} : vector<384x8xf32>, vector<8x8xf32>, vector<384x8xf32> -> vector<384x8xf32>
    %82 = arith.addf %77, %81 : vector<384x8xf32>
    %c48 = arith.constant 48 : index
    %c0_51 = arith.constant 0 : index
    %83 = vector.load %arg8[%c48, %c0_51] : memref<456x8xf32, #tpu.memory_space<vmem>>, vector<384x8xf32>
    %c6 = arith.constant 6 : index
    %c0_52 = arith.constant 0 : index
    %c0_53 = arith.constant 0 : index
    %84 = vector.load %arg2[%c6, %c0_52, %c0_53] : memref<9x8x8xf32, #tpu.memory_space<vmem>>, vector<1x8x8xf32>
    %85 = vector.shape_cast %84 : vector<1x8x8xf32> to vector<8x8xf32>
    %cst_54 = arith.constant dense<0.000000e+00> : vector<384x8xf32>
    %86 = tpu.matmul %83, %85, %cst_54 {dimension_numbers = #tpu.dot_dimension_numbers<[1], [0], [0], [1], [0, 0, 1, 1], [], []>} : vector<384x8xf32>, vector<8x8xf32>, vector<384x8xf32> -> vector<384x8xf32>
    %87 = arith.addf %82, %86 : vector<384x8xf32>
    %c49_55 = arith.constant 49 : index
    %c0_56 = arith.constant 0 : index
    %88 = vector.load %arg8[%c49_55, %c0_56] : memref<456x8xf32, #tpu.memory_space<vmem>>, vector<384x8xf32>
    %c7 = arith.constant 7 : index
    %c0_57 = arith.constant 0 : index
    %c0_58 = arith.constant 0 : index
    %89 = vector.load %arg2[%c7, %c0_57, %c0_58] : memref<9x8x8xf32, #tpu.memory_space<vmem>>, vector<1x8x8xf32>
    %90 = vector.shape_cast %89 : vector<1x8x8xf32> to vector<8x8xf32>
    %cst_59 = arith.constant dense<0.000000e+00> : vector<384x8xf32>
    %91 = tpu.matmul %88, %90, %cst_59 {dimension_numbers = #tpu.dot_dimension_numbers<[1], [0], [0], [1], [0, 0, 1, 1], [], []>} : vector<384x8xf32>, vector<8x8xf32>, vector<384x8xf32> -> vector<384x8xf32>
    %92 = arith.addf %87, %91 : vector<384x8xf32>
    %c50 = arith.constant 50 : index
    %c0_60 = arith.constant 0 : index
    %93 = vector.load %arg8[%c50, %c0_60] : memref<456x8xf32, #tpu.memory_space<vmem>>, vector<384x8xf32>
    %c8 = arith.constant 8 : index
    %c0_61 = arith.constant 0 : index
    %c0_62 = arith.constant 0 : index
    %94 = vector.load %arg2[%c8, %c0_61, %c0_62] : memref<9x8x8xf32, #tpu.memory_space<vmem>>, vector<1x8x8xf32>
    %95 = vector.shape_cast %94 : vector<1x8x8xf32> to vector<8x8xf32>
    %cst_63 = arith.constant dense<0.000000e+00> : vector<384x8xf32>
    %96 = tpu.matmul %93, %95, %cst_63 {dimension_numbers = #tpu.dot_dimension_numbers<[1], [0], [0], [1], [0, 0, 1, 1], [], []>} : vector<384x8xf32>, vector<8x8xf32>, vector<384x8xf32> -> vector<384x8xf32>
    %97 = arith.addf %92, %96 : vector<384x8xf32>
    %c0_64 = arith.constant 0 : index
    %c0_65 = arith.constant 0 : index
    %98 = vector.load %arg3[%c0_64, %c0_65] : memref<1x8xf32, #tpu.memory_space<vmem>>, vector<1x8xf32>
    %99 = vector.broadcast %98 : vector<1x8xf32> to vector<384x8xf32>
    %100 = arith.addf %97, %99 : vector<384x8xf32>
    %101 = vector.shape_cast %100 : vector<384x8xf32> to vector<16x24x8xf32>
    %102 = vector.extract_strided_slice %101 {offsets = [0, 0, 0], sizes = [16, 16, 8], strides = [1, 1, 1]} : vector<16x24x8xf32> to vector<16x16x8xf32>
    %c0_66 = arith.constant 0 : index
    %c0_67 = arith.constant 0 : index
    %c0_68 = arith.constant 0 : index
    %c0_69 = arith.constant 0 : index
    %103 = vector.load %arg4[%c0_66, %c0_67, %c0_68, %c0_69] : memref<1x16x16x4xf32, #tpu.memory_space<vmem>>, vector<1x16x16x4xf32>
    %104 = vector.shape_cast %103 : vector<1x16x16x4xf32> to vector<16x16x4xf32>
    %105 = vector.shape_cast %104 : vector<16x16x4xf32> to vector<256x4xf32>
    %c0_70 = arith.constant 0 : index
    %c0_71 = arith.constant 0 : index
    %106 = vector.load %arg5[%c0_70, %c0_71] : memref<4x8xf32, #tpu.memory_space<vmem>>, vector<4x8xf32>
    %cst_72 = arith.constant dense<0.000000e+00> : vector<256x8xf32>
    %107 = tpu.matmul %105, %106, %cst_72 {dimension_numbers = #tpu.dot_dimension_numbers<[1], [0], [0], [1], [0, 0, 1, 1], [], []>} : vector<256x4xf32>, vector<4x8xf32>, vector<256x8xf32> -> vector<256x8xf32>
    %c0_73 = arith.constant 0 : index
    %c0_74 = arith.constant 0 : index
    %108 = vector.load %arg6[%c0_73, %c0_74] : memref<1x8xf32, #tpu.memory_space<vmem>>, vector<1x8xf32>
    %109 = vector.broadcast %108 : vector<1x8xf32> to vector<256x8xf32>
    %110 = arith.addf %107, %109 : vector<256x8xf32>
    %111 = vector.shape_cast %110 : vector<256x8xf32> to vector<16x16x8xf32>
    %112 = arith.addf %102, %111 : vector<16x16x8xf32>
    %113 = vector.shape_cast %112 : vector<16x16x8xf32> to vector<1x16x16x8xf32>
    %c0_75 = arith.constant 0 : index
    %c0_76 = arith.constant 0 : index
    %c0_77 = arith.constant 0 : index
    %c0_78 = arith.constant 0 : index
    %114 = vector.load %arg7[%c0_75, %c0_76, %c0_77, %c0_78] : memref<1x16x16x8xf32, #tpu.memory_space<vmem>>, vector<1x16x16x8xf32>
    tpu.vector_store %arg7[%c0_75, %c0_76, %c0_77, %c0_78], %113 {strides = array<i32>} : memref<1x16x16x8xf32, #tpu.memory_space<vmem>>, vector<1x16x16x8xf32>,
    return
  }
  func.func @transform_0(%arg0: i32) -> (i32, i32, i32, i32) {
    %c0_i32 = arith.constant 0 : i32
    %c0_i32_0 = arith.constant 0 : i32
    %c0_i32_1 = arith.constant 0 : i32
    %c0_i32_2 = arith.constant 0 : i32
    return %arg0, %c0_i32, %c0_i32_0, %c0_i32_1 : i32, i32, i32, i32
  }
  func.func @transform_1(%arg0: i32) -> (i32, i32, i32) {
    %c0_i32 = arith.constant 0 : i32
    %c0_i32_0 = arith.constant 0 : i32
    %c0_i32_1 = arith.constant 0 : i32
    %c0_i32_2 = arith.constant 0 : i32
    return %c0_i32, %c0_i32_0, %c0_i32_1 : i32, i32, i32
  }
  func.func @transform_2(%arg0: i32) -> (i32, i32) {
    %c0_i32 = arith.constant 0 : i32
    %c0_i32_0 = arith.constant 0 : i32
    %c0_i32_1 = arith.constant 0 : i32
    return %c0_i32, %c0_i32_0 : i32, i32
  }
  func.func @transform_3(%arg0: i32) -> (i32, i32, i32, i32) {
    %c0_i32 = arith.constant 0 : i32
    %c0_i32_0 = arith.constant 0 : i32
    %c0_i32_1 = arith.constant 0 : i32
    %c0_i32_2 = arith.constant 0 : i32
    return %arg0, %c0_i32, %c0_i32_0, %c0_i32_1 : i32, i32, i32, i32
  }
  func.func @transform_4(%arg0: i32) -> (i32, i32) {
    %c0_i32 = arith.constant 0 : i32
    %c0_i32_0 = arith.constant 0 : i32
    %c0_i32_1 = arith.constant 0 : i32
    return %c0_i32, %c0_i32_0 : i32, i32
  }
  func.func @transform_5(%arg0: i32) -> (i32, i32) {
    %c0_i32 = arith.constant 0 : i32
    %c0_i32_0 = arith.constant 0 : i32
    %c0_i32_1 = arith.constant 0 : i32
    return %c0_i32, %c0_i32_0 : i32, i32
  }
  func.func @transform_6(%arg0: i32) -> (i32, i32, i32, i32) {
    %c0_i32 = arith.constant 0 : i32
    %c0_i32_0 = arith.constant 0 : i32
    %c0_i32_1 = arith.constant 0 : i32
    %c0_i32_2 = arith.constant 0 : i32
    return %arg0, %c0_i32, %c0_i32_0, %c0_i32_1 : i32, i32, i32, i32
  }
}

</mosaic_0001>

<llo_original>
// kernel: wide_basic_forward.2
$region0: #{wide_basic_forward.2}
  #allocation0 [shape = 'u32[]', space=smem, size = 0x4, offset = 0x4, fixed_abs, tag = 'smem constant byte address 0x4 - core index']
  #allocation1 [shape = 'u32[72,128]{1,0:T(1,128)}', space=vmem, size = 0x9000, scoped, tag = 'internal scratch']
  #allocation2 [shape = 'f32[456,4]{1,0:T(8,128)}', space=vmem, size = 0x39000, scoped, tag = 'scratch operand']
  %s0 = inlined_call_operand.vmem [shape: f32[2,16,16,4], index: 0, kind: input, shape index: {}]
  %s1 = inlined_call_operand.vmem [shape: f32[1,4], index: 1, kind: input, shape index: {}]
  %s2 = inlined_call_operand.vmem [shape: f32[1,4], index: 2, kind: input, shape index: {}]
  %s3 = inlined_call_operand.vmem [shape: f32[9,4,8], index: 3, kind: input, shape index: {}]
  %s4 = inlined_call_operand.vmem [shape: f32[1,8], index: 4, kind: input, shape index: {}]
  %s5 = inlined_call_operand.vmem [shape: f32[1,8], index: 5, kind: input, shape index: {}]
  %s6 = inlined_call_operand.vmem [shape: f32[1,8], index: 6, kind: input, shape index: {}]
  %s7 = inlined_call_operand.vmem [shape: f32[2,16,16,8], index: 7, kind: output, shape index: {}]
  %s8 = sld [smem:[#allocation0]]
  $region61: #{wide_basic_forward.2} parent=0
    _
  %s10 = ssub.s32 1, %s8
  %s11 = scalar_select 0, %s10, %s8
  loop: start=0, step=1, limit=4
  $region2: #{wide_basic_forward.2} parent=0 // loop_pre_header
    _
  $region3: #{wide_basic_forward.2} parent=0 // loop_header
    %s13 = sphi 0, %s17
    %p14 = scmp.ge.s32.totalorder %s13, 4
    %s23 = sphi 0, %s25
    %s26 = sphi 0, %s23
    %s27 = sphi 0, %s26
    %s43 = sphi 0, %s27
    %s47 = sphi 0, %s47
    %s49 = sphi 0, %s47
    %s50 = sphi 0, %s49
    %s64 = sphi 0, %s50
    %s68 = sphi 0, %s68
    %s70 = sphi 0, %s68
    %s71 = sphi 0, %s70
    %s85 = sphi 0, %s71
    %s89 = sphi 0, %s89
    %s91 = sphi 0, %s89
    %s92 = sphi 0, %s91
    %s106 = sphi 0, %s92
    %s110 = sphi 0, %s110
    %s112 = sphi 0, %s110
    %s113 = sphi 0, %s112
    %s127 = sphi 0, %s113
    %s131 = sphi 0, %s131
    %s133 = sphi 0, %s131
    %s134 = sphi 0, %s133
    %s148 = sphi 0, %s134
    %s152 = sphi 0, %s152
    %s154 = sphi 0, %s152
    %s155 = sphi 0, %s154
    %s169 = sphi 0, %s155
    %s175 = sphi 0, %s177
    %s178 = sphi 0, %s175
    %s179 = sphi 0, %s178
    %s195 = sphi 0, %s179
  $region4: #{wide_basic_forward.2} parent=0 // loop_header_branch
    %16 = sbr.rel (%p14) target = $region8
  $region5: #{wide_basic_forward.2} parent=0 // loop_body
    %s18 = ssub.s32 %s13, 1
    %s19 = ssub.s32 %s13, 2
    %s20 = sadd.s32 %s13, 1
    %s21 = ssub.s32 %s13, %s20
    %p22 = scmp.eq.s32.totalorder %s21, 0
    %s24 = sadd.s32 %s23, 1
    %s25 = scalar_select %p22, %s23, %s24
    %p28 = pneg %p22
    %p29 = scmp.eq.s32.totalorder %s13, 1
    %p30 = por %p28, %p29
    %p31 = scmp.ne.s32.totalorder %s23, %s26
    %p32 = scmp.eq.s32.totalorder %s13, 0
    %p33 = por %p31, %p32
    %p34 = scmp.ne.s32.totalorder %s23, %s26
    %p35 = scmp.eq.s32.totalorder %s18, 1
    %p36 = por %p34, %p35
    %p37 = scmp.ne.s32.totalorder %s26, %s27
    %p38 = scmp.eq.s32.totalorder %s18, 0
    %p39 = por %p37, %p38
    %p40 = scmp.ne.s32.totalorder %s26, %s27
    %p41 = scmp.eq.s32.totalorder %s19, 1
    %p42 = por %p40, %p41
    %p44 = scmp.ne.s32.totalorder %s27, %s43
    %p45 = scmp.eq.s32.totalorder %s19, 0
    %p46 = por %p44, %p45
    %s48 = sadd.s32 %s47, 1
    %p51 = scmp.eq.s32.totalorder %s13, 1
    %p52 = scmp.ne.s32.totalorder %s47, %s49
    %p53 = scmp.eq.s32.totalorder %s13, 0
    %p54 = por %p52, %p53
    %p55 = scmp.ne.s32.totalorder %s47, %s49
    %p56 = scmp.eq.s32.totalorder %s18, 1
    %p57 = por %p55, %p56
    %p58 = scmp.ne.s32.totalorder %s49, %s50
    %p59 = scmp.eq.s32.totalorder %s18, 0
    %p60 = por %p58, %p59
    %p61 = scmp.ne.s32.totalorder %s49, %s50
    %p62 = scmp.eq.s32.totalorder %s19, 1
    %p63 = por %p61, %p62
    %p65 = scmp.ne.s32.totalorder %s50, %s64
    %p66 = scmp.eq.s32.totalorder %s19, 0
    %p67 = por %p65, %p66
    %s69 = sadd.s32 %s68, 1
    %p72 = scmp.eq.s32.totalorder %s13, 1
    %p73 = scmp.ne.s32.totalorder %s68, %s70
    %p74 = scmp.eq.s32.totalorder %s13, 0
    %p75 = por %p73, %p74
    %p76 = scmp.ne.s32.totalorder %s68, %s70
    %p77 = scmp.eq.s32.totalorder %s18, 1
    %p78 = por %p76, %p77
    %p79 = scmp.ne.s32.totalorder %s70, %s71
    %p80 = scmp.eq.s32.totalorder %s18, 0
    %p81 = por %p79, %p80
    %p82 = scmp.ne.s32.totalorder %s70, %s71
    %p83 = scmp.eq.s32.totalorder %s19, 1
    %p84 = por %p82, %p83
    %p86 = scmp.ne.s32.totalorder %s71, %s85
    %p87 = scmp.eq.s32.totalorder %s19, 0
    %p88 = por %p86, %p87
    %s90 = sadd.s32 %s89, 1
    %p93 = scmp.eq.s32.totalorder %s13, 1
    %p94 = scmp.ne.s32.totalorder %s89, %s91
    %p95 = scmp.eq.s32.totalorder %s13, 0
    %p96 = por %p94, %p95
    %p97 = scmp.ne.s32.totalorder %s89, %s91
    %p98 = scmp.eq.s32.totalorder %s18, 1
    %p99 = por %p97, %p98
    %p100 = scmp.ne.s32.totalorder %s91, %s92
    %p101 = scmp.eq.s32.totalorder %s18, 0
    %p102 = por %p100, %p101
    %p103 = scmp.ne.s32.totalorder %s91, %s92
    %p104 = scmp.eq.s32.totalorder %s19, 1
    %p105 = por %p103, %p104
    %p107 = scmp.ne.s32.totalorder %s92, %s106
    %p108 = scmp.eq.s32.totalorder %s19, 0
    %p109 = por %p107, %p108
    %s111 = sadd.s32 %s110, 1
    %p114 = scmp.eq.s32.totalorder %s13, 1
    %p115 = scmp.ne.s32.totalorder %s110, %s112
    %p116 = scmp.eq.s32.totalorder %s13, 0
    %p117 = por %p115, %p116
    %p118 = scmp.ne.s32.totalorder %s110, %s112
    %p119 = scmp.eq.s32.totalorder %s18, 1
    %p120 = por %p118, %p119
    %p121 = scmp.ne.s32.totalorder %s112, %s113
    %p122 = scmp.eq.s32.totalorder %s18, 0
    %p123 = por %p121, %p122
    %p124 = scmp.ne.s32.totalorder %s112, %s113
    %p125 = scmp.eq.s32.totalorder %s19, 1
    %p126 = por %p124, %p125
    %p128 = scmp.ne.s32.totalorder %s113, %s127
    %p129 = scmp.eq.s32.totalorder %s19, 0
    %p130 = por %p128, %p129
    %s132 = sadd.s32 %s131, 1
    %p135 = scmp.eq.s32.totalorder %s13, 1
    %p136 = scmp.ne.s32.totalorder %s131, %s133
    %p137 = scmp.eq.s32.totalorder %s13, 0
    %p138 = por %p136, %p137
    %p139 = scmp.ne.s32.totalorder %s131, %s133
    %p140 = scmp.eq.s32.totalorder %s18, 1
    %p141 = por %p139, %p140
    %p142 = scmp.ne.s32.totalorder %s133, %s134
    %p143 = scmp.eq.s32.totalorder %s18, 0
    %p144 = por %p142, %p143
    %p145 = scmp.ne.s32.totalorder %s133, %s134
    %p146 = scmp.eq.s32.totalorder %s19, 1
    %p147 = por %p145, %p146
    %p149 = scmp.ne.s32.totalorder %s134, %s148
    %p150 = scmp.eq.s32.totalorder %s19, 0
    %p151 = por %p149, %p150
    %s153 = sadd.s32 %s152, 1
    %p156 = scmp.eq.s32.totalorder %s13, 1
    %p157 = scmp.ne.s32.totalorder %s152, %s154
    %p158 = scmp.eq.s32.totalorder %s13, 0
    %p159 = por %p157, %p158
    %p160 = scmp.ne.s32.totalorder %s152, %s154
    %p161 = scmp.eq.s32.totalorder %s18, 1
    %p162 = por %p160, %p161
    %p163 = scmp.ne.s32.totalorder %s154, %s155
    %p164 = scmp.eq.s32.totalorder %s18, 0
    %p165 = por %p163, %p164
    %p166 = scmp.ne.s32.totalorder %s154, %s155
    %p167 = scmp.eq.s32.totalorder %s19, 1
    %p168 = por %p166, %p167
    %p170 = scmp.ne.s32.totalorder %s155, %s169
    %p171 = scmp.eq.s32.totalorder %s19, 0
    %p172 = por %p170, %p171
    %s173 = ssub.s32 %s13, %s20
    %p174 = scmp.eq.s32.totalorder %s173, 0
    %s176 = sadd.s32 %s175, 1
    %s177 = scalar_select %p174, %s175, %s176
    %p180 = pneg %p174
    %p181 = scmp.eq.s32.totalorder %s13, 1
    %p182 = por %p180, %p181
    %p183 = scmp.ne.s32.totalorder %s175, %s178
    %p184 = scmp.eq.s32.totalorder %s13, 0
    %p185 = por %p183, %p184
    %p186 = scmp.ne.s32.totalorder %s175, %s178
    %p187 = scmp.eq.s32.totalorder %s18, 1
    %p188 = por %p186, %p187
    %p189 = scmp.ne.s32.totalorder %s178, %s179
    %p190 = scmp.eq.s32.totalorder %s18, 0
    %p191 = por %p189, %p190
    %p192 = scmp.ne.s32.totalorder %s178, %s179
    %p193 = scmp.eq.s32.totalorder %s19, 1
    %p194 = por %p192, %p193
    %p196 = scmp.ne.s32.totalorder %s179, %s195
    %p197 = scmp.eq.s32.totalorder %s19, 0
    %p198 = por %p196, %p197
    %p199 = scmp.le.s32.totalorder 1, %s13
    %p200 = scmp.lt.s32.totalorder %s13, 3
    %p201 = pnand %p199, %p200
    %p202 = pneg %p201
    // Predicated region
    $region9: #{wide_basic_forward.2} parent=5 // pred_check
      _
    $region10: #{wide_basic_forward.2} parent=5 // pred_check_branch
      %204 = sbr.rel (%p201) target = $region12
    $region11: #{wide_basic_forward.2} parent=5 // pred_region
      %s205 = ssub.s32 %s13, 1
      // Predicated region
      $region13: #{wide_basic_forward.2} parent=11 // pred_check
        %p206 = pneg %p60
      $region14: #{wide_basic_forward.2} parent=11 // pred_check_branch
        %208 = sbr.rel (%p206) target = $region16
      $region15: #{wide_basic_forward.2} parent=11 // pred_region
        _
      $region16: #{wide_basic_forward.2} parent=11 // pred_fallthru
        _
      // Predicated region
      $region17: #{wide_basic_forward.2} parent=11 // pred_check
        %p209 = pneg %p81
      $region18: #{wide_basic_forward.2} parent=11 // pred_check_branch
        %211 = sbr.rel (%p209) target = $region20
      $region19: #{wide_basic_forward.2} parent=11 // pred_region
        _
      $region20: #{wide_basic_forward.2} parent=11 // pred_fallthru
        _
      // Predicated region
      $region21: #{wide_basic_forward.2} parent=11 // pred_check
        %p212 = pneg %p102
      $region22: #{wide_basic_forward.2} parent=11 // pred_check_branch
        %214 = sbr.rel (%p212) target = $region24
      $region23: #{wide_basic_forward.2} parent=11 // pred_region
        _
      $region24: #{wide_basic_forward.2} parent=11 // pred_fallthru
        _
      // Predicated region
      $region25: #{wide_basic_forward.2} parent=11 // pred_check
        %p215 = pneg %p123
      $region26: #{wide_basic_forward.2} parent=11 // pred_check_branch
        %217 = sbr.rel (%p215) target = $region28
      $region27: #{wide_basic_forward.2} parent=11 // pred_region
        _
      $region28: #{wide_basic_forward.2} parent=11 // pred_fallthru
        _
      // Predicated region
      $region29: #{wide_basic_forward.2} parent=11 // pred_check
        %p218 = pneg %p144
      $region30: #{wide_basic_forward.2} parent=11 // pred_check_branch
        %220 = sbr.rel (%p218) target = $region32
      $region31: #{wide_basic_forward.2} parent=11 // pred_region
        _
      $region32: #{wide_basic_forward.2} parent=11 // pred_fallthru
        _
      // Predicated region
      $region33: #{wide_basic_forward.2} parent=11 // pred_check
        %p221 = pneg %p165
      $region34: #{wide_basic_forward.2} parent=11 // pred_check_branch
        %223 = sbr.rel (%p221) target = $region36
      $region35: #{wide_basic_forward.2} parent=11 // pred_region
        _
      $region36: #{wide_basic_forward.2} parent=11 // pred_fallthru
        _
    $region12: #{wide_basic_forward.2} parent=5 // pred_fallthru
      _
    %p224 = scmp.lt.s32.totalorder %s13, 2
    // Predicated region
    $region37: #{wide_basic_forward.2} parent=5 // pred_check
      %p225 = pneg %p224
    $region38: #{wide_basic_forward.2} parent=5 // pred_check_branch
      %227 = sbr.rel (%p225) target = $region40
    $region39: #{wide_basic_forward.2} parent=5 // pred_region
      // Predicated region
      $region41: #{wide_basic_forward.2} parent=39 // pred_check
        %p228 = pneg %p33
      $region42: #{wide_basic_forward.2} parent=39 // pred_check_branch
        %230 = sbr.rel (%p228) target = $region44
      $region43: #{wide_basic_forward.2} parent=39 // pred_region
        %p231 = scmp.lt.s32.totalorder %s13, 1
        %s232 = scalar_select %p231, %s13, 1
        %s233 = smul.addr %s232, 32
        %s234 = smul.addr %s233, 8
        %s235 = scalar_lea.vmem %s0, %s234
      $region44: #{wide_basic_forward.2} parent=39 // pred_fallthru
        _
    $region40: #{wide_basic_forward.2} parent=5 // pred_fallthru
      _
    %p236 = scmp.le.s32.totalorder 1, %s13
    %p237 = scmp.lt.s32.totalorder %s13, 3
    %p238 = pnand %p236, %p237
    %p239 = pneg %p238
    // Predicated region
    $region45: #{wide_basic_forward.2} parent=5 // pred_check
      _
    $region46: #{wide_basic_forward.2} parent=5 // pred_check_branch
      %241 = sbr.rel (%p238) target = $region48
    $region47: #{wide_basic_forward.2} parent=5 // pred_region
      %s242 = ssub.s32 %s13, 1
      %p243 = scmp.lt.s32.totalorder %s18, 1
      %s244 = scalar_select %p243, %s18, 1
      %s245 = smul.addr %s244, 32
      %s246 = smul.addr %s245, 8
      %s247 = scalar_lea.vmem %s0, %s246
      %p248 = pneg %p39
      %p249 = pneg %p36
      %p250 = pneg %p60
      %p251 = pneg %p57
      %p252 = pneg %p81
      %p253 = pneg %p78
      %p254 = pneg %p102
      %p255 = pneg %p99
      %p256 = pneg %p123
      %p257 = pneg %p120
      %p258 = pneg %p144
      %p259 = pneg %p141
      %p260 = pneg %p165
      %p261 = pneg %p162
      %p262 = pneg %p191
      %p263 = pneg %p188
      %p264 = scmp.lt.s32.totalorder %s18, 1
      %s265 = scalar_select %p264, %s18, 1
      %s266 = smul.addr %s265, 32
      %s267 = smul.addr %s266, 8
      %s268 = scalar_lea.vmem %s7, %s267
      %p269 = scmp.lt.s32.totalorder %s18, 1
      %s270 = scalar_select %p269, %s18, 1
      %s271 = smul.addr %s270, 32
      %s272 = smul.addr %s271, 8
      %s273 = scalar_lea.vmem %s0, %s272
      %p274 = scmp.lt.s32.totalorder %s18, 1
      %s275 = scalar_select %p274, %s18, 1
      %s276 = smul.addr %s275, 32
      %s277 = smul.addr %s276, 8
      %s278 = scalar_lea.vmem %s7, %s277
      %v279 = vld [vmem:[%s273] sm:$0xff]
      %v280 = vld [vmem:[%s273 + $0x8] sm:$0xff]
      %v281 = vld [vmem:[%s273 + $0x10] sm:$0xff]
      %v282 = vld [vmem:[%s273 + $0x18] sm:$0xff]
      %v283 = vld [vmem:[%s273 + $0x20] sm:$0xff]
      %v284 = vld [vmem:[%s273 + $0x28] sm:$0xff]
      %v285 = vld [vmem:[%s273 + $0x30] sm:$0xff]
      %v286 = vld [vmem:[%s273 + $0x38] sm:$0xff]
      %v287 = vld [vmem:[%s273 + $0x40] sm:$0xff]
      %v288 = vld [vmem:[%s273 + $0x48] sm:$0xff]
      %v289 = vld [vmem:[%s273 + $0x50] sm:$0xff]
      %v290 = vld [vmem:[%s273 + $0x58] sm:$0xff]
      %v291 = vld [vmem:[%s273 + $0x60] sm:$0xff]
      %v292 = vld [vmem:[%s273 + $0x68] sm:$0xff]
      %v293 = vld [vmem:[%s273 + $0x70] sm:$0xff]
      %v294 = vld [vmem:[%s273 + $0x78] sm:$0xff]
      %v295 = vld [vmem:[%s273 + $0x80] sm:$0xff]
      %v296 = vld [vmem:[%s273 + $0x88] sm:$0xff]
      %v297 = vld [vmem:[%s273 + $0x90] sm:$0xff]
      %v298 = vld [vmem:[%s273 + $0x98] sm:$0xff]
      %v299 = vld [vmem:[%s273 + $0xa0] sm:$0xff]
      %v300 = vld [vmem:[%s273 + $0xa8] sm:$0xff]
      %v301 = vld [vmem:[%s273 + $0xb0] sm:$0xff]
      %v302 = vld [vmem:[%s273 + $0xb8] sm:$0xff]
      %v303 = vld [vmem:[%s273 + $0xc0] sm:$0xff]
      %v304 = vld [vmem:[%s273 + $0xc8] sm:$0xff]
      %v305 = vld [vmem:[%s273 + $0xd0] sm:$0xff]
      %v306 = vld [vmem:[%s273 + $0xd8] sm:$0xff]
      %v307 = vld [vmem:[%s273 + $0xe0] sm:$0xff]
      %v308 = vld [vmem:[%s273 + $0xe8] sm:$0xff]
      %v309 = vld [vmem:[%s273 + $0xf0] sm:$0xff]
      %v310 = vld [vmem:[%s273 + $0xf8] sm:$0xff]
      %v311 = vld [vmem:[%s1] sm:$0x1]
      %v313 = vperm.slane %v311, 0
      %v315 = vmul.f32 %v279, %v313
      %v316 = vmul.f32 %v280, %v313
      %v317 = vmul.f32 %v281, %v313
      %v318 = vmul.f32 %v282, %v313
      %v319 = vmul.f32 %v283, %v313
      %v320 = vmul.f32 %v284, %v313
      %v321 = vmul.f32 %v285, %v313
      %v322 = vmul.f32 %v286, %v313
      %v323 = vmul.f32 %v287, %v313
      %v324 = vmul.f32 %v288, %v313
      %v325 = vmul.f32 %v289, %v313
      %v326 = vmul.f32 %v290, %v313
      %v327 = vmul.f32 %v291, %v313
      %v328 = vmul.f32 %v292, %v313
      %v329 = vmul.f32 %v293, %v313
      %v330 = vmul.f32 %v294, %v313
      %v331 = vmul.f32 %v295, %v313
      %v332 = vmul.f32 %v296, %v313
      %v333 = vmul.f32 %v297, %v313
      %v334 = vmul.f32 %v298, %v313
      %v335 = vmul.f32 %v299, %v313
      %v336 = vmul.f32 %v300, %v313
      %v337 = vmul.f32 %v301, %v313
      %v338 = vmul.f32 %v302, %v313
      %v339 = vmul.f32 %v303, %v313
      %v340 = vmul.f32 %v304, %v313
      %v341 = vmul.f32 %v305, %v313
      %v342 = vmul.f32 %v306, %v313
      %v343 = vmul.f32 %v307, %v313
      %v344 = vmul.f32 %v308, %v313
      %v345 = vmul.f32 %v309, %v313
      %v346 = vmul.f32 %v310, %v313
      %v347 = vld [vmem:[%s2] sm:$0x1]
      %v349 = vperm.slane %v347, 0
      %v351 = vadd.f32 %v315, %v349
      %v352 = vadd.f32 %v316, %v349
      %v353 = vadd.f32 %v317, %v349
      %v354 = vadd.f32 %v318, %v349
      %v355 = vadd.f32 %v319, %v349
      %v356 = vadd.f32 %v320, %v349
      %v357 = vadd.f32 %v321, %v349
      %v358 = vadd.f32 %v322, %v349
      %v359 = vadd.f32 %v323, %v349
      %v360 = vadd.f32 %v324, %v349
      %v361 = vadd.f32 %v325, %v349
      %v362 = vadd.f32 %v326, %v349
      %v363 = vadd.f32 %v327, %v349
      %v364 = vadd.f32 %v328, %v349
      %v365 = vadd.f32 %v329, %v349
      %v366 = vadd.f32 %v330, %v349
      %v367 = vadd.f32 %v331, %v349
      %v368 = vadd.f32 %v332, %v349
      %v369 = vadd.f32 %v333, %v349
      %v370 = vadd.f32 %v334, %v349
      %v371 = vadd.f32 %v335, %v349
      %v372 = vadd.f32 %v336, %v349
      %v373 = vadd.f32 %v337, %v349
      %v374 = vadd.f32 %v338, %v349
      %v375 = vadd.f32 %v339, %v349
      %v376 = vadd.f32 %v340, %v349
      %v377 = vadd.f32 %v341, %v349
      %v378 = vadd.f32 %v342, %v349
      %v379 = vadd.f32 %v343, %v349
      %v380 = vadd.f32 %v344, %v349
      %v381 = vadd.f32 %v345, %v349
      %v382 = vadd.f32 %v346, %v349
      %v383 = vmax.f32 %v351, 0.0
      %v384 = vmax.f32 %v352, 0.0
      %v385 = vmax.f32 %v353, 0.0
      %v386 = vmax.f32 %v354, 0.0
      %v387 = vmax.f32 %v355, 0.0
      %v388 = vmax.f32 %v356, 0.0
      %v389 = vmax.f32 %v357, 0.0
      %v390 = vmax.f32 %v358, 0.0
      %v391 = vmax.f32 %v359, 0.0
      %v392 = vmax.f32 %v360, 0.0
      %v393 = vmax.f32 %v361, 0.0
      %v394 = vmax.f32 %v362, 0.0
      %v395 = vmax.f32 %v363, 0.0
      %v396 = vmax.f32 %v364, 0.0
      %v397 = vmax.f32 %v365, 0.0
      %v398 = vmax.f32 %v366, 0.0
      %v399 = vmax.f32 %v367, 0.0
      %v400 = vmax.f32 %v368, 0.0
      %v401 = vmax.f32 %v369, 0.0
      %v402 = vmax.f32 %v370, 0.0
      %v403 = vmax.f32 %v371, 0.0
      %v404 = vmax.f32 %v372, 0.0
      %v405 = vmax.f32 %v373, 0.0
      %v406 = vmax.f32 %v374, 0.0
      %v407 = vmax.f32 %v375, 0.0
      %v408 = vmax.f32 %v376, 0.0
      %v409 = vmax.f32 %v377, 0.0
      %v410 = vmax.f32 %v378, 0.0
      %v411 = vmax.f32 %v379, 0.0
      %v412 = vmax.f32 %v380, 0.0
      %v413 = vmax.f32 %v381, 0.0
      %v414 = vmax.f32 %v382, 0.0
      %vm415 = vcmask 31744
      %416 = vst.msk [vmem:[#allocation2] sm:$0xff] %vm415, 0.0
      %417 = vst.msk [vmem:[#allocation2 + $0x8] sm:$0xff] %vm415, 0.0
      %418 = vst.msk [vmem:[#allocation2 + $0x10] sm:$0xff] %vm415, 0.0
      %419 = vst.msk [vmem:[#allocation2 + $0x18] sm:$0xff] %vm415, 0.0
      %420 = vst.msk [vmem:[#allocation2 + $0x20] sm:$0xff] %vm415, 0.0
      %421 = vst.msk [vmem:[#allocation2 + $0x28] sm:$0xff] %vm415, 0.0
      %422 = vst.msk [vmem:[#allocation2 + $0x30] sm:$0xff] %vm415, 0.0
      %423 = vst.msk [vmem:[#allocation2 + $0x38] sm:$0xff] %vm415, 0.0
      %424 = vst.msk [vmem:[#allocation2 + $0x40] sm:$0xff] %vm415, 0.0
      %425 = vst.msk [vmem:[#allocation2 + $0x48] sm:$0xff] %vm415, 0.0
      %426 = vst.msk [vmem:[#allocation2 + $0x50] sm:$0xff] %vm415, 0.0
      %427 = vst.msk [vmem:[#allocation2 + $0x58] sm:$0xff] %vm415, 0.0
      %428 = vst.msk [vmem:[#allocation2 + $0x60] sm:$0xff] %vm415, 0.0
      %429 = vst.msk [vmem:[#allocation2 + $0x68] sm:$0xff] %vm415, 0.0
      %430 = vst.msk [vmem:[#allocation2 + $0x70] sm:$0xff] %vm415, 0.0
      %431 = vst.msk [vmem:[#allocation2 + $0x78] sm:$0xff] %vm415, 0.0
      %432 = vst.msk [vmem:[#allocation2 + $0x80] sm:$0xff] %vm415, 0.0
      %433 = vst.msk [vmem:[#allocation2 + $0x88] sm:$0xff] %vm415, 0.0
      %434 = vst.msk [vmem:[#allocation2 + $0x90] sm:$0xff] %vm415, 0.0
      %435 = vst.msk [vmem:[#allocation2 + $0x98] sm:$0xff] %vm415, 0.0
      %436 = vst.msk [vmem:[#allocation2 + $0xa0] sm:$0xff] %vm415, 0.0
      %437 = vst.msk [vmem:[#allocation2 + $0xa8] sm:$0xff] %vm415, 0.0
      %438 = vst.msk [vmem:[#allocation2 + $0xb0] sm:$0xff] %vm415, 0.0
      %439 = vst.msk [vmem:[#allocation2 + $0xb8] sm:$0xff] %vm415, 0.0
      %440 = vst.msk [vmem:[#allocation2 + $0xc0] sm:$0xff] %vm415, 0.0
      %441 = vst.msk [vmem:[#allocation2 + $0xc8] sm:$0xff] %vm415, 0.0
      %442 = vst.msk [vmem:[#allocation2 + $0xd0] sm:$0xff] %vm415, 0.0
      %443 = vst.msk [vmem:[#allocation2 + $0xd8] sm:$0xff] %vm415, 0.0
      %444 = vst.msk [vmem:[#allocation2 + $0xe0] sm:$0xff] %vm415, 0.0
      %445 = vst.msk [vmem:[#allocation2 + $0xe8] sm:$0xff] %vm415, 0.0
      %446 = vst.msk [vmem:[#allocation2 + $0xf0] sm:$0xff] %vm415, 0.0
      %447 = vst.msk [vmem:[#allocation2 + $0xf8] sm:$0xff] %vm415, 0.0
      %448 = vst.msk [vmem:[#allocation2 + $0x100] sm:$0xff] %vm415, 0.0
      %449 = vst.msk [vmem:[#allocation2 + $0x108] sm:$0xff] %vm415, 0.0
      %450 = vst.msk [vmem:[#allocation2 + $0x110] sm:$0xff] %vm415, 0.0
      %451 = vst.msk [vmem:[#allocation2 + $0x118] sm:$0xff] %vm415, 0.0
      %452 = vst.msk [vmem:[#allocation2 + $0x120] sm:$0xff] %vm415, 0.0
      %453 = vst.msk [vmem:[#allocation2 + $0x128] sm:$0xff] %vm415, 0.0
      %454 = vst.msk [vmem:[#allocation2 + $0x130] sm:$0xff] %vm415, 0.0
      %455 = vst.msk [vmem:[#allocation2 + $0x138] sm:$0xff] %vm415, 0.0
      %456 = vst.msk [vmem:[#allocation2 + $0x140] sm:$0xff] %vm415, 0.0
      %457 = vst.msk [vmem:[#allocation2 + $0x148] sm:$0xff] %vm415, 0.0
      %458 = vst.msk [vmem:[#allocation2 + $0x150] sm:$0xff] %vm415, 0.0
      %459 = vst.msk [vmem:[#allocation2 + $0x158] sm:$0xff] %vm415, 0.0
      %460 = vst.msk [vmem:[#allocation2 + $0x160] sm:$0xff] %vm415, 0.0
      %461 = vst.msk [vmem:[#allocation2 + $0x168] sm:$0xff] %vm415, 0.0
      %462 = vst.msk [vmem:[#allocation2 + $0x170] sm:$0xff] %vm415, 0.0
      %463 = vst.msk [vmem:[#allocation2 + $0x178] sm:$0xff] %vm415, 0.0
      %464 = vst.msk [vmem:[#allocation2 + $0x180] sm:$0xff] %vm415, 0.0
      %465 = vst.msk [vmem:[#allocation2 + $0x188] sm:$0xff] %vm415, 0.0
      %466 = vst.msk [vmem:[#allocation2 + $0x190] sm:$0xff] %vm415, 0.0
      %467 = vst.msk [vmem:[#allocation2 + $0x198] sm:$0xff] %vm415, 0.0
      %468 = vst.msk [vmem:[#allocation2 + $0x1a0] sm:$0xff] %vm415, 0.0
      %469 = vst.msk [vmem:[#allocation2 + $0x1a8] sm:$0xff] %vm415, 0.0
      %470 = vst.msk [vmem:[#allocation2 + $0x1b0] sm:$0xff] %vm415, 0.0
      %471 = vst.msk [vmem:[#allocation2 + $0x1b8] sm:$0xff] %vm415, 0.0
      %472 = vst.msk [vmem:[#allocation2 + $0x1c0] sm:$0xff] %vm415, 0.0
      %473 = vst.msk [vmem:[#allocation2 + $0x19] sm:$0xff] %vm415, %v383
      %474 = vst.msk [vmem:[#allocation2 + $0x21] sm:$0xff] %vm415, %v384
      %475 = vst.msk [vmem:[#allocation2 + $0x31] sm:$0xff] %vm415, %v385
      %476 = vst.msk [vmem:[#allocation2 + $0x39] sm:$0xff] %vm415, %v386
      %477 = vst.msk [vmem:[#allocation2 + $0x49] sm:$0xff] %vm415, %v387
      %478 = vst.msk [vmem:[#allocation2 + $0x51] sm:$0xff] %vm415, %v388
      %479 = vst.msk [vmem:[#allocation2 + $0x61] sm:$0xff] %vm415, %v389
      %480 = vst.msk [vmem:[#allocation2 + $0x69] sm:$0xff] %vm415, %v390
      %481 = vst.msk [vmem:[#allocation2 + $0x79] sm:$0xff] %vm415, %v391
      %482 = vst.msk [vmem:[#allocation2 + $0x81] sm:$0xff] %vm415, %v392
      %483 = vst.msk [vmem:[#allocation2 + $0x91] sm:$0xff] %vm415, %v393
      %484 = vst.msk [vmem:[#allocation2 + $0x99] sm:$0xff] %vm415, %v394
      %485 = vst.msk [vmem:[#allocation2 + $0xa9] sm:$0xff] %vm415, %v395
      %486 = vst.msk [vmem:[#allocation2 + $0xb1] sm:$0xff] %vm415, %v396
      %487 = vst.msk [vmem:[#allocation2 + $0xc1] sm:$0xff] %vm415, %v397
      %488 = vst.msk [vmem:[#allocation2 + $0xc9] sm:$0xff] %vm415, %v398
      %489 = vst.msk [vmem:[#allocation2 + $0xd9] sm:$0xff] %vm415, %v399
      %490 = vst.msk [vmem:[#allocation2 + $0xe1] sm:$0xff] %vm415, %v400
      %491 = vst.msk [vmem:[#allocation2 + $0xf1] sm:$0xff] %vm415, %v401
      %492 = vst.msk [vmem:[#allocation2 + $0xf9] sm:$0xff] %vm415, %v402
      %493 = vst.msk [vmem:[#allocation2 + $0x109] sm:$0xff] %vm415, %v403
      %494 = vst.msk [vmem:[#allocation2 + $0x111] sm:$0xff] %vm415, %v404
      %495 = vst.msk [vmem:[#allocation2 + $0x121] sm:$0xff] %vm415, %v405
      %496 = vst.msk [vmem:[#allocation2 + $0x129] sm:$0xff] %vm415, %v406
      %497 = vst.msk [vmem:[#allocation2 + $0x139] sm:$0xff] %vm415, %v407
      %498 = vst.msk [vmem:[#allocation2 + $0x141] sm:$0xff] %vm415, %v408
      %499 = vst.msk [vmem:[#allocation2 + $0x151] sm:$0xff] %vm415, %v409
      %500 = vst.msk [vmem:[#allocation2 + $0x159] sm:$0xff] %vm415, %v410
      %501 = vst.msk [vmem:[#allocation2 + $0x169] sm:$0xff] %vm415, %v411
      %502 = vst.msk [vmem:[#allocation2 + $0x171] sm:$0xff] %vm415, %v412
      %503 = vst.msk [vmem:[#allocation2 + $0x181] sm:$0xff] %vm415, %v413
      %504 = vst.msk [vmem:[#allocation2 + $0x189] sm:$0xff] %vm415, %v414
      %v505 = vld [vmem:[#allocation2] sm:$0xff]
      %v506 = vld [vmem:[#allocation2 + $0x8] sm:$0xff]
      %v507 = vld [vmem:[#allocation2 + $0x10] sm:$0xff]
      %v508 = vld [vmem:[#allocation2 + $0x18] sm:$0xff]
      %v509 = vld [vmem:[#allocation2 + $0x20] sm:$0xff]
      %v510 = vld [vmem:[#allocation2 + $0x28] sm:$0xff]
      %v511 = vld [vmem:[#allocation2 + $0x30] sm:$0xff]
      %v512 = vld [vmem:[#allocation2 + $0x38] sm:$0xff]
      %v513 = vld [vmem:[#allocation2 + $0x40] sm:$0xff]
      %v514 = vld [vmem:[#allocation2 + $0x48] sm:$0xff]
      %v515 = vld [vmem:[#allocation2 + $0x50] sm:$0xff]
      %v516 = vld [vmem:[#allocation2 + $0x58] sm:$0xff]
      %v517 = vld [vmem:[#allocation2 + $0x60] sm:$0xff]
      %v518 = vld [vmem:[#allocation2 + $0x68] sm:$0xff]
      %v519 = vld [vmem:[#allocation2 + $0x70] sm:$0xff]
      %v520 = vld [vmem:[#allocation2 + $0x78] sm:$0xff]
      %v521 = vld [vmem:[#allocation2 + $0x80] sm:$0xff]
      %v522 = vld [vmem:[#allocation2 + $0x88] sm:$0xff]
      %v523 = vld [vmem:[#allocation2 + $0x90] sm:$0xff]
      %v524 = vld [vmem:[#allocation2 + $0x98] sm:$0xff]
      %v525 = vld [vmem:[#allocation2 + $0xa0] sm:$0xff]
      %v526 = vld [vmem:[#allocation2 + $0xa8] sm:$0xff]
      %v527 = vld [vmem:[#allocation2 + $0xb0] sm:$0xff]
      %v528 = vld [vmem:[#allocation2 + $0xb8] sm:$0xff]
      %v529 = vld [vmem:[#allocation2 + $0xc0] sm:$0xff]
      %v530 = vld [vmem:[#allocation2 + $0xc8] sm:$0xff]
      %v531 = vld [vmem:[#allocation2 + $0xd0] sm:$0xff]
      %v532 = vld [vmem:[#allocation2 + $0xd8] sm:$0xff]
      %v533 = vld [vmem:[#allocation2 + $0xe0] sm:$0xff]
      %v534 = vld [vmem:[#allocation2 + $0xe8] sm:$0xff]
      %v535 = vld [vmem:[#allocation2 + $0xf0] sm:$0xff]
      %v536 = vld [vmem:[#allocation2 + $0xf8] sm:$0xff]
      %v537 = vld [vmem:[#allocation2 + $0x100] sm:$0xff]
      %v538 = vld [vmem:[#allocation2 + $0x108] sm:$0xff]
      %v539 = vld [vmem:[#allocation2 + $0x110] sm:$0xff]
      %v540 = vld [vmem:[#allocation2 + $0x118] sm:$0xff]
      %v541 = vld [vmem:[#allocation2 + $0x120] sm:$0xff]
      %v542 = vld [vmem:[#allocation2 + $0x128] sm:$0xff]
      %v543 = vld [vmem:[#allocation2 + $0x130] sm:$0xff]
      %v544 = vld [vmem:[#allocation2 + $0x138] sm:$0xff]
      %v545 = vld [vmem:[#allocation2 + $0x140] sm:$0xff]
      %v546 = vld [vmem:[#allocation2 + $0x148] sm:$0xff]
      %v547 = vld [vmem:[#allocation2 + $0x150] sm:$0xff]
      %v548 = vld [vmem:[#allocation2 + $0x158] sm:$0xff]
      %v549 = vld [vmem:[#allocation2 + $0x160] sm:$0xff]
      %v550 = vld [vmem:[#allocation2 + $0x168] sm:$0xff]
      %v551 = vld [vmem:[#allocation2 + $0x170] sm:$0xff]
      %v552 = vld [vmem:[#allocation2 + $0x178] sm:$0xff]
      %v553 = vld [vmem:[%s3] sm:$0xf]
      %v554 = vld [vmem:[#allocation2 + $0x1] sm:$0xff]
      %v555 = vld [vmem:[#allocation2 + $0x9] sm:$0xff]
      %v556 = vld [vmem:[#allocation2 + $0x11] sm:$0xff]
      %v557 = vld [vmem:[#allocation2 + $0x19] sm:$0xff]
      %v558 = vld [vmem:[#allocation2 + $0x21] sm:$0xff]
      %v559 = vld [vmem:[#allocation2 + $0x29] sm:$0xff]
      %v560 = vld [vmem:[#allocation2 + $0x31] sm:$0xff]
      %v561 = vld [vmem:[#allocation2 + $0x39] sm:$0xff]
      %v562 = vld [vmem:[#allocation2 + $0x41] sm:$0xff]
      %v563 = vld [vmem:[#allocation2 + $0x49] sm:$0xff]
      %v564 = vld [vmem:[#allocation2 + $0x51] sm:$0xff]
      %v565 = vld [vmem:[#allocation2 + $0x59] sm:$0xff]
      %v566 = vld [vmem:[#allocation2 + $0x61] sm:$0xff]
      %v567 = vld [vmem:[#allocation2 + $0x69] sm:$0xff]
      %v568 = vld [vmem:[#allocation2 + $0x71] sm:$0xff]
      %v569 = vld [vmem:[#allocation2 + $0x79] sm:$0xff]
      %v570 = vld [vmem:[#allocation2 + $0x81] sm:$0xff]
      %v571 = vld [vmem:[#allocation2 + $0x89] sm:$0xff]
      %v572 = vld [vmem:[#allocation2 + $0x91] sm:$0xff]
      %v573 = vld [vmem:[#allocation2 + $0x99] sm:$0xff]
      %v574 = vld [vmem:[#allocation2 + $0xa1] sm:$0xff]
      %v575 = vld [vmem:[#allocation2 + $0xa9] sm:$0xff]
      %v576 = vld [vmem:[#allocation2 + $0xb1] sm:$0xff]
      %v577 = vld [vmem:[#allocation2 + $0xb9] sm:$0xff]
      %v578 = vld [vmem:[#allocation2 + $0xc1] sm:$0xff]
      %v579 = vld [vmem:[#allocation2 + $0xc9] sm:$0xff]
      %v580 = vld [vmem:[#allocation2 + $0xd1] sm:$0xff]
      %v581 = vld [vmem:[#allocation2 + $0xd9] sm:$0xff]
      %v582 = vld [vmem:[#allocation2 + $0xe1] sm:$0xff]
      %v583 = vld [vmem:[#allocation2 + $0xe9] sm:$0xff]
      %v584 = vld [vmem:[#allocation2 + $0xf1] sm:$0xff]
      %v585 = vld [vmem:[#allocation2 + $0xf9] sm:$0xff]
      %v586 = vld [vmem:[#allocation2 + $0x101] sm:$0xff]
      %v587 = vld [vmem:[#allocation2 + $0x109] sm:$0xff]
      %v588 = vld [vmem:[#allocation2 + $0x111] sm:$0xff]
      %v589 = vld [vmem:[#allocation2 + $0x119] sm:$0xff]
      %v590 = vld [vmem:[#allocation2 + $0x121] sm:$0xff]
      %v591 = vld [vmem:[#allocation2 + $0x129] sm:$0xff]
      %v592 = vld [vmem:[#allocation2 + $0x131] sm:$0xff]
      %v593 = vld [vmem:[#allocation2 + $0x139] sm:$0xff]
      %v594 = vld [vmem:[#allocation2 + $0x141] sm:$0xff]
      %v595 = vld [vmem:[#allocation2 + $0x149] sm:$0xff]
      %v596 = vld [vmem:[#allocation2 + $0x151] sm:$0xff]
      %v597 = vld [vmem:[#allocation2 + $0x159] sm:$0xff]
      %v598 = vld [vmem:[#allocation2 + $0x161] sm:$0xff]
      %v599 = vld [vmem:[#allocation2 + $0x169] sm:$0xff]
      %v600 = vld [vmem:[#allocation2 + $0x171] sm:$0xff]
      %v601 = vld [vmem:[#allocation2 + $0x179] sm:$0xff]
      %s602 = scalar_lea.vmem %s3, 4
      %v603 = vld [vmem:[%s602] sm:$0xf]
      %v605 = vsel %vm415, %v554, 0
      %v608 = vsel %vm415, %v555, 0
      %v611 = vsel %vm415, %v556, 0
      %v614 = vsel %vm415, %v557, 0
      %v617 = vsel %vm415, %v558, 0
      %v620 = vsel %vm415, %v559, 0
      %v623 = vsel %vm415, %v560, 0
      %v626 = vsel %vm415, %v561, 0
      %v629 = vsel %vm415, %v562, 0
      %v632 = vsel %vm415, %v563, 0
      %v635 = vsel %vm415, %v564, 0
      %v638 = vsel %vm415, %v565, 0
      %v641 = vsel %vm415, %v566, 0
      %v644 = vsel %vm415, %v567, 0
      %v647 = vsel %vm415, %v568, 0
      %v650 = vsel %vm415, %v569, 0
      %v653 = vsel %vm415, %v570, 0
      %v656 = vsel %vm415, %v571, 0
      %v659 = vsel %vm415, %v572, 0
      %v662 = vsel %vm415, %v573, 0
      %v665 = vsel %vm415, %v574, 0
      %v668 = vsel %vm415, %v575, 0
      %v671 = vsel %vm415, %v576, 0
      %v674 = vsel %vm415, %v577, 0
      %v677 = vsel %vm415, %v578, 0
      %v680 = vsel %vm415, %v579, 0
      %v683 = vsel %vm415, %v580, 0
      %v686 = vsel %vm415, %v581, 0
      %v689 = vsel %vm415, %v582, 0
      %v692 = vsel %vm415, %v583, 0
      %v695 = vsel %vm415, %v584, 0
      %v698 = vsel %vm415, %v585, 0
      %v701 = vsel %vm415, %v586, 0
      %v704 = vsel %vm415, %v587, 0
      %v707 = vsel %vm415, %v588, 0
      %v710 = vsel %vm415, %v589, 0
      %v713 = vsel %vm415, %v590, 0
      %v716 = vsel %vm415, %v591, 0
      %v719 = vsel %vm415, %v592, 0
      %v722 = vsel %vm415, %v593, 0
      %v725 = vsel %vm415, %v594, 0
      %v728 = vsel %vm415, %v595, 0
      %v731 = vsel %vm415, %v596, 0
      %v734 = vsel %vm415, %v597, 0
      %v737 = vsel %vm415, %v598, 0
      %v740 = vsel %vm415, %v599, 0
      %v743 = vsel %vm415, %v600, 0
      %v746 = vsel %vm415, %v601, 0
      %vm748 = vcmask 1043456
      %v750 = vsel %vm748, %v603, 0
      %752 = vmatpush.msra.mxu0 0.0
      %753 = vmatpush.msra.mxu0 0.0
      %754 = vmatpush.msra.mxu0 0.0
      %755 = vmatpush.msra.mxu0 0.0
      %756 = vmatpush.msra.mxu0 0.0
      %757 = vmatpush.msra.mxu0 0.0
      %758 = vmatpush.msra.mxu0 0.0
      %759 = vmatpush.msra.mxu0 0.0
      %760 = vmatpush.msra.mxu0 0.0
      %761 = vmatpush.msra.mxu0 0.0
      %762 = vmatpush.msra.mxu0 0.0
      %763 = vmatpush.msra.mxu0 0.0
      %764 = vmatpush.msra.mxu0 0.0
      %765 = vmatpush.msra.mxu0 0.0
      %766 = vmatpush.msra.mxu0 0.0
      %767 = vmatpush.msra.mxu0 %v750
      %768 = vmatmul.f32.gmra.mxu0 %v605
      %v769 = vpop.f32.mrf.mxu0
      %v770 = vadd.f32 0.0, %v769
      %771 = vmatmul.f32.gmra.mxu0 %v608
      %v772 = vpop.f32.mrf.mxu0
      %v773 = vadd.f32 0.0, %v772
      %774 = vmatmul.f32.gmra.mxu0 %v611
      %v775 = vpop.f32.mrf.mxu0
      %776 = vmatmul.f32.gmra.mxu0 %v614
      %v777 = vpop.f32.mrf.mxu0
      %v778 = vadd.f32 0.0, %v777
      %779 = vmatmul.f32.gmra.mxu0 %v617
      %v780 = vpop.f32.mrf.mxu0
      %v781 = vadd.f32 0.0, %v780
      %782 = vmatmul.f32.gmra.mxu0 %v620
      %v783 = vpop.f32.mrf.mxu0
      %784 = vmatmul.f32.gmra.mxu0 %v623
      %v785 = vpop.f32.mrf.mxu0
      %v786 = vadd.f32 0.0, %v785
      %787 = vmatmul.f32.gmra.mxu0 %v626
      %v788 = vpop.f32.mrf.mxu0
      %v789 = vadd.f32 0.0, %v788
      %790 = vmatmul.f32.gmra.mxu0 %v629
      %v791 = vpop.f32.mrf.mxu0
      %792 = vmatmul.f32.gmra.mxu0 %v632
      %v793 = vpop.f32.mrf.mxu0
      %v794 = vadd.f32 0.0, %v793
      %795 = vmatmul.f32.gmra.mxu0 %v635
      %v796 = vpop.f32.mrf.mxu0
      %v797 = vadd.f32 0.0, %v796
      %798 = vmatmul.f32.gmra.mxu0 %v638
      %v799 = vpop.f32.mrf.mxu0
      %800 = vmatmul.f32.gmra.mxu0 %v641
      %v801 = vpop.f32.mrf.mxu0
      %v802 = vadd.f32 0.0, %v801
      %803 = vmatmul.f32.gmra.mxu0 %v644
      %v804 = vpop.f32.mrf.mxu0
      %v805 = vadd.f32 0.0, %v804
      %806 = vmatmul.f32.gmra.mxu0 %v647
      %v807 = vpop.f32.mrf.mxu0
      %808 = vmatmul.f32.gmra.mxu0 %v650
      %v809 = vpop.f32.mrf.mxu0
      %v810 = vadd.f32 0.0, %v809
      %811 = vmatmul.f32.gmra.mxu0 %v653
      %v812 = vpop.f32.mrf.mxu0
      %v813 = vadd.f32 0.0, %v812
      %814 = vmatmul.f32.gmra.mxu0 %v656
      %v815 = vpop.f32.mrf.mxu0
      %816 = vmatmul.f32.gmra.mxu0 %v659
      %v817 = vpop.f32.mrf.mxu0
      %v818 = vadd.f32 0.0, %v817
      %819 = vmatmul.f32.gmra.mxu0 %v662
      %v820 = vpop.f32.mrf.mxu0
      %v821 = vadd.f32 0.0, %v820
      %822 = vmatmul.f32.gmra.mxu0 %v665
      %v823 = vpop.f32.mrf.mxu0
      %824 = vmatmul.f32.gmra.mxu0 %v668
      %v825 = vpop.f32.mrf.mxu0
      %v826 = vadd.f32 0.0, %v825
      %827 = vmatmul.f32.gmra.mxu0 %v671
      %v828 = vpop.f32.mrf.mxu0
      %v829 = vadd.f32 0.0, %v828
      %830 = vmatmul.f32.gmra.mxu0 %v674
      %v831 = vpop.f32.mrf.mxu0
      %832 = vmatmul.f32.gmra.mxu0 %v677
      %v833 = vpop.f32.mrf.mxu0
      %v834 = vadd.f32 0.0, %v833
      %835 = vmatmul.f32.gmra.mxu0 %v680
      %v836 = vpop.f32.mrf.mxu0
      %v837 = vadd.f32 0.0, %v836
      %838 = vmatmul.f32.gmra.mxu0 %v683
      %v839 = vpop.f32.mrf.mxu0
      %840 = vmatmul.f32.gmra.mxu0 %v686
      %v841 = vpop.f32.mrf.mxu0
      %v842 = vadd.f32 0.0, %v841
      %843 = vmatmul.f32.gmra.mxu0 %v689
      %v844 = vpop.f32.mrf.mxu0
      %v845 = vadd.f32 0.0, %v844
      %846 = vmatmul.f32.gmra.mxu0 %v692
      %v847 = vpop.f32.mrf.mxu0
      %848 = vmatmul.f32.gmra.mxu0 %v695
      %v849 = vpop.f32.mrf.mxu0
      %v850 = vadd.f32 0.0, %v849
      %851 = vmatmul.f32.gmra.mxu0 %v698
      %v852 = vpop.f32.mrf.mxu0
      %v853 = vadd.f32 0.0, %v852
      %854 = vmatmul.f32.gmra.mxu0 %v701
      %v855 = vpop.f32.mrf.mxu0
      %856 = vmatmul.f32.gmra.mxu0 %v704
      %v857 = vpop.f32.mrf.mxu0
      %v858 = vadd.f32 0.0, %v857
      %859 = vmatmul.f32.gmra.mxu0 %v707
      %v860 = vpop.f32.mrf.mxu0
      %v861 = vadd.f32 0.0, %v860
      %862 = vmatmul.f32.gmra.mxu0 %v710
      %v863 = vpop.f32.mrf.mxu0
      %864 = vmatmul.f32.gmra.mxu0 %v713
      %v865 = vpop.f32.mrf.mxu0
      %v866 = vadd.f32 0.0, %v865
      %867 = vmatmul.f32.gmra.mxu0 %v716
      %v868 = vpop.f32.mrf.mxu0
      %v869 = vadd.f32 0.0, %v868
      %870 = vmatmul.f32.gmra.mxu0 %v719
      %v871 = vpop.f32.mrf.mxu0
      %872 = vmatmul.f32.gmra.mxu0 %v722
      %v873 = vpop.f32.mrf.mxu0
      %v874 = vadd.f32 0.0, %v873
      %875 = vmatmul.f32.gmra.mxu0 %v725
      %v876 = vpop.f32.mrf.mxu0
      %v877 = vadd.f32 0.0, %v876
      %878 = vmatmul.f32.gmra.mxu0 %v728
      %v879 = vpop.f32.mrf.mxu0
      %880 = vmatmul.f32.gmra.mxu0 %v731
      %v881 = vpop.f32.mrf.mxu0
      %v882 = vadd.f32 0.0, %v881
      %883 = vmatmul.f32.gmra.mxu0 %v734
      %v884 = vpop.f32.mrf.mxu0
      %v885 = vadd.f32 0.0, %v884
      %886 = vmatmul.f32.gmra.mxu0 %v737
      %v887 = vpop.f32.mrf.mxu0
      %888 = vmatmul.f32.gmra.mxu0 %v740
      %v889 = vpop.f32.mrf.mxu0
      %v890 = vadd.f32 0.0, %v889
      %891 = vmatmul.f32.gmra.mxu0 %v743
      %v892 = vpop.f32.mrf.mxu0
      %v893 = vadd.f32 0.0, %v892
      %894 = vmatmul.f32.gmra.mxu0 %v746
      %v895 = vpop.f32.mrf.mxu0
      %896 = vdwg.mxu0
      %v898 = vsel %vm415, %v505, 0
      %v901 = vsel %vm415, %v506, 0
      %v904 = vsel %vm415, %v507, 0
      %v907 = vsel %vm415, %v508, 0
      %v910 = vsel %vm415, %v509, 0
      %v913 = vsel %vm415, %v510, 0
      %v916 = vsel %vm415, %v511, 0
      %v919 = vsel %vm415, %v512, 0
      %v922 = vsel %vm415, %v513, 0
      %v925 = vsel %vm415, %v514, 0
      %v928 = vsel %vm415, %v515, 0
      %v931 = vsel %vm415, %v516, 0
      %v934 = vsel %vm415, %v517, 0
      %v937 = vsel %vm415, %v518, 0
      %v940 = vsel %vm415, %v519, 0
      %v943 = vsel %vm415, %v520, 0
      %v946 = vsel %vm415, %v521, 0
      %v949 = vsel %vm415, %v522, 0
      %v952 = vsel %vm415, %v523, 0
      %v955 = vsel %vm415, %v524, 0
      %v958 = vsel %vm415, %v525, 0
      %v961 = vsel %vm415, %v526, 0
      %v964 = vsel %vm415, %v527, 0
      %v967 = vsel %vm415, %v528, 0
      %v970 = vsel %vm415, %v529, 0
      %v973 = vsel %vm415, %v530, 0
      %v976 = vsel %vm415, %v531, 0
      %v979 = vsel %vm415, %v532, 0
      %v982 = vsel %vm415, %v533, 0
      %v985 = vsel %vm415, %v534, 0
      %v988 = vsel %vm415, %v535, 0
      %v991 = vsel %vm415, %v536, 0
      %v994 = vsel %vm415, %v537, 0
      %v997 = vsel %vm415, %v538, 0
      %v1000 = vsel %vm415, %v539, 0
      %v1003 = vsel %vm415, %v540, 0
      %v1006 = vsel %vm415, %v541, 0
      %v1009 = vsel %vm415, %v542, 0
      %v1012 = vsel %vm415, %v543, 0
      %v1015 = vsel %vm415, %v544, 0
      %v1018 = vsel %vm415, %v545, 0
      %v1021 = vsel %vm415, %v546, 0
      %v1024 = vsel %vm415, %v547, 0
      %v1027 = vsel %vm415, %v548, 0
      %v1030 = vsel %vm415, %v549, 0
      %v1033 = vsel %vm415, %v550, 0
      %v1036 = vsel %vm415, %v551, 0
      %v1039 = vsel %vm415, %v552, 0
      %v1042 = vsel %vm748, %v553, 0
      %1044 = vmatpush.msra.mxu0 0.0
      %1045 = vmatpush.msra.mxu0 0.0
      %1046 = vmatpush.msra.mxu0 0.0
      %1047 = vmatpush.msra.mxu0 0.0
      %1048 = vmatpush.msra.mxu0 0.0
      %1049 = vmatpush.msra.mxu0 0.0
      %1050 = vmatpush.msra.mxu0 0.0
      %1051 = vmatpush.msra.mxu0 0.0
      %1052 = vmatpush.msra.mxu0 0.0
      %1053 = vmatpush.msra.mxu0 0.0
      %1054 = vmatpush.msra.mxu0 0.0
      %1055 = vmatpush.msra.mxu0 0.0
      %1056 = vmatpush.msra.mxu0 0.0
      %1057 = vmatpush.msra.mxu0 0.0
      %1058 = vmatpush.msra.mxu0 0.0
      %1059 = vmatpush.msra.mxu0 %v1042
      %1060 = vmatmul.f32.gmra.mxu0 %v898
      %v1061 = vpop.f32.mrf.mxu0
      %v1062 = vadd.f32 %v770, %v1061
      %1063 = vmatmul.f32.gmra.mxu0 %v901
      %v1064 = vpop.f32.mrf.mxu0
      %v1065 = vadd.f32 %v773, %v1064
      %1066 = vmatmul.f32.gmra.mxu0 %v904
      %v1067 = vpop.f32.mrf.mxu0
      %1068 = vmatmul.f32.gmra.mxu0 %v907
      %v1069 = vpop.f32.mrf.mxu0
      %v1070 = vadd.f32 %v778, %v1069
      %1071 = vmatmul.f32.gmra.mxu0 %v910
      %v1072 = vpop.f32.mrf.mxu0
      %v1073 = vadd.f32 %v781, %v1072
      %1074 = vmatmul.f32.gmra.mxu0 %v913
      %v1075 = vpop.f32.mrf.mxu0
      %1076 = vmatmul.f32.gmra.mxu0 %v916
      %v1077 = vpop.f32.mrf.mxu0
      %v1078 = vadd.f32 %v786, %v1077
      %1079 = vmatmul.f32.gmra.mxu0 %v919
      %v1080 = vpop.f32.mrf.mxu0
      %v1081 = vadd.f32 %v789, %v1080
      %1082 = vmatmul.f32.gmra.mxu0 %v922
      %v1083 = vpop.f32.mrf.mxu0
      %1084 = vmatmul.f32.gmra.mxu0 %v925
      %v1085 = vpop.f32.mrf.mxu0
      %v1086 = vadd.f32 %v794, %v1085
      %1087 = vmatmul.f32.gmra.mxu0 %v928
      %v1088 = vpop.f32.mrf.mxu0
      %v1089 = vadd.f32 %v797, %v1088
      %1090 = vmatmul.f32.gmra.mxu0 %v931
      %v1091 = vpop.f32.mrf.mxu0
      %1092 = vmatmul.f32.gmra.mxu0 %v934
      %v1093 = vpop.f32.mrf.mxu0
      %v1094 = vadd.f32 %v802, %v1093
      %1095 = vmatmul.f32.gmra.mxu0 %v937
      %v1096 = vpop.f32.mrf.mxu0
      %v1097 = vadd.f32 %v805, %v1096
      %1098 = vmatmul.f32.gmra.mxu0 %v940
      %v1099 = vpop.f32.mrf.mxu0
      %1100 = vmatmul.f32.gmra.mxu0 %v943
      %v1101 = vpop.f32.mrf.mxu0
      %v1102 = vadd.f32 %v810, %v1101
      %1103 = vmatmul.f32.gmra.mxu0 %v946
      %v1104 = vpop.f32.mrf.mxu0
      %v1105 = vadd.f32 %v813, %v1104
      %1106 = vmatmul.f32.gmra.mxu0 %v949
      %v1107 = vpop.f32.mrf.mxu0
      %1108 = vmatmul.f32.gmra.mxu0 %v952
      %v1109 = vpop.f32.mrf.mxu0
      %v1110 = vadd.f32 %v818, %v1109
      %1111 = vmatmul.f32.gmra.mxu0 %v955
      %v1112 = vpop.f32.mrf.mxu0
      %v1113 = vadd.f32 %v821, %v1112
      %1114 = vmatmul.f32.gmra.mxu0 %v958
      %v1115 = vpop.f32.mrf.mxu0
      %1116 = vmatmul.f32.gmra.mxu0 %v961
      %v1117 = vpop.f32.mrf.mxu0
      %v1118 = vadd.f32 %v826, %v1117
      %1119 = vmatmul.f32.gmra.mxu0 %v964
      %v1120 = vpop.f32.mrf.mxu0
      %v1121 = vadd.f32 %v829, %v1120
      %1122 = vmatmul.f32.gmra.mxu0 %v967
      %v1123 = vpop.f32.mrf.mxu0
      %1124 = vmatmul.f32.gmra.mxu0 %v970
      %v1125 = vpop.f32.mrf.mxu0
      %v1126 = vadd.f32 %v834, %v1125
      %1127 = vmatmul.f32.gmra.mxu0 %v973
      %v1128 = vpop.f32.mrf.mxu0
      %v1129 = vadd.f32 %v837, %v1128
      %1130 = vmatmul.f32.gmra.mxu0 %v976
      %v1131 = vpop.f32.mrf.mxu0
      %1132 = vmatmul.f32.gmra.mxu0 %v979
      %v1133 = vpop.f32.mrf.mxu0
      %v1134 = vadd.f32 %v842, %v1133
      %1135 = vmatmul.f32.gmra.mxu0 %v982
      %v1136 = vpop.f32.mrf.mxu0
      %v1137 = vadd.f32 %v845, %v1136
      %1138 = vmatmul.f32.gmra.mxu0 %v985
      %v1139 = vpop.f32.mrf.mxu0
      %1140 = vmatmul.f32.gmra.mxu0 %v988
      %v1141 = vpop.f32.mrf.mxu0
      %v1142 = vadd.f32 %v850, %v1141
      %1143 = vmatmul.f32.gmra.mxu0 %v991
      %v1144 = vpop.f32.mrf.mxu0
      %v1145 = vadd.f32 %v853, %v1144
      %1146 = vmatmul.f32.gmra.mxu0 %v994
      %v1147 = vpop.f32.mrf.mxu0
      %1148 = vmatmul.f32.gmra.mxu0 %v997
      %v1149 = vpop.f32.mrf.mxu0
      %v1150 = vadd.f32 %v858, %v1149
      %1151 = vmatmul.f32.gmra.mxu0 %v1000
      %v1152 = vpop.f32.mrf.mxu0
      %v1153 = vadd.f32 %v861, %v1152
      %1154 = vmatmul.f32.gmra.mxu0 %v1003
      %v1155 = vpop.f32.mrf.mxu0
      %1156 = vmatmul.f32.gmra.mxu0 %v1006
      %v1157 = vpop.f32.mrf.mxu0
      %v1158 = vadd.f32 %v866, %v1157
      %1159 = vmatmul.f32.gmra.mxu0 %v1009
      %v1160 = vpop.f32.mrf.mxu0
      %v1161 = vadd.f32 %v869, %v1160
      %1162 = vmatmul.f32.gmra.mxu0 %v1012
      %v1163 = vpop.f32.mrf.mxu0
      %1164 = vmatmul.f32.gmra.mxu0 %v1015
      %v1165 = vpop.f32.mrf.mxu0
      %v1166 = vadd.f32 %v874, %v1165
      %1167 = vmatmul.f32.gmra.mxu0 %v1018
      %v1168 = vpop.f32.mrf.mxu0
      %v1169 = vadd.f32 %v877, %v1168
      %1170 = vmatmul.f32.gmra.mxu0 %v1021
      %v1171 = vpop.f32.mrf.mxu0
      %1172 = vmatmul.f32.gmra.mxu0 %v1024
      %v1173 = vpop.f32.mrf.mxu0
      %v1174 = vadd.f32 %v882, %v1173
      %1175 = vmatmul.f32.gmra.mxu0 %v1027
      %v1176 = vpop.f32.mrf.mxu0
      %v1177 = vadd.f32 %v885, %v1176
      %1178 = vmatmul.f32.gmra.mxu0 %v1030
      %v1179 = vpop.f32.mrf.mxu0
      %1180 = vmatmul.f32.gmra.mxu0 %v1033
      %v1181 = vpop.f32.mrf.mxu0
      %v1182 = vadd.f32 %v890, %v1181
      %1183 = vmatmul.f32.gmra.mxu0 %v1036
      %v1184 = vpop.f32.mrf.mxu0
      %v1185 = vadd.f32 %v893, %v1184
      %1186 = vmatmul.f32.gmra.mxu0 %v1039
      %v1187 = vpop.f32.mrf.mxu0
      %1188 = vdwg.mxu0
      %v1189 = vld [vmem:[#allocation2 + $0x2] sm:$0xff]
      %v1190 = vld [vmem:[#allocation2 + $0xa] sm:$0xff]
      %v1191 = vld [vmem:[#allocation2 + $0x12] sm:$0xff]
      %v1192 = vld [vmem:[#allocation2 + $0x1a] sm:$0xff]
      %v1193 = vld [vmem:[#allocation2 + $0x22] sm:$0xff]
      %v1194 = vld [vmem:[#allocation2 + $0x2a] sm:$0xff]
      %v1195 = vld [vmem:[#allocation2 + $0x32] sm:$0xff]
      %v1196 = vld [vmem:[#allocation2 + $0x3a] sm:$0xff]
      %v1197 = vld [vmem:[#allocation2 + $0x42] sm:$0xff]
      %v1198 = vld [vmem:[#allocation2 + $0x4a] sm:$0xff]
      %v1199 = vld [vmem:[#allocation2 + $0x52] sm:$0xff]
      %v1200 = vld [vmem:[#allocation2 + $0x5a] sm:$0xff]
      %v1201 = vld [vmem:[#allocation2 + $0x62] sm:$0xff]
      %v1202 = vld [vmem:[#allocation2 + $0x6a] sm:$0xff]
      %v1203 = vld [vmem:[#allocation2 + $0x72] sm:$0xff]
      %v1204 = vld [vmem:[#allocation2 + $0x7a] sm:$0xff]
      %v1205 = vld [vmem:[#allocation2 + $0x82] sm:$0xff]
      %v1206 = vld [vmem:[#allocation2 + $0x8a] sm:$0xff]
      %v1207 = vld [vmem:[#allocation2 + $0x92] sm:$0xff]
      %v1208 = vld [vmem:[#allocation2 + $0x9a] sm:$0xff]
      %v1209 = vld [vmem:[#allocation2 + $0xa2] sm:$0xff]
      %v1210 = vld [vmem:[#allocation2 + $0xaa] sm:$0xff]
      %v1211 = vld [vmem:[#allocation2 + $0xb2] sm:$0xff]
      %v1212 = vld [vmem:[#allocation2 + $0xba] sm:$0xff]
      %v1213 = vld [vmem:[#allocation2 + $0xc2] sm:$0xff]
      %v1214 = vld [vmem:[#allocation2 + $0xca] sm:$0xff]
      %v1215 = vld [vmem:[#allocation2 + $0xd2] sm:$0xff]
      %v1216 = vld [vmem:[#allocation2 + $0xda] sm:$0xff]
      %v1217 = vld [vmem:[#allocation2 + $0xe2] sm:$0xff]
      %v1218 = vld [vmem:[#allocation2 + $0xea] sm:$0xff]
      %v1219 = vld [vmem:[#allocation2 + $0xf2] sm:$0xff]
      %v1220 = vld [vmem:[#allocation2 + $0xfa] sm:$0xff]
      %v1221 = vld [vmem:[#allocation2 + $0x102] sm:$0xff]
      %v1222 = vld [vmem:[#allocation2 + $0x10a] sm:$0xff]
      %v1223 = vld [vmem:[#allocation2 + $0x112] sm:$0xff]
      %v1224 = vld [vmem:[#allocation2 + $0x11a] sm:$0xff]
      %v1225 = vld [vmem:[#allocation2 + $0x122] sm:$0xff]
      %v1226 = vld [vmem:[#allocation2 + $0x12a] sm:$0xff]
      %v1227 = vld [vmem:[#allocation2 + $0x132] sm:$0xff]
      %v1228 = vld [vmem:[#allocation2 + $0x13a] sm:$0xff]
      %v1229 = vld [vmem:[#allocation2 + $0x142] sm:$0xff]
      %v1230 = vld [vmem:[#allocation2 + $0x14a] sm:$0xff]
      %v1231 = vld [vmem:[#allocation2 + $0x152] sm:$0xff]
      %v1232 = vld [vmem:[#allocation2 + $0x15a] sm:$0xff]
      %v1233 = vld [vmem:[#allocation2 + $0x162] sm:$0xff]
      %v1234 = vld [vmem:[#allocation2 + $0x16a] sm:$0xff]
      %v1235 = vld [vmem:[#allocation2 + $0x172] sm:$0xff]
      %v1236 = vld [vmem:[#allocation2 + $0x17a] sm:$0xff]
      %s1237 = scalar_lea.vmem %s3, 8
      %v1238 = vld [vmem:[%s1237] sm:$0xf]
      %v1240 = vsel %vm415, %v1189, 0
      %v1243 = vsel %vm415, %v1190, 0
      %v1246 = vsel %vm415, %v1191, 0
      %v1249 = vsel %vm415, %v1192, 0
      %v1252 = vsel %vm415, %v1193, 0
      %v1255 = vsel %vm415, %v1194, 0
      %v1258 = vsel %vm415, %v1195, 0
      %v1261 = vsel %vm415, %v1196, 0
      %v1264 = vsel %vm415, %v1197, 0
      %v1267 = vsel %vm415, %v1198, 0
      %v1270 = vsel %vm415, %v1199, 0
      %v1273 = vsel %vm415, %v1200, 0
      %v1276 = vsel %vm415, %v1201, 0
      %v1279 = vsel %vm415, %v1202, 0
      %v1282 = vsel %vm415, %v1203, 0
      %v1285 = vsel %vm415, %v1204, 0
      %v1288 = vsel %vm415, %v1205, 0
      %v1291 = vsel %vm415, %v1206, 0
      %v1294 = vsel %vm415, %v1207, 0
      %v1297 = vsel %vm415, %v1208, 0
      %v1300 = vsel %vm415, %v1209, 0
      %v1303 = vsel %vm415, %v1210, 0
      %v1306 = vsel %vm415, %v1211, 0
      %v1309 = vsel %vm415, %v1212, 0
      %v1312 = vsel %vm415, %v1213, 0
      %v1315 = vsel %vm415, %v1214, 0
      %v1318 = vsel %vm415, %v1215, 0
      %v1321 = vsel %vm415, %v1216, 0
      %v1324 = vsel %vm415, %v1217, 0
      %v1327 = vsel %vm415, %v1218, 0
      %v1330 = vsel %vm415, %v1219, 0
      %v1333 = vsel %vm415, %v1220, 0
      %v1336 = vsel %vm415, %v1221, 0
      %v1339 = vsel %vm415, %v1222, 0
      %v1342 = vsel %vm415, %v1223, 0
      %v1345 = vsel %vm415, %v1224, 0
      %v1348 = vsel %vm415, %v1225, 0
      %v1351 = vsel %vm415, %v1226, 0
      %v1354 = vsel %vm415, %v1227, 0
      %v1357 = vsel %vm415, %v1228, 0
      %v1360 = vsel %vm415, %v1229, 0
      %v1363 = vsel %vm415, %v1230, 0
      %v1366 = vsel %vm415, %v1231, 0
      %v1369 = vsel %vm415, %v1232, 0
      %v1372 = vsel %vm415, %v1233, 0
      %v1375 = vsel %vm415, %v1234, 0
      %v1378 = vsel %vm415, %v1235, 0
      %v1381 = vsel %vm415, %v1236, 0
      %v1384 = vsel %vm748, %v1238, 0
      %1386 = vmatpush.msra.mxu0 0.0
      %1387 = vmatpush.msra.mxu0 0.0
      %1388 = vmatpush.msra.mxu0 0.0
      %1389 = vmatpush.msra.mxu0 0.0
      %1390 = vmatpush.msra.mxu0 0.0
      %1391 = vmatpush.msra.mxu0 0.0
      %1392 = vmatpush.msra.mxu0 0.0
      %1393 = vmatpush.msra.mxu0 0.0
      %1394 = vmatpush.msra.mxu0 0.0
      %1395 = vmatpush.msra.mxu0 0.0
      %1396 = vmatpush.msra.mxu0 0.0
      %1397 = vmatpush.msra.mxu0 0.0
      %1398 = vmatpush.msra.mxu0 0.0
      %1399 = vmatpush.msra.mxu0 0.0
      %1400 = vmatpush.msra.mxu0 0.0
      %1401 = vmatpush.msra.mxu0 %v1384
      %1402 = vmatmul.f32.gmra.mxu0 %v1240
      %v1403 = vpop.f32.mrf.mxu0
      %v1404 = vadd.f32 0.0, %v1403
      %1405 = vmatmul.f32.gmra.mxu0 %v1243
      %v1406 = vpop.f32.mrf.mxu0
      %v1407 = vadd.f32 0.0, %v1406
      %1408 = vmatmul.f32.gmra.mxu0 %v1246
      %v1409 = vpop.f32.mrf.mxu0
      %1410 = vmatmul.f32.gmra.mxu0 %v1249
      %v1411 = vpop.f32.mrf.mxu0
      %v1412 = vadd.f32 0.0, %v1411
      %1413 = vmatmul.f32.gmra.mxu0 %v1252
      %v1414 = vpop.f32.mrf.mxu0
      %v1415 = vadd.f32 0.0, %v1414
      %1416 = vmatmul.f32.gmra.mxu0 %v1255
      %v1417 = vpop.f32.mrf.mxu0
      %1418 = vmatmul.f32.gmra.mxu0 %v1258
      %v1419 = vpop.f32.mrf.mxu0
      %v1420 = vadd.f32 0.0, %v1419
      %1421 = vmatmul.f32.gmra.mxu0 %v1261
      %v1422 = vpop.f32.mrf.mxu0
      %v1423 = vadd.f32 0.0, %v1422
      %1424 = vmatmul.f32.gmra.mxu0 %v1264
      %v1425 = vpop.f32.mrf.mxu0
      %1426 = vmatmul.f32.gmra.mxu0 %v1267
      %v1427 = vpop.f32.mrf.mxu0
      %v1428 = vadd.f32 0.0, %v1427
      %1429 = vmatmul.f32.gmra.mxu0 %v1270
      %v1430 = vpop.f32.mrf.mxu0
      %v1431 = vadd.f32 0.0, %v1430
      %1432 = vmatmul.f32.gmra.mxu0 %v1273
      %v1433 = vpop.f32.mrf.mxu0
      %1434 = vmatmul.f32.gmra.mxu0 %v1276
      %v1435 = vpop.f32.mrf.mxu0
      %v1436 = vadd.f32 0.0, %v1435
      %1437 = vmatmul.f32.gmra.mxu0 %v1279
      %v1438 = vpop.f32.mrf.mxu0
      %v1439 = vadd.f32 0.0, %v1438
      %1440 = vmatmul.f32.gmra.mxu0 %v1282
      %v1441 = vpop.f32.mrf.mxu0
      %1442 = vmatmul.f32.gmra.mxu0 %v1285
      %v1443 = vpop.f32.mrf.mxu0
      %v1444 = vadd.f32 0.0, %v1443
      %1445 = vmatmul.f32.gmra.mxu0 %v1288
      %v1446 = vpop.f32.mrf.mxu0
      %v1447 = vadd.f32 0.0, %v1446
      %1448 = vmatmul.f32.gmra.mxu0 %v1291
      %v1449 = vpop.f32.mrf.mxu0
      %1450 = vmatmul.f32.gmra.mxu0 %v1294
      %v1451 = vpop.f32.mrf.mxu0
      %v1452 = vadd.f32 0.0, %v1451
      %1453 = vmatmul.f32.gmra.mxu0 %v1297
      %v1454 = vpop.f32.mrf.mxu0
      %v1455 = vadd.f32 0.0, %v1454
      %1456 = vmatmul.f32.gmra.mxu0 %v1300
      %v1457 = vpop.f32.mrf.mxu0
      %1458 = vmatmul.f32.gmra.mxu0 %v1303
      %v1459 = vpop.f32.mrf.mxu0
      %v1460 = vadd.f32 0.0, %v1459
      %1461 = vmatmul.f32.gmra.mxu0 %v1306
      %v1462 = vpop.f32.mrf.mxu0
      %v1463 = vadd.f32 0.0, %v1462
      %1464 = vmatmul.f32.gmra.mxu0 %v1309
      %v1465 = vpop.f32.mrf.mxu0
      %1466 = vmatmul.f32.gmra.mxu0 %v1312
      %v1467 = vpop.f32.mrf.mxu0
      %v1468 = vadd.f32 0.0, %v1467
      %1469 = vmatmul.f32.gmra.mxu0 %v1315
      %v1470 = vpop.f32.mrf.mxu0
      %v1471 = vadd.f32 0.0, %v1470
      %1472 = vmatmul.f32.gmra.mxu0 %v1318
      %v1473 = vpop.f32.mrf.mxu0
      %1474 = vmatmul.f32.gmra.mxu0 %v1321
      %v1475 = vpop.f32.mrf.mxu0
      %v1476 = vadd.f32 0.0, %v1475
      %1477 = vmatmul.f32.gmra.mxu0 %v1324
      %v1478 = vpop.f32.mrf.mxu0
      %v1479 = vadd.f32 0.0, %v1478
      %1480 = vmatmul.f32.gmra.mxu0 %v1327
      %v1481 = vpop.f32.mrf.mxu0
      %1482 = vmatmul.f32.gmra.mxu0 %v1330
      %v1483 = vpop.f32.mrf.mxu0
      %v1484 = vadd.f32 0.0, %v1483
      %1485 = vmatmul.f32.gmra.mxu0 %v1333
      %v1486 = vpop.f32.mrf.mxu0
      %v1487 = vadd.f32 0.0, %v1486
      %1488 = vmatmul.f32.gmra.mxu0 %v1336
      %v1489 = vpop.f32.mrf.mxu0
      %1490 = vmatmul.f32.gmra.mxu0 %v1339
      %v1491 = vpop.f32.mrf.mxu0
      %v1492 = vadd.f32 0.0, %v1491
      %1493 = vmatmul.f32.gmra.mxu0 %v1342
      %v1494 = vpop.f32.mrf.mxu0
      %v1495 = vadd.f32 0.0, %v1494
      %1496 = vmatmul.f32.gmra.mxu0 %v1345
      %v1497 = vpop.f32.mrf.mxu0
      %1498 = vmatmul.f32.gmra.mxu0 %v1348
      %v1499 = vpop.f32.mrf.mxu0
      %v1500 = vadd.f32 0.0, %v1499
      %1501 = vmatmul.f32.gmra.mxu0 %v1351
      %v1502 = vpop.f32.mrf.mxu0
      %v1503 = vadd.f32 0.0, %v1502
      %1504 = vmatmul.f32.gmra.mxu0 %v1354
      %v1505 = vpop.f32.mrf.mxu0
      %1506 = vmatmul.f32.gmra.mxu0 %v1357
      %v1507 = vpop.f32.mrf.mxu0
      %v1508 = vadd.f32 0.0, %v1507
      %1509 = vmatmul.f32.gmra.mxu0 %v1360
      %v1510 = vpop.f32.mrf.mxu0
      %v1511 = vadd.f32 0.0, %v1510
      %1512 = vmatmul.f32.gmra.mxu0 %v1363
      %v1513 = vpop.f32.mrf.mxu0
      %1514 = vmatmul.f32.gmra.mxu0 %v1366
      %v1515 = vpop.f32.mrf.mxu0
      %v1516 = vadd.f32 0.0, %v1515
      %1517 = vmatmul.f32.gmra.mxu0 %v1369
      %v1518 = vpop.f32.mrf.mxu0
      %v1519 = vadd.f32 0.0, %v1518
      %1520 = vmatmul.f32.gmra.mxu0 %v1372
      %v1521 = vpop.f32.mrf.mxu0
      %1522 = vmatmul.f32.gmra.mxu0 %v1375
      %v1523 = vpop.f32.mrf.mxu0
      %v1524 = vadd.f32 0.0, %v1523
      %1525 = vmatmul.f32.gmra.mxu0 %v1378
      %v1526 = vpop.f32.mrf.mxu0
      %v1527 = vadd.f32 0.0, %v1526
      %1528 = vmatmul.f32.gmra.mxu0 %v1381
      %v1529 = vpop.f32.mrf.mxu0
      %1530 = vdwg.mxu0
      %v1531 = vadd.f32 %v1062, %v1404
      %v1532 = vadd.f32 %v1065, %v1407
      %v1533 = vadd.f32 %v1070, %v1412
      %v1534 = vadd.f32 %v1073, %v1415
      %v1535 = vadd.f32 %v1078, %v1420
      %v1536 = vadd.f32 %v1081, %v1423
      %v1537 = vadd.f32 %v1086, %v1428
      %v1538 = vadd.f32 %v1089, %v1431
      %v1539 = vadd.f32 %v1094, %v1436
      %v1540 = vadd.f32 %v1097, %v1439
      %v1541 = vadd.f32 %v1102, %v1444
      %v1542 = vadd.f32 %v1105, %v1447
      %v1543 = vadd.f32 %v1110, %v1452
      %v1544 = vadd.f32 %v1113, %v1455
      %v1545 = vadd.f32 %v1118, %v1460
      %v1546 = vadd.f32 %v1121, %v1463
      %v1547 = vadd.f32 %v1126, %v1468
      %v1548 = vadd.f32 %v1129, %v1471
      %v1549 = vadd.f32 %v1134, %v1476
      %v1550 = vadd.f32 %v1137, %v1479
      %v1551 = vadd.f32 %v1142, %v1484
      %v1552 = vadd.f32 %v1145, %v1487
      %v1553 = vadd.f32 %v1150, %v1492
      %v1554 = vadd.f32 %v1153, %v1495
      %v1555 = vadd.f32 %v1158, %v1500
      %v1556 = vadd.f32 %v1161, %v1503
      %v1557 = vadd.f32 %v1166, %v1508
      %v1558 = vadd.f32 %v1169, %v1511
      %v1559 = vadd.f32 %v1174, %v1516
      %v1560 = vadd.f32 %v1177, %v1519
      %v1561 = vadd.f32 %v1182, %v1524
      %v1562 = vadd.f32 %v1185, %v1527
      %v1563 = vld [vmem:[#allocation2 + $0x18] sm:$0xff]
      %v1564 = vld [vmem:[#allocation2 + $0x20] sm:$0xff]
      %v1565 = vld [vmem:[#allocation2 + $0x28] sm:$0xff]
      %v1566 = vld [vmem:[#allocation2 + $0x30] sm:$0xff]
      %v1567 = vld [vmem:[#allocation2 + $0x38] sm:$0xff]
      %v1568 = vld [vmem:[#allocation2 + $0x40] sm:$0xff]
      %v1569 = vld [vmem:[#allocation2 + $0x48] sm:$0xff]
      %v1570 = vld [vmem:[#allocation2 + $0x50] sm:$0xff]
      %v1571 = vld [vmem:[#allocation2 + $0x58] sm:$0xff]
      %v1572 = vld [vmem:[#allocation2 + $0x60] sm:$0xff]
      %v1573 = vld [vmem:[#allocation2 + $0x68] sm:$0xff]
      %v1574 = vld [vmem:[#allocation2 + $0x70] sm:$0xff]
      %v1575 = vld [vmem:[#allocation2 + $0x78] sm:$0xff]
      %v1576 = vld [vmem:[#allocation2 + $0x80] sm:$0xff]
      %v1577 = vld [vmem:[#allocation2 + $0x88] sm:$0xff]
      %v1578 = vld [vmem:[#allocation2 + $0x90] sm:$0xff]
      %v1579 = vld [vmem:[#allocation2 + $0x98] sm:$0xff]
      %v1580 = vld [vmem:[#allocation2 + $0xa0] sm:$0xff]
      %v1581 = vld [vmem:[#allocation2 + $0xa8] sm:$0xff]
      %v1582 = vld [vmem:[#allocation2 + $0xb0] sm:$0xff]
      %v1583 = vld [vmem:[#allocation2 + $0xb8] sm:$0xff]
      %v1584 = vld [vmem:[#allocation2 + $0xc0] sm:$0xff]
      %v1585 = vld [vmem:[#allocation2 + $0xc8] sm:$0xff]
      %v1586 = vld [vmem:[#allocation2 + $0xd0] sm:$0xff]
      %v1587 = vld [vmem:[#allocation2 + $0xd8] sm:$0xff]
      %v1588 = vld [vmem:[#allocation2 + $0xe0] sm:$0xff]
      %v1589 = vld [vmem:[#allocation2 + $0xe8] sm:$0xff]
      %v1590 = vld [vmem:[#allocation2 + $0xf0] sm:$0xff]
      %v1591 = vld [vmem:[#allocation2 + $0xf8] sm:$0xff]
      %v1592 = vld [vmem:[#allocation2 + $0x100] sm:$0xff]
      %v1593 = vld [vmem:[#allocation2 + $0x108] sm:$0xff]
      %v1594 = vld [vmem:[#allocation2 + $0x110] sm:$0xff]
      %v1595 = vld [vmem:[#allocation2 + $0x118] sm:$0xff]
      %v1596 = vld [vmem:[#allocation2 + $0x120] sm:$0xff]
      %v1597 = vld [vmem:[#allocation2 + $0x128] sm:$0xff]
      %v1598 = vld [vmem:[#allocation2 + $0x130] sm:$0xff]
      %v1599 = vld [vmem:[#allocation2 + $0x138] sm:$0xff]
      %v1600 = vld [vmem:[#allocation2 + $0x140] sm:$0xff]
      %v1601 = vld [vmem:[#allocation2 + $0x148] sm:$0xff]
      %v1602 = vld [vmem:[#allocation2 + $0x150] sm:$0xff]
      %v1603 = vld [vmem:[#allocation2 + $0x158] sm:$0xff]
      %v1604 = vld [vmem:[#allocation2 + $0x160] sm:$0xff]
      %v1605 = vld [vmem:[#allocation2 + $0x168] sm:$0xff]
      %v1606 = vld [vmem:[#allocation2 + $0x170] sm:$0xff]
      %v1607 = vld [vmem:[#allocation2 + $0x178] sm:$0xff]
      %v1608 = vld [vmem:[#allocation2 + $0x180] sm:$0xff]
      %v1609 = vld [vmem:[#allocation2 + $0x188] sm:$0xff]
      %v1610 = vld [vmem:[#allocation2 + $0x190] sm:$0xff]
      %s1611 = scalar_lea.vmem %s3, 12
      %v1612 = vld [vmem:[%s1611] sm:$0xf]
      %v1614 = vsel %vm415, %v1563, 0
      %v1617 = vsel %vm415, %v1564, 0
      %v1620 = vsel %vm415, %v1565, 0
      %v1623 = vsel %vm415, %v1566, 0
      %v1626 = vsel %vm415, %v1567, 0
      %v1629 = vsel %vm415, %v1568, 0
      %v1632 = vsel %vm415, %v1569, 0
      %v1635 = vsel %vm415, %v1570, 0
      %v1638 = vsel %vm415, %v1571, 0
      %v1641 = vsel %vm415, %v1572, 0
      %v1644 = vsel %vm415, %v1573, 0
      %v1647 = vsel %vm415, %v1574, 0
      %v1650 = vsel %vm415, %v1575, 0
      %v1653 = vsel %vm415, %v1576, 0
      %v1656 = vsel %vm415, %v1577, 0
      %v1659 = vsel %vm415, %v1578, 0
      %v1662 = vsel %vm415, %v1579, 0
      %v1665 = vsel %vm415, %v1580, 0
      %v1668 = vsel %vm415, %v1581, 0
      %v1671 = vsel %vm415, %v1582, 0
      %v1674 = vsel %vm415, %v1583, 0
      %v1677 = vsel %vm415, %v1584, 0
      %v1680 = vsel %vm415, %v1585, 0
      %v1683 = vsel %vm415, %v1586, 0
      %v1686 = vsel %vm415, %v1587, 0
      %v1689 = vsel %vm415, %v1588, 0
      %v1692 = vsel %vm415, %v1589, 0
      %v1695 = vsel %vm415, %v1590, 0
      %v1698 = vsel %vm415, %v1591, 0
      %v1701 = vsel %vm415, %v1592, 0
      %v1704 = vsel %vm415, %v1593, 0
      %v1707 = vsel %vm415, %v1594, 0
      %v1710 = vsel %vm415, %v1595, 0
      %v1713 = vsel %vm415, %v1596, 0
      %v1716 = vsel %vm415, %v1597, 0
      %v1719 = vsel %vm415, %v1598, 0
      %v1722 = vsel %vm415, %v1599, 0
      %v1725 = vsel %vm415, %v1600, 0
      %v1728 = vsel %vm415, %v1601, 0
      %v1731 = vsel %vm415, %v1602, 0
      %v1734 = vsel %vm415, %v1603, 0
      %v1737 = vsel %vm415, %v1604, 0
      %v1740 = vsel %vm415, %v1605, 0
      %v1743 = vsel %vm415, %v1606, 0
      %v1746 = vsel %vm415, %v1607, 0
      %v1749 = vsel %vm415, %v1608, 0
      %v1752 = vsel %vm415, %v1609, 0
      %v1755 = vsel %vm415, %v1610, 0
      %v1758 = vsel %vm748, %v1612, 0
      %1760 = vmatpush.msra.mxu0 0.0
      %1761 = vmatpush.msra.mxu0 0.0
      %1762 = vmatpush.msra.mxu0 0.0
      %1763 = vmatpush.msra.mxu0 0.0
      %1764 = vmatpush.msra.mxu0 0.0
      %1765 = vmatpush.msra.mxu0 0.0
      %1766 = vmatpush.msra.mxu0 0.0
      %1767 = vmatpush.msra.mxu0 0.0
      %1768 = vmatpush.msra.mxu0 0.0
      %1769 = vmatpush.msra.mxu0 0.0
      %1770 = vmatpush.msra.mxu0 0.0
      %1771 = vmatpush.msra.mxu0 0.0
      %1772 = vmatpush.msra.mxu0 0.0
      %1773 = vmatpush.msra.mxu0 0.0
      %1774 = vmatpush.msra.mxu0 0.0
      %1775 = vmatpush.msra.mxu0 %v1758
      %1776 = vmatmul.f32.gmra.mxu0 %v1614
      %v1777 = vpop.f32.mrf.mxu0
      %v1778 = vadd.f32 0.0, %v1777
      %1779 = vmatmul.f32.gmra.mxu0 %v1617
      %v1780 = vpop.f32.mrf.mxu0
      %v1781 = vadd.f32 0.0, %v1780
      %1782 = vmatmul.f32.gmra.mxu0 %v1620
      %v1783 = vpop.f32.mrf.mxu0
      %1784 = vmatmul.f32.gmra.mxu0 %v1623
      %v1785 = vpop.f32.mrf.mxu0
      %v1786 = vadd.f32 0.0, %v1785
      %1787 = vmatmul.f32.gmra.mxu0 %v1626
      %v1788 = vpop.f32.mrf.mxu0
      %v1789 = vadd.f32 0.0, %v1788
      %1790 = vmatmul.f32.gmra.mxu0 %v1629
      %v1791 = vpop.f32.mrf.mxu0
      %1792 = vmatmul.f32.gmra.mxu0 %v1632
      %v1793 = vpop.f32.mrf.mxu0
      %v1794 = vadd.f32 0.0, %v1793
      %1795 = vmatmul.f32.gmra.mxu0 %v1635
      %v1796 = vpop.f32.mrf.mxu0
      %v1797 = vadd.f32 0.0, %v1796
      %1798 = vmatmul.f32.gmra.mxu0 %v1638
      %v1799 = vpop.f32.mrf.mxu0
      %1800 = vmatmul.f32.gmra.mxu0 %v1641
      %v1801 = vpop.f32.mrf.mxu0
      %v1802 = vadd.f32 0.0, %v1801
      %1803 = vmatmul.f32.gmra.mxu0 %v1644
      %v1804 = vpop.f32.mrf.mxu0
      %v1805 = vadd.f32 0.0, %v1804
      %1806 = vmatmul.f32.gmra.mxu0 %v1647
      %v1807 = vpop.f32.mrf.mxu0
      %1808 = vmatmul.f32.gmra.mxu0 %v1650
      %v1809 = vpop.f32.mrf.mxu0
      %v1810 = vadd.f32 0.0, %v1809
      %1811 = vmatmul.f32.gmra.mxu0 %v1653
      %v1812 = vpop.f32.mrf.mxu0
      %v1813 = vadd.f32 0.0, %v1812
      %1814 = vmatmul.f32.gmra.mxu0 %v1656
      %v1815 = vpop.f32.mrf.mxu0
      %1816 = vmatmul.f32.gmra.mxu0 %v1659
      %v1817 = vpop.f32.mrf.mxu0
      %v1818 = vadd.f32 0.0, %v1817
      %1819 = vmatmul.f32.gmra.mxu0 %v1662
      %v1820 = vpop.f32.mrf.mxu0
      %v1821 = vadd.f32 0.0, %v1820
      %1822 = vmatmul.f32.gmra.mxu0 %v1665
      %v1823 = vpop.f32.mrf.mxu0
      %1824 = vmatmul.f32.gmra.mxu0 %v1668
      %v1825 = vpop.f32.mrf.mxu0
      %v1826 = vadd.f32 0.0, %v1825
      %1827 = vmatmul.f32.gmra.mxu0 %v1671
      %v1828 = vpop.f32.mrf.mxu0
      %v1829 = vadd.f32 0.0, %v1828
      %1830 = vmatmul.f32.gmra.mxu0 %v1674
      %v1831 = vpop.f32.mrf.mxu0
      %1832 = vmatmul.f32.gmra.mxu0 %v1677
      %v1833 = vpop.f32.mrf.mxu0
      %v1834 = vadd.f32 0.0, %v1833
      %1835 = vmatmul.f32.gmra.mxu0 %v1680
      %v1836 = vpop.f32.mrf.mxu0
      %v1837 = vadd.f32 0.0, %v1836
      %1838 = vmatmul.f32.gmra.mxu0 %v1683
      %v1839 = vpop.f32.mrf.mxu0
      %1840 = vmatmul.f32.gmra.mxu0 %v1686
      %v1841 = vpop.f32.mrf.mxu0
      %v1842 = vadd.f32 0.0, %v1841
      %1843 = vmatmul.f32.gmra.mxu0 %v1689
      %v1844 = vpop.f32.mrf.mxu0
      %v1845 = vadd.f32 0.0, %v1844
      %1846 = vmatmul.f32.gmra.mxu0 %v1692
      %v1847 = vpop.f32.mrf.mxu0
      %1848 = vmatmul.f32.gmra.mxu0 %v1695
      %v1849 = vpop.f32.mrf.mxu0
      %v1850 = vadd.f32 0.0, %v1849
      %1851 = vmatmul.f32.gmra.mxu0 %v1698
      %v1852 = vpop.f32.mrf.mxu0
      %v1853 = vadd.f32 0.0, %v1852
      %1854 = vmatmul.f32.gmra.mxu0 %v1701
      %v1855 = vpop.f32.mrf.mxu0
      %1856 = vmatmul.f32.gmra.mxu0 %v1704
      %v1857 = vpop.f32.mrf.mxu0
      %v1858 = vadd.f32 0.0, %v1857
      %1859 = vmatmul.f32.gmra.mxu0 %v1707
      %v1860 = vpop.f32.mrf.mxu0
      %v1861 = vadd.f32 0.0, %v1860
      %1862 = vmatmul.f32.gmra.mxu0 %v1710
      %v1863 = vpop.f32.mrf.mxu0
      %1864 = vmatmul.f32.gmra.mxu0 %v1713
      %v1865 = vpop.f32.mrf.mxu0
      %v1866 = vadd.f32 0.0, %v1865
      %1867 = vmatmul.f32.gmra.mxu0 %v1716
      %v1868 = vpop.f32.mrf.mxu0
      %v1869 = vadd.f32 0.0, %v1868
      %1870 = vmatmul.f32.gmra.mxu0 %v1719
      %v1871 = vpop.f32.mrf.mxu0
      %1872 = vmatmul.f32.gmra.mxu0 %v1722
      %v1873 = vpop.f32.mrf.mxu0
      %v1874 = vadd.f32 0.0, %v1873
      %1875 = vmatmul.f32.gmra.mxu0 %v1725
      %v1876 = vpop.f32.mrf.mxu0
      %v1877 = vadd.f32 0.0, %v1876
      %1878 = vmatmul.f32.gmra.mxu0 %v1728
      %v1879 = vpop.f32.mrf.mxu0
      %1880 = vmatmul.f32.gmra.mxu0 %v1731
      %v1881 = vpop.f32.mrf.mxu0
      %v1882 = vadd.f32 0.0, %v1881
      %1883 = vmatmul.f32.gmra.mxu0 %v1734
      %v1884 = vpop.f32.mrf.mxu0
      %v1885 = vadd.f32 0.0, %v1884
      %1886 = vmatmul.f32.gmra.mxu0 %v1737
      %v1887 = vpop.f32.mrf.mxu0
      %1888 = vmatmul.f32.gmra.mxu0 %v1740
      %v1889 = vpop.f32.mrf.mxu0
      %v1890 = vadd.f32 0.0, %v1889
      %1891 = vmatmul.f32.gmra.mxu0 %v1743
      %v1892 = vpop.f32.mrf.mxu0
      %v1893 = vadd.f32 0.0, %v1892
      %1894 = vmatmul.f32.gmra.mxu0 %v1746
      %v1895 = vpop.f32.mrf.mxu0
      %1896 = vmatmul.f32.gmra.mxu0 %v1749
      %v1897 = vpop.f32.mrf.mxu0
      %v1898 = vadd.f32 0.0, %v1897
      %1899 = vmatmul.f32.gmra.mxu0 %v1752
      %v1900 = vpop.f32.mrf.mxu0
      %v1901 = vadd.f32 0.0, %v1900
      %1902 = vmatmul.f32.gmra.mxu0 %v1755
      %v1903 = vpop.f32.mrf.mxu0
      %1904 = vdwg.mxu0
      %v1905 = vadd.f32 %v1531, %v1778
      %v1906 = vadd.f32 %v1532, %v1781
      %v1907 = vadd.f32 %v1533, %v1786
      %v1908 = vadd.f32 %v1534, %v1789
      %v1909 = vadd.f32 %v1535, %v1794
      %v1910 = vadd.f32 %v1536, %v1797
      %v1911 = vadd.f32 %v1537, %v1802
      %v1912 = vadd.f32 %v1538, %v1805
      %v1913 = vadd.f32 %v1539, %v1810
      %v1914 = vadd.f32 %v1540, %v1813
      %v1915 = vadd.f32 %v1541, %v1818
      %v1916 = vadd.f32 %v1542, %v1821
      %v1917 = vadd.f32 %v1543, %v1826
      %v1918 = vadd.f32 %v1544, %v1829
      %v1919 = vadd.f32 %v1545, %v1834
      %v1920 = vadd.f32 %v1546, %v1837
      %v1921 = vadd.f32 %v1547, %v1842
      %v1922 = vadd.f32 %v1548, %v1845
      %v1923 = vadd.f32 %v1549, %v1850
      %v1924 = vadd.f32 %v1550, %v1853
      %v1925 = vadd.f32 %v1551, %v1858
      %v1926 = vadd.f32 %v1552, %v1861
      %v1927 = vadd.f32 %v1553, %v1866
      %v1928 = vadd.f32 %v1554, %v1869
      %v1929 = vadd.f32 %v1555, %v1874
      %v1930 = vadd.f32 %v1556, %v1877
      %v1931 = vadd.f32 %v1557, %v1882
      %v1932 = vadd.f32 %v1558, %v1885
      %v1933 = vadd.f32 %v1559, %v1890
      %v1934 = vadd.f32 %v1560, %v1893
      %v1935 = vadd.f32 %v1561, %v1898
      %v1936 = vadd.f32 %v1562, %v1901
      %v1937 = vld [vmem:[#allocation2 + $0x19] sm:$0xff]
      %v1938 = vld [vmem:[#allocation2 + $0x21] sm:$0xff]
      %v1939 = vld [vmem:[#allocation2 + $0x29] sm:$0xff]
      %v1940 = vld [vmem:[#allocation2 + $0x31] sm:$0xff]
      %v1941 = vld [vmem:[#allocation2 + $0x39] sm:$0xff]
      %v1942 = vld [vmem:[#allocation2 + $0x41] sm:$0xff]
      %v1943 = vld [vmem:[#allocation2 + $0x49] sm:$0xff]
      %v1944 = vld [vmem:[#allocation2 + $0x51] sm:$0xff]
      %v1945 = vld [vmem:[#allocation2 + $0x59] sm:$0xff]
      %v1946 = vld [vmem:[#allocation2 + $0x61] sm:$0xff]
      %v1947 = vld [vmem:[#allocation2 + $0x69] sm:$0xff]
      %v1948 = vld [vmem:[#allocation2 + $0x71] sm:$0xff]
      %v1949 = vld [vmem:[#allocation2 + $0x79] sm:$0xff]
      %v1950 = vld [vmem:[#allocation2 + $0x81] sm:$0xff]
      %v1951 = vld [vmem:[#allocation2 + $0x89] sm:$0xff]
      %v1952 = vld [vmem:[#allocation2 + $0x91] sm:$0xff]
      %v1953 = vld [vmem:[#allocation2 + $0x99] sm:$0xff]
      %v1954 = vld [vmem:[#allocation2 + $0xa1] sm:$0xff]
      %v1955 = vld [vmem:[#allocation2 + $0xa9] sm:$0xff]
      %v1956 = vld [vmem:[#allocation2 + $0xb1] sm:$0xff]
      %v1957 = vld [vmem:[#allocation2 + $0xb9] sm:$0xff]
      %v1958 = vld [vmem:[#allocation2 + $0xc1] sm:$0xff]
      %v1959 = vld [vmem:[#allocation2 + $0xc9] sm:$0xff]
      %v1960 = vld [vmem:[#allocation2 + $0xd1] sm:$0xff]
      %v1961 = vld [vmem:[#allocation2 + $0xd9] sm:$0xff]
      %v1962 = vld [vmem:[#allocation2 + $0xe1] sm:$0xff]
      %v1963 = vld [vmem:[#allocation2 + $0xe9] sm:$0xff]
      %v1964 = vld [vmem:[#allocation2 + $0xf1] sm:$0xff]
      %v1965 = vld [vmem:[#allocation2 + $0xf9] sm:$0xff]
      %v1966 = vld [vmem:[#allocation2 + $0x101] sm:$0xff]
      %v1967 = vld [vmem:[#allocation2 + $0x109] sm:$0xff]
      %v1968 = vld [vmem:[#allocation2 + $0x111] sm:$0xff]
      %v1969 = vld [vmem:[#allocation2 + $0x119] sm:$0xff]
      %v1970 = vld [vmem:[#allocation2 + $0x121] sm:$0xff]
      %v1971 = vld [vmem:[#allocation2 + $0x129] sm:$0xff]
      %v1972 = vld [vmem:[#allocation2 + $0x131] sm:$0xff]
      %v1973 = vld [vmem:[#allocation2 + $0x139] sm:$0xff]
      %v1974 = vld [vmem:[#allocation2 + $0x141] sm:$0xff]
      %v1975 = vld [vmem:[#allocation2 + $0x149] sm:$0xff]
      %v1976 = vld [vmem:[#allocation2 + $0x151] sm:$0xff]
      %v1977 = vld [vmem:[#allocation2 + $0x159] sm:$0xff]
      %v1978 = vld [vmem:[#allocation2 + $0x161] sm:$0xff]
      %v1979 = vld [vmem:[#allocation2 + $0x169] sm:$0xff]
      %v1980 = vld [vmem:[#allocation2 + $0x171] sm:$0xff]
      %v1981 = vld [vmem:[#allocation2 + $0x179] sm:$0xff]
      %v1982 = vld [vmem:[#allocation2 + $0x181] sm:$0xff]
      %v1983 = vld [vmem:[#allocation2 + $0x189] sm:$0xff]
      %v1984 = vld [vmem:[#allocation2 + $0x191] sm:$0xff]
      %s1985 = scalar_lea.vmem %s3, 16
      %v1986 = vld [vmem:[%s1985] sm:$0xf]
      %v1988 = vsel %vm415, %v1937, 0
      %v1991 = vsel %vm415, %v1938, 0
      %v1994 = vsel %vm415, %v1939, 0
      %v1997 = vsel %vm415, %v1940, 0
      %v2000 = vsel %vm415, %v1941, 0
      %v2003 = vsel %vm415, %v1942, 0
      %v2006 = vsel %vm415, %v1943, 0
      %v2009 = vsel %vm415, %v1944, 0
      %v2012 = vsel %vm415, %v1945, 0
      %v2015 = vsel %vm415, %v1946, 0
      %v2018 = vsel %vm415, %v1947, 0
      %v2021 = vsel %vm415, %v1948, 0
      %v2024 = vsel %vm415, %v1949, 0
      %v2027 = vsel %vm415, %v1950, 0
      %v2030 = vsel %vm415, %v1951, 0
      %v2033 = vsel %vm415, %v1952, 0
      %v2036 = vsel %vm415, %v1953, 0
      %v2039 = vsel %vm415, %v1954, 0
      %v2042 = vsel %vm415, %v1955, 0
      %v2045 = vsel %vm415, %v1956, 0
      %v2048 = vsel %vm415, %v1957, 0
      %v2051 = vsel %vm415, %v1958, 0
      %v2054 = vsel %vm415, %v1959, 0
      %v2057 = vsel %vm415, %v1960, 0
      %v2060 = vsel %vm415, %v1961, 0
      %v2063 = vsel %vm415, %v1962, 0
      %v2066 = vsel %vm415, %v1963, 0
      %v2069 = vsel %vm415, %v1964, 0
      %v2072 = vsel %vm415, %v1965, 0
      %v2075 = vsel %vm415, %v1966, 0
      %v2078 = vsel %vm415, %v1967, 0
      %v2081 = vsel %vm415, %v1968, 0
      %v2084 = vsel %vm415, %v1969, 0
      %v2087 = vsel %vm415, %v1970, 0
      %v2090 = vsel %vm415, %v1971, 0
      %v2093 = vsel %vm415, %v1972, 0
      %v2096 = vsel %vm415, %v1973, 0
      %v2099 = vsel %vm415, %v1974, 0
      %v2102 = vsel %vm415, %v1975, 0
      %v2105 = vsel %vm415, %v1976, 0
      %v2108 = vsel %vm415, %v1977, 0
      %v2111 = vsel %vm415, %v1978, 0
      %v2114 = vsel %vm415, %v1979, 0
      %v2117 = vsel %vm415, %v1980, 0
      %v2120 = vsel %vm415, %v1981, 0
      %v2123 = vsel %vm415, %v1982, 0
      %v2126 = vsel %vm415, %v1983, 0
      %v2129 = vsel %vm415, %v1984, 0
      %v2132 = vsel %vm748, %v1986, 0
      %2134 = vmatpush.msra.mxu0 0.0
      %2135 = vmatpush.msra.mxu0 0.0
      %2136 = vmatpush.msra.mxu0 0.0
      %2137 = vmatpush.msra.mxu0 0.0
      %2138 = vmatpush.msra.mxu0 0.0
      %2139 = vmatpush.msra.mxu0 0.0
      %2140 = vmatpush.msra.mxu0 0.0
      %2141 = vmatpush.msra.mxu0 0.0
      %2142 = vmatpush.msra.mxu0 0.0
      %2143 = vmatpush.msra.mxu0 0.0
      %2144 = vmatpush.msra.mxu0 0.0
      %2145 = vmatpush.msra.mxu0 0.0
      %2146 = vmatpush.msra.mxu0 0.0
      %2147 = vmatpush.msra.mxu0 0.0
      %2148 = vmatpush.msra.mxu0 0.0
      %2149 = vmatpush.msra.mxu0 %v2132
      %2150 = vmatmul.f32.gmra.mxu0 %v1988
      %v2151 = vpop.f32.mrf.mxu0
      %v2152 = vadd.f32 0.0, %v2151
      %2153 = vmatmul.f32.gmra.mxu0 %v1991
      %v2154 = vpop.f32.mrf.mxu0
      %v2155 = vadd.f32 0.0, %v2154
      %2156 = vmatmul.f32.gmra.mxu0 %v1994
      %v2157 = vpop.f32.mrf.mxu0
      %2158 = vmatmul.f32.gmra.mxu0 %v1997
      %v2159 = vpop.f32.mrf.mxu0
      %v2160 = vadd.f32 0.0, %v2159
      %2161 = vmatmul.f32.gmra.mxu0 %v2000
      %v2162 = vpop.f32.mrf.mxu0
      %v2163 = vadd.f32 0.0, %v2162
      %2164 = vmatmul.f32.gmra.mxu0 %v2003
      %v2165 = vpop.f32.mrf.mxu0
      %2166 = vmatmul.f32.gmra.mxu0 %v2006
      %v2167 = vpop.f32.mrf.mxu0
      %v2168 = vadd.f32 0.0, %v2167
      %2169 = vmatmul.f32.gmra.mxu0 %v2009
      %v2170 = vpop.f32.mrf.mxu0
      %v2171 = vadd.f32 0.0, %v2170
      %2172 = vmatmul.f32.gmra.mxu0 %v2012
      %v2173 = vpop.f32.mrf.mxu0
      %2174 = vmatmul.f32.gmra.mxu0 %v2015
      %v2175 = vpop.f32.mrf.mxu0
      %v2176 = vadd.f32 0.0, %v2175
      %2177 = vmatmul.f32.gmra.mxu0 %v2018
      %v2178 = vpop.f32.mrf.mxu0
      %v2179 = vadd.f32 0.0, %v2178
      %2180 = vmatmul.f32.gmra.mxu0 %v2021
      %v2181 = vpop.f32.mrf.mxu0
      %2182 = vmatmul.f32.gmra.mxu0 %v2024
      %v2183 = vpop.f32.mrf.mxu0
      %v2184 = vadd.f32 0.0, %v2183
      %2185 = vmatmul.f32.gmra.mxu0 %v2027
      %v2186 = vpop.f32.mrf.mxu0
      %v2187 = vadd.f32 0.0, %v2186
      %2188 = vmatmul.f32.gmra.mxu0 %v2030
      %v2189 = vpop.f32.mrf.mxu0
      %2190 = vmatmul.f32.gmra.mxu0 %v2033
      %v2191 = vpop.f32.mrf.mxu0
      %v2192 = vadd.f32 0.0, %v2191
      %2193 = vmatmul.f32.gmra.mxu0 %v2036
      %v2194 = vpop.f32.mrf.mxu0
      %v2195 = vadd.f32 0.0, %v2194
      %2196 = vmatmul.f32.gmra.mxu0 %v2039
      %v2197 = vpop.f32.mrf.mxu0
      %2198 = vmatmul.f32.gmra.mxu0 %v2042
      %v2199 = vpop.f32.mrf.mxu0
      %v2200 = vadd.f32 0.0, %v2199
      %2201 = vmatmul.f32.gmra.mxu0 %v2045
      %v2202 = vpop.f32.mrf.mxu0
      %v2203 = vadd.f32 0.0, %v2202
      %2204 = vmatmul.f32.gmra.mxu0 %v2048
      %v2205 = vpop.f32.mrf.mxu0
      %2206 = vmatmul.f32.gmra.mxu0 %v2051
      %v2207 = vpop.f32.mrf.mxu0
      %v2208 = vadd.f32 0.0, %v2207
      %2209 = vmatmul.f32.gmra.mxu0 %v2054
      %v2210 = vpop.f32.mrf.mxu0
      %v2211 = vadd.f32 0.0, %v2210
      %2212 = vmatmul.f32.gmra.mxu0 %v2057
      %v2213 = vpop.f32.mrf.mxu0
      %2214 = vmatmul.f32.gmra.mxu0 %v2060
      %v2215 = vpop.f32.mrf.mxu0
      %v2216 = vadd.f32 0.0, %v2215
      %2217 = vmatmul.f32.gmra.mxu0 %v2063
      %v2218 = vpop.f32.mrf.mxu0
      %v2219 = vadd.f32 0.0, %v2218
      %2220 = vmatmul.f32.gmra.mxu0 %v2066
      %v2221 = vpop.f32.mrf.mxu0
      %2222 = vmatmul.f32.gmra.mxu0 %v2069
      %v2223 = vpop.f32.mrf.mxu0
      %v2224 = vadd.f32 0.0, %v2223
      %2225 = vmatmul.f32.gmra.mxu0 %v2072
      %v2226 = vpop.f32.mrf.mxu0
      %v2227 = vadd.f32 0.0, %v2226
      %2228 = vmatmul.f32.gmra.mxu0 %v2075
      %v2229 = vpop.f32.mrf.mxu0
      %2230 = vmatmul.f32.gmra.mxu0 %v2078
      %v2231 = vpop.f32.mrf.mxu0
      %v2232 = vadd.f32 0.0, %v2231
      %2233 = vmatmul.f32.gmra.mxu0 %v2081
      %v2234 = vpop.f32.mrf.mxu0
      %v2235 = vadd.f32 0.0, %v2234
      %2236 = vmatmul.f32.gmra.mxu0 %v2084
      %v2237 = vpop.f32.mrf.mxu0
      %2238 = vmatmul.f32.gmra.mxu0 %v2087
      %v2239 = vpop.f32.mrf.mxu0
      %v2240 = vadd.f32 0.0, %v2239
      %2241 = vmatmul.f32.gmra.mxu0 %v2090
      %v2242 = vpop.f32.mrf.mxu0
      %v2243 = vadd.f32 0.0, %v2242
      %2244 = vmatmul.f32.gmra.mxu0 %v2093
      %v2245 = vpop.f32.mrf.mxu0
      %2246 = vmatmul.f32.gmra.mxu0 %v2096
      %v2247 = vpop.f32.mrf.mxu0
      %v2248 = vadd.f32 0.0, %v2247
      %2249 = vmatmul.f32.gmra.mxu0 %v2099
      %v2250 = vpop.f32.mrf.mxu0
      %v2251 = vadd.f32 0.0, %v2250
      %2252 = vmatmul.f32.gmra.mxu0 %v2102
      %v2253 = vpop.f32.mrf.mxu0
      %2254 = vmatmul.f32.gmra.mxu0 %v2105
      %v2255 = vpop.f32.mrf.mxu0
      %v2256 = vadd.f32 0.0, %v2255
      %2257 = vmatmul.f32.gmra.mxu0 %v2108
      %v2258 = vpop.f32.mrf.mxu0
      %v2259 = vadd.f32 0.0, %v2258
      %2260 = vmatmul.f32.gmra.mxu0 %v2111
      %v2261 = vpop.f32.mrf.mxu0
      %2262 = vmatmul.f32.gmra.mxu0 %v2114
      %v2263 = vpop.f32.mrf.mxu0
      %v2264 = vadd.f32 0.0, %v2263
      %2265 = vmatmul.f32.gmra.mxu0 %v2117
      %v2266 = vpop.f32.mrf.mxu0
      %v2267 = vadd.f32 0.0, %v2266
      %2268 = vmatmul.f32.gmra.mxu0 %v2120
      %v2269 = vpop.f32.mrf.mxu0
      %2270 = vmatmul.f32.gmra.mxu0 %v2123
      %v2271 = vpop.f32.mrf.mxu0
      %v2272 = vadd.f32 0.0, %v2271
      %2273 = vmatmul.f32.gmra.mxu0 %v2126
      %v2274 = vpop.f32.mrf.mxu0
      %v2275 = vadd.f32 0.0, %v2274
      %2276 = vmatmul.f32.gmra.mxu0 %v2129
      %v2277 = vpop.f32.mrf.mxu0
      %2278 = vdwg.mxu0
      %v2279 = vadd.f32 %v1905, %v2152
      %v2280 = vadd.f32 %v1906, %v2155
      %v2281 = vadd.f32 %v1907, %v2160
      %v2282 = vadd.f32 %v1908, %v2163
      %v2283 = vadd.f32 %v1909, %v2168
      %v2284 = vadd.f32 %v1910, %v2171
      %v2285 = vadd.f32 %v1911, %v2176
      %v2286 = vadd.f32 %v1912, %v2179
      %v2287 = vadd.f32 %v1913, %v2184
      %v2288 = vadd.f32 %v1914, %v2187
      %v2289 = vadd.f32 %v1915, %v2192
      %v2290 = vadd.f32 %v1916, %v2195
      %v2291 = vadd.f32 %v1917, %v2200
      %v2292 = vadd.f32 %v1918, %v2203
      %v2293 = vadd.f32 %v1919, %v2208
      %v2294 = vadd.f32 %v1920, %v2211
      %v2295 = vadd.f32 %v1921, %v2216
      %v2296 = vadd.f32 %v1922, %v2219
      %v2297 = vadd.f32 %v1923, %v2224
      %v2298 = vadd.f32 %v1924, %v2227
      %v2299 = vadd.f32 %v1925, %v2232
      %v2300 = vadd.f32 %v1926, %v2235
      %v2301 = vadd.f32 %v1927, %v2240
      %v2302 = vadd.f32 %v1928, %v2243
      %v2303 = vadd.f32 %v1929, %v2248
      %v2304 = vadd.f32 %v1930, %v2251
      %v2305 = vadd.f32 %v1931, %v2256
      %v2306 = vadd.f32 %v1932, %v2259
      %v2307 = vadd.f32 %v1933, %v2264
      %v2308 = vadd.f32 %v1934, %v2267
      %v2309 = vadd.f32 %v1935, %v2272
      %v2310 = vadd.f32 %v1936, %v2275
      %v2311 = vld [vmem:[#allocation2 + $0x1a] sm:$0xff]
      %v2312 = vld [vmem:[#allocation2 + $0x22] sm:$0xff]
      %v2313 = vld [vmem:[#allocation2 + $0x2a] sm:$0xff]
      %v2314 = vld [vmem:[#allocation2 + $0x32] sm:$0xff]
      %v2315 = vld [vmem:[#allocation2 + $0x3a] sm:$0xff]
      %v2316 = vld [vmem:[#allocation2 + $0x42] sm:$0xff]
      %v2317 = vld [vmem:[#allocation2 + $0x4a] sm:$0xff]
      %v2318 = vld [vmem:[#allocation2 + $0x52] sm:$0xff]
      %v2319 = vld [vmem:[#allocation2 + $0x5a] sm:$0xff]
      %v2320 = vld [vmem:[#allocation2 + $0x62] sm:$0xff]
      %v2321 = vld [vmem:[#allocation2 + $0x6a] sm:$0xff]
      %v2322 = vld [vmem:[#allocation2 + $0x72] sm:$0xff]
      %v2323 = vld [vmem:[#allocation2 + $0x7a] sm:$0xff]
      %v2324 = vld [vmem:[#allocation2 + $0x82] sm:$0xff]
      %v2325 = vld [vmem:[#allocation2 + $0x8a] sm:$0xff]
      %v2326 = vld [vmem:[#allocation2 + $0x92] sm:$0xff]
      %v2327 = vld [vmem:[#allocation2 + $0x9a] sm:$0xff]
      %v2328 = vld [vmem:[#allocation2 + $0xa2] sm:$0xff]
      %v2329 = vld [vmem:[#allocation2 + $0xaa] sm:$0xff]
      %v2330 = vld [vmem:[#allocation2 + $0xb2] sm:$0xff]
      %v2331 = vld [vmem:[#allocation2 + $0xba] sm:$0xff]
      %v2332 = vld [vmem:[#allocation2 + $0xc2] sm:$0xff]
      %v2333 = vld [vmem:[#allocation2 + $0xca] sm:$0xff]
      %v2334 = vld [vmem:[#allocation2 + $0xd2] sm:$0xff]
      %v2335 = vld [vmem:[#allocation2 + $0xda] sm:$0xff]
      %v2336 = vld [vmem:[#allocation2 + $0xe2] sm:$0xff]
      %v2337 = vld [vmem:[#allocation2 + $0xea] sm:$0xff]
      %v2338 = vld [vmem:[#allocation2 + $0xf2] sm:$0xff]
      %v2339 = vld [vmem:[#allocation2 + $0xfa] sm:$0xff]
      %v2340 = vld [vmem:[#allocation2 + $0x102] sm:$0xff]
      %v2341 = vld [vmem:[#allocation2 + $0x10a] sm:$0xff]
      %v2342 = vld [vmem:[#allocation2 + $0x112] sm:$0xff]
      %v2343 = vld [vmem:[#allocation2 + $0x11a] sm:$0xff]
      %v2344 = vld [vmem:[#allocation2 + $0x122] sm:$0xff]
      %v2345 = vld [vmem:[#allocation2 + $0x12a] sm:$0xff]
      %v2346 = vld [vmem:[#allocation2 + $0x132] sm:$0xff]
      %v2347 = vld [vmem:[#allocation2 + $0x13a] sm:$0xff]
      %v2348 = vld [vmem:[#allocation2 + $0x142] sm:$0xff]
      %v2349 = vld [vmem:[#allocation2 + $0x14a] sm:$0xff]
      %v2350 = vld [vmem:[#allocation2 + $0x152] sm:$0xff]
      %v2351 = vld [vmem:[#allocation2 + $0x15a] sm:$0xff]
      %v2352 = vld [vmem:[#allocation2 + $0x162] sm:$0xff]
      %v2353 = vld [vmem:[#allocation2 + $0x16a] sm:$0xff]
      %v2354 = vld [vmem:[#allocation2 + $0x172] sm:$0xff]
      %v2355 = vld [vmem:[#allocation2 + $0x17a] sm:$0xff]
      %v2356 = vld [vmem:[#allocation2 + $0x182] sm:$0xff]
      %v2357 = vld [vmem:[#allocation2 + $0x18a] sm:$0xff]
      %v2358 = vld [vmem:[#allocation2 + $0x192] sm:$0xff]
      %s2359 = scalar_lea.vmem %s3, 20
      %v2360 = vld [vmem:[%s2359] sm:$0xf]
      %v2362 = vsel %vm415, %v2311, 0
      %v2365 = vsel %vm415, %v2312, 0
      %v2368 = vsel %vm415, %v2313, 0
      %v2371 = vsel %vm415, %v2314, 0
      %v2374 = vsel %vm415, %v2315, 0
      %v2377 = vsel %vm415, %v2316, 0
      %v2380 = vsel %vm415, %v2317, 0
      %v2383 = vsel %vm415, %v2318, 0
      %v2386 = vsel %vm415, %v2319, 0
      %v2389 = vsel %vm415, %v2320, 0
      %v2392 = vsel %vm415, %v2321, 0
      %v2395 = vsel %vm415, %v2322, 0
      %v2398 = vsel %vm415, %v2323, 0
      %v2401 = vsel %vm415, %v2324, 0
      %v2404 = vsel %vm415, %v2325, 0
      %v2407 = vsel %vm415, %v2326, 0
      %v2410 = vsel %vm415, %v2327, 0
      %v2413 = vsel %vm415, %v2328, 0
      %v2416 = vsel %vm415, %v2329, 0
      %v2419 = vsel %vm415, %v2330, 0
      %v2422 = vsel %vm415, %v2331, 0
      %v2425 = vsel %vm415, %v2332, 0
      %v2428 = vsel %vm415, %v2333, 0
      %v2431 = vsel %vm415, %v2334, 0
      %v2434 = vsel %vm415, %v2335, 0
      %v2437 = vsel %vm415, %v2336, 0
      %v2440 = vsel %vm415, %v2337, 0
      %v2443 = vsel %vm415, %v2338, 0
      %v2446 = vsel %vm415, %v2339, 0
      %v2449 = vsel %vm415, %v2340, 0
      %v2452 = vsel %vm415, %v2341, 0
      %v2455 = vsel %vm415, %v2342, 0
      %v2458 = vsel %vm415, %v2343, 0
      %v2461 = vsel %vm415, %v2344, 0
      %v2464 = vsel %vm415, %v2345, 0
      %v2467 = vsel %vm415, %v2346, 0
      %v2470 = vsel %vm415, %v2347, 0
      %v2473 = vsel %vm415, %v2348, 0
      %v2476 = vsel %vm415, %v2349, 0
      %v2479 = vsel %vm415, %v2350, 0
      %v2482 = vsel %vm415, %v2351, 0
      %v2485 = vsel %vm415, %v2352, 0
      %v2488 = vsel %vm415, %v2353, 0
      %v2491 = vsel %vm415, %v2354, 0
      %v2494 = vsel %vm415, %v2355, 0
      %v2497 = vsel %vm415, %v2356, 0
      %v2500 = vsel %vm415, %v2357, 0
      %v2503 = vsel %vm415, %v2358, 0
      %v2506 = vsel %vm748, %v2360, 0
      %2508 = vmatpush.msra.mxu0 0.0
      %2509 = vmatpush.msra.mxu0 0.0
      %2510 = vmatpush.msra.mxu0 0.0
      %2511 = vmatpush.msra.mxu0 0.0
      %2512 = vmatpush.msra.mxu0 0.0
      %2513 = vmatpush.msra.mxu0 0.0
      %2514 = vmatpush.msra.mxu0 0.0
      %2515 = vmatpush.msra.mxu0 0.0
      %2516 = vmatpush.msra.mxu0 0.0
      %2517 = vmatpush.msra.mxu0 0.0
      %2518 = vmatpush.msra.mxu0 0.0
      %2519 = vmatpush.msra.mxu0 0.0
      %2520 = vmatpush.msra.mxu0 0.0
      %2521 = vmatpush.msra.mxu0 0.0
      %2522 = vmatpush.msra.mxu0 0.0
      %2523 = vmatpush.msra.mxu0 %v2506
      %2524 = vmatmul.f32.gmra.mxu0 %v2362
      %v2525 = vpop.f32.mrf.mxu0
      %v2526 = vadd.f32 0.0, %v2525
      %2527 = vmatmul.f32.gmra.mxu0 %v2365
      %v2528 = vpop.f32.mrf.mxu0
      %v2529 = vadd.f32 0.0, %v2528
      %2530 = vmatmul.f32.gmra.mxu0 %v2368
      %v2531 = vpop.f32.mrf.mxu0
      %2532 = vmatmul.f32.gmra.mxu0 %v2371
      %v2533 = vpop.f32.mrf.mxu0
      %v2534 = vadd.f32 0.0, %v2533
      %2535 = vmatmul.f32.gmra.mxu0 %v2374
      %v2536 = vpop.f32.mrf.mxu0
      %v2537 = vadd.f32 0.0, %v2536
      %2538 = vmatmul.f32.gmra.mxu0 %v2377
      %v2539 = vpop.f32.mrf.mxu0
      %2540 = vmatmul.f32.gmra.mxu0 %v2380
      %v2541 = vpop.f32.mrf.mxu0
      %v2542 = vadd.f32 0.0, %v2541
      %2543 = vmatmul.f32.gmra.mxu0 %v2383
      %v2544 = vpop.f32.mrf.mxu0
      %v2545 = vadd.f32 0.0, %v2544
      %2546 = vmatmul.f32.gmra.mxu0 %v2386
      %v2547 = vpop.f32.mrf.mxu0
      %2548 = vmatmul.f32.gmra.mxu0 %v2389
      %v2549 = vpop.f32.mrf.mxu0
      %v2550 = vadd.f32 0.0, %v2549
      %2551 = vmatmul.f32.gmra.mxu0 %v2392
      %v2552 = vpop.f32.mrf.mxu0
      %v2553 = vadd.f32 0.0, %v2552
      %2554 = vmatmul.f32.gmra.mxu0 %v2395
      %v2555 = vpop.f32.mrf.mxu0
      %2556 = vmatmul.f32.gmra.mxu0 %v2398
      %v2557 = vpop.f32.mrf.mxu0
      %v2558 = vadd.f32 0.0, %v2557
      %2559 = vmatmul.f32.gmra.mxu0 %v2401
      %v2560 = vpop.f32.mrf.mxu0
      %v2561 = vadd.f32 0.0, %v2560
      %2562 = vmatmul.f32.gmra.mxu0 %v2404
      %v2563 = vpop.f32.mrf.mxu0
      %2564 = vmatmul.f32.gmra.mxu0 %v2407
      %v2565 = vpop.f32.mrf.mxu0
      %v2566 = vadd.f32 0.0, %v2565
      %2567 = vmatmul.f32.gmra.mxu0 %v2410
      %v2568 = vpop.f32.mrf.mxu0
      %v2569 = vadd.f32 0.0, %v2568
      %2570 = vmatmul.f32.gmra.mxu0 %v2413
      %v2571 = vpop.f32.mrf.mxu0
      %2572 = vmatmul.f32.gmra.mxu0 %v2416
      %v2573 = vpop.f32.mrf.mxu0
      %v2574 = vadd.f32 0.0, %v2573
      %2575 = vmatmul.f32.gmra.mxu0 %v2419
      %v2576 = vpop.f32.mrf.mxu0
      %v2577 = vadd.f32 0.0, %v2576
      %2578 = vmatmul.f32.gmra.mxu0 %v2422
      %v2579 = vpop.f32.mrf.mxu0
      %2580 = vmatmul.f32.gmra.mxu0 %v2425
      %v2581 = vpop.f32.mrf.mxu0
      %v2582 = vadd.f32 0.0, %v2581
      %2583 = vmatmul.f32.gmra.mxu0 %v2428
      %v2584 = vpop.f32.mrf.mxu0
      %v2585 = vadd.f32 0.0, %v2584
      %2586 = vmatmul.f32.gmra.mxu0 %v2431
      %v2587 = vpop.f32.mrf.mxu0
      %2588 = vmatmul.f32.gmra.mxu0 %v2434
      %v2589 = vpop.f32.mrf.mxu0
      %v2590 = vadd.f32 0.0, %v2589
      %2591 = vmatmul.f32.gmra.mxu0 %v2437
      %v2592 = vpop.f32.mrf.mxu0
      %v2593 = vadd.f32 0.0, %v2592
      %2594 = vmatmul.f32.gmra.mxu0 %v2440
      %v2595 = vpop.f32.mrf.mxu0
      %2596 = vmatmul.f32.gmra.mxu0 %v2443
      %v2597 = vpop.f32.mrf.mxu0
      %v2598 = vadd.f32 0.0, %v2597
      %2599 = vmatmul.f32.gmra.mxu0 %v2446
      %v2600 = vpop.f32.mrf.mxu0
      %v2601 = vadd.f32 0.0, %v2600
      %2602 = vmatmul.f32.gmra.mxu0 %v2449
      %v2603 = vpop.f32.mrf.mxu0
      %2604 = vmatmul.f32.gmra.mxu0 %v2452
      %v2605 = vpop.f32.mrf.mxu0
      %v2606 = vadd.f32 0.0, %v2605
      %2607 = vmatmul.f32.gmra.mxu0 %v2455
      %v2608 = vpop.f32.mrf.mxu0
      %v2609 = vadd.f32 0.0, %v2608
      %2610 = vmatmul.f32.gmra.mxu0 %v2458
      %v2611 = vpop.f32.mrf.mxu0
      %2612 = vmatmul.f32.gmra.mxu0 %v2461
      %v2613 = vpop.f32.mrf.mxu0
      %v2614 = vadd.f32 0.0, %v2613
      %2615 = vmatmul.f32.gmra.mxu0 %v2464
      %v2616 = vpop.f32.mrf.mxu0
      %v2617 = vadd.f32 0.0, %v2616
      %2618 = vmatmul.f32.gmra.mxu0 %v2467
      %v2619 = vpop.f32.mrf.mxu0
      %2620 = vmatmul.f32.gmra.mxu0 %v2470
      %v2621 = vpop.f32.mrf.mxu0
      %v2622 = vadd.f32 0.0, %v2621
      %2623 = vmatmul.f32.gmra.mxu0 %v2473
      %v2624 = vpop.f32.mrf.mxu0
      %v2625 = vadd.f32 0.0, %v2624
      %2626 = vmatmul.f32.gmra.mxu0 %v2476
      %v2627 = vpop.f32.mrf.mxu0
      %2628 = vmatmul.f32.gmra.mxu0 %v2479
      %v2629 = vpop.f32.mrf.mxu0
      %v2630 = vadd.f32 0.0, %v2629
      %2631 = vmatmul.f32.gmra.mxu0 %v2482
      %v2632 = vpop.f32.mrf.mxu0
      %v2633 = vadd.f32 0.0, %v2632
      %2634 = vmatmul.f32.gmra.mxu0 %v2485
      %v2635 = vpop.f32.mrf.mxu0
      %2636 = vmatmul.f32.gmra.mxu0 %v2488
      %v2637 = vpop.f32.mrf.mxu0
      %v2638 = vadd.f32 0.0, %v2637
      %2639 = vmatmul.f32.gmra.mxu0 %v2491
      %v2640 = vpop.f32.mrf.mxu0
      %v2641 = vadd.f32 0.0, %v2640
      %2642 = vmatmul.f32.gmra.mxu0 %v2494
      %v2643 = vpop.f32.mrf.mxu0
      %2644 = vmatmul.f32.gmra.mxu0 %v2497
      %v2645 = vpop.f32.mrf.mxu0
      %v2646 = vadd.f32 0.0, %v2645
      %2647 = vmatmul.f32.gmra.mxu0 %v2500
      %v2648 = vpop.f32.mrf.mxu0
      %v2649 = vadd.f32 0.0, %v2648
      %2650 = vmatmul.f32.gmra.mxu0 %v2503
      %v2651 = vpop.f32.mrf.mxu0
      %2652 = vdwg.mxu0
      %v2653 = vadd.f32 %v2279, %v2526
      %v2654 = vadd.f32 %v2280, %v2529
      %v2655 = vadd.f32 %v2281, %v2534
      %v2656 = vadd.f32 %v2282, %v2537
      %v2657 = vadd.f32 %v2283, %v2542
      %v2658 = vadd.f32 %v2284, %v2545
      %v2659 = vadd.f32 %v2285, %v2550
      %v2660 = vadd.f32 %v2286, %v2553
      %v2661 = vadd.f32 %v2287, %v2558
      %v2662 = vadd.f32 %v2288, %v2561
      %v2663 = vadd.f32 %v2289, %v2566
      %v2664 = vadd.f32 %v2290, %v2569
      %v2665 = vadd.f32 %v2291, %v2574
      %v2666 = vadd.f32 %v2292, %v2577
      %v2667 = vadd.f32 %v2293, %v2582
      %v2668 = vadd.f32 %v2294, %v2585
      %v2669 = vadd.f32 %v2295, %v2590
      %v2670 = vadd.f32 %v2296, %v2593
      %v2671 = vadd.f32 %v2297, %v2598
      %v2672 = vadd.f32 %v2298, %v2601
      %v2673 = vadd.f32 %v2299, %v2606
      %v2674 = vadd.f32 %v2300, %v2609
      %v2675 = vadd.f32 %v2301, %v2614
      %v2676 = vadd.f32 %v2302, %v2617
      %v2677 = vadd.f32 %v2303, %v2622
      %v2678 = vadd.f32 %v2304, %v2625
      %v2679 = vadd.f32 %v2305, %v2630
      %v2680 = vadd.f32 %v2306, %v2633
      %v2681 = vadd.f32 %v2307, %v2638
      %v2682 = vadd.f32 %v2308, %v2641
      %v2683 = vadd.f32 %v2309, %v2646
      %v2684 = vadd.f32 %v2310, %v2649
      %v2685 = vld [vmem:[#allocation2 + $0x30] sm:$0xff]
      %v2686 = vld [vmem:[#allocation2 + $0x38] sm:$0xff]
      %v2687 = vld [vmem:[#allocation2 + $0x40] sm:$0xff]
      %v2688 = vld [vmem:[#allocation2 + $0x48] sm:$0xff]
      %v2689 = vld [vmem:[#allocation2 + $0x50] sm:$0xff]
      %v2690 = vld [vmem:[#allocation2 + $0x58] sm:$0xff]
      %v2691 = vld [vmem:[#allocation2 + $0x60] sm:$0xff]
      %v2692 = vld [vmem:[#allocation2 + $0x68] sm:$0xff]
      %v2693 = vld [vmem:[#allocation2 + $0x70] sm:$0xff]
      %v2694 = vld [vmem:[#allocation2 + $0x78] sm:$0xff]
      %v2695 = vld [vmem:[#allocation2 + $0x80] sm:$0xff]
      %v2696 = vld [vmem:[#allocation2 + $0x88] sm:$0xff]
      %v2697 = vld [vmem:[#allocation2 + $0x90] sm:$0xff]
      %v2698 = vld [vmem:[#allocation2 + $0x98] sm:$0xff]
      %v2699 = vld [vmem:[#allocation2 + $0xa0] sm:$0xff]
      %v2700 = vld [vmem:[#allocation2 + $0xa8] sm:$0xff]
      %v2701 = vld [vmem:[#allocation2 + $0xb0] sm:$0xff]
      %v2702 = vld [vmem:[#allocation2 + $0xb8] sm:$0xff]
      %v2703 = vld [vmem:[#allocation2 + $0xc0] sm:$0xff]
      %v2704 = vld [vmem:[#allocation2 + $0xc8] sm:$0xff]
      %v2705 = vld [vmem:[#allocation2 + $0xd0] sm:$0xff]
      %v2706 = vld [vmem:[#allocation2 + $0xd8] sm:$0xff]
      %v2707 = vld [vmem:[#allocation2 + $0xe0] sm:$0xff]
      %v2708 = vld [vmem:[#allocation2 + $0xe8] sm:$0xff]
      %v2709 = vld [vmem:[#allocation2 + $0xf0] sm:$0xff]
      %v2710 = vld [vmem:[#allocation2 + $0xf8] sm:$0xff]
      %v2711 = vld [vmem:[#allocation2 + $0x100] sm:$0xff]
      %v2712 = vld [vmem:[#allocation2 + $0x108] sm:$0xff]
      %v2713 = vld [vmem:[#allocation2 + $0x110] sm:$0xff]
      %v2714 = vld [vmem:[#allocation2 + $0x118] sm:$0xff]
      %v2715 = vld [vmem:[#allocation2 + $0x120] sm:$0xff]
      %v2716 = vld [vmem:[#allocation2 + $0x128] sm:$0xff]
      %v2717 = vld [vmem:[#allocation2 + $0x130] sm:$0xff]
      %v2718 = vld [vmem:[#allocation2 + $0x138] sm:$0xff]
      %v2719 = vld [vmem:[#allocation2 + $0x140] sm:$0xff]
      %v2720 = vld [vmem:[#allocation2 + $0x148] sm:$0xff]
      %v2721 = vld [vmem:[#allocation2 + $0x150] sm:$0xff]
      %v2722 = vld [vmem:[#allocation2 + $0x158] sm:$0xff]
      %v2723 = vld [vmem:[#allocation2 + $0x160] sm:$0xff]
      %v2724 = vld [vmem:[#allocation2 + $0x168] sm:$0xff]
      %v2725 = vld [vmem:[#allocation2 + $0x170] sm:$0xff]
      %v2726 = vld [vmem:[#allocation2 + $0x178] sm:$0xff]
      %v2727 = vld [vmem:[#allocation2 + $0x180] sm:$0xff]
      %v2728 = vld [vmem:[#allocation2 + $0x188] sm:$0xff]
      %v2729 = vld [vmem:[#allocation2 + $0x190] sm:$0xff]
      %v2730 = vld [vmem:[#allocation2 + $0x198] sm:$0xff]
      %v2731 = vld [vmem:[#allocation2 + $0x1a0] sm:$0xff]
      %v2732 = vld [vmem:[#allocation2 + $0x1a8] sm:$0xff]
      %s2733 = scalar_lea.vmem %s3, 24
      %v2734 = vld [vmem:[%s2733] sm:$0xf]
      %v2736 = vsel %vm415, %v2685, 0
      %v2739 = vsel %vm415, %v2686, 0
      %v2742 = vsel %vm415, %v2687, 0
      %v2745 = vsel %vm415, %v2688, 0
      %v2748 = vsel %vm415, %v2689, 0
      %v2751 = vsel %vm415, %v2690, 0
      %v2754 = vsel %vm415, %v2691, 0
      %v2757 = vsel %vm415, %v2692, 0
      %v2760 = vsel %vm415, %v2693, 0
      %v2763 = vsel %vm415, %v2694, 0
      %v2766 = vsel %vm415, %v2695, 0
      %v2769 = vsel %vm415, %v2696, 0
      %v2772 = vsel %vm415, %v2697, 0
      %v2775 = vsel %vm415, %v2698, 0
      %v2778 = vsel %vm415, %v2699, 0
      %v2781 = vsel %vm415, %v2700, 0
      %v2784 = vsel %vm415, %v2701, 0
      %v2787 = vsel %vm415, %v2702, 0
      %v2790 = vsel %vm415, %v2703, 0
      %v2793 = vsel %vm415, %v2704, 0
      %v2796 = vsel %vm415, %v2705, 0
      %v2799 = vsel %vm415, %v2706, 0
      %v2802 = vsel %vm415, %v2707, 0
      %v2805 = vsel %vm415, %v2708, 0
      %v2808 = vsel %vm415, %v2709, 0
      %v2811 = vsel %vm415, %v2710, 0
      %v2814 = vsel %vm415, %v2711, 0
      %v2817 = vsel %vm415, %v2712, 0
      %v2820 = vsel %vm415, %v2713, 0
      %v2823 = vsel %vm415, %v2714, 0
      %v2826 = vsel %vm415, %v2715, 0
      %v2829 = vsel %vm415, %v2716, 0
      %v2832 = vsel %vm415, %v2717, 0
      %v2835 = vsel %vm415, %v2718, 0
      %v2838 = vsel %vm415, %v2719, 0
      %v2841 = vsel %vm415, %v2720, 0
      %v2844 = vsel %vm415, %v2721, 0
      %v2847 = vsel %vm415, %v2722, 0
      %v2850 = vsel %vm415, %v2723, 0
      %v2853 = vsel %vm415, %v2724, 0
      %v2856 = vsel %vm415, %v2725, 0
      %v2859 = vsel %vm415, %v2726, 0
      %v2862 = vsel %vm415, %v2727, 0
      %v2865 = vsel %vm415, %v2728, 0
      %v2868 = vsel %vm415, %v2729, 0
      %v2871 = vsel %vm415, %v2730, 0
      %v2874 = vsel %vm415, %v2731, 0
      %v2877 = vsel %vm415, %v2732, 0
      %v2880 = vsel %vm748, %v2734, 0
      %2882 = vmatpush.msra.mxu0 0.0
      %2883 = vmatpush.msra.mxu0 0.0
      %2884 = vmatpush.msra.mxu0 0.0
      %2885 = vmatpush.msra.mxu0 0.0
      %2886 = vmatpush.msra.mxu0 0.0
      %2887 = vmatpush.msra.mxu0 0.0
      %2888 = vmatpush.msra.mxu0 0.0
      %2889 = vmatpush.msra.mxu0 0.0
      %2890 = vmatpush.msra.mxu0 0.0
      %2891 = vmatpush.msra.mxu0 0.0
      %2892 = vmatpush.msra.mxu0 0.0
      %2893 = vmatpush.msra.mxu0 0.0
      %2894 = vmatpush.msra.mxu0 0.0
      %2895 = vmatpush.msra.mxu0 0.0
      %2896 = vmatpush.msra.mxu0 0.0
      %2897 = vmatpush.msra.mxu0 %v2880
      %2898 = vmatmul.f32.gmra.mxu0 %v2736
      %v2899 = vpop.f32.mrf.mxu0
      %v2900 = vadd.f32 0.0, %v2899
      %2901 = vmatmul.f32.gmra.mxu0 %v2739
      %v2902 = vpop.f32.mrf.mxu0
      %v2903 = vadd.f32 0.0, %v2902
      %2904 = vmatmul.f32.gmra.mxu0 %v2742
      %v2905 = vpop.f32.mrf.mxu0
      %2906 = vmatmul.f32.gmra.mxu0 %v2745
      %v2907 = vpop.f32.mrf.mxu0
      %v2908 = vadd.f32 0.0, %v2907
      %2909 = vmatmul.f32.gmra.mxu0 %v2748
      %v2910 = vpop.f32.mrf.mxu0
      %v2911 = vadd.f32 0.0, %v2910
      %2912 = vmatmul.f32.gmra.mxu0 %v2751
      %v2913 = vpop.f32.mrf.mxu0
      %2914 = vmatmul.f32.gmra.mxu0 %v2754
      %v2915 = vpop.f32.mrf.mxu0
      %v2916 = vadd.f32 0.0, %v2915
      %2917 = vmatmul.f32.gmra.mxu0 %v2757
      %v2918 = vpop.f32.mrf.mxu0
      %v2919 = vadd.f32 0.0, %v2918
      %2920 = vmatmul.f32.gmra.mxu0 %v2760
      %v2921 = vpop.f32.mrf.mxu0
      %2922 = vmatmul.f32.gmra.mxu0 %v2763
      %v2923 = vpop.f32.mrf.mxu0
      %v2924 = vadd.f32 0.0, %v2923
      %2925 = vmatmul.f32.gmra.mxu0 %v2766
      %v2926 = vpop.f32.mrf.mxu0
      %v2927 = vadd.f32 0.0, %v2926
      %2928 = vmatmul.f32.gmra.mxu0 %v2769
      %v2929 = vpop.f32.mrf.mxu0
      %2930 = vmatmul.f32.gmra.mxu0 %v2772
      %v2931 = vpop.f32.mrf.mxu0
      %v2932 = vadd.f32 0.0, %v2931
      %2933 = vmatmul.f32.gmra.mxu0 %v2775
      %v2934 = vpop.f32.mrf.mxu0
      %v2935 = vadd.f32 0.0, %v2934
      %2936 = vmatmul.f32.gmra.mxu0 %v2778
      %v2937 = vpop.f32.mrf.mxu0
      %2938 = vmatmul.f32.gmra.mxu0 %v2781
      %v2939 = vpop.f32.mrf.mxu0
      %v2940 = vadd.f32 0.0, %v2939
      %2941 = vmatmul.f32.gmra.mxu0 %v2784
      %v2942 = vpop.f32.mrf.mxu0
      %v2943 = vadd.f32 0.0, %v2942
      %2944 = vmatmul.f32.gmra.mxu0 %v2787
      %v2945 = vpop.f32.mrf.mxu0
      %2946 = vmatmul.f32.gmra.mxu0 %v2790
      %v2947 = vpop.f32.mrf.mxu0
      %v2948 = vadd.f32 0.0, %v2947
      %2949 = vmatmul.f32.gmra.mxu0 %v2793
      %v2950 = vpop.f32.mrf.mxu0
      %v2951 = vadd.f32 0.0, %v2950
      %2952 = vmatmul.f32.gmra.mxu0 %v2796
      %v2953 = vpop.f32.mrf.mxu0
      %2954 = vmatmul.f32.gmra.mxu0 %v2799
      %v2955 = vpop.f32.mrf.mxu0
      %v2956 = vadd.f32 0.0, %v2955
      %2957 = vmatmul.f32.gmra.mxu0 %v2802
      %v2958 = vpop.f32.mrf.mxu0
      %v2959 = vadd.f32 0.0, %v2958
      %2960 = vmatmul.f32.gmra.mxu0 %v2805
      %v2961 = vpop.f32.mrf.mxu0
      %2962 = vmatmul.f32.gmra.mxu0 %v2808
      %v2963 = vpop.f32.mrf.mxu0
      %v2964 = vadd.f32 0.0, %v2963
      %2965 = vmatmul.f32.gmra.mxu0 %v2811
      %v2966 = vpop.f32.mrf.mxu0
      %v2967 = vadd.f32 0.0, %v2966
      %2968 = vmatmul.f32.gmra.mxu0 %v2814
      %v2969 = vpop.f32.mrf.mxu0
      %2970 = vmatmul.f32.gmra.mxu0 %v2817
      %v2971 = vpop.f32.mrf.mxu0
      %v2972 = vadd.f32 0.0, %v2971
      %2973 = vmatmul.f32.gmra.mxu0 %v2820
      %v2974 = vpop.f32.mrf.mxu0
      %v2975 = vadd.f32 0.0, %v2974
      %2976 = vmatmul.f32.gmra.mxu0 %v2823
      %v2977 = vpop.f32.mrf.mxu0
      %2978 = vmatmul.f32.gmra.mxu0 %v2826
      %v2979 = vpop.f32.mrf.mxu0
      %v2980 = vadd.f32 0.0, %v2979
      %2981 = vmatmul.f32.gmra.mxu0 %v2829
      %v2982 = vpop.f32.mrf.mxu0
      %v2983 = vadd.f32 0.0, %v2982
      %2984 = vmatmul.f32.gmra.mxu0 %v2832
      %v2985 = vpop.f32.mrf.mxu0
      %2986 = vmatmul.f32.gmra.mxu0 %v2835
      %v2987 = vpop.f32.mrf.mxu0
      %v2988 = vadd.f32 0.0, %v2987
      %2989 = vmatmul.f32.gmra.mxu0 %v2838
      %v2990 = vpop.f32.mrf.mxu0
      %v2991 = vadd.f32 0.0, %v2990
      %2992 = vmatmul.f32.gmra.mxu0 %v2841
      %v2993 = vpop.f32.mrf.mxu0
      %2994 = vmatmul.f32.gmra.mxu0 %v2844
      %v2995 = vpop.f32.mrf.mxu0
      %v2996 = vadd.f32 0.0, %v2995
      %2997 = vmatmul.f32.gmra.mxu0 %v2847
      %v2998 = vpop.f32.mrf.mxu0
      %v2999 = vadd.f32 0.0, %v2998
      %3000 = vmatmul.f32.gmra.mxu0 %v2850
      %v3001 = vpop.f32.mrf.mxu0
      %3002 = vmatmul.f32.gmra.mxu0 %v2853
      %v3003 = vpop.f32.mrf.mxu0
      %v3004 = vadd.f32 0.0, %v3003
      %3005 = vmatmul.f32.gmra.mxu0 %v2856
      %v3006 = vpop.f32.mrf.mxu0
      %v3007 = vadd.f32 0.0, %v3006
      %3008 = vmatmul.f32.gmra.mxu0 %v2859
      %v3009 = vpop.f32.mrf.mxu0
      %3010 = vmatmul.f32.gmra.mxu0 %v2862
      %v3011 = vpop.f32.mrf.mxu0
      %v3012 = vadd.f32 0.0, %v3011
      %3013 = vmatmul.f32.gmra.mxu0 %v2865
      %v3014 = vpop.f32.mrf.mxu0
      %v3015 = vadd.f32 0.0, %v3014
      %3016 = vmatmul.f32.gmra.mxu0 %v2868
      %v3017 = vpop.f32.mrf.mxu0
      %3018 = vmatmul.f32.gmra.mxu0 %v2871
      %v3019 = vpop.f32.mrf.mxu0
      %v3020 = vadd.f32 0.0, %v3019
      %3021 = vmatmul.f32.gmra.mxu0 %v2874
      %v3022 = vpop.f32.mrf.mxu0
      %v3023 = vadd.f32 0.0, %v3022
      %3024 = vmatmul.f32.gmra.mxu0 %v2877
      %v3025 = vpop.f32.mrf.mxu0
      %3026 = vdwg.mxu0
      %v3027 = vadd.f32 %v2653, %v2900
      %v3028 = vadd.f32 %v2654, %v2903
      %v3029 = vadd.f32 %v2655, %v2908
      %v3030 = vadd.f32 %v2656, %v2911
      %v3031 = vadd.f32 %v2657, %v2916
      %v3032 = vadd.f32 %v2658, %v2919
      %v3033 = vadd.f32 %v2659, %v2924
      %v3034 = vadd.f32 %v2660, %v2927
      %v3035 = vadd.f32 %v2661, %v2932
      %v3036 = vadd.f32 %v2662, %v2935
      %v3037 = vadd.f32 %v2663, %v2940
      %v3038 = vadd.f32 %v2664, %v2943
      %v3039 = vadd.f32 %v2665, %v2948
      %v3040 = vadd.f32 %v2666, %v2951
      %v3041 = vadd.f32 %v2667, %v2956
      %v3042 = vadd.f32 %v2668, %v2959
      %v3043 = vadd.f32 %v2669, %v2964
      %v3044 = vadd.f32 %v2670, %v2967
      %v3045 = vadd.f32 %v2671, %v2972
      %v3046 = vadd.f32 %v2672, %v2975
      %v3047 = vadd.f32 %v2673, %v2980
      %v3048 = vadd.f32 %v2674, %v2983
      %v3049 = vadd.f32 %v2675, %v2988
      %v3050 = vadd.f32 %v2676, %v2991
      %v3051 = vadd.f32 %v2677, %v2996
      %v3052 = vadd.f32 %v2678, %v2999
      %v3053 = vadd.f32 %v2679, %v3004
      %v3054 = vadd.f32 %v2680, %v3007
      %v3055 = vadd.f32 %v2681, %v3012
      %v3056 = vadd.f32 %v2682, %v3015
      %v3057 = vadd.f32 %v2683, %v3020
      %v3058 = vadd.f32 %v2684, %v3023
      %v3059 = vld [vmem:[#allocation2 + $0x31] sm:$0xff]
      %v3060 = vld [vmem:[#allocation2 + $0x39] sm:$0xff]
      %v3061 = vld [vmem:[#allocation2 + $0x41] sm:$0xff]
      %v3062 = vld [vmem:[#allocation2 + $0x49] sm:$0xff]
      %v3063 = vld [vmem:[#allocation2 + $0x51] sm:$0xff]
      %v3064 = vld [vmem:[#allocation2 + $0x59] sm:$0xff]
      %v3065 = vld [vmem:[#allocation2 + $0x61] sm:$0xff]
      %v3066 = vld [vmem:[#allocation2 + $0x69] sm:$0xff]
      %v3067 = vld [vmem:[#allocation2 + $0x71] sm:$0xff]
      %v3068 = vld [vmem:[#allocation2 + $0x79] sm:$0xff]
      %v3069 = vld [vmem:[#allocation2 + $0x81] sm:$0xff]
      %v3070 = vld [vmem:[#allocation2 + $0x89] sm:$0xff]
      %v3071 = vld [vmem:[#allocation2 + $0x91] sm:$0xff]
      %v3072 = vld [vmem:[#allocation2 + $0x99] sm:$0xff]
      %v3073 = vld [vmem:[#allocation2 + $0xa1] sm:$0xff]
      %v3074 = vld [vmem:[#allocation2 + $0xa9] sm:$0xff]
      %v3075 = vld [vmem:[#allocation2 + $0xb1] sm:$0xff]
      %v3076 = vld [vmem:[#allocation2 + $0xb9] sm:$0xff]
      %v3077 = vld [vmem:[#allocation2 + $0xc1] sm:$0xff]
      %v3078 = vld [vmem:[#allocation2 + $0xc9] sm:$0xff]
      %v3079 = vld [vmem:[#allocation2 + $0xd1] sm:$0xff]
      %v3080 = vld [vmem:[#allocation2 + $0xd9] sm:$0xff]
      %v3081 = vld [vmem:[#allocation2 + $0xe1] sm:$0xff]
      %v3082 = vld [vmem:[#allocation2 + $0xe9] sm:$0xff]
      %v3083 = vld [vmem:[#allocation2 + $0xf1] sm:$0xff]
      %v3084 = vld [vmem:[#allocation2 + $0xf9] sm:$0xff]
      %v3085 = vld [vmem:[#allocation2 + $0x101] sm:$0xff]
      %v3086 = vld [vmem:[#allocation2 + $0x109] sm:$0xff]
      %v3087 = vld [vmem:[#allocation2 + $0x111] sm:$0xff]
      %v3088 = vld [vmem:[#allocation2 + $0x119] sm:$0xff]
      %v3089 = vld [vmem:[#allocation2 + $0x121] sm:$0xff]
      %v3090 = vld [vmem:[#allocation2 + $0x129] sm:$0xff]
      %v3091 = vld [vmem:[#allocation2 + $0x131] sm:$0xff]
      %v3092 = vld [vmem:[#allocation2 + $0x139] sm:$0xff]
      %v3093 = vld [vmem:[#allocation2 + $0x141] sm:$0xff]
      %v3094 = vld [vmem:[#allocation2 + $0x149] sm:$0xff]
      %v3095 = vld [vmem:[#allocation2 + $0x151] sm:$0xff]
      %v3096 = vld [vmem:[#allocation2 + $0x159] sm:$0xff]
      %v3097 = vld [vmem:[#allocation2 + $0x161] sm:$0xff]
      %v3098 = vld [vmem:[#allocation2 + $0x169] sm:$0xff]
      %v3099 = vld [vmem:[#allocation2 + $0x171] sm:$0xff]
      %v3100 = vld [vmem:[#allocation2 + $0x179] sm:$0xff]
      %v3101 = vld [vmem:[#allocation2 + $0x181] sm:$0xff]
      %v3102 = vld [vmem:[#allocation2 + $0x189] sm:$0xff]
      %v3103 = vld [vmem:[#allocation2 + $0x191] sm:$0xff]
      %v3104 = vld [vmem:[#allocation2 + $0x199] sm:$0xff]
      %v3105 = vld [vmem:[#allocation2 + $0x1a1] sm:$0xff]
      %v3106 = vld [vmem:[#allocation2 + $0x1a9] sm:$0xff]
      %s3107 = scalar_lea.vmem %s3, 28
      %v3108 = vld [vmem:[%s3107] sm:$0xf]
      %v3110 = vsel %vm415, %v3059, 0
      %v3113 = vsel %vm415, %v3060, 0
      %v3116 = vsel %vm415, %v3061, 0
      %v3119 = vsel %vm415, %v3062, 0
      %v3122 = vsel %vm415, %v3063, 0
      %v3125 = vsel %vm415, %v3064, 0
      %v3128 = vsel %vm415, %v3065, 0
      %v3131 = vsel %vm415, %v3066, 0
      %v3134 = vsel %vm415, %v3067, 0
      %v3137 = vsel %vm415, %v3068, 0
      %v3140 = vsel %vm415, %v3069, 0
      %v3143 = vsel %vm415, %v3070, 0
      %v3146 = vsel %vm415, %v3071, 0
      %v3149 = vsel %vm415, %v3072, 0
      %v3152 = vsel %vm415, %v3073, 0
      %v3155 = vsel %vm415, %v3074, 0
      %v3158 = vsel %vm415, %v3075, 0
      %v3161 = vsel %vm415, %v3076, 0
      %v3164 = vsel %vm415, %v3077, 0
      %v3167 = vsel %vm415, %v3078, 0
      %v3170 = vsel %vm415, %v3079, 0
      %v3173 = vsel %vm415, %v3080, 0
      %v3176 = vsel %vm415, %v3081, 0
      %v3179 = vsel %vm415, %v3082, 0
      %v3182 = vsel %vm415, %v3083, 0
      %v3185 = vsel %vm415, %v3084, 0
      %v3188 = vsel %vm415, %v3085, 0
      %v3191 = vsel %vm415, %v3086, 0
      %v3194 = vsel %vm415, %v3087, 0
      %v3197 = vsel %vm415, %v3088, 0
      %v3200 = vsel %vm415, %v3089, 0
      %v3203 = vsel %vm415, %v3090, 0
      %v3206 = vsel %vm415, %v3091, 0
      %v3209 = vsel %vm415, %v3092, 0
      %v3212 = vsel %vm415, %v3093, 0
      %v3215 = vsel %vm415, %v3094, 0
      %v3218 = vsel %vm415, %v3095, 0
      %v3221 = vsel %vm415, %v3096, 0
      %v3224 = vsel %vm415, %v3097, 0
      %v3227 = vsel %vm415, %v3098, 0
      %v3230 = vsel %vm415, %v3099, 0
      %v3233 = vsel %vm415, %v3100, 0
      %v3236 = vsel %vm415, %v3101, 0
      %v3239 = vsel %vm415, %v3102, 0
      %v3242 = vsel %vm415, %v3103, 0
      %v3245 = vsel %vm415, %v3104, 0
      %v3248 = vsel %vm415, %v3105, 0
      %v3251 = vsel %vm415, %v3106, 0
      %v3254 = vsel %vm748, %v3108, 0
      %3256 = vmatpush.msra.mxu0 0.0
      %3257 = vmatpush.msra.mxu0 0.0
      %3258 = vmatpush.msra.mxu0 0.0
      %3259 = vmatpush.msra.mxu0 0.0
      %3260 = vmatpush.msra.mxu0 0.0
      %3261 = vmatpush.msra.mxu0 0.0
      %3262 = vmatpush.msra.mxu0 0.0
      %3263 = vmatpush.msra.mxu0 0.0
      %3264 = vmatpush.msra.mxu0 0.0
      %3265 = vmatpush.msra.mxu0 0.0
      %3266 = vmatpush.msra.mxu0 0.0
      %3267 = vmatpush.msra.mxu0 0.0
      %3268 = vmatpush.msra.mxu0 0.0
      %3269 = vmatpush.msra.mxu0 0.0
      %3270 = vmatpush.msra.mxu0 0.0
      %3271 = vmatpush.msra.mxu0 %v3254
      %3272 = vmatmul.f32.gmra.mxu0 %v3110
      %v3273 = vpop.f32.mrf.mxu0
      %v3274 = vadd.f32 0.0, %v3273
      %3275 = vmatmul.f32.gmra.mxu0 %v3113
      %v3276 = vpop.f32.mrf.mxu0
      %v3277 = vadd.f32 0.0, %v3276
      %3278 = vmatmul.f32.gmra.mxu0 %v3116
      %v3279 = vpop.f32.mrf.mxu0
      %3280 = vmatmul.f32.gmra.mxu0 %v3119
      %v3281 = vpop.f32.mrf.mxu0
      %v3282 = vadd.f32 0.0, %v3281
      %3283 = vmatmul.f32.gmra.mxu0 %v3122
      %v3284 = vpop.f32.mrf.mxu0
      %v3285 = vadd.f32 0.0, %v3284
      %3286 = vmatmul.f32.gmra.mxu0 %v3125
      %v3287 = vpop.f32.mrf.mxu0
      %3288 = vmatmul.f32.gmra.mxu0 %v3128
      %v3289 = vpop.f32.mrf.mxu0
      %v3290 = vadd.f32 0.0, %v3289
      %3291 = vmatmul.f32.gmra.mxu0 %v3131
      %v3292 = vpop.f32.mrf.mxu0
      %v3293 = vadd.f32 0.0, %v3292
      %3294 = vmatmul.f32.gmra.mxu0 %v3134
      %v3295 = vpop.f32.mrf.mxu0
      %3296 = vmatmul.f32.gmra.mxu0 %v3137
      %v3297 = vpop.f32.mrf.mxu0
      %v3298 = vadd.f32 0.0, %v3297
      %3299 = vmatmul.f32.gmra.mxu0 %v3140
      %v3300 = vpop.f32.mrf.mxu0
      %v3301 = vadd.f32 0.0, %v3300
      %3302 = vmatmul.f32.gmra.mxu0 %v3143
      %v3303 = vpop.f32.mrf.mxu0
      %3304 = vmatmul.f32.gmra.mxu0 %v3146
      %v3305 = vpop.f32.mrf.mxu0
      %v3306 = vadd.f32 0.0, %v3305
      %3307 = vmatmul.f32.gmra.mxu0 %v3149
      %v3308 = vpop.f32.mrf.mxu0
      %v3309 = vadd.f32 0.0, %v3308
      %3310 = vmatmul.f32.gmra.mxu0 %v3152
      %v3311 = vpop.f32.mrf.mxu0
      %3312 = vmatmul.f32.gmra.mxu0 %v3155
      %v3313 = vpop.f32.mrf.mxu0
      %v3314 = vadd.f32 0.0, %v3313
      %3315 = vmatmul.f32.gmra.mxu0 %v3158
      %v3316 = vpop.f32.mrf.mxu0
      %v3317 = vadd.f32 0.0, %v3316
      %3318 = vmatmul.f32.gmra.mxu0 %v3161
      %v3319 = vpop.f32.mrf.mxu0
      %3320 = vmatmul.f32.gmra.mxu0 %v3164
      %v3321 = vpop.f32.mrf.mxu0
      %v3322 = vadd.f32 0.0, %v3321
      %3323 = vmatmul.f32.gmra.mxu0 %v3167
      %v3324 = vpop.f32.mrf.mxu0
      %v3325 = vadd.f32 0.0, %v3324
      %3326 = vmatmul.f32.gmra.mxu0 %v3170
      %v3327 = vpop.f32.mrf.mxu0
      %3328 = vmatmul.f32.gmra.mxu0 %v3173
      %v3329 = vpop.f32.mrf.mxu0
      %v3330 = vadd.f32 0.0, %v3329
      %3331 = vmatmul.f32.gmra.mxu0 %v3176
      %v3332 = vpop.f32.mrf.mxu0
      %v3333 = vadd.f32 0.0, %v3332
      %3334 = vmatmul.f32.gmra.mxu0 %v3179
      %v3335 = vpop.f32.mrf.mxu0
      %3336 = vmatmul.f32.gmra.mxu0 %v3182
      %v3337 = vpop.f32.mrf.mxu0
      %v3338 = vadd.f32 0.0, %v3337
      %3339 = vmatmul.f32.gmra.mxu0 %v3185
      %v3340 = vpop.f32.mrf.mxu0
      %v3341 = vadd.f32 0.0, %v3340
      %3342 = vmatmul.f32.gmra.mxu0 %v3188
      %v3343 = vpop.f32.mrf.mxu0
      %3344 = vmatmul.f32.gmra.mxu0 %v3191
      %v3345 = vpop.f32.mrf.mxu0
      %v3346 = vadd.f32 0.0, %v3345
      %3347 = vmatmul.f32.gmra.mxu0 %v3194
      %v3348 = vpop.f32.mrf.mxu0
      %v3349 = vadd.f32 0.0, %v3348
      %3350 = vmatmul.f32.gmra.mxu0 %v3197
      %v3351 = vpop.f32.mrf.mxu0
      %3352 = vmatmul.f32.gmra.mxu0 %v3200
      %v3353 = vpop.f32.mrf.mxu0
      %v3354 = vadd.f32 0.0, %v3353
      %3355 = vmatmul.f32.gmra.mxu0 %v3203
      %v3356 = vpop.f32.mrf.mxu0
      %v3357 = vadd.f32 0.0, %v3356
      %3358 = vmatmul.f32.gmra.mxu0 %v3206
      %v3359 = vpop.f32.mrf.mxu0
      %3360 = vmatmul.f32.gmra.mxu0 %v3209
      %v3361 = vpop.f32.mrf.mxu0
      %v3362 = vadd.f32 0.0, %v3361
      %3363 = vmatmul.f32.gmra.mxu0 %v3212
      %v3364 = vpop.f32.mrf.mxu0
      %v3365 = vadd.f32 0.0, %v3364
      %3366 = vmatmul.f32.gmra.mxu0 %v3215
      %v3367 = vpop.f32.mrf.mxu0
      %3368 = vmatmul.f32.gmra.mxu0 %v3218
      %v3369 = vpop.f32.mrf.mxu0
      %v3370 = vadd.f32 0.0, %v3369
      %3371 = vmatmul.f32.gmra.mxu0 %v3221
      %v3372 = vpop.f32.mrf.mxu0
      %v3373 = vadd.f32 0.0, %v3372
      %3374 = vmatmul.f32.gmra.mxu0 %v3224
      %v3375 = vpop.f32.mrf.mxu0
      %3376 = vmatmul.f32.gmra.mxu0 %v3227
      %v3377 = vpop.f32.mrf.mxu0
      %v3378 = vadd.f32 0.0, %v3377
      %3379 = vmatmul.f32.gmra.mxu0 %v3230
      %v3380 = vpop.f32.mrf.mxu0
      %v3381 = vadd.f32 0.0, %v3380
      %3382 = vmatmul.f32.gmra.mxu0 %v3233
      %v3383 = vpop.f32.mrf.mxu0
      %3384 = vmatmul.f32.gmra.mxu0 %v3236
      %v3385 = vpop.f32.mrf.mxu0
      %v3386 = vadd.f32 0.0, %v3385
      %3387 = vmatmul.f32.gmra.mxu0 %v3239
      %v3388 = vpop.f32.mrf.mxu0
      %v3389 = vadd.f32 0.0, %v3388
      %3390 = vmatmul.f32.gmra.mxu0 %v3242
      %v3391 = vpop.f32.mrf.mxu0
      %3392 = vmatmul.f32.gmra.mxu0 %v3245
      %v3393 = vpop.f32.mrf.mxu0
      %v3394 = vadd.f32 0.0, %v3393
      %3395 = vmatmul.f32.gmra.mxu0 %v3248
      %v3396 = vpop.f32.mrf.mxu0
      %v3397 = vadd.f32 0.0, %v3396
      %3398 = vmatmul.f32.gmra.mxu0 %v3251
      %v3399 = vpop.f32.mrf.mxu0
      %3400 = vdwg.mxu0
      %v3401 = vadd.f32 %v3027, %v3274
      %v3402 = vadd.f32 %v3028, %v3277
      %v3403 = vadd.f32 %v3029, %v3282
      %v3404 = vadd.f32 %v3030, %v3285
      %v3405 = vadd.f32 %v3031, %v3290
      %v3406 = vadd.f32 %v3032, %v3293
      %v3407 = vadd.f32 %v3033, %v3298
      %v3408 = vadd.f32 %v3034, %v3301
      %v3409 = vadd.f32 %v3035, %v3306
      %v3410 = vadd.f32 %v3036, %v3309
      %v3411 = vadd.f32 %v3037, %v3314
      %v3412 = vadd.f32 %v3038, %v3317
      %v3413 = vadd.f32 %v3039, %v3322
      %v3414 = vadd.f32 %v3040, %v3325
      %v3415 = vadd.f32 %v3041, %v3330
      %v3416 = vadd.f32 %v3042, %v3333
      %v3417 = vadd.f32 %v3043, %v3338
      %v3418 = vadd.f32 %v3044, %v3341
      %v3419 = vadd.f32 %v3045, %v3346
      %v3420 = vadd.f32 %v3046, %v3349
      %v3421 = vadd.f32 %v3047, %v3354
      %v3422 = vadd.f32 %v3048, %v3357
      %v3423 = vadd.f32 %v3049, %v3362
      %v3424 = vadd.f32 %v3050, %v3365
      %v3425 = vadd.f32 %v3051, %v3370
      %v3426 = vadd.f32 %v3052, %v3373
      %v3427 = vadd.f32 %v3053, %v3378
      %v3428 = vadd.f32 %v3054, %v3381
      %v3429 = vadd.f32 %v3055, %v3386
      %v3430 = vadd.f32 %v3056, %v3389
      %v3431 = vadd.f32 %v3057, %v3394
      %v3432 = vadd.f32 %v3058, %v3397
      %v3433 = vld [vmem:[#allocation2 + $0x32] sm:$0xff]
      %v3434 = vld [vmem:[#allocation2 + $0x3a] sm:$0xff]
      %v3435 = vld [vmem:[#allocation2 + $0x42] sm:$0xff]
      %v3436 = vld [vmem:[#allocation2 + $0x4a] sm:$0xff]
      %v3437 = vld [vmem:[#allocation2 + $0x52] sm:$0xff]
      %v3438 = vld [vmem:[#allocation2 + $0x5a] sm:$0xff]
      %v3439 = vld [vmem:[#allocation2 + $0x62] sm:$0xff]
      %v3440 = vld [vmem:[#allocation2 + $0x6a] sm:$0xff]
      %v3441 = vld [vmem:[#allocation2 + $0x72] sm:$0xff]
      %v3442 = vld [vmem:[#allocation2 + $0x7a] sm:$0xff]
      %v3443 = vld [vmem:[#allocation2 + $0x82] sm:$0xff]
      %v3444 = vld [vmem:[#allocation2 + $0x8a] sm:$0xff]
      %v3445 = vld [vmem:[#allocation2 + $0x92] sm:$0xff]
      %v3446 = vld [vmem:[#allocation2 + $0x9a] sm:$0xff]
      %v3447 = vld [vmem:[#allocation2 + $0xa2] sm:$0xff]
      %v3448 = vld [vmem:[#allocation2 + $0xaa] sm:$0xff]
      %v3449 = vld [vmem:[#allocation2 + $0xb2] sm:$0xff]
      %v3450 = vld [vmem:[#allocation2 + $0xba] sm:$0xff]
      %v3451 = vld [vmem:[#allocation2 + $0xc2] sm:$0xff]
      %v3452 = vld [vmem:[#allocation2 + $0xca] sm:$0xff]
      %v3453 = vld [vmem:[#allocation2 + $0xd2] sm:$0xff]
      %v3454 = vld [vmem:[#allocation2 + $0xda] sm:$0xff]
      %v3455 = vld [vmem:[#allocation2 + $0xe2] sm:$0xff]
      %v3456 = vld [vmem:[#allocation2 + $0xea] sm:$0xff]
      %v3457 = vld [vmem:[#allocation2 + $0xf2] sm:$0xff]
      %v3458 = vld [vmem:[#allocation2 + $0xfa] sm:$0xff]
      %v3459 = vld [vmem:[#allocation2 + $0x102] sm:$0xff]
      %v3460 = vld [vmem:[#allocation2 + $0x10a] sm:$0xff]
      %v3461 = vld [vmem:[#allocation2 + $0x112] sm:$0xff]
      %v3462 = vld [vmem:[#allocation2 + $0x11a] sm:$0xff]
      %v3463 = vld [vmem:[#allocation2 + $0x122] sm:$0xff]
      %v3464 = vld [vmem:[#allocation2 + $0x12a] sm:$0xff]
      %v3465 = vld [vmem:[#allocation2 + $0x132] sm:$0xff]
      %v3466 = vld [vmem:[#allocation2 + $0x13a] sm:$0xff]
      %v3467 = vld [vmem:[#allocation2 + $0x142] sm:$0xff]
      %v3468 = vld [vmem:[#allocation2 + $0x14a] sm:$0xff]
      %v3469 = vld [vmem:[#allocation2 + $0x152] sm:$0xff]
      %v3470 = vld [vmem:[#allocation2 + $0x15a] sm:$0xff]
      %v3471 = vld [vmem:[#allocation2 + $0x162] sm:$0xff]
      %v3472 = vld [vmem:[#allocation2 + $0x16a] sm:$0xff]
      %v3473 = vld [vmem:[#allocation2 + $0x172] sm:$0xff]
      %v3474 = vld [vmem:[#allocation2 + $0x17a] sm:$0xff]
      %v3475 = vld [vmem:[#allocation2 + $0x182] sm:$0xff]
      %v3476 = vld [vmem:[#allocation2 + $0x18a] sm:$0xff]
      %v3477 = vld [vmem:[#allocation2 + $0x192] sm:$0xff]
      %v3478 = vld [vmem:[#allocation2 + $0x19a] sm:$0xff]
      %v3479 = vld [vmem:[#allocation2 + $0x1a2] sm:$0xff]
      %v3480 = vld [vmem:[#allocation2 + $0x1aa] sm:$0xff]
      %s3481 = scalar_lea.vmem %s3, 32
      %v3482 = vld [vmem:[%s3481] sm:$0xf]
      %v3484 = vsel %vm415, %v3433, 0
      %v3487 = vsel %vm415, %v3434, 0
      %v3490 = vsel %vm415, %v3435, 0
      %v3493 = vsel %vm415, %v3436, 0
      %v3496 = vsel %vm415, %v3437, 0
      %v3499 = vsel %vm415, %v3438, 0
      %v3502 = vsel %vm415, %v3439, 0
      %v3505 = vsel %vm415, %v3440, 0
      %v3508 = vsel %vm415, %v3441, 0
      %v3511 = vsel %vm415, %v3442, 0
      %v3514 = vsel %vm415, %v3443, 0
      %v3517 = vsel %vm415, %v3444, 0
      %v3520 = vsel %vm415, %v3445, 0
      %v3523 = vsel %vm415, %v3446, 0
      %v3526 = vsel %vm415, %v3447, 0
      %v3529 = vsel %vm415, %v3448, 0
      %v3532 = vsel %vm415, %v3449, 0
      %v3535 = vsel %vm415, %v3450, 0
      %v3538 = vsel %vm415, %v3451, 0
      %v3541 = vsel %vm415, %v3452, 0
      %v3544 = vsel %vm415, %v3453, 0
      %v3547 = vsel %vm415, %v3454, 0
      %v3550 = vsel %vm415, %v3455, 0
      %v3553 = vsel %vm415, %v3456, 0
      %v3556 = vsel %vm415, %v3457, 0
      %v3559 = vsel %vm415, %v3458, 0
      %v3562 = vsel %vm415, %v3459, 0
      %v3565 = vsel %vm415, %v3460, 0
      %v3568 = vsel %vm415, %v3461, 0
      %v3571 = vsel %vm415, %v3462, 0
      %v3574 = vsel %vm415, %v3463, 0
      %v3577 = vsel %vm415, %v3464, 0
      %v3580 = vsel %vm415, %v3465, 0
      %v3583 = vsel %vm415, %v3466, 0
      %v3586 = vsel %vm415, %v3467, 0
      %v3589 = vsel %vm415, %v3468, 0
      %v3592 = vsel %vm415, %v3469, 0
      %v3595 = vsel %vm415, %v3470, 0
      %v3598 = vsel %vm415, %v3471, 0
      %v3601 = vsel %vm415, %v3472, 0
      %v3604 = vsel %vm415, %v3473, 0
      %v3607 = vsel %vm415, %v3474, 0
      %v3610 = vsel %vm415, %v3475, 0
      %v3613 = vsel %vm415, %v3476, 0
      %v3616 = vsel %vm415, %v3477, 0
      %v3619 = vsel %vm415, %v3478, 0
      %v3622 = vsel %vm415, %v3479, 0
      %v3625 = vsel %vm415, %v3480, 0
      %v3628 = vsel %vm748, %v3482, 0
      %3630 = vmatpush.msra.mxu0 0.0
      %3631 = vmatpush.msra.mxu0 0.0
      %3632 = vmatpush.msra.mxu0 0.0
      %3633 = vmatpush.msra.mxu0 0.0
      %3634 = vmatpush.msra.mxu0 0.0
      %3635 = vmatpush.msra.mxu0 0.0
      %3636 = vmatpush.msra.mxu0 0.0
      %3637 = vmatpush.msra.mxu0 0.0
      %3638 = vmatpush.msra.mxu0 0.0
      %3639 = vmatpush.msra.mxu0 0.0
      %3640 = vmatpush.msra.mxu0 0.0
      %3641 = vmatpush.msra.mxu0 0.0
      %3642 = vmatpush.msra.mxu0 0.0
      %3643 = vmatpush.msra.mxu0 0.0
      %3644 = vmatpush.msra.mxu0 0.0
      %3645 = vmatpush.msra.mxu0 %v3628
      %3646 = vmatmul.f32.gmra.mxu0 %v3484
      %v3647 = vpop.f32.mrf.mxu0
      %v3648 = vadd.f32 0.0, %v3647
      %3649 = vmatmul.f32.gmra.mxu0 %v3487
      %v3650 = vpop.f32.mrf.mxu0
      %v3651 = vadd.f32 0.0, %v3650
      %3652 = vmatmul.f32.gmra.mxu0 %v3490
      %v3653 = vpop.f32.mrf.mxu0
      %3654 = vmatmul.f32.gmra.mxu0 %v3493
      %v3655 = vpop.f32.mrf.mxu0
      %v3656 = vadd.f32 0.0, %v3655
      %3657 = vmatmul.f32.gmra.mxu0 %v3496
      %v3658 = vpop.f32.mrf.mxu0
      %v3659 = vadd.f32 0.0, %v3658
      %3660 = vmatmul.f32.gmra.mxu0 %v3499
      %v3661 = vpop.f32.mrf.mxu0
      %3662 = vmatmul.f32.gmra.mxu0 %v3502
      %v3663 = vpop.f32.mrf.mxu0
      %v3664 = vadd.f32 0.0, %v3663
      %3665 = vmatmul.f32.gmra.mxu0 %v3505
      %v3666 = vpop.f32.mrf.mxu0
      %v3667 = vadd.f32 0.0, %v3666
      %3668 = vmatmul.f32.gmra.mxu0 %v3508
      %v3669 = vpop.f32.mrf.mxu0
      %3670 = vmatmul.f32.gmra.mxu0 %v3511
      %v3671 = vpop.f32.mrf.mxu0
      %v3672 = vadd.f32 0.0, %v3671
      %3673 = vmatmul.f32.gmra.mxu0 %v3514
      %v3674 = vpop.f32.mrf.mxu0
      %v3675 = vadd.f32 0.0, %v3674
      %3676 = vmatmul.f32.gmra.mxu0 %v3517
      %v3677 = vpop.f32.mrf.mxu0
      %3678 = vmatmul.f32.gmra.mxu0 %v3520
      %v3679 = vpop.f32.mrf.mxu0
      %v3680 = vadd.f32 0.0, %v3679
      %3681 = vmatmul.f32.gmra.mxu0 %v3523
      %v3682 = vpop.f32.mrf.mxu0
      %v3683 = vadd.f32 0.0, %v3682
      %3684 = vmatmul.f32.gmra.mxu0 %v3526
      %v3685 = vpop.f32.mrf.mxu0
      %3686 = vmatmul.f32.gmra.mxu0 %v3529
      %v3687 = vpop.f32.mrf.mxu0
      %v3688 = vadd.f32 0.0, %v3687
      %3689 = vmatmul.f32.gmra.mxu0 %v3532
      %v3690 = vpop.f32.mrf.mxu0
      %v3691 = vadd.f32 0.0, %v3690
      %3692 = vmatmul.f32.gmra.mxu0 %v3535
      %v3693 = vpop.f32.mrf.mxu0
      %3694 = vmatmul.f32.gmra.mxu0 %v3538
      %v3695 = vpop.f32.mrf.mxu0
      %v3696 = vadd.f32 0.0, %v3695
      %3697 = vmatmul.f32.gmra.mxu0 %v3541
      %v3698 = vpop.f32.mrf.mxu0
      %v3699 = vadd.f32 0.0, %v3698
      %3700 = vmatmul.f32.gmra.mxu0 %v3544
      %v3701 = vpop.f32.mrf.mxu0
      %3702 = vmatmul.f32.gmra.mxu0 %v3547
      %v3703 = vpop.f32.mrf.mxu0
      %v3704 = vadd.f32 0.0, %v3703
      %3705 = vmatmul.f32.gmra.mxu0 %v3550
      %v3706 = vpop.f32.mrf.mxu0
      %v3707 = vadd.f32 0.0, %v3706
      %3708 = vmatmul.f32.gmra.mxu0 %v3553
      %v3709 = vpop.f32.mrf.mxu0
      %3710 = vmatmul.f32.gmra.mxu0 %v3556
      %v3711 = vpop.f32.mrf.mxu0
      %v3712 = vadd.f32 0.0, %v3711
      %3713 = vmatmul.f32.gmra.mxu0 %v3559
      %v3714 = vpop.f32.mrf.mxu0
      %v3715 = vadd.f32 0.0, %v3714
      %3716 = vmatmul.f32.gmra.mxu0 %v3562
      %v3717 = vpop.f32.mrf.mxu0
      %3718 = vmatmul.f32.gmra.mxu0 %v3565
      %v3719 = vpop.f32.mrf.mxu0
      %v3720 = vadd.f32 0.0, %v3719
      %3721 = vmatmul.f32.gmra.mxu0 %v3568
      %v3722 = vpop.f32.mrf.mxu0
      %v3723 = vadd.f32 0.0, %v3722
      %3724 = vmatmul.f32.gmra.mxu0 %v3571
      %v3725 = vpop.f32.mrf.mxu0
      %3726 = vmatmul.f32.gmra.mxu0 %v3574
      %v3727 = vpop.f32.mrf.mxu0
      %v3728 = vadd.f32 0.0, %v3727
      %3729 = vmatmul.f32.gmra.mxu0 %v3577
      %v3730 = vpop.f32.mrf.mxu0
      %v3731 = vadd.f32 0.0, %v3730
      %3732 = vmatmul.f32.gmra.mxu0 %v3580
      %v3733 = vpop.f32.mrf.mxu0
      %3734 = vmatmul.f32.gmra.mxu0 %v3583
      %v3735 = vpop.f32.mrf.mxu0
      %v3736 = vadd.f32 0.0, %v3735
      %3737 = vmatmul.f32.gmra.mxu0 %v3586
      %v3738 = vpop.f32.mrf.mxu0
      %v3739 = vadd.f32 0.0, %v3738
      %3740 = vmatmul.f32.gmra.mxu0 %v3589
      %v3741 = vpop.f32.mrf.mxu0
      %3742 = vmatmul.f32.gmra.mxu0 %v3592
      %v3743 = vpop.f32.mrf.mxu0
      %v3744 = vadd.f32 0.0, %v3743
      %3745 = vmatmul.f32.gmra.mxu0 %v3595
      %v3746 = vpop.f32.mrf.mxu0
      %v3747 = vadd.f32 0.0, %v3746
      %3748 = vmatmul.f32.gmra.mxu0 %v3598
      %v3749 = vpop.f32.mrf.mxu0
      %3750 = vmatmul.f32.gmra.mxu0 %v3601
      %v3751 = vpop.f32.mrf.mxu0
      %v3752 = vadd.f32 0.0, %v3751
      %3753 = vmatmul.f32.gmra.mxu0 %v3604
      %v3754 = vpop.f32.mrf.mxu0
      %v3755 = vadd.f32 0.0, %v3754
      %3756 = vmatmul.f32.gmra.mxu0 %v3607
      %v3757 = vpop.f32.mrf.mxu0
      %3758 = vmatmul.f32.gmra.mxu0 %v3610
      %v3759 = vpop.f32.mrf.mxu0
      %v3760 = vadd.f32 0.0, %v3759
      %3761 = vmatmul.f32.gmra.mxu0 %v3613
      %v3762 = vpop.f32.mrf.mxu0
      %v3763 = vadd.f32 0.0, %v3762
      %3764 = vmatmul.f32.gmra.mxu0 %v3616
      %v3765 = vpop.f32.mrf.mxu0
      %3766 = vmatmul.f32.gmra.mxu0 %v3619
      %v3767 = vpop.f32.mrf.mxu0
      %v3768 = vadd.f32 0.0, %v3767
      %3769 = vmatmul.f32.gmra.mxu0 %v3622
      %v3770 = vpop.f32.mrf.mxu0
      %v3771 = vadd.f32 0.0, %v3770
      %3772 = vmatmul.f32.gmra.mxu0 %v3625
      %v3773 = vpop.f32.mrf.mxu0
      %3774 = vdwg.mxu0
      %v3775 = vadd.f32 %v3401, %v3648
      %v3776 = vadd.f32 %v3402, %v3651
      %v3777 = vadd.f32 %v3403, %v3656
      %v3778 = vadd.f32 %v3404, %v3659
      %v3779 = vadd.f32 %v3405, %v3664
      %v3780 = vadd.f32 %v3406, %v3667
      %v3781 = vadd.f32 %v3407, %v3672
      %v3782 = vadd.f32 %v3408, %v3675
      %v3783 = vadd.f32 %v3409, %v3680
      %v3784 = vadd.f32 %v3410, %v3683
      %v3785 = vadd.f32 %v3411, %v3688
      %v3786 = vadd.f32 %v3412, %v3691
      %v3787 = vadd.f32 %v3413, %v3696
      %v3788 = vadd.f32 %v3414, %v3699
      %v3789 = vadd.f32 %v3415, %v3704
      %v3790 = vadd.f32 %v3416, %v3707
      %v3791 = vadd.f32 %v3417, %v3712
      %v3792 = vadd.f32 %v3418, %v3715
      %v3793 = vadd.f32 %v3419, %v3720
      %v3794 = vadd.f32 %v3420, %v3723
      %v3795 = vadd.f32 %v3421, %v3728
      %v3796 = vadd.f32 %v3422, %v3731
      %v3797 = vadd.f32 %v3423, %v3736
      %v3798 = vadd.f32 %v3424, %v3739
      %v3799 = vadd.f32 %v3425, %v3744
      %v3800 = vadd.f32 %v3426, %v3747
      %v3801 = vadd.f32 %v3427, %v3752
      %v3802 = vadd.f32 %v3428, %v3755
      %v3803 = vadd.f32 %v3429, %v3760
      %v3804 = vadd.f32 %v3430, %v3763
      %v3805 = vadd.f32 %v3431, %v3768
      %v3806 = vadd.f32 %v3432, %v3771
      %v3807 = vld [vmem:[%s4] sm:$0x1]
      %v3809 = vperm.slane %v3807, 0
      %v3811 = vadd.f32 %v3775, %v3809
      %v3812 = vadd.f32 %v3776, %v3809
      %v3813 = vadd.f32 %v3777, %v3809
      %v3814 = vadd.f32 %v3778, %v3809
      %v3815 = vadd.f32 %v3779, %v3809
      %v3816 = vadd.f32 %v3780, %v3809
      %v3817 = vadd.f32 %v3781, %v3809
      %v3818 = vadd.f32 %v3782, %v3809
      %v3819 = vadd.f32 %v3783, %v3809
      %v3820 = vadd.f32 %v3784, %v3809
      %v3821 = vadd.f32 %v3785, %v3809
      %v3822 = vadd.f32 %v3786, %v3809
      %v3823 = vadd.f32 %v3787, %v3809
      %v3824 = vadd.f32 %v3788, %v3809
      %v3825 = vadd.f32 %v3789, %v3809
      %v3826 = vadd.f32 %v3790, %v3809
      %v3827 = vadd.f32 %v3791, %v3809
      %v3828 = vadd.f32 %v3792, %v3809
      %v3829 = vadd.f32 %v3793, %v3809
      %v3830 = vadd.f32 %v3794, %v3809
      %v3831 = vadd.f32 %v3795, %v3809
      %v3832 = vadd.f32 %v3796, %v3809
      %v3833 = vadd.f32 %v3797, %v3809
      %v3834 = vadd.f32 %v3798, %v3809
      %v3835 = vadd.f32 %v3799, %v3809
      %v3836 = vadd.f32 %v3800, %v3809
      %v3837 = vadd.f32 %v3801, %v3809
      %v3838 = vadd.f32 %v3802, %v3809
      %v3839 = vadd.f32 %v3803, %v3809
      %v3840 = vadd.f32 %v3804, %v3809
      %v3841 = vadd.f32 %v3805, %v3809
      %v3842 = vadd.f32 %v3806, %v3809
      %v3843 = vld [vmem:[%s5] sm:$0x1]
      %v3845 = vperm.slane %v3843, 0
      %v3847 = vmul.f32 %v3811, %v3845
      %v3848 = vmul.f32 %v3812, %v3845
      %v3849 = vmul.f32 %v3813, %v3845
      %v3850 = vmul.f32 %v3814, %v3845
      %v3851 = vmul.f32 %v3815, %v3845
      %v3852 = vmul.f32 %v3816, %v3845
      %v3853 = vmul.f32 %v3817, %v3845
      %v3854 = vmul.f32 %v3818, %v3845
      %v3855 = vmul.f32 %v3819, %v3845
      %v3856 = vmul.f32 %v3820, %v3845
      %v3857 = vmul.f32 %v3821, %v3845
      %v3858 = vmul.f32 %v3822, %v3845
      %v3859 = vmul.f32 %v3823, %v3845
      %v3860 = vmul.f32 %v3824, %v3845
      %v3861 = vmul.f32 %v3825, %v3845
      %v3862 = vmul.f32 %v3826, %v3845
      %v3863 = vmul.f32 %v3827, %v3845
      %v3864 = vmul.f32 %v3828, %v3845
      %v3865 = vmul.f32 %v3829, %v3845
      %v3866 = vmul.f32 %v3830, %v3845
      %v3867 = vmul.f32 %v3831, %v3845
      %v3868 = vmul.f32 %v3832, %v3845
      %v3869 = vmul.f32 %v3833, %v3845
      %v3870 = vmul.f32 %v3834, %v3845
      %v3871 = vmul.f32 %v3835, %v3845
      %v3872 = vmul.f32 %v3836, %v3845
      %v3873 = vmul.f32 %v3837, %v3845
      %v3874 = vmul.f32 %v3838, %v3845
      %v3875 = vmul.f32 %v3839, %v3845
      %v3876 = vmul.f32 %v3840, %v3845
      %v3877 = vmul.f32 %v3841, %v3845
      %v3878 = vmul.f32 %v3842, %v3845
      %v3879 = vld [vmem:[%s6] sm:$0x1]
      %v3881 = vperm.slane %v3879, 0
      %v3883 = vadd.f32 %v3847, %v3881
      %v3884 = vadd.f32 %v3848, %v3881
      %v3885 = vadd.f32 %v3849, %v3881
      %v3886 = vadd.f32 %v3850, %v3881
      %v3887 = vadd.f32 %v3851, %v3881
      %v3888 = vadd.f32 %v3852, %v3881
      %v3889 = vadd.f32 %v3853, %v3881
      %v3890 = vadd.f32 %v3854, %v3881
      %v3891 = vadd.f32 %v3855, %v3881
      %v3892 = vadd.f32 %v3856, %v3881
      %v3893 = vadd.f32 %v3857, %v3881
      %v3894 = vadd.f32 %v3858, %v3881
      %v3895 = vadd.f32 %v3859, %v3881
      %v3896 = vadd.f32 %v3860, %v3881
      %v3897 = vadd.f32 %v3861, %v3881
      %v3898 = vadd.f32 %v3862, %v3881
      %v3899 = vadd.f32 %v3863, %v3881
      %v3900 = vadd.f32 %v3864, %v3881
      %v3901 = vadd.f32 %v3865, %v3881
      %v3902 = vadd.f32 %v3866, %v3881
      %v3903 = vadd.f32 %v3867, %v3881
      %v3904 = vadd.f32 %v3868, %v3881
      %v3905 = vadd.f32 %v3869, %v3881
      %v3906 = vadd.f32 %v3870, %v3881
      %v3907 = vadd.f32 %v3871, %v3881
      %v3908 = vadd.f32 %v3872, %v3881
      %v3909 = vadd.f32 %v3873, %v3881
      %v3910 = vadd.f32 %v3874, %v3881
      %v3911 = vadd.f32 %v3875, %v3881
      %v3912 = vadd.f32 %v3876, %v3881
      %v3913 = vadd.f32 %v3877, %v3881
      %v3914 = vadd.f32 %v3878, %v3881
      %v3915 = vmax.f32 %v3883, 0.0
      %v3916 = vmax.f32 %v3884, 0.0
      %v3917 = vmax.f32 %v3885, 0.0
      %v3918 = vmax.f32 %v3886, 0.0
      %v3919 = vmax.f32 %v3887, 0.0
      %v3920 = vmax.f32 %v3888, 0.0
      %v3921 = vmax.f32 %v3889, 0.0
      %v3922 = vmax.f32 %v3890, 0.0
      %v3923 = vmax.f32 %v3891, 0.0
      %v3924 = vmax.f32 %v3892, 0.0
      %v3925 = vmax.f32 %v3893, 0.0
      %v3926 = vmax.f32 %v3894, 0.0
      %v3927 = vmax.f32 %v3895, 0.0
      %v3928 = vmax.f32 %v3896, 0.0
      %v3929 = vmax.f32 %v3897, 0.0
      %v3930 = vmax.f32 %v3898, 0.0
      %v3931 = vmax.f32 %v3899, 0.0
      %v3932 = vmax.f32 %v3900, 0.0
      %v3933 = vmax.f32 %v3901, 0.0
      %v3934 = vmax.f32 %v3902, 0.0
      %v3935 = vmax.f32 %v3903, 0.0
      %v3936 = vmax.f32 %v3904, 0.0
      %v3937 = vmax.f32 %v3905, 0.0
      %v3938 = vmax.f32 %v3906, 0.0
      %v3939 = vmax.f32 %v3907, 0.0
      %v3940 = vmax.f32 %v3908, 0.0
      %v3941 = vmax.f32 %v3909, 0.0
      %v3942 = vmax.f32 %v3910, 0.0
      %v3943 = vmax.f32 %v3911, 0.0
      %v3944 = vmax.f32 %v3912, 0.0
      %v3945 = vmax.f32 %v3913, 0.0
      %v3946 = vmax.f32 %v3914, 0.0
      %vm3947 = vcmask 64512
      %3948 = vst.msk [vmem:[%s278] sm:$0xff] %vm3947, %v3915
      %3949 = vst.msk [vmem:[%s278 + $0x8] sm:$0xff] %vm3947, %v3916
      %3950 = vst.msk [vmem:[%s278 + $0x10] sm:$0xff] %vm3947, %v3917
      %3951 = vst.msk [vmem:[%s278 + $0x18] sm:$0xff] %vm3947, %v3918
      %3952 = vst.msk [vmem:[%s278 + $0x20] sm:$0xff] %vm3947, %v3919
      %3953 = vst.msk [vmem:[%s278 + $0x28] sm:$0xff] %vm3947, %v3920
      %3954 = vst.msk [vmem:[%s278 + $0x30] sm:$0xff] %vm3947, %v3921
      %3955 = vst.msk [vmem:[%s278 + $0x38] sm:$0xff] %vm3947, %v3922
      %3956 = vst.msk [vmem:[%s278 + $0x40] sm:$0xff] %vm3947, %v3923
      %3957 = vst.msk [vmem:[%s278 + $0x48] sm:$0xff] %vm3947, %v3924
      %3958 = vst.msk [vmem:[%s278 + $0x50] sm:$0xff] %vm3947, %v3925
      %3959 = vst.msk [vmem:[%s278 + $0x58] sm:$0xff] %vm3947, %v3926
      %3960 = vst.msk [vmem:[%s278 + $0x60] sm:$0xff] %vm3947, %v3927
      %3961 = vst.msk [vmem:[%s278 + $0x68] sm:$0xff] %vm3947, %v3928
      %3962 = vst.msk [vmem:[%s278 + $0x70] sm:$0xff] %vm3947, %v3929
      %3963 = vst.msk [vmem:[%s278 + $0x78] sm:$0xff] %vm3947, %v3930
      %3964 = vst.msk [vmem:[%s278 + $0x80] sm:$0xff] %vm3947, %v3931
      %3965 = vst.msk [vmem:[%s278 + $0x88] sm:$0xff] %vm3947, %v3932
      %3966 = vst.msk [vmem:[%s278 + $0x90] sm:$0xff] %vm3947, %v3933
      %3967 = vst.msk [vmem:[%s278 + $0x98] sm:$0xff] %vm3947, %v3934
      %3968 = vst.msk [vmem:[%s278 + $0xa0] sm:$0xff] %vm3947, %v3935
      %3969 = vst.msk [vmem:[%s278 + $0xa8] sm:$0xff] %vm3947, %v3936
      %3970 = vst.msk [vmem:[%s278 + $0xb0] sm:$0xff] %vm3947, %v3937
      %3971 = vst.msk [vmem:[%s278 + $0xb8] sm:$0xff] %vm3947, %v3938
      %3972 = vst.msk [vmem:[%s278 + $0xc0] sm:$0xff] %vm3947, %v3939
      %3973 = vst.msk [vmem:[%s278 + $0xc8] sm:$0xff] %vm3947, %v3940
      %3974 = vst.msk [vmem:[%s278 + $0xd0] sm:$0xff] %vm3947, %v3941
      %3975 = vst.msk [vmem:[%s278 + $0xd8] sm:$0xff] %vm3947, %v3942
      %3976 = vst.msk [vmem:[%s278 + $0xe0] sm:$0xff] %vm3947, %v3943
      %3977 = vst.msk [vmem:[%s278 + $0xe8] sm:$0xff] %vm3947, %v3944
      %3978 = vst.msk [vmem:[%s278 + $0xf0] sm:$0xff] %vm3947, %v3945
      %3979 = vst.msk [vmem:[%s278 + $0xf8] sm:$0xff] %vm3947, %v3946
      %p3980 = scmp.lt.s32.totalorder %s18, 1
      %s3981 = scalar_select %p3980, %s18, 1
      %s3982 = smul.addr %s3981, 32
      %s3983 = smul.addr %s3982, 8
      %s3984 = scalar_lea.vmem %s7, %s3983
      // Predicated region
      $region49: #{wide_basic_forward.2} parent=47 // pred_check
        %p3985 = pneg %p188
      $region50: #{wide_basic_forward.2} parent=47 // pred_check_branch
        %3987 = sbr.rel (%p3985) target = $region52
      $region51: #{wide_basic_forward.2} parent=47 // pred_region
        _
      $region52: #{wide_basic_forward.2} parent=47 // pred_fallthru
        _
    $region48: #{wide_basic_forward.2} parent=5 // pred_fallthru
      _
    %p3988 = scmp.le.s32.totalorder 2, %s13
    // Predicated region
    $region53: #{wide_basic_forward.2} parent=5 // pred_check
      %p3989 = pneg %p3988
    $region54: #{wide_basic_forward.2} parent=5 // pred_check_branch
      %3991 = sbr.rel (%p3989) target = $region56
    $region55: #{wide_basic_forward.2} parent=5 // pred_region
      %s3992 = ssub.s32 %s13, 2
      // Predicated region
      $region57: #{wide_basic_forward.2} parent=55 // pred_check
        %p3993 = pneg %p194
      $region58: #{wide_basic_forward.2} parent=55 // pred_check_branch
        %3995 = sbr.rel (%p3993) target = $region60
      $region59: #{wide_basic_forward.2} parent=55 // pred_region
        %p3996 = scmp.lt.s32.totalorder %s19, 1
        %s3997 = scalar_select %p3996, %s19, 1
        %s3998 = smul.addr %s3997, 32
        %s3999 = smul.addr %s3998, 8
        %s4000 = scalar_lea.vmem %s7, %s3999
      $region60: #{wide_basic_forward.2} parent=55 // pred_fallthru
        _
    $region56: #{wide_basic_forward.2} parent=5 // pred_fallthru
      _
  $region6: #{wide_basic_forward.2} parent=0 // loop_footer
    %s17 = sadd.s32 1, %s13
  $region7: #{wide_basic_forward.2} parent=0 // loop_footer_branch
    %12 = sbr.rel target = $region3
  $region8: #{wide_basic_forward.2} parent=0 // loop_exit
    _

// kernel: wide_basic_forward.3
$region0: #{wide_basic_forward.3}
  #allocation0 [shape = 'u32[]', space=smem, size = 0x4, offset = 0x4, fixed_abs, tag = 'smem constant byte address 0x4 - core index']
  #allocation1 [shape = 'u32[72,128]{1,0:T(1,128)}', space=vmem, size = 0x9000, scoped, tag = 'internal scratch']
  #allocation2 [shape = 'f32[456,8]{1,0:T(8,128)}', space=vmem, size = 0x39000, scoped, tag = 'scratch operand']
  %s0 = inlined_call_operand.vmem [shape: f32[2,16,16,8], index: 0, kind: input, shape index: {}]
  %s1 = inlined_call_operand.vmem [shape: f32[9,8,8], index: 1, kind: input, shape index: {}]
  %s2 = inlined_call_operand.vmem [shape: f32[1,8], index: 2, kind: input, shape index: {}]
  %s3 = inlined_call_operand.vmem [shape: f32[2,16,16,4], index: 3, kind: input, shape index: {}]
  %s4 = inlined_call_operand.vmem [shape: f32[4,8], index: 4, kind: input, shape index: {}]
  %s5 = inlined_call_operand.vmem [shape: f32[1,8], index: 5, kind: input, shape index: {}]
  %s6 = inlined_call_operand.vmem [shape: f32[2,16,16,8], index: 6, kind: output, shape index: {}]
  %s7 = sld [smem:[#allocation0]]
  $region57: #{wide_basic_forward.3} parent=0
    _
  %s9 = ssub.s32 1, %s7
  %s10 = scalar_select 0, %s9, %s7
  loop: start=0, step=1, limit=4
  $region2: #{wide_basic_forward.3} parent=0 // loop_pre_header
    _
  $region3: #{wide_basic_forward.3} parent=0 // loop_header
    %s12 = sphi 0, %s16
    %p13 = scmp.ge.s32.totalorder %s12, 4
    %s22 = sphi 0, %s24
    %s25 = sphi 0, %s22
    %s26 = sphi 0, %s25
    %s42 = sphi 0, %s26
    %s46 = sphi 0, %s46
    %s48 = sphi 0, %s46
    %s49 = sphi 0, %s48
    %s63 = sphi 0, %s49
    %s67 = sphi 0, %s67
    %s69 = sphi 0, %s67
    %s70 = sphi 0, %s69
    %s84 = sphi 0, %s70
    %s90 = sphi 0, %s92
    %s93 = sphi 0, %s90
    %s94 = sphi 0, %s93
    %s110 = sphi 0, %s94
    %s114 = sphi 0, %s114
    %s116 = sphi 0, %s114
    %s117 = sphi 0, %s116
    %s131 = sphi 0, %s117
    %s135 = sphi 0, %s135
    %s137 = sphi 0, %s135
    %s138 = sphi 0, %s137
    %s152 = sphi 0, %s138
    %s158 = sphi 0, %s160
    %s161 = sphi 0, %s158
    %s162 = sphi 0, %s161
    %s178 = sphi 0, %s162
  $region4: #{wide_basic_forward.3} parent=0 // loop_header_branch
    %15 = sbr.rel (%p13) target = $region8
  $region5: #{wide_basic_forward.3} parent=0 // loop_body
    %s17 = ssub.s32 %s12, 1
    %s18 = ssub.s32 %s12, 2
    %s19 = sadd.s32 %s12, 1
    %s20 = ssub.s32 %s12, %s19
    %p21 = scmp.eq.s32.totalorder %s20, 0
    %s23 = sadd.s32 %s22, 1
    %s24 = scalar_select %p21, %s22, %s23
    %p27 = pneg %p21
    %p28 = scmp.eq.s32.totalorder %s12, 1
    %p29 = por %p27, %p28
    %p30 = scmp.ne.s32.totalorder %s22, %s25
    %p31 = scmp.eq.s32.totalorder %s12, 0
    %p32 = por %p30, %p31
    %p33 = scmp.ne.s32.totalorder %s22, %s25
    %p34 = scmp.eq.s32.totalorder %s17, 1
    %p35 = por %p33, %p34
    %p36 = scmp.ne.s32.totalorder %s25, %s26
    %p37 = scmp.eq.s32.totalorder %s17, 0
    %p38 = por %p36, %p37
    %p39 = scmp.ne.s32.totalorder %s25, %s26
    %p40 = scmp.eq.s32.totalorder %s18, 1
    %p41 = por %p39, %p40
    %p43 = scmp.ne.s32.totalorder %s26, %s42
    %p44 = scmp.eq.s32.totalorder %s18, 0
    %p45 = por %p43, %p44
    %s47 = sadd.s32 %s46, 1
    %p50 = scmp.eq.s32.totalorder %s12, 1
    %p51 = scmp.ne.s32.totalorder %s46, %s48
    %p52 = scmp.eq.s32.totalorder %s12, 0
    %p53 = por %p51, %p52
    %p54 = scmp.ne.s32.totalorder %s46, %s48
    %p55 = scmp.eq.s32.totalorder %s17, 1
    %p56 = por %p54, %p55
    %p57 = scmp.ne.s32.totalorder %s48, %s49
    %p58 = scmp.eq.s32.totalorder %s17, 0
    %p59 = por %p57, %p58
    %p60 = scmp.ne.s32.totalorder %s48, %s49
    %p61 = scmp.eq.s32.totalorder %s18, 1
    %p62 = por %p60, %p61
    %p64 = scmp.ne.s32.totalorder %s49, %s63
    %p65 = scmp.eq.s32.totalorder %s18, 0
    %p66 = por %p64, %p65
    %s68 = sadd.s32 %s67, 1
    %p71 = scmp.eq.s32.totalorder %s12, 1
    %p72 = scmp.ne.s32.totalorder %s67, %s69
    %p73 = scmp.eq.s32.totalorder %s12, 0
    %p74 = por %p72, %p73
    %p75 = scmp.ne.s32.totalorder %s67, %s69
    %p76 = scmp.eq.s32.totalorder %s17, 1
    %p77 = por %p75, %p76
    %p78 = scmp.ne.s32.totalorder %s69, %s70
    %p79 = scmp.eq.s32.totalorder %s17, 0
    %p80 = por %p78, %p79
    %p81 = scmp.ne.s32.totalorder %s69, %s70
    %p82 = scmp.eq.s32.totalorder %s18, 1
    %p83 = por %p81, %p82
    %p85 = scmp.ne.s32.totalorder %s70, %s84
    %p86 = scmp.eq.s32.totalorder %s18, 0
    %p87 = por %p85, %p86
    %s88 = ssub.s32 %s12, %s19
    %p89 = scmp.eq.s32.totalorder %s88, 0
    %s91 = sadd.s32 %s90, 1
    %s92 = scalar_select %p89, %s90, %s91
    %p95 = pneg %p89
    %p96 = scmp.eq.s32.totalorder %s12, 1
    %p97 = por %p95, %p96
    %p98 = scmp.ne.s32.totalorder %s90, %s93
    %p99 = scmp.eq.s32.totalorder %s12, 0
    %p100 = por %p98, %p99
    %p101 = scmp.ne.s32.totalorder %s90, %s93
    %p102 = scmp.eq.s32.totalorder %s17, 1
    %p103 = por %p101, %p102
    %p104 = scmp.ne.s32.totalorder %s93, %s94
    %p105 = scmp.eq.s32.totalorder %s17, 0
    %p106 = por %p104, %p105
    %p107 = scmp.ne.s32.totalorder %s93, %s94
    %p108 = scmp.eq.s32.totalorder %s18, 1
    %p109 = por %p107, %p108
    %p111 = scmp.ne.s32.totalorder %s94, %s110
    %p112 = scmp.eq.s32.totalorder %s18, 0
    %p113 = por %p111, %p112
    %s115 = sadd.s32 %s114, 1
    %p118 = scmp.eq.s32.totalorder %s12, 1
    %p119 = scmp.ne.s32.totalorder %s114, %s116
    %p120 = scmp.eq.s32.totalorder %s12, 0
    %p121 = por %p119, %p120
    %p122 = scmp.ne.s32.totalorder %s114, %s116
    %p123 = scmp.eq.s32.totalorder %s17, 1
    %p124 = por %p122, %p123
    %p125 = scmp.ne.s32.totalorder %s116, %s117
    %p126 = scmp.eq.s32.totalorder %s17, 0
    %p127 = por %p125, %p126
    %p128 = scmp.ne.s32.totalorder %s116, %s117
    %p129 = scmp.eq.s32.totalorder %s18, 1
    %p130 = por %p128, %p129
    %p132 = scmp.ne.s32.totalorder %s117, %s131
    %p133 = scmp.eq.s32.totalorder %s18, 0
    %p134 = por %p132, %p133
    %s136 = sadd.s32 %s135, 1
    %p139 = scmp.eq.s32.totalorder %s12, 1
    %p140 = scmp.ne.s32.totalorder %s135, %s137
    %p141 = scmp.eq.s32.totalorder %s12, 0
    %p142 = por %p140, %p141
    %p143 = scmp.ne.s32.totalorder %s135, %s137
    %p144 = scmp.eq.s32.totalorder %s17, 1
    %p145 = por %p143, %p144
    %p146 = scmp.ne.s32.totalorder %s137, %s138
    %p147 = scmp.eq.s32.totalorder %s17, 0
    %p148 = por %p146, %p147
    %p149 = scmp.ne.s32.totalorder %s137, %s138
    %p150 = scmp.eq.s32.totalorder %s18, 1
    %p151 = por %p149, %p150
    %p153 = scmp.ne.s32.totalorder %s138, %s152
    %p154 = scmp.eq.s32.totalorder %s18, 0
    %p155 = por %p153, %p154
    %s156 = ssub.s32 %s12, %s19
    %p157 = scmp.eq.s32.totalorder %s156, 0
    %s159 = sadd.s32 %s158, 1
    %s160 = scalar_select %p157, %s158, %s159
    %p163 = pneg %p157
    %p164 = scmp.eq.s32.totalorder %s12, 1
    %p165 = por %p163, %p164
    %p166 = scmp.ne.s32.totalorder %s158, %s161
    %p167 = scmp.eq.s32.totalorder %s12, 0
    %p168 = por %p166, %p167
    %p169 = scmp.ne.s32.totalorder %s158, %s161
    %p170 = scmp.eq.s32.totalorder %s17, 1
    %p171 = por %p169, %p170
    %p172 = scmp.ne.s32.totalorder %s161, %s162
    %p173 = scmp.eq.s32.totalorder %s17, 0
    %p174 = por %p172, %p173
    %p175 = scmp.ne.s32.totalorder %s161, %s162
    %p176 = scmp.eq.s32.totalorder %s18, 1
    %p177 = por %p175, %p176
    %p179 = scmp.ne.s32.totalorder %s162, %s178
    %p180 = scmp.eq.s32.totalorder %s18, 0
    %p181 = por %p179, %p180
    %p182 = scmp.le.s32.totalorder 1, %s12
    %p183 = scmp.lt.s32.totalorder %s12, 3
    %p184 = pnand %p182, %p183
    %p185 = pneg %p184
    // Predicated region
    $region9: #{wide_basic_forward.3} parent=5 // pred_check
      _
    $region10: #{wide_basic_forward.3} parent=5 // pred_check_branch
      %187 = sbr.rel (%p184) target = $region12
    $region11: #{wide_basic_forward.3} parent=5 // pred_region
      %s188 = ssub.s32 %s12, 1
      // Predicated region
      $region13: #{wide_basic_forward.3} parent=11 // pred_check
        %p189 = pneg %p59
      $region14: #{wide_basic_forward.3} parent=11 // pred_check_branch
        %191 = sbr.rel (%p189) target = $region16
      $region15: #{wide_basic_forward.3} parent=11 // pred_region
        _
      $region16: #{wide_basic_forward.3} parent=11 // pred_fallthru
        _
      // Predicated region
      $region17: #{wide_basic_forward.3} parent=11 // pred_check
        %p192 = pneg %p80
      $region18: #{wide_basic_forward.3} parent=11 // pred_check_branch
        %194 = sbr.rel (%p192) target = $region20
      $region19: #{wide_basic_forward.3} parent=11 // pred_region
        _
      $region20: #{wide_basic_forward.3} parent=11 // pred_fallthru
        _
      // Predicated region
      $region21: #{wide_basic_forward.3} parent=11 // pred_check
        %p195 = pneg %p127
      $region22: #{wide_basic_forward.3} parent=11 // pred_check_branch
        %197 = sbr.rel (%p195) target = $region24
      $region23: #{wide_basic_forward.3} parent=11 // pred_region
        _
      $region24: #{wide_basic_forward.3} parent=11 // pred_fallthru
        _
      // Predicated region
      $region25: #{wide_basic_forward.3} parent=11 // pred_check
        %p198 = pneg %p148
      $region26: #{wide_basic_forward.3} parent=11 // pred_check_branch
        %200 = sbr.rel (%p198) target = $region28
      $region27: #{wide_basic_forward.3} parent=11 // pred_region
        _
      $region28: #{wide_basic_forward.3} parent=11 // pred_fallthru
        _
    $region12: #{wide_basic_forward.3} parent=5 // pred_fallthru
      _
    %p201 = scmp.lt.s32.totalorder %s12, 2
    // Predicated region
    $region29: #{wide_basic_forward.3} parent=5 // pred_check
      %p202 = pneg %p201
    $region30: #{wide_basic_forward.3} parent=5 // pred_check_branch
      %204 = sbr.rel (%p202) target = $region32
    $region31: #{wide_basic_forward.3} parent=5 // pred_region
      // Predicated region
      $region33: #{wide_basic_forward.3} parent=31 // pred_check
        %p205 = pneg %p32
      $region34: #{wide_basic_forward.3} parent=31 // pred_check_branch
        %207 = sbr.rel (%p205) target = $region36
      $region35: #{wide_basic_forward.3} parent=31 // pred_region
        %p208 = scmp.lt.s32.totalorder %s12, 1
        %s209 = scalar_select %p208, %s12, 1
        %s210 = smul.addr %s209, 32
        %s211 = smul.addr %s210, 8
        %s212 = scalar_lea.vmem %s0, %s211
      $region36: #{wide_basic_forward.3} parent=31 // pred_fallthru
        _
      // Predicated region
      $region37: #{wide_basic_forward.3} parent=31 // pred_check
        %p213 = pneg %p100
      $region38: #{wide_basic_forward.3} parent=31 // pred_check_branch
        %215 = sbr.rel (%p213) target = $region40
      $region39: #{wide_basic_forward.3} parent=31 // pred_region
        %p216 = scmp.lt.s32.totalorder %s12, 1
        %s217 = scalar_select %p216, %s12, 1
        %s218 = smul.addr %s217, 32
        %s219 = smul.addr %s218, 8
        %s220 = scalar_lea.vmem %s3, %s219
      $region40: #{wide_basic_forward.3} parent=31 // pred_fallthru
        _
    $region32: #{wide_basic_forward.3} parent=5 // pred_fallthru
      _
    %p221 = scmp.le.s32.totalorder 1, %s12
    %p222 = scmp.lt.s32.totalorder %s12, 3
    %p223 = pnand %p221, %p222
    %p224 = pneg %p223
    // Predicated region
    $region41: #{wide_basic_forward.3} parent=5 // pred_check
      _
    $region42: #{wide_basic_forward.3} parent=5 // pred_check_branch
      %226 = sbr.rel (%p223) target = $region44
    $region43: #{wide_basic_forward.3} parent=5 // pred_region
      %s227 = ssub.s32 %s12, 1
      %p228 = scmp.lt.s32.totalorder %s17, 1
      %s229 = scalar_select %p228, %s17, 1
      %s230 = smul.addr %s229, 32
      %s231 = smul.addr %s230, 8
      %s232 = scalar_lea.vmem %s0, %s231
      %p233 = pneg %p38
      %p234 = pneg %p35
      %p235 = pneg %p59
      %p236 = pneg %p56
      %p237 = pneg %p80
      %p238 = pneg %p77
      %p239 = scmp.lt.s32.totalorder %s17, 1
      %s240 = scalar_select %p239, %s17, 1
      %s241 = smul.addr %s240, 32
      %s242 = smul.addr %s241, 8
      %s243 = scalar_lea.vmem %s3, %s242
      %p244 = pneg %p106
      %p245 = pneg %p103
      %p246 = pneg %p127
      %p247 = pneg %p124
      %p248 = pneg %p148
      %p249 = pneg %p145
      %p250 = pneg %p174
      %p251 = pneg %p171
      %p252 = scmp.lt.s32.totalorder %s17, 1
      %s253 = scalar_select %p252, %s17, 1
      %s254 = smul.addr %s253, 32
      %s255 = smul.addr %s254, 8
      %s256 = scalar_lea.vmem %s6, %s255
      %p257 = scmp.lt.s32.totalorder %s17, 1
      %s258 = scalar_select %p257, %s17, 1
      %s259 = smul.addr %s258, 32
      %s260 = smul.addr %s259, 8
      %s261 = scalar_lea.vmem %s0, %s260
      %p262 = scmp.lt.s32.totalorder %s17, 1
      %s263 = scalar_select %p262, %s17, 1
      %s264 = smul.addr %s263, 32
      %s265 = smul.addr %s264, 8
      %s266 = scalar_lea.vmem %s3, %s265
      %p267 = scmp.lt.s32.totalorder %s17, 1
      %s268 = scalar_select %p267, %s17, 1
      %s269 = smul.addr %s268, 32
      %s270 = smul.addr %s269, 8
      %s271 = scalar_lea.vmem %s6, %s270
      %v272 = vld [vmem:[%s261] sm:$0xff]
      %v273 = vld [vmem:[%s261 + $0x8] sm:$0xff]
      %v274 = vld [vmem:[%s261 + $0x10] sm:$0xff]
      %v275 = vld [vmem:[%s261 + $0x18] sm:$0xff]
      %v276 = vld [vmem:[%s261 + $0x20] sm:$0xff]
      %v277 = vld [vmem:[%s261 + $0x28] sm:$0xff]
      %v278 = vld [vmem:[%s261 + $0x30] sm:$0xff]
      %v279 = vld [vmem:[%s261 + $0x38] sm:$0xff]
      %v280 = vld [vmem:[%s261 + $0x40] sm:$0xff]
      %v281 = vld [vmem:[%s261 + $0x48] sm:$0xff]
      %v282 = vld [vmem:[%s261 + $0x50] sm:$0xff]
      %v283 = vld [vmem:[%s261 + $0x58] sm:$0xff]
      %v284 = vld [vmem:[%s261 + $0x60] sm:$0xff]
      %v285 = vld [vmem:[%s261 + $0x68] sm:$0xff]
      %v286 = vld [vmem:[%s261 + $0x70] sm:$0xff]
      %v287 = vld [vmem:[%s261 + $0x78] sm:$0xff]
      %v288 = vld [vmem:[%s261 + $0x80] sm:$0xff]
      %v289 = vld [vmem:[%s261 + $0x88] sm:$0xff]
      %v290 = vld [vmem:[%s261 + $0x90] sm:$0xff]
      %v291 = vld [vmem:[%s261 + $0x98] sm:$0xff]
      %v292 = vld [vmem:[%s261 + $0xa0] sm:$0xff]
      %v293 = vld [vmem:[%s261 + $0xa8] sm:$0xff]
      %v294 = vld [vmem:[%s261 + $0xb0] sm:$0xff]
      %v295 = vld [vmem:[%s261 + $0xb8] sm:$0xff]
      %v296 = vld [vmem:[%s261 + $0xc0] sm:$0xff]
      %v297 = vld [vmem:[%s261 + $0xc8] sm:$0xff]
      %v298 = vld [vmem:[%s261 + $0xd0] sm:$0xff]
      %v299 = vld [vmem:[%s261 + $0xd8] sm:$0xff]
      %v300 = vld [vmem:[%s261 + $0xe0] sm:$0xff]
      %v301 = vld [vmem:[%s261 + $0xe8] sm:$0xff]
      %v302 = vld [vmem:[%s261 + $0xf0] sm:$0xff]
      %v303 = vld [vmem:[%s261 + $0xf8] sm:$0xff]
      %vm304 = vcmask 64512
      %305 = vst.msk [vmem:[#allocation2] sm:$0xff] %vm304, 0.0
      %306 = vst.msk [vmem:[#allocation2 + $0x8] sm:$0xff] %vm304, 0.0
      %307 = vst.msk [vmem:[#allocation2 + $0x10] sm:$0xff] %vm304, 0.0
      %308 = vst.msk [vmem:[#allocation2 + $0x18] sm:$0xff] %vm304, 0.0
      %309 = vst.msk [vmem:[#allocation2 + $0x20] sm:$0xff] %vm304, 0.0
      %310 = vst.msk [vmem:[#allocation2 + $0x28] sm:$0xff] %vm304, 0.0
      %311 = vst.msk [vmem:[#allocation2 + $0x30] sm:$0xff] %vm304, 0.0
      %312 = vst.msk [vmem:[#allocation2 + $0x38] sm:$0xff] %vm304, 0.0
      %313 = vst.msk [vmem:[#allocation2 + $0x40] sm:$0xff] %vm304, 0.0
      %314 = vst.msk [vmem:[#allocation2 + $0x48] sm:$0xff] %vm304, 0.0
      %315 = vst.msk [vmem:[#allocation2 + $0x50] sm:$0xff] %vm304, 0.0
      %316 = vst.msk [vmem:[#allocation2 + $0x58] sm:$0xff] %vm304, 0.0
      %317 = vst.msk [vmem:[#allocation2 + $0x60] sm:$0xff] %vm304, 0.0
      %318 = vst.msk [vmem:[#allocation2 + $0x68] sm:$0xff] %vm304, 0.0
      %319 = vst.msk [vmem:[#allocation2 + $0x70] sm:$0xff] %vm304, 0.0
      %320 = vst.msk [vmem:[#allocation2 + $0x78] sm:$0xff] %vm304, 0.0
      %321 = vst.msk [vmem:[#allocation2 + $0x80] sm:$0xff] %vm304, 0.0
      %322 = vst.msk [vmem:[#allocation2 + $0x88] sm:$0xff] %vm304, 0.0
      %323 = vst.msk [vmem:[#allocation2 + $0x90] sm:$0xff] %vm304, 0.0
      %324 = vst.msk [vmem:[#allocation2 + $0x98] sm:$0xff] %vm304, 0.0
      %325 = vst.msk [vmem:[#allocation2 + $0xa0] sm:$0xff] %vm304, 0.0
      %326 = vst.msk [vmem:[#allocation2 + $0xa8] sm:$0xff] %vm304, 0.0
      %327 = vst.msk [vmem:[#allocation2 + $0xb0] sm:$0xff] %vm304, 0.0
      %328 = vst.msk [vmem:[#allocation2 + $0xb8] sm:$0xff] %vm304, 0.0
      %329 = vst.msk [vmem:[#allocation2 + $0xc0] sm:$0xff] %vm304, 0.0
      %330 = vst.msk [vmem:[#allocation2 + $0xc8] sm:$0xff] %vm304, 0.0
      %331 = vst.msk [vmem:[#allocation2 + $0xd0] sm:$0xff] %vm304, 0.0
      %332 = vst.msk [vmem:[#allocation2 + $0xd8] sm:$0xff] %vm304, 0.0
      %333 = vst.msk [vmem:[#allocation2 + $0xe0] sm:$0xff] %vm304, 0.0
      %334 = vst.msk [vmem:[#allocation2 + $0xe8] sm:$0xff] %vm304, 0.0
      %335 = vst.msk [vmem:[#allocation2 + $0xf0] sm:$0xff] %vm304, 0.0
      %336 = vst.msk [vmem:[#allocation2 + $0xf8] sm:$0xff] %vm304, 0.0
      %337 = vst.msk [vmem:[#allocation2 + $0x100] sm:$0xff] %vm304, 0.0
      %338 = vst.msk [vmem:[#allocation2 + $0x108] sm:$0xff] %vm304, 0.0
      %339 = vst.msk [vmem:[#allocation2 + $0x110] sm:$0xff] %vm304, 0.0
      %340 = vst.msk [vmem:[#allocation2 + $0x118] sm:$0xff] %vm304, 0.0
      %341 = vst.msk [vmem:[#allocation2 + $0x120] sm:$0xff] %vm304, 0.0
      %342 = vst.msk [vmem:[#allocation2 + $0x128] sm:$0xff] %vm304, 0.0
      %343 = vst.msk [vmem:[#allocation2 + $0x130] sm:$0xff] %vm304, 0.0
      %344 = vst.msk [vmem:[#allocation2 + $0x138] sm:$0xff] %vm304, 0.0
      %345 = vst.msk [vmem:[#allocation2 + $0x140] sm:$0xff] %vm304, 0.0
      %346 = vst.msk [vmem:[#allocation2 + $0x148] sm:$0xff] %vm304, 0.0
      %347 = vst.msk [vmem:[#allocation2 + $0x150] sm:$0xff] %vm304, 0.0
      %348 = vst.msk [vmem:[#allocation2 + $0x158] sm:$0xff] %vm304, 0.0
      %349 = vst.msk [vmem:[#allocation2 + $0x160] sm:$0xff] %vm304, 0.0
      %350 = vst.msk [vmem:[#allocation2 + $0x168] sm:$0xff] %vm304, 0.0
      %351 = vst.msk [vmem:[#allocation2 + $0x170] sm:$0xff] %vm304, 0.0
      %352 = vst.msk [vmem:[#allocation2 + $0x178] sm:$0xff] %vm304, 0.0
      %353 = vst.msk [vmem:[#allocation2 + $0x180] sm:$0xff] %vm304, 0.0
      %354 = vst.msk [vmem:[#allocation2 + $0x188] sm:$0xff] %vm304, 0.0
      %355 = vst.msk [vmem:[#allocation2 + $0x190] sm:$0xff] %vm304, 0.0
      %356 = vst.msk [vmem:[#allocation2 + $0x198] sm:$0xff] %vm304, 0.0
      %357 = vst.msk [vmem:[#allocation2 + $0x1a0] sm:$0xff] %vm304, 0.0
      %358 = vst.msk [vmem:[#allocation2 + $0x1a8] sm:$0xff] %vm304, 0.0
      %359 = vst.msk [vmem:[#allocation2 + $0x1b0] sm:$0xff] %vm304, 0.0
      %360 = vst.msk [vmem:[#allocation2 + $0x1b8] sm:$0xff] %vm304, 0.0
      %361 = vst.msk [vmem:[#allocation2 + $0x1c0] sm:$0xff] %vm304, 0.0
      %362 = vst.msk [vmem:[#allocation2 + $0x19] sm:$0xff] %vm304, %v272
      %363 = vst.msk [vmem:[#allocation2 + $0x21] sm:$0xff] %vm304, %v273
      %364 = vst.msk [vmem:[#allocation2 + $0x31] sm:$0xff] %vm304, %v274
      %365 = vst.msk [vmem:[#allocation2 + $0x39] sm:$0xff] %vm304, %v275
      %366 = vst.msk [vmem:[#allocation2 + $0x49] sm:$0xff] %vm304, %v276
      %367 = vst.msk [vmem:[#allocation2 + $0x51] sm:$0xff] %vm304, %v277
      %368 = vst.msk [vmem:[#allocation2 + $0x61] sm:$0xff] %vm304, %v278
      %369 = vst.msk [vmem:[#allocation2 + $0x69] sm:$0xff] %vm304, %v279
      %370 = vst.msk [vmem:[#allocation2 + $0x79] sm:$0xff] %vm304, %v280
      %371 = vst.msk [vmem:[#allocation2 + $0x81] sm:$0xff] %vm304, %v281
      %372 = vst.msk [vmem:[#allocation2 + $0x91] sm:$0xff] %vm304, %v282
      %373 = vst.msk [vmem:[#allocation2 + $0x99] sm:$0xff] %vm304, %v283
      %374 = vst.msk [vmem:[#allocation2 + $0xa9] sm:$0xff] %vm304, %v284
      %375 = vst.msk [vmem:[#allocation2 + $0xb1] sm:$0xff] %vm304, %v285
      %376 = vst.msk [vmem:[#allocation2 + $0xc1] sm:$0xff] %vm304, %v286
      %377 = vst.msk [vmem:[#allocation2 + $0xc9] sm:$0xff] %vm304, %v287
      %378 = vst.msk [vmem:[#allocation2 + $0xd9] sm:$0xff] %vm304, %v288
      %379 = vst.msk [vmem:[#allocation2 + $0xe1] sm:$0xff] %vm304, %v289
      %380 = vst.msk [vmem:[#allocation2 + $0xf1] sm:$0xff] %vm304, %v290
      %381 = vst.msk [vmem:[#allocation2 + $0xf9] sm:$0xff] %vm304, %v291
      %382 = vst.msk [vmem:[#allocation2 + $0x109] sm:$0xff] %vm304, %v292
      %383 = vst.msk [vmem:[#allocation2 + $0x111] sm:$0xff] %vm304, %v293
      %384 = vst.msk [vmem:[#allocation2 + $0x121] sm:$0xff] %vm304, %v294
      %385 = vst.msk [vmem:[#allocation2 + $0x129] sm:$0xff] %vm304, %v295
      %386 = vst.msk [vmem:[#allocation2 + $0x139] sm:$0xff] %vm304, %v296
      %387 = vst.msk [vmem:[#allocation2 + $0x141] sm:$0xff] %vm304, %v297
      %388 = vst.msk [vmem:[#allocation2 + $0x151] sm:$0xff] %vm304, %v298
      %389 = vst.msk [vmem:[#allocation2 + $0x159] sm:$0xff] %vm304, %v299
      %390 = vst.msk [vmem:[#allocation2 + $0x169] sm:$0xff] %vm304, %v300
      %391 = vst.msk [vmem:[#allocation2 + $0x171] sm:$0xff] %vm304, %v301
      %392 = vst.msk [vmem:[#allocation2 + $0x181] sm:$0xff] %vm304, %v302
      %393 = vst.msk [vmem:[#allocation2 + $0x189] sm:$0xff] %vm304, %v303
      %v394 = vld [vmem:[#allocation2] sm:$0xff]
      %v395 = vld [vmem:[#allocation2 + $0x8] sm:$0xff]
      %v396 = vld [vmem:[#allocation2 + $0x10] sm:$0xff]
      %v397 = vld [vmem:[#allocation2 + $0x18] sm:$0xff]
      %v398 = vld [vmem:[#allocation2 + $0x20] sm:$0xff]
      %v399 = vld [vmem:[#allocation2 + $0x28] sm:$0xff]
      %v400 = vld [vmem:[#allocation2 + $0x30] sm:$0xff]
      %v401 = vld [vmem:[#allocation2 + $0x38] sm:$0xff]
      %v402 = vld [vmem:[#allocation2 + $0x40] sm:$0xff]
      %v403 = vld [vmem:[#allocation2 + $0x48] sm:$0xff]
      %v404 = vld [vmem:[#allocation2 + $0x50] sm:$0xff]
      %v405 = vld [vmem:[#allocation2 + $0x58] sm:$0xff]
      %v406 = vld [vmem:[#allocation2 + $0x60] sm:$0xff]
      %v407 = vld [vmem:[#allocation2 + $0x68] sm:$0xff]
      %v408 = vld [vmem:[#allocation2 + $0x70] sm:$0xff]
      %v409 = vld [vmem:[#allocation2 + $0x78] sm:$0xff]
      %v410 = vld [vmem:[#allocation2 + $0x80] sm:$0xff]
      %v411 = vld [vmem:[#allocation2 + $0x88] sm:$0xff]
      %v412 = vld [vmem:[#allocation2 + $0x90] sm:$0xff]
      %v413 = vld [vmem:[#allocation2 + $0x98] sm:$0xff]
      %v414 = vld [vmem:[#allocation2 + $0xa0] sm:$0xff]
      %v415 = vld [vmem:[#allocation2 + $0xa8] sm:$0xff]
      %v416 = vld [vmem:[#allocation2 + $0xb0] sm:$0xff]
      %v417 = vld [vmem:[#allocation2 + $0xb8] sm:$0xff]
      %v418 = vld [vmem:[#allocation2 + $0xc0] sm:$0xff]
      %v419 = vld [vmem:[#allocation2 + $0xc8] sm:$0xff]
      %v420 = vld [vmem:[#allocation2 + $0xd0] sm:$0xff]
      %v421 = vld [vmem:[#allocation2 + $0xd8] sm:$0xff]
      %v422 = vld [vmem:[#allocation2 + $0xe0] sm:$0xff]
      %v423 = vld [vmem:[#allocation2 + $0xe8] sm:$0xff]
      %v424 = vld [vmem:[#allocation2 + $0xf0] sm:$0xff]
      %v425 = vld [vmem:[#allocation2 + $0xf8] sm:$0xff]
      %v426 = vld [vmem:[#allocation2 + $0x100] sm:$0xff]
      %v427 = vld [vmem:[#allocation2 + $0x108] sm:$0xff]
      %v428 = vld [vmem:[#allocation2 + $0x110] sm:$0xff]
      %v429 = vld [vmem:[#allocation2 + $0x118] sm:$0xff]
      %v430 = vld [vmem:[#allocation2 + $0x120] sm:$0xff]
      %v431 = vld [vmem:[#allocation2 + $0x128] sm:$0xff]
      %v432 = vld [vmem:[#allocation2 + $0x130] sm:$0xff]
      %v433 = vld [vmem:[#allocation2 + $0x138] sm:$0xff]
      %v434 = vld [vmem:[#allocation2 + $0x140] sm:$0xff]
      %v435 = vld [vmem:[#allocation2 + $0x148] sm:$0xff]
      %v436 = vld [vmem:[#allocation2 + $0x150] sm:$0xff]
      %v437 = vld [vmem:[#allocation2 + $0x158] sm:$0xff]
      %v438 = vld [vmem:[#allocation2 + $0x160] sm:$0xff]
      %v439 = vld [vmem:[#allocation2 + $0x168] sm:$0xff]
      %v440 = vld [vmem:[#allocation2 + $0x170] sm:$0xff]
      %v441 = vld [vmem:[#allocation2 + $0x178] sm:$0xff]
      %v442 = vld [vmem:[%s1] sm:$0xff]
      %v443 = vld [vmem:[#allocation2 + $0x1] sm:$0xff]
      %v444 = vld [vmem:[#allocation2 + $0x9] sm:$0xff]
      %v445 = vld [vmem:[#allocation2 + $0x11] sm:$0xff]
      %v446 = vld [vmem:[#allocation2 + $0x19] sm:$0xff]
      %v447 = vld [vmem:[#allocation2 + $0x21] sm:$0xff]
      %v448 = vld [vmem:[#allocation2 + $0x29] sm:$0xff]
      %v449 = vld [vmem:[#allocation2 + $0x31] sm:$0xff]
      %v450 = vld [vmem:[#allocation2 + $0x39] sm:$0xff]
      %v451 = vld [vmem:[#allocation2 + $0x41] sm:$0xff]
      %v452 = vld [vmem:[#allocation2 + $0x49] sm:$0xff]
      %v453 = vld [vmem:[#allocation2 + $0x51] sm:$0xff]
      %v454 = vld [vmem:[#allocation2 + $0x59] sm:$0xff]
      %v455 = vld [vmem:[#allocation2 + $0x61] sm:$0xff]
      %v456 = vld [vmem:[#allocation2 + $0x69] sm:$0xff]
      %v457 = vld [vmem:[#allocation2 + $0x71] sm:$0xff]
      %v458 = vld [vmem:[#allocation2 + $0x79] sm:$0xff]
      %v459 = vld [vmem:[#allocation2 + $0x81] sm:$0xff]
      %v460 = vld [vmem:[#allocation2 + $0x89] sm:$0xff]
      %v461 = vld [vmem:[#allocation2 + $0x91] sm:$0xff]
      %v462 = vld [vmem:[#allocation2 + $0x99] sm:$0xff]
      %v463 = vld [vmem:[#allocation2 + $0xa1] sm:$0xff]
      %v464 = vld [vmem:[#allocation2 + $0xa9] sm:$0xff]
      %v465 = vld [vmem:[#allocation2 + $0xb1] sm:$0xff]
      %v466 = vld [vmem:[#allocation2 + $0xb9] sm:$0xff]
      %v467 = vld [vmem:[#allocation2 + $0xc1] sm:$0xff]
      %v468 = vld [vmem:[#allocation2 + $0xc9] sm:$0xff]
      %v469 = vld [vmem:[#allocation2 + $0xd1] sm:$0xff]
      %v470 = vld [vmem:[#allocation2 + $0xd9] sm:$0xff]
      %v471 = vld [vmem:[#allocation2 + $0xe1] sm:$0xff]
      %v472 = vld [vmem:[#allocation2 + $0xe9] sm:$0xff]
      %v473 = vld [vmem:[#allocation2 + $0xf1] sm:$0xff]
      %v474 = vld [vmem:[#allocation2 + $0xf9] sm:$0xff]
      %v475 = vld [vmem:[#allocation2 + $0x101] sm:$0xff]
      %v476 = vld [vmem:[#allocation2 + $0x109] sm:$0xff]
      %v477 = vld [vmem:[#allocation2 + $0x111] sm:$0xff]
      %v478 = vld [vmem:[#allocation2 + $0x119] sm:$0xff]
      %v479 = vld [vmem:[#allocation2 + $0x121] sm:$0xff]
      %v480 = vld [vmem:[#allocation2 + $0x129] sm:$0xff]
      %v481 = vld [vmem:[#allocation2 + $0x131] sm:$0xff]
      %v482 = vld [vmem:[#allocation2 + $0x139] sm:$0xff]
      %v483 = vld [vmem:[#allocation2 + $0x141] sm:$0xff]
      %v484 = vld [vmem:[#allocation2 + $0x149] sm:$0xff]
      %v485 = vld [vmem:[#allocation2 + $0x151] sm:$0xff]
      %v486 = vld [vmem:[#allocation2 + $0x159] sm:$0xff]
      %v487 = vld [vmem:[#allocation2 + $0x161] sm:$0xff]
      %v488 = vld [vmem:[#allocation2 + $0x169] sm:$0xff]
      %v489 = vld [vmem:[#allocation2 + $0x171] sm:$0xff]
      %v490 = vld [vmem:[#allocation2 + $0x179] sm:$0xff]
      %s491 = scalar_lea.vmem %s1, 8
      %v492 = vld [vmem:[%s491] sm:$0xff]
      %v494 = vsel %vm304, %v443, 0
      %v497 = vsel %vm304, %v444, 0
      %v500 = vsel %vm304, %v445, 0
      %v503 = vsel %vm304, %v446, 0
      %v506 = vsel %vm304, %v447, 0
      %v509 = vsel %vm304, %v448, 0
      %v512 = vsel %vm304, %v449, 0
      %v515 = vsel %vm304, %v450, 0
      %v518 = vsel %vm304, %v451, 0
      %v521 = vsel %vm304, %v452, 0
      %v524 = vsel %vm304, %v453, 0
      %v527 = vsel %vm304, %v454, 0
      %v530 = vsel %vm304, %v455, 0
      %v533 = vsel %vm304, %v456, 0
      %v536 = vsel %vm304, %v457, 0
      %v539 = vsel %vm304, %v458, 0
      %v542 = vsel %vm304, %v459, 0
      %v545 = vsel %vm304, %v460, 0
      %v548 = vsel %vm304, %v461, 0
      %v551 = vsel %vm304, %v462, 0
      %v554 = vsel %vm304, %v463, 0
      %v557 = vsel %vm304, %v464, 0
      %v560 = vsel %vm304, %v465, 0
      %v563 = vsel %vm304, %v466, 0
      %v566 = vsel %vm304, %v467, 0
      %v569 = vsel %vm304, %v468, 0
      %v572 = vsel %vm304, %v469, 0
      %v575 = vsel %vm304, %v470, 0
      %v578 = vsel %vm304, %v471, 0
      %v581 = vsel %vm304, %v472, 0
      %v584 = vsel %vm304, %v473, 0
      %v587 = vsel %vm304, %v474, 0
      %v590 = vsel %vm304, %v475, 0
      %v593 = vsel %vm304, %v476, 0
      %v596 = vsel %vm304, %v477, 0
      %v599 = vsel %vm304, %v478, 0
      %v602 = vsel %vm304, %v479, 0
      %v605 = vsel %vm304, %v480, 0
      %v608 = vsel %vm304, %v481, 0
      %v611 = vsel %vm304, %v482, 0
      %v614 = vsel %vm304, %v483, 0
      %v617 = vsel %vm304, %v484, 0
      %v620 = vsel %vm304, %v485, 0
      %v623 = vsel %vm304, %v486, 0
      %v626 = vsel %vm304, %v487, 0
      %v629 = vsel %vm304, %v488, 0
      %v632 = vsel %vm304, %v489, 0
      %v635 = vsel %vm304, %v490, 0
      %637 = vmatpush.msra.mxu0 0.0
      %638 = vmatpush.msra.mxu0 0.0
      %639 = vmatpush.msra.mxu0 0.0
      %640 = vmatpush.msra.mxu0 0.0
      %641 = vmatpush.msra.mxu0 0.0
      %642 = vmatpush.msra.mxu0 0.0
      %643 = vmatpush.msra.mxu0 0.0
      %644 = vmatpush.msra.mxu0 0.0
      %645 = vmatpush.msra.mxu0 0.0
      %646 = vmatpush.msra.mxu0 0.0
      %647 = vmatpush.msra.mxu0 0.0
      %648 = vmatpush.msra.mxu0 0.0
      %649 = vmatpush.msra.mxu0 0.0
      %650 = vmatpush.msra.mxu0 0.0
      %651 = vmatpush.msra.mxu0 0.0
      %652 = vmatpush.msra.mxu0 %v492
      %653 = vmatmul.f32.gmra.mxu0 %v494
      %v654 = vpop.f32.mrf.mxu0
      %v655 = vadd.f32 0.0, %v654
      %656 = vmatmul.f32.gmra.mxu0 %v497
      %v657 = vpop.f32.mrf.mxu0
      %v658 = vadd.f32 0.0, %v657
      %659 = vmatmul.f32.gmra.mxu0 %v500
      %v660 = vpop.f32.mrf.mxu0
      %661 = vmatmul.f32.gmra.mxu0 %v503
      %v662 = vpop.f32.mrf.mxu0
      %v663 = vadd.f32 0.0, %v662
      %664 = vmatmul.f32.gmra.mxu0 %v506
      %v665 = vpop.f32.mrf.mxu0
      %v666 = vadd.f32 0.0, %v665
      %667 = vmatmul.f32.gmra.mxu0 %v509
      %v668 = vpop.f32.mrf.mxu0
      %669 = vmatmul.f32.gmra.mxu0 %v512
      %v670 = vpop.f32.mrf.mxu0
      %v671 = vadd.f32 0.0, %v670
      %672 = vmatmul.f32.gmra.mxu0 %v515
      %v673 = vpop.f32.mrf.mxu0
      %v674 = vadd.f32 0.0, %v673
      %675 = vmatmul.f32.gmra.mxu0 %v518
      %v676 = vpop.f32.mrf.mxu0
      %677 = vmatmul.f32.gmra.mxu0 %v521
      %v678 = vpop.f32.mrf.mxu0
      %v679 = vadd.f32 0.0, %v678
      %680 = vmatmul.f32.gmra.mxu0 %v524
      %v681 = vpop.f32.mrf.mxu0
      %v682 = vadd.f32 0.0, %v681
      %683 = vmatmul.f32.gmra.mxu0 %v527
      %v684 = vpop.f32.mrf.mxu0
      %685 = vmatmul.f32.gmra.mxu0 %v530
      %v686 = vpop.f32.mrf.mxu0
      %v687 = vadd.f32 0.0, %v686
      %688 = vmatmul.f32.gmra.mxu0 %v533
      %v689 = vpop.f32.mrf.mxu0
      %v690 = vadd.f32 0.0, %v689
      %691 = vmatmul.f32.gmra.mxu0 %v536
      %v692 = vpop.f32.mrf.mxu0
      %693 = vmatmul.f32.gmra.mxu0 %v539
      %v694 = vpop.f32.mrf.mxu0
      %v695 = vadd.f32 0.0, %v694
      %696 = vmatmul.f32.gmra.mxu0 %v542
      %v697 = vpop.f32.mrf.mxu0
      %v698 = vadd.f32 0.0, %v697
      %699 = vmatmul.f32.gmra.mxu0 %v545
      %v700 = vpop.f32.mrf.mxu0
      %701 = vmatmul.f32.gmra.mxu0 %v548
      %v702 = vpop.f32.mrf.mxu0
      %v703 = vadd.f32 0.0, %v702
      %704 = vmatmul.f32.gmra.mxu0 %v551
      %v705 = vpop.f32.mrf.mxu0
      %v706 = vadd.f32 0.0, %v705
      %707 = vmatmul.f32.gmra.mxu0 %v554
      %v708 = vpop.f32.mrf.mxu0
      %709 = vmatmul.f32.gmra.mxu0 %v557
      %v710 = vpop.f32.mrf.mxu0
      %v711 = vadd.f32 0.0, %v710
      %712 = vmatmul.f32.gmra.mxu0 %v560
      %v713 = vpop.f32.mrf.mxu0
      %v714 = vadd.f32 0.0, %v713
      %715 = vmatmul.f32.gmra.mxu0 %v563
      %v716 = vpop.f32.mrf.mxu0
      %717 = vmatmul.f32.gmra.mxu0 %v566
      %v718 = vpop.f32.mrf.mxu0
      %v719 = vadd.f32 0.0, %v718
      %720 = vmatmul.f32.gmra.mxu0 %v569
      %v721 = vpop.f32.mrf.mxu0
      %v722 = vadd.f32 0.0, %v721
      %723 = vmatmul.f32.gmra.mxu0 %v572
      %v724 = vpop.f32.mrf.mxu0
      %725 = vmatmul.f32.gmra.mxu0 %v575
      %v726 = vpop.f32.mrf.mxu0
      %v727 = vadd.f32 0.0, %v726
      %728 = vmatmul.f32.gmra.mxu0 %v578
      %v729 = vpop.f32.mrf.mxu0
      %v730 = vadd.f32 0.0, %v729
      %731 = vmatmul.f32.gmra.mxu0 %v581
      %v732 = vpop.f32.mrf.mxu0
      %733 = vmatmul.f32.gmra.mxu0 %v584
      %v734 = vpop.f32.mrf.mxu0
      %v735 = vadd.f32 0.0, %v734
      %736 = vmatmul.f32.gmra.mxu0 %v587
      %v737 = vpop.f32.mrf.mxu0
      %v738 = vadd.f32 0.0, %v737
      %739 = vmatmul.f32.gmra.mxu0 %v590
      %v740 = vpop.f32.mrf.mxu0
      %741 = vmatmul.f32.gmra.mxu0 %v593
      %v742 = vpop.f32.mrf.mxu0
      %v743 = vadd.f32 0.0, %v742
      %744 = vmatmul.f32.gmra.mxu0 %v596
      %v745 = vpop.f32.mrf.mxu0
      %v746 = vadd.f32 0.0, %v745
      %747 = vmatmul.f32.gmra.mxu0 %v599
      %v748 = vpop.f32.mrf.mxu0
      %749 = vmatmul.f32.gmra.mxu0 %v602
      %v750 = vpop.f32.mrf.mxu0
      %v751 = vadd.f32 0.0, %v750
      %752 = vmatmul.f32.gmra.mxu0 %v605
      %v753 = vpop.f32.mrf.mxu0
      %v754 = vadd.f32 0.0, %v753
      %755 = vmatmul.f32.gmra.mxu0 %v608
      %v756 = vpop.f32.mrf.mxu0
      %757 = vmatmul.f32.gmra.mxu0 %v611
      %v758 = vpop.f32.mrf.mxu0
      %v759 = vadd.f32 0.0, %v758
      %760 = vmatmul.f32.gmra.mxu0 %v614
      %v761 = vpop.f32.mrf.mxu0
      %v762 = vadd.f32 0.0, %v761
      %763 = vmatmul.f32.gmra.mxu0 %v617
      %v764 = vpop.f32.mrf.mxu0
      %765 = vmatmul.f32.gmra.mxu0 %v620
      %v766 = vpop.f32.mrf.mxu0
      %v767 = vadd.f32 0.0, %v766
      %768 = vmatmul.f32.gmra.mxu0 %v623
      %v769 = vpop.f32.mrf.mxu0
      %v770 = vadd.f32 0.0, %v769
      %771 = vmatmul.f32.gmra.mxu0 %v626
      %v772 = vpop.f32.mrf.mxu0
      %773 = vmatmul.f32.gmra.mxu0 %v629
      %v774 = vpop.f32.mrf.mxu0
      %v775 = vadd.f32 0.0, %v774
      %776 = vmatmul.f32.gmra.mxu0 %v632
      %v777 = vpop.f32.mrf.mxu0
      %v778 = vadd.f32 0.0, %v777
      %779 = vmatmul.f32.gmra.mxu0 %v635
      %v780 = vpop.f32.mrf.mxu0
      %781 = vdwg.mxu0
      %v783 = vsel %vm304, %v394, 0
      %v786 = vsel %vm304, %v395, 0
      %v789 = vsel %vm304, %v396, 0
      %v792 = vsel %vm304, %v397, 0
      %v795 = vsel %vm304, %v398, 0
      %v798 = vsel %vm304, %v399, 0
      %v801 = vsel %vm304, %v400, 0
      %v804 = vsel %vm304, %v401, 0
      %v807 = vsel %vm304, %v402, 0
      %v810 = vsel %vm304, %v403, 0
      %v813 = vsel %vm304, %v404, 0
      %v816 = vsel %vm304, %v405, 0
      %v819 = vsel %vm304, %v406, 0
      %v822 = vsel %vm304, %v407, 0
      %v825 = vsel %vm304, %v408, 0
      %v828 = vsel %vm304, %v409, 0
      %v831 = vsel %vm304, %v410, 0
      %v834 = vsel %vm304, %v411, 0
      %v837 = vsel %vm304, %v412, 0
      %v840 = vsel %vm304, %v413, 0
      %v843 = vsel %vm304, %v414, 0
      %v846 = vsel %vm304, %v415, 0
      %v849 = vsel %vm304, %v416, 0
      %v852 = vsel %vm304, %v417, 0
      %v855 = vsel %vm304, %v418, 0
      %v858 = vsel %vm304, %v419, 0
      %v861 = vsel %vm304, %v420, 0
      %v864 = vsel %vm304, %v421, 0
      %v867 = vsel %vm304, %v422, 0
      %v870 = vsel %vm304, %v423, 0
      %v873 = vsel %vm304, %v424, 0
      %v876 = vsel %vm304, %v425, 0
      %v879 = vsel %vm304, %v426, 0
      %v882 = vsel %vm304, %v427, 0
      %v885 = vsel %vm304, %v428, 0
      %v888 = vsel %vm304, %v429, 0
      %v891 = vsel %vm304, %v430, 0
      %v894 = vsel %vm304, %v431, 0
      %v897 = vsel %vm304, %v432, 0
      %v900 = vsel %vm304, %v433, 0
      %v903 = vsel %vm304, %v434, 0
      %v906 = vsel %vm304, %v435, 0
      %v909 = vsel %vm304, %v436, 0
      %v912 = vsel %vm304, %v437, 0
      %v915 = vsel %vm304, %v438, 0
      %v918 = vsel %vm304, %v439, 0
      %v921 = vsel %vm304, %v440, 0
      %v924 = vsel %vm304, %v441, 0
      %926 = vmatpush.msra.mxu0 0.0
      %927 = vmatpush.msra.mxu0 0.0
      %928 = vmatpush.msra.mxu0 0.0
      %929 = vmatpush.msra.mxu0 0.0
      %930 = vmatpush.msra.mxu0 0.0
      %931 = vmatpush.msra.mxu0 0.0
      %932 = vmatpush.msra.mxu0 0.0
      %933 = vmatpush.msra.mxu0 0.0
      %934 = vmatpush.msra.mxu0 0.0
      %935 = vmatpush.msra.mxu0 0.0
      %936 = vmatpush.msra.mxu0 0.0
      %937 = vmatpush.msra.mxu0 0.0
      %938 = vmatpush.msra.mxu0 0.0
      %939 = vmatpush.msra.mxu0 0.0
      %940 = vmatpush.msra.mxu0 0.0
      %941 = vmatpush.msra.mxu0 %v442
      %942 = vmatmul.f32.gmra.mxu0 %v783
      %v943 = vpop.f32.mrf.mxu0
      %v944 = vadd.f32 %v655, %v943
      %945 = vmatmul.f32.gmra.mxu0 %v786
      %v946 = vpop.f32.mrf.mxu0
      %v947 = vadd.f32 %v658, %v946
      %948 = vmatmul.f32.gmra.mxu0 %v789
      %v949 = vpop.f32.mrf.mxu0
      %950 = vmatmul.f32.gmra.mxu0 %v792
      %v951 = vpop.f32.mrf.mxu0
      %v952 = vadd.f32 %v663, %v951
      %953 = vmatmul.f32.gmra.mxu0 %v795
      %v954 = vpop.f32.mrf.mxu0
      %v955 = vadd.f32 %v666, %v954
      %956 = vmatmul.f32.gmra.mxu0 %v798
      %v957 = vpop.f32.mrf.mxu0
      %958 = vmatmul.f32.gmra.mxu0 %v801
      %v959 = vpop.f32.mrf.mxu0
      %v960 = vadd.f32 %v671, %v959
      %961 = vmatmul.f32.gmra.mxu0 %v804
      %v962 = vpop.f32.mrf.mxu0
      %v963 = vadd.f32 %v674, %v962
      %964 = vmatmul.f32.gmra.mxu0 %v807
      %v965 = vpop.f32.mrf.mxu0
      %966 = vmatmul.f32.gmra.mxu0 %v810
      %v967 = vpop.f32.mrf.mxu0
      %v968 = vadd.f32 %v679, %v967
      %969 = vmatmul.f32.gmra.mxu0 %v813
      %v970 = vpop.f32.mrf.mxu0
      %v971 = vadd.f32 %v682, %v970
      %972 = vmatmul.f32.gmra.mxu0 %v816
      %v973 = vpop.f32.mrf.mxu0
      %974 = vmatmul.f32.gmra.mxu0 %v819
      %v975 = vpop.f32.mrf.mxu0
      %v976 = vadd.f32 %v687, %v975
      %977 = vmatmul.f32.gmra.mxu0 %v822
      %v978 = vpop.f32.mrf.mxu0
      %v979 = vadd.f32 %v690, %v978
      %980 = vmatmul.f32.gmra.mxu0 %v825
      %v981 = vpop.f32.mrf.mxu0
      %982 = vmatmul.f32.gmra.mxu0 %v828
      %v983 = vpop.f32.mrf.mxu0
      %v984 = vadd.f32 %v695, %v983
      %985 = vmatmul.f32.gmra.mxu0 %v831
      %v986 = vpop.f32.mrf.mxu0
      %v987 = vadd.f32 %v698, %v986
      %988 = vmatmul.f32.gmra.mxu0 %v834
      %v989 = vpop.f32.mrf.mxu0
      %990 = vmatmul.f32.gmra.mxu0 %v837
      %v991 = vpop.f32.mrf.mxu0
      %v992 = vadd.f32 %v703, %v991
      %993 = vmatmul.f32.gmra.mxu0 %v840
      %v994 = vpop.f32.mrf.mxu0
      %v995 = vadd.f32 %v706, %v994
      %996 = vmatmul.f32.gmra.mxu0 %v843
      %v997 = vpop.f32.mrf.mxu0
      %998 = vmatmul.f32.gmra.mxu0 %v846
      %v999 = vpop.f32.mrf.mxu0
      %v1000 = vadd.f32 %v711, %v999
      %1001 = vmatmul.f32.gmra.mxu0 %v849
      %v1002 = vpop.f32.mrf.mxu0
      %v1003 = vadd.f32 %v714, %v1002
      %1004 = vmatmul.f32.gmra.mxu0 %v852
      %v1005 = vpop.f32.mrf.mxu0
      %1006 = vmatmul.f32.gmra.mxu0 %v855
      %v1007 = vpop.f32.mrf.mxu0
      %v1008 = vadd.f32 %v719, %v1007
      %1009 = vmatmul.f32.gmra.mxu0 %v858
      %v1010 = vpop.f32.mrf.mxu0
      %v1011 = vadd.f32 %v722, %v1010
      %1012 = vmatmul.f32.gmra.mxu0 %v861
      %v1013 = vpop.f32.mrf.mxu0
      %1014 = vmatmul.f32.gmra.mxu0 %v864
      %v1015 = vpop.f32.mrf.mxu0
      %v1016 = vadd.f32 %v727, %v1015
      %1017 = vmatmul.f32.gmra.mxu0 %v867
      %v1018 = vpop.f32.mrf.mxu0
      %v1019 = vadd.f32 %v730, %v1018
      %1020 = vmatmul.f32.gmra.mxu0 %v870
      %v1021 = vpop.f32.mrf.mxu0
      %1022 = vmatmul.f32.gmra.mxu0 %v873
      %v1023 = vpop.f32.mrf.mxu0
      %v1024 = vadd.f32 %v735, %v1023
      %1025 = vmatmul.f32.gmra.mxu0 %v876
      %v1026 = vpop.f32.mrf.mxu0
      %v1027 = vadd.f32 %v738, %v1026
      %1028 = vmatmul.f32.gmra.mxu0 %v879
      %v1029 = vpop.f32.mrf.mxu0
      %1030 = vmatmul.f32.gmra.mxu0 %v882
      %v1031 = vpop.f32.mrf.mxu0
      %v1032 = vadd.f32 %v743, %v1031
      %1033 = vmatmul.f32.gmra.mxu0 %v885
      %v1034 = vpop.f32.mrf.mxu0
      %v1035 = vadd.f32 %v746, %v1034
      %1036 = vmatmul.f32.gmra.mxu0 %v888
      %v1037 = vpop.f32.mrf.mxu0
      %1038 = vmatmul.f32.gmra.mxu0 %v891
      %v1039 = vpop.f32.mrf.mxu0
      %v1040 = vadd.f32 %v751, %v1039
      %1041 = vmatmul.f32.gmra.mxu0 %v894
      %v1042 = vpop.f32.mrf.mxu0
      %v1043 = vadd.f32 %v754, %v1042
      %1044 = vmatmul.f32.gmra.mxu0 %v897
      %v1045 = vpop.f32.mrf.mxu0
      %1046 = vmatmul.f32.gmra.mxu0 %v900
      %v1047 = vpop.f32.mrf.mxu0
      %v1048 = vadd.f32 %v759, %v1047
      %1049 = vmatmul.f32.gmra.mxu0 %v903
      %v1050 = vpop.f32.mrf.mxu0
      %v1051 = vadd.f32 %v762, %v1050
      %1052 = vmatmul.f32.gmra.mxu0 %v906
      %v1053 = vpop.f32.mrf.mxu0
      %1054 = vmatmul.f32.gmra.mxu0 %v909
      %v1055 = vpop.f32.mrf.mxu0
      %v1056 = vadd.f32 %v767, %v1055
      %1057 = vmatmul.f32.gmra.mxu0 %v912
      %v1058 = vpop.f32.mrf.mxu0
      %v1059 = vadd.f32 %v770, %v1058
      %1060 = vmatmul.f32.gmra.mxu0 %v915
      %v1061 = vpop.f32.mrf.mxu0
      %1062 = vmatmul.f32.gmra.mxu0 %v918
      %v1063 = vpop.f32.mrf.mxu0
      %v1064 = vadd.f32 %v775, %v1063
      %1065 = vmatmul.f32.gmra.mxu0 %v921
      %v1066 = vpop.f32.mrf.mxu0
      %v1067 = vadd.f32 %v778, %v1066
      %1068 = vmatmul.f32.gmra.mxu0 %v924
      %v1069 = vpop.f32.mrf.mxu0
      %1070 = vdwg.mxu0
      %v1071 = vld [vmem:[#allocation2 + $0x2] sm:$0xff]
      %v1072 = vld [vmem:[#allocation2 + $0xa] sm:$0xff]
      %v1073 = vld [vmem:[#allocation2 + $0x12] sm:$0xff]
      %v1074 = vld [vmem:[#allocation2 + $0x1a] sm:$0xff]
      %v1075 = vld [vmem:[#allocation2 + $0x22] sm:$0xff]
      %v1076 = vld [vmem:[#allocation2 + $0x2a] sm:$0xff]
      %v1077 = vld [vmem:[#allocation2 + $0x32] sm:$0xff]
      %v1078 = vld [vmem:[#allocation2 + $0x3a] sm:$0xff]
      %v1079 = vld [vmem:[#allocation2 + $0x42] sm:$0xff]
      %v1080 = vld [vmem:[#allocation2 + $0x4a] sm:$0xff]
      %v1081 = vld [vmem:[#allocation2 + $0x52] sm:$0xff]
      %v1082 = vld [vmem:[#allocation2 + $0x5a] sm:$0xff]
      %v1083 = vld [vmem:[#allocation2 + $0x62] sm:$0xff]
      %v1084 = vld [vmem:[#allocation2 + $0x6a] sm:$0xff]
      %v1085 = vld [vmem:[#allocation2 + $0x72] sm:$0xff]
      %v1086 = vld [vmem:[#allocation2 + $0x7a] sm:$0xff]
      %v1087 = vld [vmem:[#allocation2 + $0x82] sm:$0xff]
      %v1088 = vld [vmem:[#allocation2 + $0x8a] sm:$0xff]
      %v1089 = vld [vmem:[#allocation2 + $0x92] sm:$0xff]
      %v1090 = vld [vmem:[#allocation2 + $0x9a] sm:$0xff]
      %v1091 = vld [vmem:[#allocation2 + $0xa2] sm:$0xff]
      %v1092 = vld [vmem:[#allocation2 + $0xaa] sm:$0xff]
      %v1093 = vld [vmem:[#allocation2 + $0xb2] sm:$0xff]
      %v1094 = vld [vmem:[#allocation2 + $0xba] sm:$0xff]
      %v1095 = vld [vmem:[#allocation2 + $0xc2] sm:$0xff]
      %v1096 = vld [vmem:[#allocation2 + $0xca] sm:$0xff]
      %v1097 = vld [vmem:[#allocation2 + $0xd2] sm:$0xff]
      %v1098 = vld [vmem:[#allocation2 + $0xda] sm:$0xff]
      %v1099 = vld [vmem:[#allocation2 + $0xe2] sm:$0xff]
      %v1100 = vld [vmem:[#allocation2 + $0xea] sm:$0xff]
      %v1101 = vld [vmem:[#allocation2 + $0xf2] sm:$0xff]
      %v1102 = vld [vmem:[#allocation2 + $0xfa] sm:$0xff]
      %v1103 = vld [vmem:[#allocation2 + $0x102] sm:$0xff]
      %v1104 = vld [vmem:[#allocation2 + $0x10a] sm:$0xff]
      %v1105 = vld [vmem:[#allocation2 + $0x112] sm:$0xff]
      %v1106 = vld [vmem:[#allocation2 + $0x11a] sm:$0xff]
      %v1107 = vld [vmem:[#allocation2 + $0x122] sm:$0xff]
      %v1108 = vld [vmem:[#allocation2 + $0x12a] sm:$0xff]
      %v1109 = vld [vmem:[#allocation2 + $0x132] sm:$0xff]
      %v1110 = vld [vmem:[#allocation2 + $0x13a] sm:$0xff]
      %v1111 = vld [vmem:[#allocation2 + $0x142] sm:$0xff]
      %v1112 = vld [vmem:[#allocation2 + $0x14a] sm:$0xff]
      %v1113 = vld [vmem:[#allocation2 + $0x152] sm:$0xff]
      %v1114 = vld [vmem:[#allocation2 + $0x15a] sm:$0xff]
      %v1115 = vld [vmem:[#allocation2 + $0x162] sm:$0xff]
      %v1116 = vld [vmem:[#allocation2 + $0x16a] sm:$0xff]
      %v1117 = vld [vmem:[#allocation2 + $0x172] sm:$0xff]
      %v1118 = vld [vmem:[#allocation2 + $0x17a] sm:$0xff]
      %s1119 = scalar_lea.vmem %s1, 16
      %v1120 = vld [vmem:[%s1119] sm:$0xff]
      %v1122 = vsel %vm304, %v1071, 0
      %v1125 = vsel %vm304, %v1072, 0
      %v1128 = vsel %vm304, %v1073, 0
      %v1131 = vsel %vm304, %v1074, 0
      %v1134 = vsel %vm304, %v1075, 0
      %v1137 = vsel %vm304, %v1076, 0
      %v1140 = vsel %vm304, %v1077, 0
      %v1143 = vsel %vm304, %v1078, 0
      %v1146 = vsel %vm304, %v1079, 0
      %v1149 = vsel %vm304, %v1080, 0
      %v1152 = vsel %vm304, %v1081, 0
      %v1155 = vsel %vm304, %v1082, 0
      %v1158 = vsel %vm304, %v1083, 0
      %v1161 = vsel %vm304, %v1084, 0
      %v1164 = vsel %vm304, %v1085, 0
      %v1167 = vsel %vm304, %v1086, 0
      %v1170 = vsel %vm304, %v1087, 0
      %v1173 = vsel %vm304, %v1088, 0
      %v1176 = vsel %vm304, %v1089, 0
      %v1179 = vsel %vm304, %v1090, 0
      %v1182 = vsel %vm304, %v1091, 0
      %v1185 = vsel %vm304, %v1092, 0
      %v1188 = vsel %vm304, %v1093, 0
      %v1191 = vsel %vm304, %v1094, 0
      %v1194 = vsel %vm304, %v1095, 0
      %v1197 = vsel %vm304, %v1096, 0
      %v1200 = vsel %vm304, %v1097, 0
      %v1203 = vsel %vm304, %v1098, 0
      %v1206 = vsel %vm304, %v1099, 0
      %v1209 = vsel %vm304, %v1100, 0
      %v1212 = vsel %vm304, %v1101, 0
      %v1215 = vsel %vm304, %v1102, 0
      %v1218 = vsel %vm304, %v1103, 0
      %v1221 = vsel %vm304, %v1104, 0
      %v1224 = vsel %vm304, %v1105, 0
      %v1227 = vsel %vm304, %v1106, 0
      %v1230 = vsel %vm304, %v1107, 0
      %v1233 = vsel %vm304, %v1108, 0
      %v1236 = vsel %vm304, %v1109, 0
      %v1239 = vsel %vm304, %v1110, 0
      %v1242 = vsel %vm304, %v1111, 0
      %v1245 = vsel %vm304, %v1112, 0
      %v1248 = vsel %vm304, %v1113, 0
      %v1251 = vsel %vm304, %v1114, 0
      %v1254 = vsel %vm304, %v1115, 0
      %v1257 = vsel %vm304, %v1116, 0
      %v1260 = vsel %vm304, %v1117, 0
      %v1263 = vsel %vm304, %v1118, 0
      %1265 = vmatpush.msra.mxu0 0.0
      %1266 = vmatpush.msra.mxu0 0.0
      %1267 = vmatpush.msra.mxu0 0.0
      %1268 = vmatpush.msra.mxu0 0.0
      %1269 = vmatpush.msra.mxu0 0.0
      %1270 = vmatpush.msra.mxu0 0.0
      %1271 = vmatpush.msra.mxu0 0.0
      %1272 = vmatpush.msra.mxu0 0.0
      %1273 = vmatpush.msra.mxu0 0.0
      %1274 = vmatpush.msra.mxu0 0.0
      %1275 = vmatpush.msra.mxu0 0.0
      %1276 = vmatpush.msra.mxu0 0.0
      %1277 = vmatpush.msra.mxu0 0.0
      %1278 = vmatpush.msra.mxu0 0.0
      %1279 = vmatpush.msra.mxu0 0.0
      %1280 = vmatpush.msra.mxu0 %v1120
      %1281 = vmatmul.f32.gmra.mxu0 %v1122
      %v1282 = vpop.f32.mrf.mxu0
      %v1283 = vadd.f32 0.0, %v1282
      %1284 = vmatmul.f32.gmra.mxu0 %v1125
      %v1285 = vpop.f32.mrf.mxu0
      %v1286 = vadd.f32 0.0, %v1285
      %1287 = vmatmul.f32.gmra.mxu0 %v1128
      %v1288 = vpop.f32.mrf.mxu0
      %1289 = vmatmul.f32.gmra.mxu0 %v1131
      %v1290 = vpop.f32.mrf.mxu0
      %v1291 = vadd.f32 0.0, %v1290
      %1292 = vmatmul.f32.gmra.mxu0 %v1134
      %v1293 = vpop.f32.mrf.mxu0
      %v1294 = vadd.f32 0.0, %v1293
      %1295 = vmatmul.f32.gmra.mxu0 %v1137
      %v1296 = vpop.f32.mrf.mxu0
      %1297 = vmatmul.f32.gmra.mxu0 %v1140
      %v1298 = vpop.f32.mrf.mxu0
      %v1299 = vadd.f32 0.0, %v1298
      %1300 = vmatmul.f32.gmra.mxu0 %v1143
      %v1301 = vpop.f32.mrf.mxu0
      %v1302 = vadd.f32 0.0, %v1301
      %1303 = vmatmul.f32.gmra.mxu0 %v1146
      %v1304 = vpop.f32.mrf.mxu0
      %1305 = vmatmul.f32.gmra.mxu0 %v1149
      %v1306 = vpop.f32.mrf.mxu0
      %v1307 = vadd.f32 0.0, %v1306
      %1308 = vmatmul.f32.gmra.mxu0 %v1152
      %v1309 = vpop.f32.mrf.mxu0
      %v1310 = vadd.f32 0.0, %v1309
      %1311 = vmatmul.f32.gmra.mxu0 %v1155
      %v1312 = vpop.f32.mrf.mxu0
      %1313 = vmatmul.f32.gmra.mxu0 %v1158
      %v1314 = vpop.f32.mrf.mxu0
      %v1315 = vadd.f32 0.0, %v1314
      %1316 = vmatmul.f32.gmra.mxu0 %v1161
      %v1317 = vpop.f32.mrf.mxu0
      %v1318 = vadd.f32 0.0, %v1317
      %1319 = vmatmul.f32.gmra.mxu0 %v1164
      %v1320 = vpop.f32.mrf.mxu0
      %1321 = vmatmul.f32.gmra.mxu0 %v1167
      %v1322 = vpop.f32.mrf.mxu0
      %v1323 = vadd.f32 0.0, %v1322
      %1324 = vmatmul.f32.gmra.mxu0 %v1170
      %v1325 = vpop.f32.mrf.mxu0
      %v1326 = vadd.f32 0.0, %v1325
      %1327 = vmatmul.f32.gmra.mxu0 %v1173
      %v1328 = vpop.f32.mrf.mxu0
      %1329 = vmatmul.f32.gmra.mxu0 %v1176
      %v1330 = vpop.f32.mrf.mxu0
      %v1331 = vadd.f32 0.0, %v1330
      %1332 = vmatmul.f32.gmra.mxu0 %v1179
      %v1333 = vpop.f32.mrf.mxu0
      %v1334 = vadd.f32 0.0, %v1333
      %1335 = vmatmul.f32.gmra.mxu0 %v1182
      %v1336 = vpop.f32.mrf.mxu0
      %1337 = vmatmul.f32.gmra.mxu0 %v1185
      %v1338 = vpop.f32.mrf.mxu0
      %v1339 = vadd.f32 0.0, %v1338
      %1340 = vmatmul.f32.gmra.mxu0 %v1188
      %v1341 = vpop.f32.mrf.mxu0
      %v1342 = vadd.f32 0.0, %v1341
      %1343 = vmatmul.f32.gmra.mxu0 %v1191
      %v1344 = vpop.f32.mrf.mxu0
      %1345 = vmatmul.f32.gmra.mxu0 %v1194
      %v1346 = vpop.f32.mrf.mxu0
      %v1347 = vadd.f32 0.0, %v1346
      %1348 = vmatmul.f32.gmra.mxu0 %v1197
      %v1349 = vpop.f32.mrf.mxu0
      %v1350 = vadd.f32 0.0, %v1349
      %1351 = vmatmul.f32.gmra.mxu0 %v1200
      %v1352 = vpop.f32.mrf.mxu0
      %1353 = vmatmul.f32.gmra.mxu0 %v1203
      %v1354 = vpop.f32.mrf.mxu0
      %v1355 = vadd.f32 0.0, %v1354
      %1356 = vmatmul.f32.gmra.mxu0 %v1206
      %v1357 = vpop.f32.mrf.mxu0
      %v1358 = vadd.f32 0.0, %v1357
      %1359 = vmatmul.f32.gmra.mxu0 %v1209
      %v1360 = vpop.f32.mrf.mxu0
      %1361 = vmatmul.f32.gmra.mxu0 %v1212
      %v1362 = vpop.f32.mrf.mxu0
      %v1363 = vadd.f32 0.0, %v1362
      %1364 = vmatmul.f32.gmra.mxu0 %v1215
      %v1365 = vpop.f32.mrf.mxu0
      %v1366 = vadd.f32 0.0, %v1365
      %1367 = vmatmul.f32.gmra.mxu0 %v1218
      %v1368 = vpop.f32.mrf.mxu0
      %1369 = vmatmul.f32.gmra.mxu0 %v1221
      %v1370 = vpop.f32.mrf.mxu0
      %v1371 = vadd.f32 0.0, %v1370
      %1372 = vmatmul.f32.gmra.mxu0 %v1224
      %v1373 = vpop.f32.mrf.mxu0
      %v1374 = vadd.f32 0.0, %v1373
      %1375 = vmatmul.f32.gmra.mxu0 %v1227
      %v1376 = vpop.f32.mrf.mxu0
      %1377 = vmatmul.f32.gmra.mxu0 %v1230
      %v1378 = vpop.f32.mrf.mxu0
      %v1379 = vadd.f32 0.0, %v1378
      %1380 = vmatmul.f32.gmra.mxu0 %v1233
      %v1381 = vpop.f32.mrf.mxu0
      %v1382 = vadd.f32 0.0, %v1381
      %1383 = vmatmul.f32.gmra.mxu0 %v1236
      %v1384 = vpop.f32.mrf.mxu0
      %1385 = vmatmul.f32.gmra.mxu0 %v1239
      %v1386 = vpop.f32.mrf.mxu0
      %v1387 = vadd.f32 0.0, %v1386
      %1388 = vmatmul.f32.gmra.mxu0 %v1242
      %v1389 = vpop.f32.mrf.mxu0
      %v1390 = vadd.f32 0.0, %v1389
      %1391 = vmatmul.f32.gmra.mxu0 %v1245
      %v1392 = vpop.f32.mrf.mxu0
      %1393 = vmatmul.f32.gmra.mxu0 %v1248
      %v1394 = vpop.f32.mrf.mxu0
      %v1395 = vadd.f32 0.0, %v1394
      %1396 = vmatmul.f32.gmra.mxu0 %v1251
      %v1397 = vpop.f32.mrf.mxu0
      %v1398 = vadd.f32 0.0, %v1397
      %1399 = vmatmul.f32.gmra.mxu0 %v1254
      %v1400 = vpop.f32.mrf.mxu0
      %1401 = vmatmul.f32.gmra.mxu0 %v1257
      %v1402 = vpop.f32.mrf.mxu0
      %v1403 = vadd.f32 0.0, %v1402
      %1404 = vmatmul.f32.gmra.mxu0 %v1260
      %v1405 = vpop.f32.mrf.mxu0
      %v1406 = vadd.f32 0.0, %v1405
      %1407 = vmatmul.f32.gmra.mxu0 %v1263
      %v1408 = vpop.f32.mrf.mxu0
      %1409 = vdwg.mxu0
      %v1410 = vadd.f32 %v944, %v1283
      %v1411 = vadd.f32 %v947, %v1286
      %v1412 = vadd.f32 %v952, %v1291
      %v1413 = vadd.f32 %v955, %v1294
      %v1414 = vadd.f32 %v960, %v1299
      %v1415 = vadd.f32 %v963, %v1302
      %v1416 = vadd.f32 %v968, %v1307
      %v1417 = vadd.f32 %v971, %v1310
      %v1418 = vadd.f32 %v976, %v1315
      %v1419 = vadd.f32 %v979, %v1318
      %v1420 = vadd.f32 %v984, %v1323
      %v1421 = vadd.f32 %v987, %v1326
      %v1422 = vadd.f32 %v992, %v1331
      %v1423 = vadd.f32 %v995, %v1334
      %v1424 = vadd.f32 %v1000, %v1339
      %v1425 = vadd.f32 %v1003, %v1342
      %v1426 = vadd.f32 %v1008, %v1347
      %v1427 = vadd.f32 %v1011, %v1350
      %v1428 = vadd.f32 %v1016, %v1355
      %v1429 = vadd.f32 %v1019, %v1358
      %v1430 = vadd.f32 %v1024, %v1363
      %v1431 = vadd.f32 %v1027, %v1366
      %v1432 = vadd.f32 %v1032, %v1371
      %v1433 = vadd.f32 %v1035, %v1374
      %v1434 = vadd.f32 %v1040, %v1379
      %v1435 = vadd.f32 %v1043, %v1382
      %v1436 = vadd.f32 %v1048, %v1387
      %v1437 = vadd.f32 %v1051, %v1390
      %v1438 = vadd.f32 %v1056, %v1395
      %v1439 = vadd.f32 %v1059, %v1398
      %v1440 = vadd.f32 %v1064, %v1403
      %v1441 = vadd.f32 %v1067, %v1406
      %v1442 = vld [vmem:[#allocation2 + $0x18] sm:$0xff]
      %v1443 = vld [vmem:[#allocation2 + $0x20] sm:$0xff]
      %v1444 = vld [vmem:[#allocation2 + $0x28] sm:$0xff]
      %v1445 = vld [vmem:[#allocation2 + $0x30] sm:$0xff]
      %v1446 = vld [vmem:[#allocation2 + $0x38] sm:$0xff]
      %v1447 = vld [vmem:[#allocation2 + $0x40] sm:$0xff]
      %v1448 = vld [vmem:[#allocation2 + $0x48] sm:$0xff]
      %v1449 = vld [vmem:[#allocation2 + $0x50] sm:$0xff]
      %v1450 = vld [vmem:[#allocation2 + $0x58] sm:$0xff]
      %v1451 = vld [vmem:[#allocation2 + $0x60] sm:$0xff]
      %v1452 = vld [vmem:[#allocation2 + $0x68] sm:$0xff]
      %v1453 = vld [vmem:[#allocation2 + $0x70] sm:$0xff]
      %v1454 = vld [vmem:[#allocation2 + $0x78] sm:$0xff]
      %v1455 = vld [vmem:[#allocation2 + $0x80] sm:$0xff]
      %v1456 = vld [vmem:[#allocation2 + $0x88] sm:$0xff]
      %v1457 = vld [vmem:[#allocation2 + $0x90] sm:$0xff]
      %v1458 = vld [vmem:[#allocation2 + $0x98] sm:$0xff]
      %v1459 = vld [vmem:[#allocation2 + $0xa0] sm:$0xff]
      %v1460 = vld [vmem:[#allocation2 + $0xa8] sm:$0xff]
      %v1461 = vld [vmem:[#allocation2 + $0xb0] sm:$0xff]
      %v1462 = vld [vmem:[#allocation2 + $0xb8] sm:$0xff]
      %v1463 = vld [vmem:[#allocation2 + $0xc0] sm:$0xff]
      %v1464 = vld [vmem:[#allocation2 + $0xc8] sm:$0xff]
      %v1465 = vld [vmem:[#allocation2 + $0xd0] sm:$0xff]
      %v1466 = vld [vmem:[#allocation2 + $0xd8] sm:$0xff]
      %v1467 = vld [vmem:[#allocation2 + $0xe0] sm:$0xff]
      %v1468 = vld [vmem:[#allocation2 + $0xe8] sm:$0xff]
      %v1469 = vld [vmem:[#allocation2 + $0xf0] sm:$0xff]
      %v1470 = vld [vmem:[#allocation2 + $0xf8] sm:$0xff]
      %v1471 = vld [vmem:[#allocation2 + $0x100] sm:$0xff]
      %v1472 = vld [vmem:[#allocation2 + $0x108] sm:$0xff]
      %v1473 = vld [vmem:[#allocation2 + $0x110] sm:$0xff]
      %v1474 = vld [vmem:[#allocation2 + $0x118] sm:$0xff]
      %v1475 = vld [vmem:[#allocation2 + $0x120] sm:$0xff]
      %v1476 = vld [vmem:[#allocation2 + $0x128] sm:$0xff]
      %v1477 = vld [vmem:[#allocation2 + $0x130] sm:$0xff]
      %v1478 = vld [vmem:[#allocation2 + $0x138] sm:$0xff]
      %v1479 = vld [vmem:[#allocation2 + $0x140] sm:$0xff]
      %v1480 = vld [vmem:[#allocation2 + $0x148] sm:$0xff]
      %v1481 = vld [vmem:[#allocation2 + $0x150] sm:$0xff]
      %v1482 = vld [vmem:[#allocation2 + $0x158] sm:$0xff]
      %v1483 = vld [vmem:[#allocation2 + $0x160] sm:$0xff]
      %v1484 = vld [vmem:[#allocation2 + $0x168] sm:$0xff]
      %v1485 = vld [vmem:[#allocation2 + $0x170] sm:$0xff]
      %v1486 = vld [vmem:[#allocation2 + $0x178] sm:$0xff]
      %v1487 = vld [vmem:[#allocation2 + $0x180] sm:$0xff]
      %v1488 = vld [vmem:[#allocation2 + $0x188] sm:$0xff]
      %v1489 = vld [vmem:[#allocation2 + $0x190] sm:$0xff]
      %s1490 = scalar_lea.vmem %s1, 24
      %v1491 = vld [vmem:[%s1490] sm:$0xff]
      %v1493 = vsel %vm304, %v1442, 0
      %v1496 = vsel %vm304, %v1443, 0
      %v1499 = vsel %vm304, %v1444, 0
      %v1502 = vsel %vm304, %v1445, 0
      %v1505 = vsel %vm304, %v1446, 0
      %v1508 = vsel %vm304, %v1447, 0
      %v1511 = vsel %vm304, %v1448, 0
      %v1514 = vsel %vm304, %v1449, 0
      %v1517 = vsel %vm304, %v1450, 0
      %v1520 = vsel %vm304, %v1451, 0
      %v1523 = vsel %vm304, %v1452, 0
      %v1526 = vsel %vm304, %v1453, 0
      %v1529 = vsel %vm304, %v1454, 0
      %v1532 = vsel %vm304, %v1455, 0
      %v1535 = vsel %vm304, %v1456, 0
      %v1538 = vsel %vm304, %v1457, 0
      %v1541 = vsel %vm304, %v1458, 0
      %v1544 = vsel %vm304, %v1459, 0
      %v1547 = vsel %vm304, %v1460, 0
      %v1550 = vsel %vm304, %v1461, 0
      %v1553 = vsel %vm304, %v1462, 0
      %v1556 = vsel %vm304, %v1463, 0
      %v1559 = vsel %vm304, %v1464, 0
      %v1562 = vsel %vm304, %v1465, 0
      %v1565 = vsel %vm304, %v1466, 0
      %v1568 = vsel %vm304, %v1467, 0
      %v1571 = vsel %vm304, %v1468, 0
      %v1574 = vsel %vm304, %v1469, 0
      %v1577 = vsel %vm304, %v1470, 0
      %v1580 = vsel %vm304, %v1471, 0
      %v1583 = vsel %vm304, %v1472, 0
      %v1586 = vsel %vm304, %v1473, 0
      %v1589 = vsel %vm304, %v1474, 0
      %v1592 = vsel %vm304, %v1475, 0
      %v1595 = vsel %vm304, %v1476, 0
      %v1598 = vsel %vm304, %v1477, 0
      %v1601 = vsel %vm304, %v1478, 0
      %v1604 = vsel %vm304, %v1479, 0
      %v1607 = vsel %vm304, %v1480, 0
      %v1610 = vsel %vm304, %v1481, 0
      %v1613 = vsel %vm304, %v1482, 0
      %v1616 = vsel %vm304, %v1483, 0
      %v1619 = vsel %vm304, %v1484, 0
      %v1622 = vsel %vm304, %v1485, 0
      %v1625 = vsel %vm304, %v1486, 0
      %v1628 = vsel %vm304, %v1487, 0
      %v1631 = vsel %vm304, %v1488, 0
      %v1634 = vsel %vm304, %v1489, 0
      %1636 = vmatpush.msra.mxu0 0.0
      %1637 = vmatpush.msra.mxu0 0.0
      %1638 = vmatpush.msra.mxu0 0.0
      %1639 = vmatpush.msra.mxu0 0.0
      %1640 = vmatpush.msra.mxu0 0.0
      %1641 = vmatpush.msra.mxu0 0.0
      %1642 = vmatpush.msra.mxu0 0.0
      %1643 = vmatpush.msra.mxu0 0.0
      %1644 = vmatpush.msra.mxu0 0.0
      %1645 = vmatpush.msra.mxu0 0.0
      %1646 = vmatpush.msra.mxu0 0.0
      %1647 = vmatpush.msra.mxu0 0.0
      %1648 = vmatpush.msra.mxu0 0.0
      %1649 = vmatpush.msra.mxu0 0.0
      %1650 = vmatpush.msra.mxu0 0.0
      %1651 = vmatpush.msra.mxu0 %v1491
      %1652 = vmatmul.f32.gmra.mxu0 %v1493
      %v1653 = vpop.f32.mrf.mxu0
      %v1654 = vadd.f32 0.0, %v1653
      %1655 = vmatmul.f32.gmra.mxu0 %v1496
      %v1656 = vpop.f32.mrf.mxu0
      %v1657 = vadd.f32 0.0, %v1656
      %1658 = vmatmul.f32.gmra.mxu0 %v1499
      %v1659 = vpop.f32.mrf.mxu0
      %1660 = vmatmul.f32.gmra.mxu0 %v1502
      %v1661 = vpop.f32.mrf.mxu0
      %v1662 = vadd.f32 0.0, %v1661
      %1663 = vmatmul.f32.gmra.mxu0 %v1505
      %v1664 = vpop.f32.mrf.mxu0
      %v1665 = vadd.f32 0.0, %v1664
      %1666 = vmatmul.f32.gmra.mxu0 %v1508
      %v1667 = vpop.f32.mrf.mxu0
      %1668 = vmatmul.f32.gmra.mxu0 %v1511
      %v1669 = vpop.f32.mrf.mxu0
      %v1670 = vadd.f32 0.0, %v1669
      %1671 = vmatmul.f32.gmra.mxu0 %v1514
      %v1672 = vpop.f32.mrf.mxu0
      %v1673 = vadd.f32 0.0, %v1672
      %1674 = vmatmul.f32.gmra.mxu0 %v1517
      %v1675 = vpop.f32.mrf.mxu0
      %1676 = vmatmul.f32.gmra.mxu0 %v1520
      %v1677 = vpop.f32.mrf.mxu0
      %v1678 = vadd.f32 0.0, %v1677
      %1679 = vmatmul.f32.gmra.mxu0 %v1523
      %v1680 = vpop.f32.mrf.mxu0
      %v1681 = vadd.f32 0.0, %v1680
      %1682 = vmatmul.f32.gmra.mxu0 %v1526
      %v1683 = vpop.f32.mrf.mxu0
      %1684 = vmatmul.f32.gmra.mxu0 %v1529
      %v1685 = vpop.f32.mrf.mxu0
      %v1686 = vadd.f32 0.0, %v1685
      %1687 = vmatmul.f32.gmra.mxu0 %v1532
      %v1688 = vpop.f32.mrf.mxu0
      %v1689 = vadd.f32 0.0, %v1688
      %1690 = vmatmul.f32.gmra.mxu0 %v1535
      %v1691 = vpop.f32.mrf.mxu0
      %1692 = vmatmul.f32.gmra.mxu0 %v1538
      %v1693 = vpop.f32.mrf.mxu0
      %v1694 = vadd.f32 0.0, %v1693
      %1695 = vmatmul.f32.gmra.mxu0 %v1541
      %v1696 = vpop.f32.mrf.mxu0
      %v1697 = vadd.f32 0.0, %v1696
      %1698 = vmatmul.f32.gmra.mxu0 %v1544
      %v1699 = vpop.f32.mrf.mxu0
      %1700 = vmatmul.f32.gmra.mxu0 %v1547
      %v1701 = vpop.f32.mrf.mxu0
      %v1702 = vadd.f32 0.0, %v1701
      %1703 = vmatmul.f32.gmra.mxu0 %v1550
      %v1704 = vpop.f32.mrf.mxu0
      %v1705 = vadd.f32 0.0, %v1704
      %1706 = vmatmul.f32.gmra.mxu0 %v1553
      %v1707 = vpop.f32.mrf.mxu0
      %1708 = vmatmul.f32.gmra.mxu0 %v1556
      %v1709 = vpop.f32.mrf.mxu0
      %v1710 = vadd.f32 0.0, %v1709
      %1711 = vmatmul.f32.gmra.mxu0 %v1559
      %v1712 = vpop.f32.mrf.mxu0
      %v1713 = vadd.f32 0.0, %v1712
      %1714 = vmatmul.f32.gmra.mxu0 %v1562
      %v1715 = vpop.f32.mrf.mxu0
      %1716 = vmatmul.f32.gmra.mxu0 %v1565
      %v1717 = vpop.f32.mrf.mxu0
      %v1718 = vadd.f32 0.0, %v1717
      %1719 = vmatmul.f32.gmra.mxu0 %v1568
      %v1720 = vpop.f32.mrf.mxu0
      %v1721 = vadd.f32 0.0, %v1720
      %1722 = vmatmul.f32.gmra.mxu0 %v1571
      %v1723 = vpop.f32.mrf.mxu0
      %1724 = vmatmul.f32.gmra.mxu0 %v1574
      %v1725 = vpop.f32.mrf.mxu0
      %v1726 = vadd.f32 0.0, %v1725
      %1727 = vmatmul.f32.gmra.mxu0 %v1577
      %v1728 = vpop.f32.mrf.mxu0
      %v1729 = vadd.f32 0.0, %v1728
      %1730 = vmatmul.f32.gmra.mxu0 %v1580
      %v1731 = vpop.f32.mrf.mxu0
      %1732 = vmatmul.f32.gmra.mxu0 %v1583
      %v1733 = vpop.f32.mrf.mxu0
      %v1734 = vadd.f32 0.0, %v1733
      %1735 = vmatmul.f32.gmra.mxu0 %v1586
      %v1736 = vpop.f32.mrf.mxu0
      %v1737 = vadd.f32 0.0, %v1736
      %1738 = vmatmul.f32.gmra.mxu0 %v1589
      %v1739 = vpop.f32.mrf.mxu0
      %1740 = vmatmul.f32.gmra.mxu0 %v1592
      %v1741 = vpop.f32.mrf.mxu0
      %v1742 = vadd.f32 0.0, %v1741
      %1743 = vmatmul.f32.gmra.mxu0 %v1595
      %v1744 = vpop.f32.mrf.mxu0
      %v1745 = vadd.f32 0.0, %v1744
      %1746 = vmatmul.f32.gmra.mxu0 %v1598
      %v1747 = vpop.f32.mrf.mxu0
      %1748 = vmatmul.f32.gmra.mxu0 %v1601
      %v1749 = vpop.f32.mrf.mxu0
      %v1750 = vadd.f32 0.0, %v1749
      %1751 = vmatmul.f32.gmra.mxu0 %v1604
      %v1752 = vpop.f32.mrf.mxu0
      %v1753 = vadd.f32 0.0, %v1752
      %1754 = vmatmul.f32.gmra.mxu0 %v1607
      %v1755 = vpop.f32.mrf.mxu0
      %1756 = vmatmul.f32.gmra.mxu0 %v1610
      %v1757 = vpop.f32.mrf.mxu0
      %v1758 = vadd.f32 0.0, %v1757
      %1759 = vmatmul.f32.gmra.mxu0 %v1613
      %v1760 = vpop.f32.mrf.mxu0
      %v1761 = vadd.f32 0.0, %v1760
      %1762 = vmatmul.f32.gmra.mxu0 %v1616
      %v1763 = vpop.f32.mrf.mxu0
      %1764 = vmatmul.f32.gmra.mxu0 %v1619
      %v1765 = vpop.f32.mrf.mxu0
      %v1766 = vadd.f32 0.0, %v1765
      %1767 = vmatmul.f32.gmra.mxu0 %v1622
      %v1768 = vpop.f32.mrf.mxu0
      %v1769 = vadd.f32 0.0, %v1768
      %1770 = vmatmul.f32.gmra.mxu0 %v1625
      %v1771 = vpop.f32.mrf.mxu0
      %1772 = vmatmul.f32.gmra.mxu0 %v1628
      %v1773 = vpop.f32.mrf.mxu0
      %v1774 = vadd.f32 0.0, %v1773
      %1775 = vmatmul.f32.gmra.mxu0 %v1631
      %v1776 = vpop.f32.mrf.mxu0
      %v1777 = vadd.f32 0.0, %v1776
      %1778 = vmatmul.f32.gmra.mxu0 %v1634
      %v1779 = vpop.f32.mrf.mxu0
      %1780 = vdwg.mxu0
      %v1781 = vadd.f32 %v1410, %v1654
      %v1782 = vadd.f32 %v1411, %v1657
      %v1783 = vadd.f32 %v1412, %v1662
      %v1784 = vadd.f32 %v1413, %v1665
      %v1785 = vadd.f32 %v1414, %v1670
      %v1786 = vadd.f32 %v1415, %v1673
      %v1787 = vadd.f32 %v1416, %v1678
      %v1788 = vadd.f32 %v1417, %v1681
      %v1789 = vadd.f32 %v1418, %v1686
      %v1790 = vadd.f32 %v1419, %v1689
      %v1791 = vadd.f32 %v1420, %v1694
      %v1792 = vadd.f32 %v1421, %v1697
      %v1793 = vadd.f32 %v1422, %v1702
      %v1794 = vadd.f32 %v1423, %v1705
      %v1795 = vadd.f32 %v1424, %v1710
      %v1796 = vadd.f32 %v1425, %v1713
      %v1797 = vadd.f32 %v1426, %v1718
      %v1798 = vadd.f32 %v1427, %v1721
      %v1799 = vadd.f32 %v1428, %v1726
      %v1800 = vadd.f32 %v1429, %v1729
      %v1801 = vadd.f32 %v1430, %v1734
      %v1802 = vadd.f32 %v1431, %v1737
      %v1803 = vadd.f32 %v1432, %v1742
      %v1804 = vadd.f32 %v1433, %v1745
      %v1805 = vadd.f32 %v1434, %v1750
      %v1806 = vadd.f32 %v1435, %v1753
      %v1807 = vadd.f32 %v1436, %v1758
      %v1808 = vadd.f32 %v1437, %v1761
      %v1809 = vadd.f32 %v1438, %v1766
      %v1810 = vadd.f32 %v1439, %v1769
      %v1811 = vadd.f32 %v1440, %v1774
      %v1812 = vadd.f32 %v1441, %v1777
      %v1813 = vld [vmem:[#allocation2 + $0x19] sm:$0xff]
      %v1814 = vld [vmem:[#allocation2 + $0x21] sm:$0xff]
      %v1815 = vld [vmem:[#allocation2 + $0x29] sm:$0xff]
      %v1816 = vld [vmem:[#allocation2 + $0x31] sm:$0xff]
      %v1817 = vld [vmem:[#allocation2 + $0x39] sm:$0xff]
      %v1818 = vld [vmem:[#allocation2 + $0x41] sm:$0xff]
      %v1819 = vld [vmem:[#allocation2 + $0x49] sm:$0xff]
      %v1820 = vld [vmem:[#allocation2 + $0x51] sm:$0xff]
      %v1821 = vld [vmem:[#allocation2 + $0x59] sm:$0xff]
      %v1822 = vld [vmem:[#allocation2 + $0x61] sm:$0xff]
      %v1823 = vld [vmem:[#allocation2 + $0x69] sm:$0xff]
      %v1824 = vld [vmem:[#allocation2 + $0x71] sm:$0xff]
      %v1825 = vld [vmem:[#allocation2 + $0x79] sm:$0xff]
      %v1826 = vld [vmem:[#allocation2 + $0x81] sm:$0xff]
      %v1827 = vld [vmem:[#allocation2 + $0x89] sm:$0xff]
      %v1828 = vld [vmem:[#allocation2 + $0x91] sm:$0xff]
      %v1829 = vld [vmem:[#allocation2 + $0x99] sm:$0xff]
      %v1830 = vld [vmem:[#allocation2 + $0xa1] sm:$0xff]
      %v1831 = vld [vmem:[#allocation2 + $0xa9] sm:$0xff]
      %v1832 = vld [vmem:[#allocation2 + $0xb1] sm:$0xff]
      %v1833 = vld [vmem:[#allocation2 + $0xb9] sm:$0xff]
      %v1834 = vld [vmem:[#allocation2 + $0xc1] sm:$0xff]
      %v1835 = vld [vmem:[#allocation2 + $0xc9] sm:$0xff]
      %v1836 = vld [vmem:[#allocation2 + $0xd1] sm:$0xff]
      %v1837 = vld [vmem:[#allocation2 + $0xd9] sm:$0xff]
      %v1838 = vld [vmem:[#allocation2 + $0xe1] sm:$0xff]
      %v1839 = vld [vmem:[#allocation2 + $0xe9] sm:$0xff]
      %v1840 = vld [vmem:[#allocation2 + $0xf1] sm:$0xff]
      %v1841 = vld [vmem:[#allocation2 + $0xf9] sm:$0xff]
      %v1842 = vld [vmem:[#allocation2 + $0x101] sm:$0xff]
      %v1843 = vld [vmem:[#allocation2 + $0x109] sm:$0xff]
      %v1844 = vld [vmem:[#allocation2 + $0x111] sm:$0xff]
      %v1845 = vld [vmem:[#allocation2 + $0x119] sm:$0xff]
      %v1846 = vld [vmem:[#allocation2 + $0x121] sm:$0xff]
      %v1847 = vld [vmem:[#allocation2 + $0x129] sm:$0xff]
      %v1848 = vld [vmem:[#allocation2 + $0x131] sm:$0xff]
      %v1849 = vld [vmem:[#allocation2 + $0x139] sm:$0xff]
      %v1850 = vld [vmem:[#allocation2 + $0x141] sm:$0xff]
      %v1851 = vld [vmem:[#allocation2 + $0x149] sm:$0xff]
      %v1852 = vld [vmem:[#allocation2 + $0x151] sm:$0xff]
      %v1853 = vld [vmem:[#allocation2 + $0x159] sm:$0xff]
      %v1854 = vld [vmem:[#allocation2 + $0x161] sm:$0xff]
      %v1855 = vld [vmem:[#allocation2 + $0x169] sm:$0xff]
      %v1856 = vld [vmem:[#allocation2 + $0x171] sm:$0xff]
      %v1857 = vld [vmem:[#allocation2 + $0x179] sm:$0xff]
      %v1858 = vld [vmem:[#allocation2 + $0x181] sm:$0xff]
      %v1859 = vld [vmem:[#allocation2 + $0x189] sm:$0xff]
      %v1860 = vld [vmem:[#allocation2 + $0x191] sm:$0xff]
      %s1861 = scalar_lea.vmem %s1, 32
      %v1862 = vld [vmem:[%s1861] sm:$0xff]
      %v1864 = vsel %vm304, %v1813, 0
      %v1867 = vsel %vm304, %v1814, 0
      %v1870 = vsel %vm304, %v1815, 0
      %v1873 = vsel %vm304, %v1816, 0
      %v1876 = vsel %vm304, %v1817, 0
      %v1879 = vsel %vm304, %v1818, 0
      %v1882 = vsel %vm304, %v1819, 0
      %v1885 = vsel %vm304, %v1820, 0
      %v1888 = vsel %vm304, %v1821, 0
      %v1891 = vsel %vm304, %v1822, 0
      %v1894 = vsel %vm304, %v1823, 0
      %v1897 = vsel %vm304, %v1824, 0
      %v1900 = vsel %vm304, %v1825, 0
      %v1903 = vsel %vm304, %v1826, 0
      %v1906 = vsel %vm304, %v1827, 0
      %v1909 = vsel %vm304, %v1828, 0
      %v1912 = vsel %vm304, %v1829, 0
      %v1915 = vsel %vm304, %v1830, 0
      %v1918 = vsel %vm304, %v1831, 0
      %v1921 = vsel %vm304, %v1832, 0
      %v1924 = vsel %vm304, %v1833, 0
      %v1927 = vsel %vm304, %v1834, 0
      %v1930 = vsel %vm304, %v1835, 0
      %v1933 = vsel %vm304, %v1836, 0
      %v1936 = vsel %vm304, %v1837, 0
      %v1939 = vsel %vm304, %v1838, 0
      %v1942 = vsel %vm304, %v1839, 0
      %v1945 = vsel %vm304, %v1840, 0
      %v1948 = vsel %vm304, %v1841, 0
      %v1951 = vsel %vm304, %v1842, 0
      %v1954 = vsel %vm304, %v1843, 0
      %v1957 = vsel %vm304, %v1844, 0
      %v1960 = vsel %vm304, %v1845, 0
      %v1963 = vsel %vm304, %v1846, 0
      %v1966 = vsel %vm304, %v1847, 0
      %v1969 = vsel %vm304, %v1848, 0
      %v1972 = vsel %vm304, %v1849, 0
      %v1975 = vsel %vm304, %v1850, 0
      %v1978 = vsel %vm304, %v1851, 0
      %v1981 = vsel %vm304, %v1852, 0
      %v1984 = vsel %vm304, %v1853, 0
      %v1987 = vsel %vm304, %v1854, 0
      %v1990 = vsel %vm304, %v1855, 0
      %v1993 = vsel %vm304, %v1856, 0
      %v1996 = vsel %vm304, %v1857, 0
      %v1999 = vsel %vm304, %v1858, 0
      %v2002 = vsel %vm304, %v1859, 0
      %v2005 = vsel %vm304, %v1860, 0
      %2007 = vmatpush.msra.mxu0 0.0
      %2008 = vmatpush.msra.mxu0 0.0
      %2009 = vmatpush.msra.mxu0 0.0
      %2010 = vmatpush.msra.mxu0 0.0
      %2011 = vmatpush.msra.mxu0 0.0
      %2012 = vmatpush.msra.mxu0 0.0
      %2013 = vmatpush.msra.mxu0 0.0
      %2014 = vmatpush.msra.mxu0 0.0
      %2015 = vmatpush.msra.mxu0 0.0
      %2016 = vmatpush.msra.mxu0 0.0
      %2017 = vmatpush.msra.mxu0 0.0
      %2018 = vmatpush.msra.mxu0 0.0
      %2019 = vmatpush.msra.mxu0 0.0
      %2020 = vmatpush.msra.mxu0 0.0
      %2021 = vmatpush.msra.mxu0 0.0
      %2022 = vmatpush.msra.mxu0 %v1862
      %2023 = vmatmul.f32.gmra.mxu0 %v1864
      %v2024 = vpop.f32.mrf.mxu0
      %v2025 = vadd.f32 0.0, %v2024
      %2026 = vmatmul.f32.gmra.mxu0 %v1867
      %v2027 = vpop.f32.mrf.mxu0
      %v2028 = vadd.f32 0.0, %v2027
      %2029 = vmatmul.f32.gmra.mxu0 %v1870
      %v2030 = vpop.f32.mrf.mxu0
      %2031 = vmatmul.f32.gmra.mxu0 %v1873
      %v2032 = vpop.f32.mrf.mxu0
      %v2033 = vadd.f32 0.0, %v2032
      %2034 = vmatmul.f32.gmra.mxu0 %v1876
      %v2035 = vpop.f32.mrf.mxu0
      %v2036 = vadd.f32 0.0, %v2035
      %2037 = vmatmul.f32.gmra.mxu0 %v1879
      %v2038 = vpop.f32.mrf.mxu0
      %2039 = vmatmul.f32.gmra.mxu0 %v1882
      %v2040 = vpop.f32.mrf.mxu0
      %v2041 = vadd.f32 0.0, %v2040
      %2042 = vmatmul.f32.gmra.mxu0 %v1885
      %v2043 = vpop.f32.mrf.mxu0
      %v2044 = vadd.f32 0.0, %v2043
      %2045 = vmatmul.f32.gmra.mxu0 %v1888
      %v2046 = vpop.f32.mrf.mxu0
      %2047 = vmatmul.f32.gmra.mxu0 %v1891
      %v2048 = vpop.f32.mrf.mxu0
      %v2049 = vadd.f32 0.0, %v2048
      %2050 = vmatmul.f32.gmra.mxu0 %v1894
      %v2051 = vpop.f32.mrf.mxu0
      %v2052 = vadd.f32 0.0, %v2051
      %2053 = vmatmul.f32.gmra.mxu0 %v1897
      %v2054 = vpop.f32.mrf.mxu0
      %2055 = vmatmul.f32.gmra.mxu0 %v1900
      %v2056 = vpop.f32.mrf.mxu0
      %v2057 = vadd.f32 0.0, %v2056
      %2058 = vmatmul.f32.gmra.mxu0 %v1903
      %v2059 = vpop.f32.mrf.mxu0
      %v2060 = vadd.f32 0.0, %v2059
      %2061 = vmatmul.f32.gmra.mxu0 %v1906
      %v2062 = vpop.f32.mrf.mxu0
      %2063 = vmatmul.f32.gmra.mxu0 %v1909
      %v2064 = vpop.f32.mrf.mxu0
      %v2065 = vadd.f32 0.0, %v2064
      %2066 = vmatmul.f32.gmra.mxu0 %v1912
      %v2067 = vpop.f32.mrf.mxu0
      %v2068 = vadd.f32 0.0, %v2067
      %2069 = vmatmul.f32.gmra.mxu0 %v1915
      %v2070 = vpop.f32.mrf.mxu0
      %2071 = vmatmul.f32.gmra.mxu0 %v1918
      %v2072 = vpop.f32.mrf.mxu0
      %v2073 = vadd.f32 0.0, %v2072
      %2074 = vmatmul.f32.gmra.mxu0 %v1921
      %v2075 = vpop.f32.mrf.mxu0
      %v2076 = vadd.f32 0.0, %v2075
      %2077 = vmatmul.f32.gmra.mxu0 %v1924
      %v2078 = vpop.f32.mrf.mxu0
      %2079 = vmatmul.f32.gmra.mxu0 %v1927
      %v2080 = vpop.f32.mrf.mxu0
      %v2081 = vadd.f32 0.0, %v2080
      %2082 = vmatmul.f32.gmra.mxu0 %v1930
      %v2083 = vpop.f32.mrf.mxu0
      %v2084 = vadd.f32 0.0, %v2083
      %2085 = vmatmul.f32.gmra.mxu0 %v1933
      %v2086 = vpop.f32.mrf.mxu0
      %2087 = vmatmul.f32.gmra.mxu0 %v1936
      %v2088 = vpop.f32.mrf.mxu0
      %v2089 = vadd.f32 0.0, %v2088
      %2090 = vmatmul.f32.gmra.mxu0 %v1939
      %v2091 = vpop.f32.mrf.mxu0
      %v2092 = vadd.f32 0.0, %v2091
      %2093 = vmatmul.f32.gmra.mxu0 %v1942
      %v2094 = vpop.f32.mrf.mxu0
      %2095 = vmatmul.f32.gmra.mxu0 %v1945
      %v2096 = vpop.f32.mrf.mxu0
      %v2097 = vadd.f32 0.0, %v2096
      %2098 = vmatmul.f32.gmra.mxu0 %v1948
      %v2099 = vpop.f32.mrf.mxu0
      %v2100 = vadd.f32 0.0, %v2099
      %2101 = vmatmul.f32.gmra.mxu0 %v1951
      %v2102 = vpop.f32.mrf.mxu0
      %2103 = vmatmul.f32.gmra.mxu0 %v1954
      %v2104 = vpop.f32.mrf.mxu0
      %v2105 = vadd.f32 0.0, %v2104
      %2106 = vmatmul.f32.gmra.mxu0 %v1957
      %v2107 = vpop.f32.mrf.mxu0
      %v2108 = vadd.f32 0.0, %v2107
      %2109 = vmatmul.f32.gmra.mxu0 %v1960
      %v2110 = vpop.f32.mrf.mxu0
      %2111 = vmatmul.f32.gmra.mxu0 %v1963
      %v2112 = vpop.f32.mrf.mxu0
      %v2113 = vadd.f32 0.0, %v2112
      %2114 = vmatmul.f32.gmra.mxu0 %v1966
      %v2115 = vpop.f32.mrf.mxu0
      %v2116 = vadd.f32 0.0, %v2115
      %2117 = vmatmul.f32.gmra.mxu0 %v1969
      %v2118 = vpop.f32.mrf.mxu0
      %2119 = vmatmul.f32.gmra.mxu0 %v1972
      %v2120 = vpop.f32.mrf.mxu0
      %v2121 = vadd.f32 0.0, %v2120
      %2122 = vmatmul.f32.gmra.mxu0 %v1975
      %v2123 = vpop.f32.mrf.mxu0
      %v2124 = vadd.f32 0.0, %v2123
      %2125 = vmatmul.f32.gmra.mxu0 %v1978
      %v2126 = vpop.f32.mrf.mxu0
      %2127 = vmatmul.f32.gmra.mxu0 %v1981
      %v2128 = vpop.f32.mrf.mxu0
      %v2129 = vadd.f32 0.0, %v2128
      %2130 = vmatmul.f32.gmra.mxu0 %v1984
      %v2131 = vpop.f32.mrf.mxu0
      %v2132 = vadd.f32 0.0, %v2131
      %2133 = vmatmul.f32.gmra.mxu0 %v1987
      %v2134 = vpop.f32.mrf.mxu0
      %2135 = vmatmul.f32.gmra.mxu0 %v1990
      %v2136 = vpop.f32.mrf.mxu0
      %v2137 = vadd.f32 0.0, %v2136
      %2138 = vmatmul.f32.gmra.mxu0 %v1993
      %v2139 = vpop.f32.mrf.mxu0
      %v2140 = vadd.f32 0.0, %v2139
      %2141 = vmatmul.f32.gmra.mxu0 %v1996
      %v2142 = vpop.f32.mrf.mxu0
      %2143 = vmatmul.f32.gmra.mxu0 %v1999
      %v2144 = vpop.f32.mrf.mxu0
      %v2145 = vadd.f32 0.0, %v2144
      %2146 = vmatmul.f32.gmra.mxu0 %v2002
      %v2147 = vpop.f32.mrf.mxu0
      %v2148 = vadd.f32 0.0, %v2147
      %2149 = vmatmul.f32.gmra.mxu0 %v2005
      %v2150 = vpop.f32.mrf.mxu0
      %2151 = vdwg.mxu0
      %v2152 = vadd.f32 %v1781, %v2025
      %v2153 = vadd.f32 %v1782, %v2028
      %v2154 = vadd.f32 %v1783, %v2033
      %v2155 = vadd.f32 %v1784, %v2036
      %v2156 = vadd.f32 %v1785, %v2041
      %v2157 = vadd.f32 %v1786, %v2044
      %v2158 = vadd.f32 %v1787, %v2049
      %v2159 = vadd.f32 %v1788, %v2052
      %v2160 = vadd.f32 %v1789, %v2057
      %v2161 = vadd.f32 %v1790, %v2060
      %v2162 = vadd.f32 %v1791, %v2065
      %v2163 = vadd.f32 %v1792, %v2068
      %v2164 = vadd.f32 %v1793, %v2073
      %v2165 = vadd.f32 %v1794, %v2076
      %v2166 = vadd.f32 %v1795, %v2081
      %v2167 = vadd.f32 %v1796, %v2084
      %v2168 = vadd.f32 %v1797, %v2089
      %v2169 = vadd.f32 %v1798, %v2092
      %v2170 = vadd.f32 %v1799, %v2097
      %v2171 = vadd.f32 %v1800, %v2100
      %v2172 = vadd.f32 %v1801, %v2105
      %v2173 = vadd.f32 %v1802, %v2108
      %v2174 = vadd.f32 %v1803, %v2113
      %v2175 = vadd.f32 %v1804, %v2116
      %v2176 = vadd.f32 %v1805, %v2121
      %v2177 = vadd.f32 %v1806, %v2124
      %v2178 = vadd.f32 %v1807, %v2129
      %v2179 = vadd.f32 %v1808, %v2132
      %v2180 = vadd.f32 %v1809, %v2137
      %v2181 = vadd.f32 %v1810, %v2140
      %v2182 = vadd.f32 %v1811, %v2145
      %v2183 = vadd.f32 %v1812, %v2148
      %v2184 = vld [vmem:[#allocation2 + $0x1a] sm:$0xff]
      %v2185 = vld [vmem:[#allocation2 + $0x22] sm:$0xff]
      %v2186 = vld [vmem:[#allocation2 + $0x2a] sm:$0xff]
      %v2187 = vld [vmem:[#allocation2 + $0x32] sm:$0xff]
      %v2188 = vld [vmem:[#allocation2 + $0x3a] sm:$0xff]
      %v2189 = vld [vmem:[#allocation2 + $0x42] sm:$0xff]
      %v2190 = vld [vmem:[#allocation2 + $0x4a] sm:$0xff]
      %v2191 = vld [vmem:[#allocation2 + $0x52] sm:$0xff]
      %v2192 = vld [vmem:[#allocation2 + $0x5a] sm:$0xff]
      %v2193 = vld [vmem:[#allocation2 + $0x62] sm:$0xff]
      %v2194 = vld [vmem:[#allocation2 + $0x6a] sm:$0xff]
      %v2195 = vld [vmem:[#allocation2 + $0x72] sm:$0xff]
      %v2196 = vld [vmem:[#allocation2 + $0x7a] sm:$0xff]
      %v2197 = vld [vmem:[#allocation2 + $0x82] sm:$0xff]
      %v2198 = vld [vmem:[#allocation2 + $0x8a] sm:$0xff]
      %v2199 = vld [vmem:[#allocation2 + $0x92] sm:$0xff]
      %v2200 = vld [vmem:[#allocation2 + $0x9a] sm:$0xff]
      %v2201 = vld [vmem:[#allocation2 + $0xa2] sm:$0xff]
      %v2202 = vld [vmem:[#allocation2 + $0xaa] sm:$0xff]
      %v2203 = vld [vmem:[#allocation2 + $0xb2] sm:$0xff]
      %v2204 = vld [vmem:[#allocation2 + $0xba] sm:$0xff]
      %v2205 = vld [vmem:[#allocation2 + $0xc2] sm:$0xff]
      %v2206 = vld [vmem:[#allocation2 + $0xca] sm:$0xff]
      %v2207 = vld [vmem:[#allocation2 + $0xd2] sm:$0xff]
      %v2208 = vld [vmem:[#allocation2 + $0xda] sm:$0xff]
      %v2209 = vld [vmem:[#allocation2 + $0xe2] sm:$0xff]
      %v2210 = vld [vmem:[#allocation2 + $0xea] sm:$0xff]
      %v2211 = vld [vmem:[#allocation2 + $0xf2] sm:$0xff]
      %v2212 = vld [vmem:[#allocation2 + $0xfa] sm:$0xff]
      %v2213 = vld [vmem:[#allocation2 + $0x102] sm:$0xff]
      %v2214 = vld [vmem:[#allocation2 + $0x10a] sm:$0xff]
      %v2215 = vld [vmem:[#allocation2 + $0x112] sm:$0xff]
      %v2216 = vld [vmem:[#allocation2 + $0x11a] sm:$0xff]
      %v2217 = vld [vmem:[#allocation2 + $0x122] sm:$0xff]
      %v2218 = vld [vmem:[#allocation2 + $0x12a] sm:$0xff]
      %v2219 = vld [vmem:[#allocation2 + $0x132] sm:$0xff]
      %v2220 = vld [vmem:[#allocation2 + $0x13a] sm:$0xff]
      %v2221 = vld [vmem:[#allocation2 + $0x142] sm:$0xff]
      %v2222 = vld [vmem:[#allocation2 + $0x14a] sm:$0xff]
      %v2223 = vld [vmem:[#allocation2 + $0x152] sm:$0xff]
      %v2224 = vld [vmem:[#allocation2 + $0x15a] sm:$0xff]
      %v2225 = vld [vmem:[#allocation2 + $0x162] sm:$0xff]
      %v2226 = vld [vmem:[#allocation2 + $0x16a] sm:$0xff]
      %v2227 = vld [vmem:[#allocation2 + $0x172] sm:$0xff]
      %v2228 = vld [vmem:[#allocation2 + $0x17a] sm:$0xff]
      %v2229 = vld [vmem:[#allocation2 + $0x182] sm:$0xff]
      %v2230 = vld [vmem:[#allocation2 + $0x18a] sm:$0xff]
      %v2231 = vld [vmem:[#allocation2 + $0x192] sm:$0xff]
      %s2232 = scalar_lea.vmem %s1, 40
      %v2233 = vld [vmem:[%s2232] sm:$0xff]
      %v2235 = vsel %vm304, %v2184, 0
      %v2238 = vsel %vm304, %v2185, 0
      %v2241 = vsel %vm304, %v2186, 0
      %v2244 = vsel %vm304, %v2187, 0
      %v2247 = vsel %vm304, %v2188, 0
      %v2250 = vsel %vm304, %v2189, 0
      %v2253 = vsel %vm304, %v2190, 0
      %v2256 = vsel %vm304, %v2191, 0
      %v2259 = vsel %vm304, %v2192, 0
      %v2262 = vsel %vm304, %v2193, 0
      %v2265 = vsel %vm304, %v2194, 0
      %v2268 = vsel %vm304, %v2195, 0
      %v2271 = vsel %vm304, %v2196, 0
      %v2274 = vsel %vm304, %v2197, 0
      %v2277 = vsel %vm304, %v2198, 0
      %v2280 = vsel %vm304, %v2199, 0
      %v2283 = vsel %vm304, %v2200, 0
      %v2286 = vsel %vm304, %v2201, 0
      %v2289 = vsel %vm304, %v2202, 0
      %v2292 = vsel %vm304, %v2203, 0
      %v2295 = vsel %vm304, %v2204, 0
      %v2298 = vsel %vm304, %v2205, 0
      %v2301 = vsel %vm304, %v2206, 0
      %v2304 = vsel %vm304, %v2207, 0
      %v2307 = vsel %vm304, %v2208, 0
      %v2310 = vsel %vm304, %v2209, 0
      %v2313 = vsel %vm304, %v2210, 0
      %v2316 = vsel %vm304, %v2211, 0
      %v2319 = vsel %vm304, %v2212, 0
      %v2322 = vsel %vm304, %v2213, 0
      %v2325 = vsel %vm304, %v2214, 0
      %v2328 = vsel %vm304, %v2215, 0
      %v2331 = vsel %vm304, %v2216, 0
      %v2334 = vsel %vm304, %v2217, 0
      %v2337 = vsel %vm304, %v2218, 0
      %v2340 = vsel %vm304, %v2219, 0
      %v2343 = vsel %vm304, %v2220, 0
      %v2346 = vsel %vm304, %v2221, 0
      %v2349 = vsel %vm304, %v2222, 0
      %v2352 = vsel %vm304, %v2223, 0
      %v2355 = vsel %vm304, %v2224, 0
      %v2358 = vsel %vm304, %v2225, 0
      %v2361 = vsel %vm304, %v2226, 0
      %v2364 = vsel %vm304, %v2227, 0
      %v2367 = vsel %vm304, %v2228, 0
      %v2370 = vsel %vm304, %v2229, 0
      %v2373 = vsel %vm304, %v2230, 0
      %v2376 = vsel %vm304, %v2231, 0
      %2378 = vmatpush.msra.mxu0 0.0
      %2379 = vmatpush.msra.mxu0 0.0
      %2380 = vmatpush.msra.mxu0 0.0
      %2381 = vmatpush.msra.mxu0 0.0
      %2382 = vmatpush.msra.mxu0 0.0
      %2383 = vmatpush.msra.mxu0 0.0
      %2384 = vmatpush.msra.mxu0 0.0
      %2385 = vmatpush.msra.mxu0 0.0
      %2386 = vmatpush.msra.mxu0 0.0
      %2387 = vmatpush.msra.mxu0 0.0
      %2388 = vmatpush.msra.mxu0 0.0
      %2389 = vmatpush.msra.mxu0 0.0
      %2390 = vmatpush.msra.mxu0 0.0
      %2391 = vmatpush.msra.mxu0 0.0
      %2392 = vmatpush.msra.mxu0 0.0
      %2393 = vmatpush.msra.mxu0 %v2233
      %2394 = vmatmul.f32.gmra.mxu0 %v2235
      %v2395 = vpop.f32.mrf.mxu0
      %v2396 = vadd.f32 0.0, %v2395
      %2397 = vmatmul.f32.gmra.mxu0 %v2238
      %v2398 = vpop.f32.mrf.mxu0
      %v2399 = vadd.f32 0.0, %v2398
      %2400 = vmatmul.f32.gmra.mxu0 %v2241
      %v2401 = vpop.f32.mrf.mxu0
      %2402 = vmatmul.f32.gmra.mxu0 %v2244
      %v2403 = vpop.f32.mrf.mxu0
      %v2404 = vadd.f32 0.0, %v2403
      %2405 = vmatmul.f32.gmra.mxu0 %v2247
      %v2406 = vpop.f32.mrf.mxu0
      %v2407 = vadd.f32 0.0, %v2406
      %2408 = vmatmul.f32.gmra.mxu0 %v2250
      %v2409 = vpop.f32.mrf.mxu0
      %2410 = vmatmul.f32.gmra.mxu0 %v2253
      %v2411 = vpop.f32.mrf.mxu0
      %v2412 = vadd.f32 0.0, %v2411
      %2413 = vmatmul.f32.gmra.mxu0 %v2256
      %v2414 = vpop.f32.mrf.mxu0
      %v2415 = vadd.f32 0.0, %v2414
      %2416 = vmatmul.f32.gmra.mxu0 %v2259
      %v2417 = vpop.f32.mrf.mxu0
      %2418 = vmatmul.f32.gmra.mxu0 %v2262
      %v2419 = vpop.f32.mrf.mxu0
      %v2420 = vadd.f32 0.0, %v2419
      %2421 = vmatmul.f32.gmra.mxu0 %v2265
      %v2422 = vpop.f32.mrf.mxu0
      %v2423 = vadd.f32 0.0, %v2422
      %2424 = vmatmul.f32.gmra.mxu0 %v2268
      %v2425 = vpop.f32.mrf.mxu0
      %2426 = vmatmul.f32.gmra.mxu0 %v2271
      %v2427 = vpop.f32.mrf.mxu0
      %v2428 = vadd.f32 0.0, %v2427
      %2429 = vmatmul.f32.gmra.mxu0 %v2274
      %v2430 = vpop.f32.mrf.mxu0
      %v2431 = vadd.f32 0.0, %v2430
      %2432 = vmatmul.f32.gmra.mxu0 %v2277
      %v2433 = vpop.f32.mrf.mxu0
      %2434 = vmatmul.f32.gmra.mxu0 %v2280
      %v2435 = vpop.f32.mrf.mxu0
      %v2436 = vadd.f32 0.0, %v2435
      %2437 = vmatmul.f32.gmra.mxu0 %v2283
      %v2438 = vpop.f32.mrf.mxu0
      %v2439 = vadd.f32 0.0, %v2438
      %2440 = vmatmul.f32.gmra.mxu0 %v2286
      %v2441 = vpop.f32.mrf.mxu0
      %2442 = vmatmul.f32.gmra.mxu0 %v2289
      %v2443 = vpop.f32.mrf.mxu0
      %v2444 = vadd.f32 0.0, %v2443
      %2445 = vmatmul.f32.gmra.mxu0 %v2292
      %v2446 = vpop.f32.mrf.mxu0
      %v2447 = vadd.f32 0.0, %v2446
      %2448 = vmatmul.f32.gmra.mxu0 %v2295
      %v2449 = vpop.f32.mrf.mxu0
      %2450 = vmatmul.f32.gmra.mxu0 %v2298
      %v2451 = vpop.f32.mrf.mxu0
      %v2452 = vadd.f32 0.0, %v2451
      %2453 = vmatmul.f32.gmra.mxu0 %v2301
      %v2454 = vpop.f32.mrf.mxu0
      %v2455 = vadd.f32 0.0, %v2454
      %2456 = vmatmul.f32.gmra.mxu0 %v2304
      %v2457 = vpop.f32.mrf.mxu0
      %2458 = vmatmul.f32.gmra.mxu0 %v2307
      %v2459 = vpop.f32.mrf.mxu0
      %v2460 = vadd.f32 0.0, %v2459
      %2461 = vmatmul.f32.gmra.mxu0 %v2310
      %v2462 = vpop.f32.mrf.mxu0
      %v2463 = vadd.f32 0.0, %v2462
      %2464 = vmatmul.f32.gmra.mxu0 %v2313
      %v2465 = vpop.f32.mrf.mxu0
      %2466 = vmatmul.f32.gmra.mxu0 %v2316
      %v2467 = vpop.f32.mrf.mxu0
      %v2468 = vadd.f32 0.0, %v2467
      %2469 = vmatmul.f32.gmra.mxu0 %v2319
      %v2470 = vpop.f32.mrf.mxu0
      %v2471 = vadd.f32 0.0, %v2470
      %2472 = vmatmul.f32.gmra.mxu0 %v2322
      %v2473 = vpop.f32.mrf.mxu0
      %2474 = vmatmul.f32.gmra.mxu0 %v2325
      %v2475 = vpop.f32.mrf.mxu0
      %v2476 = vadd.f32 0.0, %v2475
      %2477 = vmatmul.f32.gmra.mxu0 %v2328
      %v2478 = vpop.f32.mrf.mxu0
      %v2479 = vadd.f32 0.0, %v2478
      %2480 = vmatmul.f32.gmra.mxu0 %v2331
      %v2481 = vpop.f32.mrf.mxu0
      %2482 = vmatmul.f32.gmra.mxu0 %v2334
      %v2483 = vpop.f32.mrf.mxu0
      %v2484 = vadd.f32 0.0, %v2483
      %2485 = vmatmul.f32.gmra.mxu0 %v2337
      %v2486 = vpop.f32.mrf.mxu0
      %v2487 = vadd.f32 0.0, %v2486
      %2488 = vmatmul.f32.gmra.mxu0 %v2340
      %v2489 = vpop.f32.mrf.mxu0
      %2490 = vmatmul.f32.gmra.mxu0 %v2343
      %v2491 = vpop.f32.mrf.mxu0
      %v2492 = vadd.f32 0.0, %v2491
      %2493 = vmatmul.f32.gmra.mxu0 %v2346
      %v2494 = vpop.f32.mrf.mxu0
      %v2495 = vadd.f32 0.0, %v2494
      %2496 = vmatmul.f32.gmra.mxu0 %v2349
      %v2497 = vpop.f32.mrf.mxu0
      %2498 = vmatmul.f32.gmra.mxu0 %v2352
      %v2499 = vpop.f32.mrf.mxu0
      %v2500 = vadd.f32 0.0, %v2499
      %2501 = vmatmul.f32.gmra.mxu0 %v2355
      %v2502 = vpop.f32.mrf.mxu0
      %v2503 = vadd.f32 0.0, %v2502
      %2504 = vmatmul.f32.gmra.mxu0 %v2358
      %v2505 = vpop.f32.mrf.mxu0
      %2506 = vmatmul.f32.gmra.mxu0 %v2361
      %v2507 = vpop.f32.mrf.mxu0
      %v2508 = vadd.f32 0.0, %v2507
      %2509 = vmatmul.f32.gmra.mxu0 %v2364
      %v2510 = vpop.f32.mrf.mxu0
      %v2511 = vadd.f32 0.0, %v2510
      %2512 = vmatmul.f32.gmra.mxu0 %v2367
      %v2513 = vpop.f32.mrf.mxu0
      %2514 = vmatmul.f32.gmra.mxu0 %v2370
      %v2515 = vpop.f32.mrf.mxu0
      %v2516 = vadd.f32 0.0, %v2515
      %2517 = vmatmul.f32.gmra.mxu0 %v2373
      %v2518 = vpop.f32.mrf.mxu0
      %v2519 = vadd.f32 0.0, %v2518
      %2520 = vmatmul.f32.gmra.mxu0 %v2376
      %v2521 = vpop.f32.mrf.mxu0
      %2522 = vdwg.mxu0
      %v2523 = vadd.f32 %v2152, %v2396
      %v2524 = vadd.f32 %v2153, %v2399
      %v2525 = vadd.f32 %v2154, %v2404
      %v2526 = vadd.f32 %v2155, %v2407
      %v2527 = vadd.f32 %v2156, %v2412
      %v2528 = vadd.f32 %v2157, %v2415
      %v2529 = vadd.f32 %v2158, %v2420
      %v2530 = vadd.f32 %v2159, %v2423
      %v2531 = vadd.f32 %v2160, %v2428
      %v2532 = vadd.f32 %v2161, %v2431
      %v2533 = vadd.f32 %v2162, %v2436
      %v2534 = vadd.f32 %v2163, %v2439
      %v2535 = vadd.f32 %v2164, %v2444
      %v2536 = vadd.f32 %v2165, %v2447
      %v2537 = vadd.f32 %v2166, %v2452
      %v2538 = vadd.f32 %v2167, %v2455
      %v2539 = vadd.f32 %v2168, %v2460
      %v2540 = vadd.f32 %v2169, %v2463
      %v2541 = vadd.f32 %v2170, %v2468
      %v2542 = vadd.f32 %v2171, %v2471
      %v2543 = vadd.f32 %v2172, %v2476
      %v2544 = vadd.f32 %v2173, %v2479
      %v2545 = vadd.f32 %v2174, %v2484
      %v2546 = vadd.f32 %v2175, %v2487
      %v2547 = vadd.f32 %v2176, %v2492
      %v2548 = vadd.f32 %v2177, %v2495
      %v2549 = vadd.f32 %v2178, %v2500
      %v2550 = vadd.f32 %v2179, %v2503
      %v2551 = vadd.f32 %v2180, %v2508
      %v2552 = vadd.f32 %v2181, %v2511
      %v2553 = vadd.f32 %v2182, %v2516
      %v2554 = vadd.f32 %v2183, %v2519
      %v2555 = vld [vmem:[#allocation2 + $0x30] sm:$0xff]
      %v2556 = vld [vmem:[#allocation2 + $0x38] sm:$0xff]
      %v2557 = vld [vmem:[#allocation2 + $0x40] sm:$0xff]
      %v2558 = vld [vmem:[#allocation2 + $0x48] sm:$0xff]
      %v2559 = vld [vmem:[#allocation2 + $0x50] sm:$0xff]
      %v2560 = vld [vmem:[#allocation2 + $0x58] sm:$0xff]
      %v2561 = vld [vmem:[#allocation2 + $0x60] sm:$0xff]
      %v2562 = vld [vmem:[#allocation2 + $0x68] sm:$0xff]
      %v2563 = vld [vmem:[#allocation2 + $0x70] sm:$0xff]
      %v2564 = vld [vmem:[#allocation2 + $0x78] sm:$0xff]
      %v2565 = vld [vmem:[#allocation2 + $0x80] sm:$0xff]
      %v2566 = vld [vmem:[#allocation2 + $0x88] sm:$0xff]
      %v2567 = vld [vmem:[#allocation2 + $0x90] sm:$0xff]
      %v2568 = vld [vmem:[#allocation2 + $0x98] sm:$0xff]
      %v2569 = vld [vmem:[#allocation2 + $0xa0] sm:$0xff]
      %v2570 = vld [vmem:[#allocation2 + $0xa8] sm:$0xff]
      %v2571 = vld [vmem:[#allocation2 + $0xb0] sm:$0xff]
      %v2572 = vld [vmem:[#allocation2 + $0xb8] sm:$0xff]
      %v2573 = vld [vmem:[#allocation2 + $0xc0] sm:$0xff]
      %v2574 = vld [vmem:[#allocation2 + $0xc8] sm:$0xff]
      %v2575 = vld [vmem:[#allocation2 + $0xd0] sm:$0xff]
      %v2576 = vld [vmem:[#allocation2 + $0xd8] sm:$0xff]
      %v2577 = vld [vmem:[#allocation2 + $0xe0] sm:$0xff]
      %v2578 = vld [vmem:[#allocation2 + $0xe8] sm:$0xff]
      %v2579 = vld [vmem:[#allocation2 + $0xf0] sm:$0xff]
      %v2580 = vld [vmem:[#allocation2 + $0xf8] sm:$0xff]
      %v2581 = vld [vmem:[#allocation2 + $0x100] sm:$0xff]
      %v2582 = vld [vmem:[#allocation2 + $0x108] sm:$0xff]
      %v2583 = vld [vmem:[#allocation2 + $0x110] sm:$0xff]
      %v2584 = vld [vmem:[#allocation2 + $0x118] sm:$0xff]
      %v2585 = vld [vmem:[#allocation2 + $0x120] sm:$0xff]
      %v2586 = vld [vmem:[#allocation2 + $0x128] sm:$0xff]
      %v2587 = vld [vmem:[#allocation2 + $0x130] sm:$0xff]
      %v2588 = vld [vmem:[#allocation2 + $0x138] sm:$0xff]
      %v2589 = vld [vmem:[#allocation2 + $0x140] sm:$0xff]
      %v2590 = vld [vmem:[#allocation2 + $0x148] sm:$0xff]
      %v2591 = vld [vmem:[#allocation2 + $0x150] sm:$0xff]
      %v2592 = vld [vmem:[#allocation2 + $0x158] sm:$0xff]
      %v2593 = vld [vmem:[#allocation2 + $0x160] sm:$0xff]
      %v2594 = vld [vmem:[#allocation2 + $0x168] sm:$0xff]
      %v2595 = vld [vmem:[#allocation2 + $0x170] sm:$0xff]
      %v2596 = vld [vmem:[#allocation2 + $0x178] sm:$0xff]
      %v2597 = vld [vmem:[#allocation2 + $0x180] sm:$0xff]
      %v2598 = vld [vmem:[#allocation2 + $0x188] sm:$0xff]
      %v2599 = vld [vmem:[#allocation2 + $0x190] sm:$0xff]
      %v2600 = vld [vmem:[#allocation2 + $0x198] sm:$0xff]
      %v2601 = vld [vmem:[#allocation2 + $0x1a0] sm:$0xff]
      %v2602 = vld [vmem:[#allocation2 + $0x1a8] sm:$0xff]
      %s2603 = scalar_lea.vmem %s1, 48
      %v2604 = vld [vmem:[%s2603] sm:$0xff]
      %v2606 = vsel %vm304, %v2555, 0
      %v2609 = vsel %vm304, %v2556, 0
      %v2612 = vsel %vm304, %v2557, 0
      %v2615 = vsel %vm304, %v2558, 0
      %v2618 = vsel %vm304, %v2559, 0
      %v2621 = vsel %vm304, %v2560, 0
      %v2624 = vsel %vm304, %v2561, 0
      %v2627 = vsel %vm304, %v2562, 0
      %v2630 = vsel %vm304, %v2563, 0
      %v2633 = vsel %vm304, %v2564, 0
      %v2636 = vsel %vm304, %v2565, 0
      %v2639 = vsel %vm304, %v2566, 0
      %v2642 = vsel %vm304, %v2567, 0
      %v2645 = vsel %vm304, %v2568, 0
      %v2648 = vsel %vm304, %v2569, 0
      %v2651 = vsel %vm304, %v2570, 0
      %v2654 = vsel %vm304, %v2571, 0
      %v2657 = vsel %vm304, %v2572, 0
      %v2660 = vsel %vm304, %v2573, 0
      %v2663 = vsel %vm304, %v2574, 0
      %v2666 = vsel %vm304, %v2575, 0
      %v2669 = vsel %vm304, %v2576, 0
      %v2672 = vsel %vm304, %v2577, 0
      %v2675 = vsel %vm304, %v2578, 0
      %v2678 = vsel %vm304, %v2579, 0
      %v2681 = vsel %vm304, %v2580, 0
      %v2684 = vsel %vm304, %v2581, 0
      %v2687 = vsel %vm304, %v2582, 0
      %v2690 = vsel %vm304, %v2583, 0
      %v2693 = vsel %vm304, %v2584, 0
      %v2696 = vsel %vm304, %v2585, 0
      %v2699 = vsel %vm304, %v2586, 0
      %v2702 = vsel %vm304, %v2587, 0
      %v2705 = vsel %vm304, %v2588, 0
      %v2708 = vsel %vm304, %v2589, 0
      %v2711 = vsel %vm304, %v2590, 0
      %v2714 = vsel %vm304, %v2591, 0
      %v2717 = vsel %vm304, %v2592, 0
      %v2720 = vsel %vm304, %v2593, 0
      %v2723 = vsel %vm304, %v2594, 0
      %v2726 = vsel %vm304, %v2595, 0
      %v2729 = vsel %vm304, %v2596, 0
      %v2732 = vsel %vm304, %v2597, 0
      %v2735 = vsel %vm304, %v2598, 0
      %v2738 = vsel %vm304, %v2599, 0
      %v2741 = vsel %vm304, %v2600, 0
      %v2744 = vsel %vm304, %v2601, 0
      %v2747 = vsel %vm304, %v2602, 0
      %2749 = vmatpush.msra.mxu0 0.0
      %2750 = vmatpush.msra.mxu0 0.0
      %2751 = vmatpush.msra.mxu0 0.0
      %2752 = vmatpush.msra.mxu0 0.0
      %2753 = vmatpush.msra.mxu0 0.0
      %2754 = vmatpush.msra.mxu0 0.0
      %2755 = vmatpush.msra.mxu0 0.0
      %2756 = vmatpush.msra.mxu0 0.0
      %2757 = vmatpush.msra.mxu0 0.0
      %2758 = vmatpush.msra.mxu0 0.0
      %2759 = vmatpush.msra.mxu0 0.0
      %2760 = vmatpush.msra.mxu0 0.0
      %2761 = vmatpush.msra.mxu0 0.0
      %2762 = vmatpush.msra.mxu0 0.0
      %2763 = vmatpush.msra.mxu0 0.0
      %2764 = vmatpush.msra.mxu0 %v2604
      %2765 = vmatmul.f32.gmra.mxu0 %v2606
      %v2766 = vpop.f32.mrf.mxu0
      %v2767 = vadd.f32 0.0, %v2766
      %2768 = vmatmul.f32.gmra.mxu0 %v2609
      %v2769 = vpop.f32.mrf.mxu0
      %v2770 = vadd.f32 0.0, %v2769
      %2771 = vmatmul.f32.gmra.mxu0 %v2612
      %v2772 = vpop.f32.mrf.mxu0
      %2773 = vmatmul.f32.gmra.mxu0 %v2615
      %v2774 = vpop.f32.mrf.mxu0
      %v2775 = vadd.f32 0.0, %v2774
      %2776 = vmatmul.f32.gmra.mxu0 %v2618
      %v2777 = vpop.f32.mrf.mxu0
      %v2778 = vadd.f32 0.0, %v2777
      %2779 = vmatmul.f32.gmra.mxu0 %v2621
      %v2780 = vpop.f32.mrf.mxu0
      %2781 = vmatmul.f32.gmra.mxu0 %v2624
      %v2782 = vpop.f32.mrf.mxu0
      %v2783 = vadd.f32 0.0, %v2782
      %2784 = vmatmul.f32.gmra.mxu0 %v2627
      %v2785 = vpop.f32.mrf.mxu0
      %v2786 = vadd.f32 0.0, %v2785
      %2787 = vmatmul.f32.gmra.mxu0 %v2630
      %v2788 = vpop.f32.mrf.mxu0
      %2789 = vmatmul.f32.gmra.mxu0 %v2633
      %v2790 = vpop.f32.mrf.mxu0
      %v2791 = vadd.f32 0.0, %v2790
      %2792 = vmatmul.f32.gmra.mxu0 %v2636
      %v2793 = vpop.f32.mrf.mxu0
      %v2794 = vadd.f32 0.0, %v2793
      %2795 = vmatmul.f32.gmra.mxu0 %v2639
      %v2796 = vpop.f32.mrf.mxu0
      %2797 = vmatmul.f32.gmra.mxu0 %v2642
      %v2798 = vpop.f32.mrf.mxu0
      %v2799 = vadd.f32 0.0, %v2798
      %2800 = vmatmul.f32.gmra.mxu0 %v2645
      %v2801 = vpop.f32.mrf.mxu0
      %v2802 = vadd.f32 0.0, %v2801
      %2803 = vmatmul.f32.gmra.mxu0 %v2648
      %v2804 = vpop.f32.mrf.mxu0
      %2805 = vmatmul.f32.gmra.mxu0 %v2651
      %v2806 = vpop.f32.mrf.mxu0
      %v2807 = vadd.f32 0.0, %v2806
      %2808 = vmatmul.f32.gmra.mxu0 %v2654
      %v2809 = vpop.f32.mrf.mxu0
      %v2810 = vadd.f32 0.0, %v2809
      %2811 = vmatmul.f32.gmra.mxu0 %v2657
      %v2812 = vpop.f32.mrf.mxu0
      %2813 = vmatmul.f32.gmra.mxu0 %v2660
      %v2814 = vpop.f32.mrf.mxu0
      %v2815 = vadd.f32 0.0, %v2814
      %2816 = vmatmul.f32.gmra.mxu0 %v2663
      %v2817 = vpop.f32.mrf.mxu0
      %v2818 = vadd.f32 0.0, %v2817
      %2819 = vmatmul.f32.gmra.mxu0 %v2666
      %v2820 = vpop.f32.mrf.mxu0
      %2821 = vmatmul.f32.gmra.mxu0 %v2669
      %v2822 = vpop.f32.mrf.mxu0
      %v2823 = vadd.f32 0.0, %v2822
      %2824 = vmatmul.f32.gmra.mxu0 %v2672
      %v2825 = vpop.f32.mrf.mxu0
      %v2826 = vadd.f32 0.0, %v2825
      %2827 = vmatmul.f32.gmra.mxu0 %v2675
      %v2828 = vpop.f32.mrf.mxu0
      %2829 = vmatmul.f32.gmra.mxu0 %v2678
      %v2830 = vpop.f32.mrf.mxu0
      %v2831 = vadd.f32 0.0, %v2830
      %2832 = vmatmul.f32.gmra.mxu0 %v2681
      %v2833 = vpop.f32.mrf.mxu0
      %v2834 = vadd.f32 0.0, %v2833
      %2835 = vmatmul.f32.gmra.mxu0 %v2684
      %v2836 = vpop.f32.mrf.mxu0
      %2837 = vmatmul.f32.gmra.mxu0 %v2687
      %v2838 = vpop.f32.mrf.mxu0
      %v2839 = vadd.f32 0.0, %v2838
      %2840 = vmatmul.f32.gmra.mxu0 %v2690
      %v2841 = vpop.f32.mrf.mxu0
      %v2842 = vadd.f32 0.0, %v2841
      %2843 = vmatmul.f32.gmra.mxu0 %v2693
      %v2844 = vpop.f32.mrf.mxu0
      %2845 = vmatmul.f32.gmra.mxu0 %v2696
      %v2846 = vpop.f32.mrf.mxu0
      %v2847 = vadd.f32 0.0, %v2846
      %2848 = vmatmul.f32.gmra.mxu0 %v2699
      %v2849 = vpop.f32.mrf.mxu0
      %v2850 = vadd.f32 0.0, %v2849
      %2851 = vmatmul.f32.gmra.mxu0 %v2702
      %v2852 = vpop.f32.mrf.mxu0
      %2853 = vmatmul.f32.gmra.mxu0 %v2705
      %v2854 = vpop.f32.mrf.mxu0
      %v2855 = vadd.f32 0.0, %v2854
      %2856 = vmatmul.f32.gmra.mxu0 %v2708
      %v2857 = vpop.f32.mrf.mxu0
      %v2858 = vadd.f32 0.0, %v2857
      %2859 = vmatmul.f32.gmra.mxu0 %v2711
      %v2860 = vpop.f32.mrf.mxu0
      %2861 = vmatmul.f32.gmra.mxu0 %v2714
      %v2862 = vpop.f32.mrf.mxu0
      %v2863 = vadd.f32 0.0, %v2862
      %2864 = vmatmul.f32.gmra.mxu0 %v2717
      %v2865 = vpop.f32.mrf.mxu0
      %v2866 = vadd.f32 0.0, %v2865
      %2867 = vmatmul.f32.gmra.mxu0 %v2720
      %v2868 = vpop.f32.mrf.mxu0
      %2869 = vmatmul.f32.gmra.mxu0 %v2723
      %v2870 = vpop.f32.mrf.mxu0
      %v2871 = vadd.f32 0.0, %v2870
      %2872 = vmatmul.f32.gmra.mxu0 %v2726
      %v2873 = vpop.f32.mrf.mxu0
      %v2874 = vadd.f32 0.0, %v2873
      %2875 = vmatmul.f32.gmra.mxu0 %v2729
      %v2876 = vpop.f32.mrf.mxu0
      %2877 = vmatmul.f32.gmra.mxu0 %v2732
      %v2878 = vpop.f32.mrf.mxu0
      %v2879 = vadd.f32 0.0, %v2878
      %2880 = vmatmul.f32.gmra.mxu0 %v2735
      %v2881 = vpop.f32.mrf.mxu0
      %v2882 = vadd.f32 0.0, %v2881
      %2883 = vmatmul.f32.gmra.mxu0 %v2738
      %v2884 = vpop.f32.mrf.mxu0
      %2885 = vmatmul.f32.gmra.mxu0 %v2741
      %v2886 = vpop.f32.mrf.mxu0
      %v2887 = vadd.f32 0.0, %v2886
      %2888 = vmatmul.f32.gmra.mxu0 %v2744
      %v2889 = vpop.f32.mrf.mxu0
      %v2890 = vadd.f32 0.0, %v2889
      %2891 = vmatmul.f32.gmra.mxu0 %v2747
      %v2892 = vpop.f32.mrf.mxu0
      %2893 = vdwg.mxu0
      %v2894 = vadd.f32 %v2523, %v2767
      %v2895 = vadd.f32 %v2524, %v2770
      %v2896 = vadd.f32 %v2525, %v2775
      %v2897 = vadd.f32 %v2526, %v2778
      %v2898 = vadd.f32 %v2527, %v2783
      %v2899 = vadd.f32 %v2528, %v2786
      %v2900 = vadd.f32 %v2529, %v2791
      %v2901 = vadd.f32 %v2530, %v2794
      %v2902 = vadd.f32 %v2531, %v2799
      %v2903 = vadd.f32 %v2532, %v2802
      %v2904 = vadd.f32 %v2533, %v2807
      %v2905 = vadd.f32 %v2534, %v2810
      %v2906 = vadd.f32 %v2535, %v2815
      %v2907 = vadd.f32 %v2536, %v2818
      %v2908 = vadd.f32 %v2537, %v2823
      %v2909 = vadd.f32 %v2538, %v2826
      %v2910 = vadd.f32 %v2539, %v2831
      %v2911 = vadd.f32 %v2540, %v2834
      %v2912 = vadd.f32 %v2541, %v2839
      %v2913 = vadd.f32 %v2542, %v2842
      %v2914 = vadd.f32 %v2543, %v2847
      %v2915 = vadd.f32 %v2544, %v2850
      %v2916 = vadd.f32 %v2545, %v2855
      %v2917 = vadd.f32 %v2546, %v2858
      %v2918 = vadd.f32 %v2547, %v2863
      %v2919 = vadd.f32 %v2548, %v2866
      %v2920 = vadd.f32 %v2549, %v2871
      %v2921 = vadd.f32 %v2550, %v2874
      %v2922 = vadd.f32 %v2551, %v2879
      %v2923 = vadd.f32 %v2552, %v2882
      %v2924 = vadd.f32 %v2553, %v2887
      %v2925 = vadd.f32 %v2554, %v2890
      %v2926 = vld [vmem:[#allocation2 + $0x31] sm:$0xff]
      %v2927 = vld [vmem:[#allocation2 + $0x39] sm:$0xff]
      %v2928 = vld [vmem:[#allocation2 + $0x41] sm:$0xff]
      %v2929 = vld [vmem:[#allocation2 + $0x49] sm:$0xff]
      %v2930 = vld [vmem:[#allocation2 + $0x51] sm:$0xff]
      %v2931 = vld [vmem:[#allocation2 + $0x59] sm:$0xff]
      %v2932 = vld [vmem:[#allocation2 + $0x61] sm:$0xff]
      %v2933 = vld [vmem:[#allocation2 + $0x69] sm:$0xff]
      %v2934 = vld [vmem:[#allocation2 + $0x71] sm:$0xff]
      %v2935 = vld [vmem:[#allocation2 + $0x79] sm:$0xff]
      %v2936 = vld [vmem:[#allocation2 + $0x81] sm:$0xff]
      %v2937 = vld [vmem:[#allocation2 + $0x89] sm:$0xff]
      %v2938 = vld [vmem:[#allocation2 + $0x91] sm:$0xff]
      %v2939 = vld [vmem:[#allocation2 + $0x99] sm:$0xff]
      %v2940 = vld [vmem:[#allocation2 + $0xa1] sm:$0xff]
      %v2941 = vld [vmem:[#allocation2 + $0xa9] sm:$0xff]
      %v2942 = vld [vmem:[#allocation2 + $0xb1] sm:$0xff]
      %v2943 = vld [vmem:[#allocation2 + $0xb9] sm:$0xff]
      %v2944 = vld [vmem:[#allocation2 + $0xc1] sm:$0xff]
      %v2945 = vld [vmem:[#allocation2 + $0xc9] sm:$0xff]
      %v2946 = vld [vmem:[#allocation2 + $0xd1] sm:$0xff]
      %v2947 = vld [vmem:[#allocation2 + $0xd9] sm:$0xff]
      %v2948 = vld [vmem:[#allocation2 + $0xe1] sm:$0xff]
      %v2949 = vld [vmem:[#allocation2 + $0xe9] sm:$0xff]
      %v2950 = vld [vmem:[#allocation2 + $0xf1] sm:$0xff]
      %v2951 = vld [vmem:[#allocation2 + $0xf9] sm:$0xff]
      %v2952 = vld [vmem:[#allocation2 + $0x101] sm:$0xff]
      %v2953 = vld [vmem:[#allocation2 + $0x109] sm:$0xff]
      %v2954 = vld [vmem:[#allocation2 + $0x111] sm:$0xff]
      %v2955 = vld [vmem:[#allocation2 + $0x119] sm:$0xff]
      %v2956 = vld [vmem:[#allocation2 + $0x121] sm:$0xff]
      %v2957 = vld [vmem:[#allocation2 + $0x129] sm:$0xff]
      %v2958 = vld [vmem:[#allocation2 + $0x131] sm:$0xff]
      %v2959 = vld [vmem:[#allocation2 + $0x139] sm:$0xff]
      %v2960 = vld [vmem:[#allocation2 + $0x141] sm:$0xff]
      %v2961 = vld [vmem:[#allocation2 + $0x149] sm:$0xff]
      %v2962 = vld [vmem:[#allocation2 + $0x151] sm:$0xff]
      %v2963 = vld [vmem:[#allocation2 + $0x159] sm:$0xff]
      %v2964 = vld [vmem:[#allocation2 + $0x161] sm:$0xff]
      %v2965 = vld [vmem:[#allocation2 + $0x169] sm:$0xff]
      %v2966 = vld [vmem:[#allocation2 + $0x171] sm:$0xff]
      %v2967 = vld [vmem:[#allocation2 + $0x179] sm:$0xff]
      %v2968 = vld [vmem:[#allocation2 + $0x181] sm:$0xff]
      %v2969 = vld [vmem:[#allocation2 + $0x189] sm:$0xff]
      %v2970 = vld [vmem:[#allocation2 + $0x191] sm:$0xff]
      %v2971 = vld [vmem:[#allocation2 + $0x199] sm:$0xff]
      %v2972 = vld [vmem:[#allocation2 + $0x1a1] sm:$0xff]
      %v2973 = vld [vmem:[#allocation2 + $0x1a9] sm:$0xff]
      %s2974 = scalar_lea.vmem %s1, 56
      %v2975 = vld [vmem:[%s2974] sm:$0xff]
      %v2977 = vsel %vm304, %v2926, 0
      %v2980 = vsel %vm304, %v2927, 0
      %v2983 = vsel %vm304, %v2928, 0
      %v2986 = vsel %vm304, %v2929, 0
      %v2989 = vsel %vm304, %v2930, 0
      %v2992 = vsel %vm304, %v2931, 0
      %v2995 = vsel %vm304, %v2932, 0
      %v2998 = vsel %vm304, %v2933, 0
      %v3001 = vsel %vm304, %v2934, 0
      %v3004 = vsel %vm304, %v2935, 0
      %v3007 = vsel %vm304, %v2936, 0
      %v3010 = vsel %vm304, %v2937, 0
      %v3013 = vsel %vm304, %v2938, 0
      %v3016 = vsel %vm304, %v2939, 0
      %v3019 = vsel %vm304, %v2940, 0
      %v3022 = vsel %vm304, %v2941, 0
      %v3025 = vsel %vm304, %v2942, 0
      %v3028 = vsel %vm304, %v2943, 0
      %v3031 = vsel %vm304, %v2944, 0
      %v3034 = vsel %vm304, %v2945, 0
      %v3037 = vsel %vm304, %v2946, 0
      %v3040 = vsel %vm304, %v2947, 0
      %v3043 = vsel %vm304, %v2948, 0
      %v3046 = vsel %vm304, %v2949, 0
      %v3049 = vsel %vm304, %v2950, 0
      %v3052 = vsel %vm304, %v2951, 0
      %v3055 = vsel %vm304, %v2952, 0
      %v3058 = vsel %vm304, %v2953, 0
      %v3061 = vsel %vm304, %v2954, 0
      %v3064 = vsel %vm304, %v2955, 0
      %v3067 = vsel %vm304, %v2956, 0
      %v3070 = vsel %vm304, %v2957, 0
      %v3073 = vsel %vm304, %v2958, 0
      %v3076 = vsel %vm304, %v2959, 0
      %v3079 = vsel %vm304, %v2960, 0
      %v3082 = vsel %vm304, %v2961, 0
      %v3085 = vsel %vm304, %v2962, 0
      %v3088 = vsel %vm304, %v2963, 0
      %v3091 = vsel %vm304, %v2964, 0
      %v3094 = vsel %vm304, %v2965, 0
      %v3097 = vsel %vm304, %v2966, 0
      %v3100 = vsel %vm304, %v2967, 0
      %v3103 = vsel %vm304, %v2968, 0
      %v3106 = vsel %vm304, %v2969, 0
      %v3109 = vsel %vm304, %v2970, 0
      %v3112 = vsel %vm304, %v2971, 0
      %v3115 = vsel %vm304, %v2972, 0
      %v3118 = vsel %vm304, %v2973, 0
      %3120 = vmatpush.msra.mxu0 0.0
      %3121 = vmatpush.msra.mxu0 0.0
      %3122 = vmatpush.msra.mxu0 0.0
      %3123 = vmatpush.msra.mxu0 0.0
      %3124 = vmatpush.msra.mxu0 0.0
      %3125 = vmatpush.msra.mxu0 0.0
      %3126 = vmatpush.msra.mxu0 0.0
      %3127 = vmatpush.msra.mxu0 0.0
      %3128 = vmatpush.msra.mxu0 0.0
      %3129 = vmatpush.msra.mxu0 0.0
      %3130 = vmatpush.msra.mxu0 0.0
      %3131 = vmatpush.msra.mxu0 0.0
      %3132 = vmatpush.msra.mxu0 0.0
      %3133 = vmatpush.msra.mxu0 0.0
      %3134 = vmatpush.msra.mxu0 0.0
      %3135 = vmatpush.msra.mxu0 %v2975
      %3136 = vmatmul.f32.gmra.mxu0 %v2977
      %v3137 = vpop.f32.mrf.mxu0
      %v3138 = vadd.f32 0.0, %v3137
      %3139 = vmatmul.f32.gmra.mxu0 %v2980
      %v3140 = vpop.f32.mrf.mxu0
      %v3141 = vadd.f32 0.0, %v3140
      %3142 = vmatmul.f32.gmra.mxu0 %v2983
      %v3143 = vpop.f32.mrf.mxu0
      %3144 = vmatmul.f32.gmra.mxu0 %v2986
      %v3145 = vpop.f32.mrf.mxu0
      %v3146 = vadd.f32 0.0, %v3145
      %3147 = vmatmul.f32.gmra.mxu0 %v2989
      %v3148 = vpop.f32.mrf.mxu0
      %v3149 = vadd.f32 0.0, %v3148
      %3150 = vmatmul.f32.gmra.mxu0 %v2992
      %v3151 = vpop.f32.mrf.mxu0
      %3152 = vmatmul.f32.gmra.mxu0 %v2995
      %v3153 = vpop.f32.mrf.mxu0
      %v3154 = vadd.f32 0.0, %v3153
      %3155 = vmatmul.f32.gmra.mxu0 %v2998
      %v3156 = vpop.f32.mrf.mxu0
      %v3157 = vadd.f32 0.0, %v3156
      %3158 = vmatmul.f32.gmra.mxu0 %v3001
      %v3159 = vpop.f32.mrf.mxu0
      %3160 = vmatmul.f32.gmra.mxu0 %v3004
      %v3161 = vpop.f32.mrf.mxu0
      %v3162 = vadd.f32 0.0, %v3161
      %3163 = vmatmul.f32.gmra.mxu0 %v3007
      %v3164 = vpop.f32.mrf.mxu0
      %v3165 = vadd.f32 0.0, %v3164
      %3166 = vmatmul.f32.gmra.mxu0 %v3010
      %v3167 = vpop.f32.mrf.mxu0
      %3168 = vmatmul.f32.gmra.mxu0 %v3013
      %v3169 = vpop.f32.mrf.mxu0
      %v3170 = vadd.f32 0.0, %v3169
      %3171 = vmatmul.f32.gmra.mxu0 %v3016
      %v3172 = vpop.f32.mrf.mxu0
      %v3173 = vadd.f32 0.0, %v3172
      %3174 = vmatmul.f32.gmra.mxu0 %v3019
      %v3175 = vpop.f32.mrf.mxu0
      %3176 = vmatmul.f32.gmra.mxu0 %v3022
      %v3177 = vpop.f32.mrf.mxu0
      %v3178 = vadd.f32 0.0, %v3177
      %3179 = vmatmul.f32.gmra.mxu0 %v3025
      %v3180 = vpop.f32.mrf.mxu0
      %v3181 = vadd.f32 0.0, %v3180
      %3182 = vmatmul.f32.gmra.mxu0 %v3028
      %v3183 = vpop.f32.mrf.mxu0
      %3184 = vmatmul.f32.gmra.mxu0 %v3031
      %v3185 = vpop.f32.mrf.mxu0
      %v3186 = vadd.f32 0.0, %v3185
      %3187 = vmatmul.f32.gmra.mxu0 %v3034
      %v3188 = vpop.f32.mrf.mxu0
      %v3189 = vadd.f32 0.0, %v3188
      %3190 = vmatmul.f32.gmra.mxu0 %v3037
      %v3191 = vpop.f32.mrf.mxu0
      %3192 = vmatmul.f32.gmra.mxu0 %v3040
      %v3193 = vpop.f32.mrf.mxu0
      %v3194 = vadd.f32 0.0, %v3193
      %3195 = vmatmul.f32.gmra.mxu0 %v3043
      %v3196 = vpop.f32.mrf.mxu0
      %v3197 = vadd.f32 0.0, %v3196
      %3198 = vmatmul.f32.gmra.mxu0 %v3046
      %v3199 = vpop.f32.mrf.mxu0
      %3200 = vmatmul.f32.gmra.mxu0 %v3049
      %v3201 = vpop.f32.mrf.mxu0
      %v3202 = vadd.f32 0.0, %v3201
      %3203 = vmatmul.f32.gmra.mxu0 %v3052
      %v3204 = vpop.f32.mrf.mxu0
      %v3205 = vadd.f32 0.0, %v3204
      %3206 = vmatmul.f32.gmra.mxu0 %v3055
      %v3207 = vpop.f32.mrf.mxu0
      %3208 = vmatmul.f32.gmra.mxu0 %v3058
      %v3209 = vpop.f32.mrf.mxu0
      %v3210 = vadd.f32 0.0, %v3209
      %3211 = vmatmul.f32.gmra.mxu0 %v3061
      %v3212 = vpop.f32.mrf.mxu0
      %v3213 = vadd.f32 0.0, %v3212
      %3214 = vmatmul.f32.gmra.mxu0 %v3064
      %v3215 = vpop.f32.mrf.mxu0
      %3216 = vmatmul.f32.gmra.mxu0 %v3067
      %v3217 = vpop.f32.mrf.mxu0
      %v3218 = vadd.f32 0.0, %v3217
      %3219 = vmatmul.f32.gmra.mxu0 %v3070
      %v3220 = vpop.f32.mrf.mxu0
      %v3221 = vadd.f32 0.0, %v3220
      %3222 = vmatmul.f32.gmra.mxu0 %v3073
      %v3223 = vpop.f32.mrf.mxu0
      %3224 = vmatmul.f32.gmra.mxu0 %v3076
      %v3225 = vpop.f32.mrf.mxu0
      %v3226 = vadd.f32 0.0, %v3225
      %3227 = vmatmul.f32.gmra.mxu0 %v3079
      %v3228 = vpop.f32.mrf.mxu0
      %v3229 = vadd.f32 0.0, %v3228
      %3230 = vmatmul.f32.gmra.mxu0 %v3082
      %v3231 = vpop.f32.mrf.mxu0
      %3232 = vmatmul.f32.gmra.mxu0 %v3085
      %v3233 = vpop.f32.mrf.mxu0
      %v3234 = vadd.f32 0.0, %v3233
      %3235 = vmatmul.f32.gmra.mxu0 %v3088
      %v3236 = vpop.f32.mrf.mxu0
      %v3237 = vadd.f32 0.0, %v3236
      %3238 = vmatmul.f32.gmra.mxu0 %v3091
      %v3239 = vpop.f32.mrf.mxu0
      %3240 = vmatmul.f32.gmra.mxu0 %v3094
      %v3241 = vpop.f32.mrf.mxu0
      %v3242 = vadd.f32 0.0, %v3241
      %3243 = vmatmul.f32.gmra.mxu0 %v3097
      %v3244 = vpop.f32.mrf.mxu0
      %v3245 = vadd.f32 0.0, %v3244
      %3246 = vmatmul.f32.gmra.mxu0 %v3100
      %v3247 = vpop.f32.mrf.mxu0
      %3248 = vmatmul.f32.gmra.mxu0 %v3103
      %v3249 = vpop.f32.mrf.mxu0
      %v3250 = vadd.f32 0.0, %v3249
      %3251 = vmatmul.f32.gmra.mxu0 %v3106
      %v3252 = vpop.f32.mrf.mxu0
      %v3253 = vadd.f32 0.0, %v3252
      %3254 = vmatmul.f32.gmra.mxu0 %v3109
      %v3255 = vpop.f32.mrf.mxu0
      %3256 = vmatmul.f32.gmra.mxu0 %v3112
      %v3257 = vpop.f32.mrf.mxu0
      %v3258 = vadd.f32 0.0, %v3257
      %3259 = vmatmul.f32.gmra.mxu0 %v3115
      %v3260 = vpop.f32.mrf.mxu0
      %v3261 = vadd.f32 0.0, %v3260
      %3262 = vmatmul.f32.gmra.mxu0 %v3118
      %v3263 = vpop.f32.mrf.mxu0
      %3264 = vdwg.mxu0
      %v3265 = vadd.f32 %v2894, %v3138
      %v3266 = vadd.f32 %v2895, %v3141
      %v3267 = vadd.f32 %v2896, %v3146
      %v3268 = vadd.f32 %v2897, %v3149
      %v3269 = vadd.f32 %v2898, %v3154
      %v3270 = vadd.f32 %v2899, %v3157
      %v3271 = vadd.f32 %v2900, %v3162
      %v3272 = vadd.f32 %v2901, %v3165
      %v3273 = vadd.f32 %v2902, %v3170
      %v3274 = vadd.f32 %v2903, %v3173
      %v3275 = vadd.f32 %v2904, %v3178
      %v3276 = vadd.f32 %v2905, %v3181
      %v3277 = vadd.f32 %v2906, %v3186
      %v3278 = vadd.f32 %v2907, %v3189
      %v3279 = vadd.f32 %v2908, %v3194
      %v3280 = vadd.f32 %v2909, %v3197
      %v3281 = vadd.f32 %v2910, %v3202
      %v3282 = vadd.f32 %v2911, %v3205
      %v3283 = vadd.f32 %v2912, %v3210
      %v3284 = vadd.f32 %v2913, %v3213
      %v3285 = vadd.f32 %v2914, %v3218
      %v3286 = vadd.f32 %v2915, %v3221
      %v3287 = vadd.f32 %v2916, %v3226
      %v3288 = vadd.f32 %v2917, %v3229
      %v3289 = vadd.f32 %v2918, %v3234
      %v3290 = vadd.f32 %v2919, %v3237
      %v3291 = vadd.f32 %v2920, %v3242
      %v3292 = vadd.f32 %v2921, %v3245
      %v3293 = vadd.f32 %v2922, %v3250
      %v3294 = vadd.f32 %v2923, %v3253
      %v3295 = vadd.f32 %v2924, %v3258
      %v3296 = vadd.f32 %v2925, %v3261
      %v3297 = vld [vmem:[#allocation2 + $0x32] sm:$0xff]
      %v3298 = vld [vmem:[#allocation2 + $0x3a] sm:$0xff]
      %v3299 = vld [vmem:[#allocation2 + $0x42] sm:$0xff]
      %v3300 = vld [vmem:[#allocation2 + $0x4a] sm:$0xff]
      %v3301 = vld [vmem:[#allocation2 + $0x52] sm:$0xff]
      %v3302 = vld [vmem:[#allocation2 + $0x5a] sm:$0xff]
      %v3303 = vld [vmem:[#allocation2 + $0x62] sm:$0xff]
      %v3304 = vld [vmem:[#allocation2 + $0x6a] sm:$0xff]
      %v3305 = vld [vmem:[#allocation2 + $0x72] sm:$0xff]
      %v3306 = vld [vmem:[#allocation2 + $0x7a] sm:$0xff]
      %v3307 = vld [vmem:[#allocation2 + $0x82] sm:$0xff]
      %v3308 = vld [vmem:[#allocation2 + $0x8a] sm:$0xff]
      %v3309 = vld [vmem:[#allocation2 + $0x92] sm:$0xff]
      %v3310 = vld [vmem:[#allocation2 + $0x9a] sm:$0xff]
      %v3311 = vld [vmem:[#allocation2 + $0xa2] sm:$0xff]
      %v3312 = vld [vmem:[#allocation2 + $0xaa] sm:$0xff]
      %v3313 = vld [vmem:[#allocation2 + $0xb2] sm:$0xff]
      %v3314 = vld [vmem:[#allocation2 + $0xba] sm:$0xff]
      %v3315 = vld [vmem:[#allocation2 + $0xc2] sm:$0xff]
      %v3316 = vld [vmem:[#allocation2 + $0xca] sm:$0xff]
      %v3317 = vld [vmem:[#allocation2 + $0xd2] sm:$0xff]
      %v3318 = vld [vmem:[#allocation2 + $0xda] sm:$0xff]
      %v3319 = vld [vmem:[#allocation2 + $0xe2] sm:$0xff]
      %v3320 = vld [vmem:[#allocation2 + $0xea] sm:$0xff]
      %v3321 = vld [vmem:[#allocation2 + $0xf2] sm:$0xff]
      %v3322 = vld [vmem:[#allocation2 + $0xfa] sm:$0xff]
      %v3323 = vld [vmem:[#allocation2 + $0x102] sm:$0xff]
      %v3324 = vld [vmem:[#allocation2 + $0x10a] sm:$0xff]
      %v3325 = vld [vmem:[#allocation2 + $0x112] sm:$0xff]
      %v3326 = vld [vmem:[#allocation2 + $0x11a] sm:$0xff]
      %v3327 = vld [vmem:[#allocation2 + $0x122] sm:$0xff]
      %v3328 = vld [vmem:[#allocation2 + $0x12a] sm:$0xff]
      %v3329 = vld [vmem:[#allocation2 + $0x132] sm:$0xff]
      %v3330 = vld [vmem:[#allocation2 + $0x13a] sm:$0xff]
      %v3331 = vld [vmem:[#allocation2 + $0x142] sm:$0xff]
      %v3332 = vld [vmem:[#allocation2 + $0x14a] sm:$0xff]
      %v3333 = vld [vmem:[#allocation2 + $0x152] sm:$0xff]
      %v3334 = vld [vmem:[#allocation2 + $0x15a] sm:$0xff]
      %v3335 = vld [vmem:[#allocation2 + $0x162] sm:$0xff]
      %v3336 = vld [vmem:[#allocation2 + $0x16a] sm:$0xff]
      %v3337 = vld [vmem:[#allocation2 + $0x172] sm:$0xff]
      %v3338 = vld [vmem:[#allocation2 + $0x17a] sm:$0xff]
      %v3339 = vld [vmem:[#allocation2 + $0x182] sm:$0xff]
      %v3340 = vld [vmem:[#allocation2 + $0x18a] sm:$0xff]
      %v3341 = vld [vmem:[#allocation2 + $0x192] sm:$0xff]
      %v3342 = vld [vmem:[#allocation2 + $0x19a] sm:$0xff]
      %v3343 = vld [vmem:[#allocation2 + $0x1a2] sm:$0xff]
      %v3344 = vld [vmem:[#allocation2 + $0x1aa] sm:$0xff]
      %s3345 = scalar_lea.vmem %s1, 64
      %v3346 = vld [vmem:[%s3345] sm:$0xff]
      %v3348 = vsel %vm304, %v3297, 0
      %v3351 = vsel %vm304, %v3298, 0
      %v3354 = vsel %vm304, %v3299, 0
      %v3357 = vsel %vm304, %v3300, 0
      %v3360 = vsel %vm304, %v3301, 0
      %v3363 = vsel %vm304, %v3302, 0
      %v3366 = vsel %vm304, %v3303, 0
      %v3369 = vsel %vm304, %v3304, 0
      %v3372 = vsel %vm304, %v3305, 0
      %v3375 = vsel %vm304, %v3306, 0
      %v3378 = vsel %vm304, %v3307, 0
      %v3381 = vsel %vm304, %v3308, 0
      %v3384 = vsel %vm304, %v3309, 0
      %v3387 = vsel %vm304, %v3310, 0
      %v3390 = vsel %vm304, %v3311, 0
      %v3393 = vsel %vm304, %v3312, 0
      %v3396 = vsel %vm304, %v3313, 0
      %v3399 = vsel %vm304, %v3314, 0
      %v3402 = vsel %vm304, %v3315, 0
      %v3405 = vsel %vm304, %v3316, 0
      %v3408 = vsel %vm304, %v3317, 0
      %v3411 = vsel %vm304, %v3318, 0
      %v3414 = vsel %vm304, %v3319, 0
      %v3417 = vsel %vm304, %v3320, 0
      %v3420 = vsel %vm304, %v3321, 0
      %v3423 = vsel %vm304, %v3322, 0
      %v3426 = vsel %vm304, %v3323, 0
      %v3429 = vsel %vm304, %v3324, 0
      %v3432 = vsel %vm304, %v3325, 0
      %v3435 = vsel %vm304, %v3326, 0
      %v3438 = vsel %vm304, %v3327, 0
      %v3441 = vsel %vm304, %v3328, 0
      %v3444 = vsel %vm304, %v3329, 0
      %v3447 = vsel %vm304, %v3330, 0
      %v3450 = vsel %vm304, %v3331, 0
      %v3453 = vsel %vm304, %v3332, 0
      %v3456 = vsel %vm304, %v3333, 0
      %v3459 = vsel %vm304, %v3334, 0
      %v3462 = vsel %vm304, %v3335, 0
      %v3465 = vsel %vm304, %v3336, 0
      %v3468 = vsel %vm304, %v3337, 0
      %v3471 = vsel %vm304, %v3338, 0
      %v3474 = vsel %vm304, %v3339, 0
      %v3477 = vsel %vm304, %v3340, 0
      %v3480 = vsel %vm304, %v3341, 0
      %v3483 = vsel %vm304, %v3342, 0
      %v3486 = vsel %vm304, %v3343, 0
      %v3489 = vsel %vm304, %v3344, 0
      %3491 = vmatpush.msra.mxu0 0.0
      %3492 = vmatpush.msra.mxu0 0.0
      %3493 = vmatpush.msra.mxu0 0.0
      %3494 = vmatpush.msra.mxu0 0.0
      %3495 = vmatpush.msra.mxu0 0.0
      %3496 = vmatpush.msra.mxu0 0.0
      %3497 = vmatpush.msra.mxu0 0.0
      %3498 = vmatpush.msra.mxu0 0.0
      %3499 = vmatpush.msra.mxu0 0.0
      %3500 = vmatpush.msra.mxu0 0.0
      %3501 = vmatpush.msra.mxu0 0.0
      %3502 = vmatpush.msra.mxu0 0.0
      %3503 = vmatpush.msra.mxu0 0.0
      %3504 = vmatpush.msra.mxu0 0.0
      %3505 = vmatpush.msra.mxu0 0.0
      %3506 = vmatpush.msra.mxu0 %v3346
      %3507 = vmatmul.f32.gmra.mxu0 %v3348
      %v3508 = vpop.f32.mrf.mxu0
      %v3509 = vadd.f32 0.0, %v3508
      %3510 = vmatmul.f32.gmra.mxu0 %v3351
      %v3511 = vpop.f32.mrf.mxu0
      %v3512 = vadd.f32 0.0, %v3511
      %3513 = vmatmul.f32.gmra.mxu0 %v3354
      %v3514 = vpop.f32.mrf.mxu0
      %3515 = vmatmul.f32.gmra.mxu0 %v3357
      %v3516 = vpop.f32.mrf.mxu0
      %v3517 = vadd.f32 0.0, %v3516
      %3518 = vmatmul.f32.gmra.mxu0 %v3360
      %v3519 = vpop.f32.mrf.mxu0
      %v3520 = vadd.f32 0.0, %v3519
      %3521 = vmatmul.f32.gmra.mxu0 %v3363
      %v3522 = vpop.f32.mrf.mxu0
      %3523 = vmatmul.f32.gmra.mxu0 %v3366
      %v3524 = vpop.f32.mrf.mxu0
      %v3525 = vadd.f32 0.0, %v3524
      %3526 = vmatmul.f32.gmra.mxu0 %v3369
      %v3527 = vpop.f32.mrf.mxu0
      %v3528 = vadd.f32 0.0, %v3527
      %3529 = vmatmul.f32.gmra.mxu0 %v3372
      %v3530 = vpop.f32.mrf.mxu0
      %3531 = vmatmul.f32.gmra.mxu0 %v3375
      %v3532 = vpop.f32.mrf.mxu0
      %v3533 = vadd.f32 0.0, %v3532
      %3534 = vmatmul.f32.gmra.mxu0 %v3378
      %v3535 = vpop.f32.mrf.mxu0
      %v3536 = vadd.f32 0.0, %v3535
      %3537 = vmatmul.f32.gmra.mxu0 %v3381
      %v3538 = vpop.f32.mrf.mxu0
      %3539 = vmatmul.f32.gmra.mxu0 %v3384
      %v3540 = vpop.f32.mrf.mxu0
      %v3541 = vadd.f32 0.0, %v3540
      %3542 = vmatmul.f32.gmra.mxu0 %v3387
      %v3543 = vpop.f32.mrf.mxu0
      %v3544 = vadd.f32 0.0, %v3543
      %3545 = vmatmul.f32.gmra.mxu0 %v3390
      %v3546 = vpop.f32.mrf.mxu0
      %3547 = vmatmul.f32.gmra.mxu0 %v3393
      %v3548 = vpop.f32.mrf.mxu0
      %v3549 = vadd.f32 0.0, %v3548
      %3550 = vmatmul.f32.gmra.mxu0 %v3396
      %v3551 = vpop.f32.mrf.mxu0
      %v3552 = vadd.f32 0.0, %v3551
      %3553 = vmatmul.f32.gmra.mxu0 %v3399
      %v3554 = vpop.f32.mrf.mxu0
      %3555 = vmatmul.f32.gmra.mxu0 %v3402
      %v3556 = vpop.f32.mrf.mxu0
      %v3557 = vadd.f32 0.0, %v3556
      %3558 = vmatmul.f32.gmra.mxu0 %v3405
      %v3559 = vpop.f32.mrf.mxu0
      %v3560 = vadd.f32 0.0, %v3559
      %3561 = vmatmul.f32.gmra.mxu0 %v3408
      %v3562 = vpop.f32.mrf.mxu0
      %3563 = vmatmul.f32.gmra.mxu0 %v3411
      %v3564 = vpop.f32.mrf.mxu0
      %v3565 = vadd.f32 0.0, %v3564
      %3566 = vmatmul.f32.gmra.mxu0 %v3414
      %v3567 = vpop.f32.mrf.mxu0
      %v3568 = vadd.f32 0.0, %v3567
      %3569 = vmatmul.f32.gmra.mxu0 %v3417
      %v3570 = vpop.f32.mrf.mxu0
      %3571 = vmatmul.f32.gmra.mxu0 %v3420
      %v3572 = vpop.f32.mrf.mxu0
      %v3573 = vadd.f32 0.0, %v3572
      %3574 = vmatmul.f32.gmra.mxu0 %v3423
      %v3575 = vpop.f32.mrf.mxu0
      %v3576 = vadd.f32 0.0, %v3575
      %3577 = vmatmul.f32.gmra.mxu0 %v3426
      %v3578 = vpop.f32.mrf.mxu0
      %3579 = vmatmul.f32.gmra.mxu0 %v3429
      %v3580 = vpop.f32.mrf.mxu0
      %v3581 = vadd.f32 0.0, %v3580
      %3582 = vmatmul.f32.gmra.mxu0 %v3432
      %v3583 = vpop.f32.mrf.mxu0
      %v3584 = vadd.f32 0.0, %v3583
      %3585 = vmatmul.f32.gmra.mxu0 %v3435
      %v3586 = vpop.f32.mrf.mxu0
      %3587 = vmatmul.f32.gmra.mxu0 %v3438
      %v3588 = vpop.f32.mrf.mxu0
      %v3589 = vadd.f32 0.0, %v3588
      %3590 = vmatmul.f32.gmra.mxu0 %v3441
      %v3591 = vpop.f32.mrf.mxu0
      %v3592 = vadd.f32 0.0, %v3591
      %3593 = vmatmul.f32.gmra.mxu0 %v3444
      %v3594 = vpop.f32.mrf.mxu0
      %3595 = vmatmul.f32.gmra.mxu0 %v3447
      %v3596 = vpop.f32.mrf.mxu0
      %v3597 = vadd.f32 0.0, %v3596
      %3598 = vmatmul.f32.gmra.mxu0 %v3450
      %v3599 = vpop.f32.mrf.mxu0
      %v3600 = vadd.f32 0.0, %v3599
      %3601 = vmatmul.f32.gmra.mxu0 %v3453
      %v3602 = vpop.f32.mrf.mxu0
      %3603 = vmatmul.f32.gmra.mxu0 %v3456
      %v3604 = vpop.f32.mrf.mxu0
      %v3605 = vadd.f32 0.0, %v3604
      %3606 = vmatmul.f32.gmra.mxu0 %v3459
      %v3607 = vpop.f32.mrf.mxu0
      %v3608 = vadd.f32 0.0, %v3607
      %3609 = vmatmul.f32.gmra.mxu0 %v3462
      %v3610 = vpop.f32.mrf.mxu0
      %3611 = vmatmul.f32.gmra.mxu0 %v3465
      %v3612 = vpop.f32.mrf.mxu0
      %v3613 = vadd.f32 0.0, %v3612
      %3614 = vmatmul.f32.gmra.mxu0 %v3468
      %v3615 = vpop.f32.mrf.mxu0
      %v3616 = vadd.f32 0.0, %v3615
      %3617 = vmatmul.f32.gmra.mxu0 %v3471
      %v3618 = vpop.f32.mrf.mxu0
      %3619 = vmatmul.f32.gmra.mxu0 %v3474
      %v3620 = vpop.f32.mrf.mxu0
      %v3621 = vadd.f32 0.0, %v3620
      %3622 = vmatmul.f32.gmra.mxu0 %v3477
      %v3623 = vpop.f32.mrf.mxu0
      %v3624 = vadd.f32 0.0, %v3623
      %3625 = vmatmul.f32.gmra.mxu0 %v3480
      %v3626 = vpop.f32.mrf.mxu0
      %3627 = vmatmul.f32.gmra.mxu0 %v3483
      %v3628 = vpop.f32.mrf.mxu0
      %v3629 = vadd.f32 0.0, %v3628
      %3630 = vmatmul.f32.gmra.mxu0 %v3486
      %v3631 = vpop.f32.mrf.mxu0
      %v3632 = vadd.f32 0.0, %v3631
      %3633 = vmatmul.f32.gmra.mxu0 %v3489
      %v3634 = vpop.f32.mrf.mxu0
      %3635 = vdwg.mxu0
      %v3636 = vadd.f32 %v3265, %v3509
      %v3637 = vadd.f32 %v3266, %v3512
      %v3638 = vadd.f32 %v3267, %v3517
      %v3639 = vadd.f32 %v3268, %v3520
      %v3640 = vadd.f32 %v3269, %v3525
      %v3641 = vadd.f32 %v3270, %v3528
      %v3642 = vadd.f32 %v3271, %v3533
      %v3643 = vadd.f32 %v3272, %v3536
      %v3644 = vadd.f32 %v3273, %v3541
      %v3645 = vadd.f32 %v3274, %v3544
      %v3646 = vadd.f32 %v3275, %v3549
      %v3647 = vadd.f32 %v3276, %v3552
      %v3648 = vadd.f32 %v3277, %v3557
      %v3649 = vadd.f32 %v3278, %v3560
      %v3650 = vadd.f32 %v3279, %v3565
      %v3651 = vadd.f32 %v3280, %v3568
      %v3652 = vadd.f32 %v3281, %v3573
      %v3653 = vadd.f32 %v3282, %v3576
      %v3654 = vadd.f32 %v3283, %v3581
      %v3655 = vadd.f32 %v3284, %v3584
      %v3656 = vadd.f32 %v3285, %v3589
      %v3657 = vadd.f32 %v3286, %v3592
      %v3658 = vadd.f32 %v3287, %v3597
      %v3659 = vadd.f32 %v3288, %v3600
      %v3660 = vadd.f32 %v3289, %v3605
      %v3661 = vadd.f32 %v3290, %v3608
      %v3662 = vadd.f32 %v3291, %v3613
      %v3663 = vadd.f32 %v3292, %v3616
      %v3664 = vadd.f32 %v3293, %v3621
      %v3665 = vadd.f32 %v3294, %v3624
      %v3666 = vadd.f32 %v3295, %v3629
      %v3667 = vadd.f32 %v3296, %v3632
      %v3668 = vld [vmem:[%s2] sm:$0x1]
      %v3670 = vperm.slane %v3668, 0
      %v3672 = vadd.f32 %v3636, %v3670
      %v3673 = vadd.f32 %v3637, %v3670
      %v3674 = vadd.f32 %v3638, %v3670
      %v3675 = vadd.f32 %v3639, %v3670
      %v3676 = vadd.f32 %v3640, %v3670
      %v3677 = vadd.f32 %v3641, %v3670
      %v3678 = vadd.f32 %v3642, %v3670
      %v3679 = vadd.f32 %v3643, %v3670
      %v3680 = vadd.f32 %v3644, %v3670
      %v3681 = vadd.f32 %v3645, %v3670
      %v3682 = vadd.f32 %v3646, %v3670
      %v3683 = vadd.f32 %v3647, %v3670
      %v3684 = vadd.f32 %v3648, %v3670
      %v3685 = vadd.f32 %v3649, %v3670
      %v3686 = vadd.f32 %v3650, %v3670
      %v3687 = vadd.f32 %v3651, %v3670
      %v3688 = vadd.f32 %v3652, %v3670
      %v3689 = vadd.f32 %v3653, %v3670
      %v3690 = vadd.f32 %v3654, %v3670
      %v3691 = vadd.f32 %v3655, %v3670
      %v3692 = vadd.f32 %v3656, %v3670
      %v3693 = vadd.f32 %v3657, %v3670
      %v3694 = vadd.f32 %v3658, %v3670
      %v3695 = vadd.f32 %v3659, %v3670
      %v3696 = vadd.f32 %v3660, %v3670
      %v3697 = vadd.f32 %v3661, %v3670
      %v3698 = vadd.f32 %v3662, %v3670
      %v3699 = vadd.f32 %v3663, %v3670
      %v3700 = vadd.f32 %v3664, %v3670
      %v3701 = vadd.f32 %v3665, %v3670
      %v3702 = vadd.f32 %v3666, %v3670
      %v3703 = vadd.f32 %v3667, %v3670
      %v3704 = vld [vmem:[%s266] sm:$0xff]
      %v3705 = vld [vmem:[%s266 + $0x8] sm:$0xff]
      %v3706 = vld [vmem:[%s266 + $0x10] sm:$0xff]
      %v3707 = vld [vmem:[%s266 + $0x18] sm:$0xff]
      %v3708 = vld [vmem:[%s266 + $0x20] sm:$0xff]
      %v3709 = vld [vmem:[%s266 + $0x28] sm:$0xff]
      %v3710 = vld [vmem:[%s266 + $0x30] sm:$0xff]
      %v3711 = vld [vmem:[%s266 + $0x38] sm:$0xff]
      %v3712 = vld [vmem:[%s266 + $0x40] sm:$0xff]
      %v3713 = vld [vmem:[%s266 + $0x48] sm:$0xff]
      %v3714 = vld [vmem:[%s266 + $0x50] sm:$0xff]
      %v3715 = vld [vmem:[%s266 + $0x58] sm:$0xff]
      %v3716 = vld [vmem:[%s266 + $0x60] sm:$0xff]
      %v3717 = vld [vmem:[%s266 + $0x68] sm:$0xff]
      %v3718 = vld [vmem:[%s266 + $0x70] sm:$0xff]
      %v3719 = vld [vmem:[%s266 + $0x78] sm:$0xff]
      %v3720 = vld [vmem:[%s266 + $0x80] sm:$0xff]
      %v3721 = vld [vmem:[%s266 + $0x88] sm:$0xff]
      %v3722 = vld [vmem:[%s266 + $0x90] sm:$0xff]
      %v3723 = vld [vmem:[%s266 + $0x98] sm:$0xff]
      %v3724 = vld [vmem:[%s266 + $0xa0] sm:$0xff]
      %v3725 = vld [vmem:[%s266 + $0xa8] sm:$0xff]
      %v3726 = vld [vmem:[%s266 + $0xb0] sm:$0xff]
      %v3727 = vld [vmem:[%s266 + $0xb8] sm:$0xff]
      %v3728 = vld [vmem:[%s266 + $0xc0] sm:$0xff]
      %v3729 = vld [vmem:[%s266 + $0xc8] sm:$0xff]
      %v3730 = vld [vmem:[%s266 + $0xd0] sm:$0xff]
      %v3731 = vld [vmem:[%s266 + $0xd8] sm:$0xff]
      %v3732 = vld [vmem:[%s266 + $0xe0] sm:$0xff]
      %v3733 = vld [vmem:[%s266 + $0xe8] sm:$0xff]
      %v3734 = vld [vmem:[%s266 + $0xf0] sm:$0xff]
      %v3735 = vld [vmem:[%s266 + $0xf8] sm:$0xff]
      %v3736 = vld [vmem:[%s4] sm:$0xf]
      %v3737 = vld [vmem:[%s5] sm:$0x1]
      %v3739 = vperm.slane %v3737, 0
      %vm3741 = vcmask 31744
      %v3743 = vsel %vm3741, %v3704, 0
      %v3746 = vsel %vm3741, %v3705, 0
      %v3749 = vsel %vm3741, %v3706, 0
      %v3752 = vsel %vm3741, %v3707, 0
      %v3755 = vsel %vm3741, %v3708, 0
      %v3758 = vsel %vm3741, %v3709, 0
      %v3761 = vsel %vm3741, %v3710, 0
      %v3764 = vsel %vm3741, %v3711, 0
      %v3767 = vsel %vm3741, %v3712, 0
      %v3770 = vsel %vm3741, %v3713, 0
      %v3773 = vsel %vm3741, %v3714, 0
      %v3776 = vsel %vm3741, %v3715, 0
      %v3779 = vsel %vm3741, %v3716, 0
      %v3782 = vsel %vm3741, %v3717, 0
      %v3785 = vsel %vm3741, %v3718, 0
      %v3788 = vsel %vm3741, %v3719, 0
      %v3791 = vsel %vm3741, %v3720, 0
      %v3794 = vsel %vm3741, %v3721, 0
      %v3797 = vsel %vm3741, %v3722, 0
      %v3800 = vsel %vm3741, %v3723, 0
      %v3803 = vsel %vm3741, %v3724, 0
      %v3806 = vsel %vm3741, %v3725, 0
      %v3809 = vsel %vm3741, %v3726, 0
      %v3812 = vsel %vm3741, %v3727, 0
      %v3815 = vsel %vm3741, %v3728, 0
      %v3818 = vsel %vm3741, %v3729, 0
      %v3821 = vsel %vm3741, %v3730, 0
      %v3824 = vsel %vm3741, %v3731, 0
      %v3827 = vsel %vm3741, %v3732, 0
      %v3830 = vsel %vm3741, %v3733, 0
      %v3833 = vsel %vm3741, %v3734, 0
      %v3836 = vsel %vm3741, %v3735, 0
      %vm3838 = vcmask 1043456
      %v3840 = vsel %vm3838, %v3736, 0
      %3842 = vmatpush.msra.mxu0 0.0
      %3843 = vmatpush.msra.mxu0 0.0
      %3844 = vmatpush.msra.mxu0 0.0
      %3845 = vmatpush.msra.mxu0 0.0
      %3846 = vmatpush.msra.mxu0 0.0
      %3847 = vmatpush.msra.mxu0 0.0
      %3848 = vmatpush.msra.mxu0 0.0
      %3849 = vmatpush.msra.mxu0 0.0
      %3850 = vmatpush.msra.mxu0 0.0
      %3851 = vmatpush.msra.mxu0 0.0
      %3852 = vmatpush.msra.mxu0 0.0
      %3853 = vmatpush.msra.mxu0 0.0
      %3854 = vmatpush.msra.mxu0 0.0
      %3855 = vmatpush.msra.mxu0 0.0
      %3856 = vmatpush.msra.mxu0 0.0
      %3857 = vmatpush.msra.mxu0 %v3840
      %3858 = vmatmul.f32.gmra.mxu0 %v3743
      %v3859 = vpop.f32.mrf.mxu0
      %v3860 = vadd.f32 %v3739, %v3859
      %3861 = vmatmul.f32.gmra.mxu0 %v3746
      %v3862 = vpop.f32.mrf.mxu0
      %v3863 = vadd.f32 %v3739, %v3862
      %3864 = vmatmul.f32.gmra.mxu0 %v3749
      %v3865 = vpop.f32.mrf.mxu0
      %v3866 = vadd.f32 %v3739, %v3865
      %3867 = vmatmul.f32.gmra.mxu0 %v3752
      %v3868 = vpop.f32.mrf.mxu0
      %v3869 = vadd.f32 %v3739, %v3868
      %3870 = vmatmul.f32.gmra.mxu0 %v3755
      %v3871 = vpop.f32.mrf.mxu0
      %v3872 = vadd.f32 %v3739, %v3871
      %3873 = vmatmul.f32.gmra.mxu0 %v3758
      %v3874 = vpop.f32.mrf.mxu0
      %v3875 = vadd.f32 %v3739, %v3874
      %3876 = vmatmul.f32.gmra.mxu0 %v3761
      %v3877 = vpop.f32.mrf.mxu0
      %v3878 = vadd.f32 %v3739, %v3877
      %3879 = vmatmul.f32.gmra.mxu0 %v3764
      %v3880 = vpop.f32.mrf.mxu0
      %v3881 = vadd.f32 %v3739, %v3880
      %3882 = vmatmul.f32.gmra.mxu0 %v3767
      %v3883 = vpop.f32.mrf.mxu0
      %v3884 = vadd.f32 %v3739, %v3883
      %3885 = vmatmul.f32.gmra.mxu0 %v3770
      %v3886 = vpop.f32.mrf.mxu0
      %v3887 = vadd.f32 %v3739, %v3886
      %3888 = vmatmul.f32.gmra.mxu0 %v3773
      %v3889 = vpop.f32.mrf.mxu0
      %v3890 = vadd.f32 %v3739, %v3889
      %3891 = vmatmul.f32.gmra.mxu0 %v3776
      %v3892 = vpop.f32.mrf.mxu0
      %v3893 = vadd.f32 %v3739, %v3892
      %3894 = vmatmul.f32.gmra.mxu0 %v3779
      %v3895 = vpop.f32.mrf.mxu0
      %v3896 = vadd.f32 %v3739, %v3895
      %3897 = vmatmul.f32.gmra.mxu0 %v3782
      %v3898 = vpop.f32.mrf.mxu0
      %v3899 = vadd.f32 %v3739, %v3898
      %3900 = vmatmul.f32.gmra.mxu0 %v3785
      %v3901 = vpop.f32.mrf.mxu0
      %v3902 = vadd.f32 %v3739, %v3901
      %3903 = vmatmul.f32.gmra.mxu0 %v3788
      %v3904 = vpop.f32.mrf.mxu0
      %v3905 = vadd.f32 %v3739, %v3904
      %3906 = vmatmul.f32.gmra.mxu0 %v3791
      %v3907 = vpop.f32.mrf.mxu0
      %v3908 = vadd.f32 %v3739, %v3907
      %3909 = vmatmul.f32.gmra.mxu0 %v3794
      %v3910 = vpop.f32.mrf.mxu0
      %v3911 = vadd.f32 %v3739, %v3910
      %3912 = vmatmul.f32.gmra.mxu0 %v3797
      %v3913 = vpop.f32.mrf.mxu0
      %v3914 = vadd.f32 %v3739, %v3913
      %3915 = vmatmul.f32.gmra.mxu0 %v3800
      %v3916 = vpop.f32.mrf.mxu0
      %v3917 = vadd.f32 %v3739, %v3916
      %3918 = vmatmul.f32.gmra.mxu0 %v3803
      %v3919 = vpop.f32.mrf.mxu0
      %v3920 = vadd.f32 %v3739, %v3919
      %3921 = vmatmul.f32.gmra.mxu0 %v3806
      %v3922 = vpop.f32.mrf.mxu0
      %v3923 = vadd.f32 %v3739, %v3922
      %3924 = vmatmul.f32.gmra.mxu0 %v3809
      %v3925 = vpop.f32.mrf.mxu0
      %v3926 = vadd.f32 %v3739, %v3925
      %3927 = vmatmul.f32.gmra.mxu0 %v3812
      %v3928 = vpop.f32.mrf.mxu0
      %v3929 = vadd.f32 %v3739, %v3928
      %3930 = vmatmul.f32.gmra.mxu0 %v3815
      %v3931 = vpop.f32.mrf.mxu0
      %v3932 = vadd.f32 %v3739, %v3931
      %3933 = vmatmul.f32.gmra.mxu0 %v3818
      %v3934 = vpop.f32.mrf.mxu0
      %v3935 = vadd.f32 %v3739, %v3934
      %3936 = vmatmul.f32.gmra.mxu0 %v3821
      %v3937 = vpop.f32.mrf.mxu0
      %v3938 = vadd.f32 %v3739, %v3937
      %3939 = vmatmul.f32.gmra.mxu0 %v3824
      %v3940 = vpop.f32.mrf.mxu0
      %v3941 = vadd.f32 %v3739, %v3940
      %3942 = vmatmul.f32.gmra.mxu0 %v3827
      %v3943 = vpop.f32.mrf.mxu0
      %v3944 = vadd.f32 %v3739, %v3943
      %3945 = vmatmul.f32.gmra.mxu0 %v3830
      %v3946 = vpop.f32.mrf.mxu0
      %v3947 = vadd.f32 %v3739, %v3946
      %3948 = vmatmul.f32.gmra.mxu0 %v3833
      %v3949 = vpop.f32.mrf.mxu0
      %v3950 = vadd.f32 %v3739, %v3949
      %3951 = vmatmul.f32.gmra.mxu0 %v3836
      %v3952 = vpop.f32.mrf.mxu0
      %v3953 = vadd.f32 %v3739, %v3952
      %3954 = vdwg.mxu0
      %v3955 = vadd.f32 %v3672, %v3860
      %v3956 = vadd.f32 %v3673, %v3863
      %v3957 = vadd.f32 %v3674, %v3866
      %v3958 = vadd.f32 %v3675, %v3869
      %v3959 = vadd.f32 %v3676, %v3872
      %v3960 = vadd.f32 %v3677, %v3875
      %v3961 = vadd.f32 %v3678, %v3878
      %v3962 = vadd.f32 %v3679, %v3881
      %v3963 = vadd.f32 %v3680, %v3884
      %v3964 = vadd.f32 %v3681, %v3887
      %v3965 = vadd.f32 %v3682, %v3890
      %v3966 = vadd.f32 %v3683, %v3893
      %v3967 = vadd.f32 %v3684, %v3896
      %v3968 = vadd.f32 %v3685, %v3899
      %v3969 = vadd.f32 %v3686, %v3902
      %v3970 = vadd.f32 %v3687, %v3905
      %v3971 = vadd.f32 %v3688, %v3908
      %v3972 = vadd.f32 %v3689, %v3911
      %v3973 = vadd.f32 %v3690, %v3914
      %v3974 = vadd.f32 %v3691, %v3917
      %v3975 = vadd.f32 %v3692, %v3920
      %v3976 = vadd.f32 %v3693, %v3923
      %v3977 = vadd.f32 %v3694, %v3926
      %v3978 = vadd.f32 %v3695, %v3929
      %v3979 = vadd.f32 %v3696, %v3932
      %v3980 = vadd.f32 %v3697, %v3935
      %v3981 = vadd.f32 %v3698, %v3938
      %v3982 = vadd.f32 %v3699, %v3941
      %v3983 = vadd.f32 %v3700, %v3944
      %v3984 = vadd.f32 %v3701, %v3947
      %v3985 = vadd.f32 %v3702, %v3950
      %v3986 = vadd.f32 %v3703, %v3953
      %3987 = vst.msk [vmem:[%s271] sm:$0xff] %vm304, %v3955
      %3988 = vst.msk [vmem:[%s271 + $0x8] sm:$0xff] %vm304, %v3956
      %3989 = vst.msk [vmem:[%s271 + $0x10] sm:$0xff] %vm304, %v3957
      %3990 = vst.msk [vmem:[%s271 + $0x18] sm:$0xff] %vm304, %v3958
      %3991 = vst.msk [vmem:[%s271 + $0x20] sm:$0xff] %vm304, %v3959
      %3992 = vst.msk [vmem:[%s271 + $0x28] sm:$0xff] %vm304, %v3960
      %3993 = vst.msk [vmem:[%s271 + $0x30] sm:$0xff] %vm304, %v3961
      %3994 = vst.msk [vmem:[%s271 + $0x38] sm:$0xff] %vm304, %v3962
      %3995 = vst.msk [vmem:[%s271 + $0x40] sm:$0xff] %vm304, %v3963
      %3996 = vst.msk [vmem:[%s271 + $0x48] sm:$0xff] %vm304, %v3964
      %3997 = vst.msk [vmem:[%s271 + $0x50] sm:$0xff] %vm304, %v3965
      %3998 = vst.msk [vmem:[%s271 + $0x58] sm:$0xff] %vm304, %v3966
      %3999 = vst.msk [vmem:[%s271 + $0x60] sm:$0xff] %vm304, %v3967
      %4000 = vst.msk [vmem:[%s271 + $0x68] sm:$0xff] %vm304, %v3968
      %4001 = vst.msk [vmem:[%s271 + $0x70] sm:$0xff] %vm304, %v3969
      %4002 = vst.msk [vmem:[%s271 + $0x78] sm:$0xff] %vm304, %v3970
      %4003 = vst.msk [vmem:[%s271 + $0x80] sm:$0xff] %vm304, %v3971
      %4004 = vst.msk [vmem:[%s271 + $0x88] sm:$0xff] %vm304, %v3972
      %4005 = vst.msk [vmem:[%s271 + $0x90] sm:$0xff] %vm304, %v3973
      %4006 = vst.msk [vmem:[%s271 + $0x98] sm:$0xff] %vm304, %v3974
      %4007 = vst.msk [vmem:[%s271 + $0xa0] sm:$0xff] %vm304, %v3975
      %4008 = vst.msk [vmem:[%s271 + $0xa8] sm:$0xff] %vm304, %v3976
      %4009 = vst.msk [vmem:[%s271 + $0xb0] sm:$0xff] %vm304, %v3977
      %4010 = vst.msk [vmem:[%s271 + $0xb8] sm:$0xff] %vm304, %v3978
      %4011 = vst.msk [vmem:[%s271 + $0xc0] sm:$0xff] %vm304, %v3979
      %4012 = vst.msk [vmem:[%s271 + $0xc8] sm:$0xff] %vm304, %v3980
      %4013 = vst.msk [vmem:[%s271 + $0xd0] sm:$0xff] %vm304, %v3981
      %4014 = vst.msk [vmem:[%s271 + $0xd8] sm:$0xff] %vm304, %v3982
      %4015 = vst.msk [vmem:[%s271 + $0xe0] sm:$0xff] %vm304, %v3983
      %4016 = vst.msk [vmem:[%s271 + $0xe8] sm:$0xff] %vm304, %v3984
      %4017 = vst.msk [vmem:[%s271 + $0xf0] sm:$0xff] %vm304, %v3985
      %4018 = vst.msk [vmem:[%s271 + $0xf8] sm:$0xff] %vm304, %v3986
      %p4019 = scmp.lt.s32.totalorder %s17, 1
      %s4020 = scalar_select %p4019, %s17, 1
      %s4021 = smul.addr %s4020, 32
      %s4022 = smul.addr %s4021, 8
      %s4023 = scalar_lea.vmem %s6, %s4022
      // Predicated region
      $region45: #{wide_basic_forward.3} parent=43 // pred_check
        %p4024 = pneg %p171
      $region46: #{wide_basic_forward.3} parent=43 // pred_check_branch
        %4026 = sbr.rel (%p4024) target = $region48
      $region47: #{wide_basic_forward.3} parent=43 // pred_region
        _
      $region48: #{wide_basic_forward.3} parent=43 // pred_fallthru
        _
    $region44: #{wide_basic_forward.3} parent=5 // pred_fallthru
      _
    %p4027 = scmp.le.s32.totalorder 2, %s12
    // Predicated region
    $region49: #{wide_basic_forward.3} parent=5 // pred_check
      %p4028 = pneg %p4027
    $region50: #{wide_basic_forward.3} parent=5 // pred_check_branch
      %4030 = sbr.rel (%p4028) target = $region52
    $region51: #{wide_basic_forward.3} parent=5 // pred_region
      %s4031 = ssub.s32 %s12, 2
      // Predicated region
      $region53: #{wide_basic_forward.3} parent=51 // pred_check
        %p4032 = pneg %p177
      $region54: #{wide_basic_forward.3} parent=51 // pred_check_branch
        %4034 = sbr.rel (%p4032) target = $region56
      $region55: #{wide_basic_forward.3} parent=51 // pred_region
        %p4035 = scmp.lt.s32.totalorder %s18, 1
        %s4036 = scalar_select %p4035, %s18, 1
        %s4037 = smul.addr %s4036, 32
        %s4038 = smul.addr %s4037, 8
        %s4039 = scalar_lea.vmem %s6, %s4038
      $region56: #{wide_basic_forward.3} parent=51 // pred_fallthru
        _
    $region52: #{wide_basic_forward.3} parent=5 // pred_fallthru
      _
  $region6: #{wide_basic_forward.3} parent=0 // loop_footer
    %s16 = sadd.s32 1, %s12
  $region7: #{wide_basic_forward.3} parent=0 // loop_footer_branch
    %11 = sbr.rel target = $region3
  $region8: #{wide_basic_forward.3} parent=0 // loop_exit
    _

</llo_original>
